<compile_context>
chip_gen: v6e
topology: v6e:2x2x1
jax: 0.10.0
libtpu: 0.0.40
codegen_flags: <defaults>
</compile_context>

<pallas_src>
import math
import jax
import jax.numpy as jnp
from jax.scipy.linalg import block_diag
from jax.experimental import pallas as pl
from jax.experimental.pallas import tpu as pltpu


# ----------------------------- fused whole-layer Pallas kernel -----------------------------

def _fused_layer_kernel(x_ref, wv_ref, bv_ref, wdw_ref, bdw_ref,
                        wp_ref, bp_ref, w1_ref, b1_ref, w2_ref, b2_ref,
                        mix_ref, o_ref):
    """All `depth` TransformerBlocks for BOTH streams and ALL batch images (channel-packed).

    x_ref   : (H, W, C2)         C2 = 2*B*dim activations, lane-dense (128 for B=2, dim=32)
    wv/wp   : (depth, C2, C2)    block-diagonal 1x1 conv weights (V / proj)
    wdw     : (depth, 25, C2)    depthwise 5x5 taps, tiled across batch+stream
    w1/w2   : (depth, C2, Ch2) / (depth, Ch2, C2) block-diagonal Mlp weights
    mix     : (depth, 1, C2)     per-channel mix coefficients (inactive half statically zero)
    """
    H, W, C2 = x_ref.shape
    HW = H * W
    BC = C2 // 2
    depth = wv_ref.shape[0]

    xf = x_ref[...].reshape(HW, C2)

    for d in range(depth):          # static unroll; activations stay in VMEM across blocks
        # --- V = 1x1 conv (MXU) ---
        v = (jnp.dot(xf, wv_ref[d], preferred_element_type=jnp.float32)
             + bv_ref[d]).reshape(H, W, C2)

        # --- reflect pad by 2 (matches jnp.pad mode='reflect'; needs H, W >= 3) ---
        vrow = jnp.concatenate(
            [v[2:3], v[1:2], v, v[H - 2:H - 1], v[H - 3:H - 2]], axis=0)          # (H+4, W, C2)
        vp = jnp.concatenate(
            [vrow[:, 2:3], vrow[:, 1:2], vrow,
             vrow[:, W - 2:W - 1], vrow[:, W - 3:W - 2]], axis=1)                 # (H+4, W+4, C2)

        # --- build the 5 W(sublane)-shifted slabs ONCE; tap loop then only takes cheap
        #     major-axis (H) slices instead of 25 sublane-offset window repacks ---
        shifted = [vp[:, kw:kw + W, :] for kw in range(5)]                        # each (H+4, W, C2)

        # --- depthwise 5x5: 25 shifted multiply-accumulates on the VPU; acc seeded with tap 0 ---
        wdw = wdw_ref[d]                                   # (25, C2), loaded once per block
        acc = shifted[0][0:H] * wdw[0:1, :]
        for kh in range(5):
            for kw in range(5):
                if kh == 0 and kw == 0:
                    continue
                k = kh * 5 + kw
                acc = acc + shifted[kw][kh:kh + H] * wdw[k:k + 1, :]
        conv = (acc + bdw_ref[d]).reshape(HW, C2)

        # --- proj 1x1 + residual, then Mlp (1x1 -> ReLU -> 1x1) + residual ---
        # TODO(synk): optionally cast the Mlp matmul operands to bf16 (preferred_element_type=f32)
        #             on v6e/v7x after re-validating the 2e-4 tolerance.
        y = xf + jnp.dot(conv, wp_ref[d], preferred_element_type=jnp.float32) + bp_ref[d]
        h = jnp.maximum(
            jnp.dot(y, w1_ref[d], preferred_element_type=jnp.float32) + b1_ref[d], 0.0)
        z = y + jnp.dot(h, w2_ref[d], preferred_element_type=jnp.float32) + b2_ref[d]

        # --- BasicLayer cross-stream mix: only even blocks (statically specialized); the
        #     ivif<->mfif swap is a half-width lane rotation on the XLU, inactive half masked ---
        if d % 2 == 0:
            z = z + pltpu.roll(z, BC, axis=1) * mix_ref[d]
        xf = z

    o_ref[...] = xf.reshape(H, W, C2)


def fused_layer(x, stacked, mixmat):
    """x: (H, W, 2*B*dim) lane-dense packed activations; one pallas_call for the whole layer."""
    H, W, C2 = x.shape
    depth, _, Ch2 = stacked["w1"].shape

    def full(shape):
        n = len(shape)
        return pl.BlockSpec(shape, lambda *_: (0,) * n)

    # TODO(synk): for v7x (2 TensorCores) or large H*W, add a "parallel" grid axis over H row
    #             tiles with a 2-row halo and size tiles against 64 MiB VMEM (vmem_limit_bytes).
    return pl.pallas_call(
        _fused_layer_kernel,
        out_shape=jax.ShapeDtypeStruct((H, W, C2), jnp.float32),
        grid=(1,),
        in_specs=[full((H, W, C2)),
                  full((depth, C2, C2)), full((depth, 1, C2)),     # V 1x1
                  full((depth, 25, C2)), full((depth, 1, C2)),     # depthwise 5x5
                  full((depth, C2, C2)), full((depth, 1, C2)),     # proj 1x1
                  full((depth, C2, Ch2)), full((depth, 1, Ch2)),   # Mlp conv1
                  full((depth, Ch2, C2)), full((depth, 1, C2)),    # Mlp conv2
                  full((depth, 1, C2))],                           # mix vectors
        out_specs=full((H, W, C2)),
        compiler_params=pltpu.CompilerParams(dimension_semantics=("arbitrary",)),
    )(x, stacked["wv"], stacked["bv"], stacked["wdw"], stacked["bdw"],
      stacked["wp"], stacked["bp"], stacked["w1"], stacked["b1"],
      stacked["w2"], stacked["b2"], mixmat)


# ----------------------------- stream + batch packing (block-diagonal weights) -----------------------------

def _pack_block_params(blk, B):
    """Pack both streams AND the batch onto the channel axis: lanes = [ivif_b0..ivif_bB-1, mfif_b0..]."""
    si, sm = blk["ivif"], blk["mfif"]

    def bd(name):   # block-diagonal 1x1 / Mlp weight, same per-stream weight repeated per batch
        return block_diag(*([si[name]] * B + [sm[name]] * B))

    def cat(name):  # per-channel params (biases, dwconv taps) tiled across batch
        return jnp.concatenate([si[name]] * B + [sm[name]] * B, axis=1)

    return {"wv": bd("wv"), "bv": cat("bv"),
            "wdw": cat("wdw"), "bdw": cat("bdw"),
            "wp": bd("wp"), "bp": cat("bp"),
            "w1": bd("w1"), "b1": cat("b1"),
            "w2": bd("w2"), "b2": cat("b2")}


def _stack_layer_params(blocks, B):
    packed = [_pack_block_params(blk, B) for blk in blocks]
    return {k: jnp.stack([p[k] for p in packed], axis=0) for k in packed[0]}


# ----------------------------- BasicLayer forward (public wrapper, NCHW) -----------------------------

def basic_layer_forward(x_ivif_nchw, x_mfif_nchw, params, training_tag=1):
    B, C, H, W = x_ivif_nchw.shape
    assert H >= 3 and W >= 3, "in-kernel reflect pad (pad=2) requires H, W >= 3"

    # Layout plumbing only: (B,C,H,W) -> (H,W,B*C), both streams concatenated on the lane axis
    # so the kernel sees a lane-dense (H, W, 2*B*C) slab (128 lanes for B=2, C=32).
    xi = jnp.transpose(x_ivif_nchw.astype(jnp.float32), (2, 3, 0, 1)).reshape(H, W, B * C)
    xm = jnp.transpose(x_mfif_nchw.astype(jnp.float32), (2, 3, 0, 1)).reshape(H, W, B * C)
    x = jnp.concatenate([xi, xm], axis=-1)

    BC = B * C
    C2 = 2 * BC
    depth = len(params["blocks"])
    stacked = _stack_layer_params(params["blocks"], B)

    # Per-block mix vectors: inactive half statically zero (mask baked in here); odd blocks
    # never read their row because the kernel skips the epilogue for them at trace time.
    rows = []
    for i in range(depth):
        if i % 2 == 0:
            if training_tag == 1:
                w = params["weights"][i][0]                # x_ivif += w * x_mfif
                row = jnp.concatenate([w * jnp.ones((1, BC), jnp.float32),
                                       jnp.zeros((1, BC), jnp.float32)], axis=1)
            else:
                w = params["weights_mfif"][i][0]           # x_mfif += w * x_ivif
                row = jnp.concatenate([jnp.zeros((1, BC), jnp.float32),
                                       w * jnp.ones((1, BC), jnp.float32)], axis=1)
        else:
            row = jnp.zeros((1, C2), jnp.float32)
        rows.append(row)
    mixmat = jnp.stack(rows, axis=0)                       # (depth, 1, C2)

    out = fused_layer(x, stacked, mixmat)
    half = out[..., :BC] if training_tag == 1 else out[..., BC:]
    return jnp.transpose(half.reshape(H, W, B, C), (2, 3, 0, 1))   # back to NCHW


# ----------------------------- deterministic parameter init -----------------------------

def _trunc_normal(key, shape, std):
    return std * jax.random.truncated_normal(key, -2.0, 2.0, shape, jnp.float32)


def init_params(key, dim, depth, mlp_ratio, network_depth):
    hidden = int(dim * mlp_ratio)
    gain = (8.0 * network_depth) ** (-0.25)
    std_1x1 = gain * math.sqrt(2.0 / (dim + dim))
    std_dw = gain * math.sqrt(2.0 / (25.0 + 25.0 * dim))
    std_m1 = gain * math.sqrt(2.0 / (dim + hidden))
    std_m2 = gain * math.sqrt(2.0 / (hidden + dim))
    blocks = []
    for _ in range(depth):
        blk = {}
        for s in ("ivif", "mfif"):
            key, k1, k2, k3, k4, k5 = jax.random.split(key, 6)
            blk[s] = {
                "wv":  _trunc_normal(k1, (dim, dim), std_1x1),      # V 1x1 (Cin x Cout)
                "bv":  jnp.zeros((1, dim), jnp.float32),
                "wdw": _trunc_normal(k2, (25, dim), std_dw),        # depthwise 5x5 taps x C
                "bdw": jnp.zeros((1, dim), jnp.float32),
                "wp":  _trunc_normal(k3, (dim, dim), std_1x1),      # proj 1x1
                "bp":  jnp.zeros((1, dim), jnp.float32),
                "w1":  _trunc_normal(k4, (dim, hidden), std_m1),    # Mlp conv1
                "b1":  jnp.zeros((1, hidden), jnp.float32),
                "w2":  _trunc_normal(k5, (hidden, dim), std_m2),    # Mlp conv2
                "b2":  jnp.zeros((1, dim), jnp.float32),
            }
        blocks.append(blk)
    key, kw1, kw2 = jax.random.split(key, 3)
    return {
        "blocks": blocks,
        "weights": [jax.random.uniform(jax.random.fold_in(kw1, i), (1,), jnp.float32)
                    for i in range(depth)],
        "weights_mfif": [jax.random.uniform(jax.random.fold_in(kw2, i), (1,), jnp.float32)
                         for i in range(depth)],
    }


# ----------------------------- pure-JAX reference (for verification) -----------------------------

def _ref_stream(x, p):
    B, H, W, C = x.shape
    v = (x.reshape(-1, C) @ p["wv"] + p["bv"]).reshape(B, H, W, C)
    vpad = jnp.pad(v, ((0, 0), (2, 2), (2, 2), (0, 0)), mode="reflect")
    w_hwio = p["wdw"].reshape(5, 5, C)[:, :, None, :]
    conv = jax.lax.conv_general_dilated(
        vpad, w_hwio, (1, 1), "VALID",
        dimension_numbers=("NHWC", "HWIO", "NHWC"),
        feature_group_count=C) + p["bdw"].reshape(1, 1, 1, C)
    y = x + (conv.reshape(-1, C) @ p["wp"] + p["bp"]).reshape(B, H, W, C)
    h = jnp.maximum(y.reshape(-1, C) @ p["w1"] + p["b1"], 0.0)
    return y + (h @ p["w2"] + p["b2"]).reshape(B, H, W, C)


def ref_basic_layer(x_ivif_nchw, x_mfif_nchw, params, training_tag=1):
    x_ivif = jnp.transpose(x_ivif_nchw, (0, 2, 3, 1)).astype(jnp.float32)
    x_mfif = jnp.transpose(x_mfif_nchw, (0, 2, 3, 1)).astype(jnp.float32)
    for i, blk in enumerate(params["blocks"]):
        x_ivif, x_mfif = _ref_stream(x_ivif, blk["ivif"]), _ref_stream(x_mfif, blk["mfif"])
        if i % 2 == 0:
            if training_tag == 1:
                x_ivif = x_ivif + params["weights"][i][0] * x_mfif
            else:
                x_mfif = x_mfif + params["weights_mfif"][i][0] * x_ivif
    out = x_ivif if training_tag == 1 else x_mfif
    return jnp.transpose(out, (0, 3, 1, 2))


# ----------------------------- main -----------------------------

if __name__ == "__main__":
    # BasicLayer(network_depth=8, dim=32, depth=2, num_heads=4, mlp_ratio=4.0,
    #            window_size=8, attn_ratio=0.0, conv_type='DWConv'); trainingTag=1.
    # TODO(synk): use_attn=True path (WindowAttention) is not exercised -- the reference code's
    # default attn_ratio=0 means no block ever instantiates it, so only the DWConv configuration
    # is runnable and implemented here.
    B, C, H, W = 2, 32, 16, 16
    depth, network_depth, mlp_ratio = 2, 8, 4.0

    key = jax.random.PRNGKey(0)
    kx1, kx2, kp = jax.random.split(key, 3)
    x_ivif = jax.random.normal(kx1, (B, C, H, W), jnp.float32)   # NCHW, like PyTorch
    x_mfif = jax.random.normal(kx2, (B, C, H, W), jnp.float32)
    params = init_params(kp, C, depth, mlp_ratio, network_depth)

    fwd = jax.jit(basic_layer_forward, static_argnames=("training_tag",))
    out = jax.block_until_ready(fwd(x_ivif, x_mfif, params, training_tag=1))

    ref = ref_basic_layer(x_ivif, x_mfif, params, training_tag=1)
    assert out.shape == (B, C, H, W), out.shape
    max_err = float(jnp.max(jnp.abs(out - ref)))
    assert jnp.allclose(out, ref, atol=2e-4, rtol=2e-4), max_err

    print("KERNEL_OK")
</pallas_src>

<mosaic_0001>
module attributes {stable_mosaic.version = 11 : i64} {
  func.func @_fused_layer_kernel(%arg0: i32, %arg1: memref<16x16x128xf32, #tpu.memory_space<vmem>>, %arg2: memref<2x128x128xf32, #tpu.memory_space<vmem>>, %arg3: memref<2x1x128xf32, #tpu.memory_space<vmem>>, %arg4: memref<2x25x128xf32, #tpu.memory_space<vmem>>, %arg5: memref<2x1x128xf32, #tpu.memory_space<vmem>>, %arg6: memref<2x128x128xf32, #tpu.memory_space<vmem>>, %arg7: memref<2x1x128xf32, #tpu.memory_space<vmem>>, %arg8: memref<2x128x512xf32, #tpu.memory_space<vmem>>, %arg9: memref<2x1x512xf32, #tpu.memory_space<vmem>>, %arg10: memref<2x512x128xf32, #tpu.memory_space<vmem>>, %arg11: memref<2x1x128xf32, #tpu.memory_space<vmem>>, %arg12: memref<2x1x128xf32, #tpu.memory_space<vmem>>, %arg13: memref<16x16x128xf32, #tpu.memory_space<vmem>>) attributes {dimension_semantics = [#tpu.dimension_semantics<arbitrary>], iteration_bounds = array<i64: 1>, scalar_prefetch = 0 : i64, scratch_operands = 0 : i64, tpu.core_type = #tpu.core_type<tc>, window_params = [{pipeline_mode = #tpu.pipeline_mode<synchronous>, transform_indices = @transform_0, window_bounds = array<i64: 16, 16, 128>}, {pipeline_mode = #tpu.pipeline_mode<synchronous>, transform_indices = @transform_1, window_bounds = array<i64: 2, 128, 128>}, {pipeline_mode = #tpu.pipeline_mode<synchronous>, transform_indices = @transform_2, window_bounds = array<i64: 2, 1, 128>}, {pipeline_mode = #tpu.pipeline_mode<synchronous>, transform_indices = @transform_3, window_bounds = array<i64: 2, 25, 128>}, {pipeline_mode = #tpu.pipeline_mode<synchronous>, transform_indices = @transform_4, window_bounds = array<i64: 2, 1, 128>}, {pipeline_mode = #tpu.pipeline_mode<synchronous>, transform_indices = @transform_5, window_bounds = array<i64: 2, 128, 128>}, {pipeline_mode = #tpu.pipeline_mode<synchronous>, transform_indices = @transform_6, window_bounds = array<i64: 2, 1, 128>}, {pipeline_mode = #tpu.pipeline_mode<synchronous>, transform_indices = @transform_7, window_bounds = array<i64: 2, 128, 512>}, {pipeline_mode = #tpu.pipeline_mode<synchronous>, transform_indices = @transform_8, window_bounds = array<i64: 2, 1, 512>}, {pipeline_mode = #tpu.pipeline_mode<synchronous>, transform_indices = @transform_9, window_bounds = array<i64: 2, 512, 128>}, {pipeline_mode = #tpu.pipeline_mode<synchronous>, transform_indices = @transform_10, window_bounds = array<i64: 2, 1, 128>}, {pipeline_mode = #tpu.pipeline_mode<synchronous>, transform_indices = @transform_11, window_bounds = array<i64: 2, 1, 128>}, {pipeline_mode = #tpu.pipeline_mode<synchronous>, transform_indices = @transform_12, window_bounds = array<i64: 16, 16, 128>}]} {
    %c0 = arith.constant 0 : index
    %c0_0 = arith.constant 0 : index
    %c0_1 = arith.constant 0 : index
    %0 = vector.load %arg1[%c0, %c0_0, %c0_1] : memref<16x16x128xf32, #tpu.memory_space<vmem>>, vector<16x16x128xf32>
    %1 = vector.shape_cast %0 : vector<16x16x128xf32> to vector<256x128xf32>
    %c0_2 = arith.constant 0 : index
    %c0_3 = arith.constant 0 : index
    %c0_4 = arith.constant 0 : index
    %2 = vector.load %arg2[%c0_2, %c0_3, %c0_4] : memref<2x128x128xf32, #tpu.memory_space<vmem>>, vector<1x128x128xf32>
    %3 = vector.shape_cast %2 : vector<1x128x128xf32> to vector<128x128xf32>
    %cst = arith.constant dense<0.000000e+00> : vector<256x128xf32>
    %4 = tpu.matmul %1, %3, %cst {dimension_numbers = #tpu.dot_dimension_numbers<[1], [0], [0], [1], [0, 0, 1, 1], [], []>} : vector<256x128xf32>, vector<128x128xf32>, vector<256x128xf32> -> vector<256x128xf32>
    %c0_5 = arith.constant 0 : index
    %c0_6 = arith.constant 0 : index
    %c0_7 = arith.constant 0 : index
    %5 = vector.load %arg3[%c0_5, %c0_6, %c0_7] : memref<2x1x128xf32, #tpu.memory_space<vmem>>, vector<1x1x128xf32>
    %6 = vector.shape_cast %5 : vector<1x1x128xf32> to vector<1x128xf32>
    %7 = vector.broadcast %6 : vector<1x128xf32> to vector<256x128xf32>
    %8 = arith.addf %4, %7 : vector<256x128xf32>
    %9 = vector.shape_cast %8 : vector<256x128xf32> to vector<16x16x128xf32>
    %10 = vector.extract_strided_slice %9 {offsets = [2, 0, 0], sizes = [1, 16, 128], strides = [1, 1, 1]} : vector<16x16x128xf32> to vector<1x16x128xf32>
    %11 = vector.extract_strided_slice %9 {offsets = [1, 0, 0], sizes = [1, 16, 128], strides = [1, 1, 1]} : vector<16x16x128xf32> to vector<1x16x128xf32>
    %12 = vector.extract_strided_slice %9 {offsets = [14, 0, 0], sizes = [1, 16, 128], strides = [1, 1, 1]} : vector<16x16x128xf32> to vector<1x16x128xf32>
    %13 = vector.extract_strided_slice %9 {offsets = [13, 0, 0], sizes = [1, 16, 128], strides = [1, 1, 1]} : vector<16x16x128xf32> to vector<1x16x128xf32>
    %14 = tpu.concatenate %10, %11, %9, %12, %13 in 0 : vector<1x16x128xf32>, vector<1x16x128xf32>, vector<16x16x128xf32>, vector<1x16x128xf32>, vector<1x16x128xf32> -> vector<20x16x128xf32>
    %15 = vector.extract_strided_slice %14 {offsets = [0, 2, 0], sizes = [20, 1, 128], strides = [1, 1, 1]} : vector<20x16x128xf32> to vector<20x1x128xf32>
    %16 = vector.extract_strided_slice %14 {offsets = [0, 1, 0], sizes = [20, 1, 128], strides = [1, 1, 1]} : vector<20x16x128xf32> to vector<20x1x128xf32>
    %17 = vector.extract_strided_slice %14 {offsets = [0, 14, 0], sizes = [20, 1, 128], strides = [1, 1, 1]} : vector<20x16x128xf32> to vector<20x1x128xf32>
    %18 = vector.extract_strided_slice %14 {offsets = [0, 13, 0], sizes = [20, 1, 128], strides = [1, 1, 1]} : vector<20x16x128xf32> to vector<20x1x128xf32>
    %19 = tpu.concatenate %15, %16, %14, %17, %18 in 1 : vector<20x1x128xf32>, vector<20x1x128xf32>, vector<20x16x128xf32>, vector<20x1x128xf32>, vector<20x1x128xf32> -> vector<20x20x128xf32>
    %20 = vector.extract_strided_slice %19 {offsets = [0, 0, 0], sizes = [20, 16, 128], strides = [1, 1, 1]} : vector<20x20x128xf32> to vector<20x16x128xf32>
    %21 = vector.extract_strided_slice %19 {offsets = [0, 1, 0], sizes = [20, 16, 128], strides = [1, 1, 1]} : vector<20x20x128xf32> to vector<20x16x128xf32>
    %22 = vector.extract_strided_slice %19 {offsets = [0, 2, 0], sizes = [20, 16, 128], strides = [1, 1, 1]} : vector<20x20x128xf32> to vector<20x16x128xf32>
    %23 = vector.extract_strided_slice %19 {offsets = [0, 3, 0], sizes = [20, 16, 128], strides = [1, 1, 1]} : vector<20x20x128xf32> to vector<20x16x128xf32>
    %24 = vector.extract_strided_slice %19 {offsets = [0, 4, 0], sizes = [20, 16, 128], strides = [1, 1, 1]} : vector<20x20x128xf32> to vector<20x16x128xf32>
    %c0_8 = arith.constant 0 : index
    %c0_9 = arith.constant 0 : index
    %c0_10 = arith.constant 0 : index
    %25 = vector.load %arg4[%c0_8, %c0_9, %c0_10] : memref<2x25x128xf32, #tpu.memory_space<vmem>>, vector<1x25x128xf32>
    %26 = vector.shape_cast %25 : vector<1x25x128xf32> to vector<25x128xf32>
    %27 = vector.extract_strided_slice %20 {offsets = [0, 0, 0], sizes = [16, 16, 128], strides = [1, 1, 1]} : vector<20x16x128xf32> to vector<16x16x128xf32>
    %28 = vector.extract_strided_slice %26 {offsets = [0, 0], sizes = [1, 128], strides = [1, 1]} : vector<25x128xf32> to vector<1x128xf32>
    %29 = vector.shape_cast %28 : vector<1x128xf32> to vector<1x1x128xf32>
    %30 = vector.broadcast %29 : vector<1x1x128xf32> to vector<16x16x128xf32>
    %31 = arith.mulf %27, %30 : vector<16x16x128xf32>
    %32 = vector.extract_strided_slice %21 {offsets = [0, 0, 0], sizes = [16, 16, 128], strides = [1, 1, 1]} : vector<20x16x128xf32> to vector<16x16x128xf32>
    %33 = vector.extract_strided_slice %26 {offsets = [1, 0], sizes = [1, 128], strides = [1, 1]} : vector<25x128xf32> to vector<1x128xf32>
    %34 = vector.shape_cast %33 : vector<1x128xf32> to vector<1x1x128xf32>
    %35 = vector.broadcast %34 : vector<1x1x128xf32> to vector<16x16x128xf32>
    %36 = arith.mulf %32, %35 : vector<16x16x128xf32>
    %37 = arith.addf %31, %36 : vector<16x16x128xf32>
    %38 = vector.extract_strided_slice %22 {offsets = [0, 0, 0], sizes = [16, 16, 128], strides = [1, 1, 1]} : vector<20x16x128xf32> to vector<16x16x128xf32>
    %39 = vector.extract_strided_slice %26 {offsets = [2, 0], sizes = [1, 128], strides = [1, 1]} : vector<25x128xf32> to vector<1x128xf32>
    %40 = vector.shape_cast %39 : vector<1x128xf32> to vector<1x1x128xf32>
    %41 = vector.broadcast %40 : vector<1x1x128xf32> to vector<16x16x128xf32>
    %42 = arith.mulf %38, %41 : vector<16x16x128xf32>
    %43 = arith.addf %37, %42 : vector<16x16x128xf32>
    %44 = vector.extract_strided_slice %23 {offsets = [0, 0, 0], sizes = [16, 16, 128], strides = [1, 1, 1]} : vector<20x16x128xf32> to vector<16x16x128xf32>
    %45 = vector.extract_strided_slice %26 {offsets = [3, 0], sizes = [1, 128], strides = [1, 1]} : vector<25x128xf32> to vector<1x128xf32>
    %46 = vector.shape_cast %45 : vector<1x128xf32> to vector<1x1x128xf32>
    %47 = vector.broadcast %46 : vector<1x1x128xf32> to vector<16x16x128xf32>
    %48 = arith.mulf %44, %47 : vector<16x16x128xf32>
    %49 = arith.addf %43, %48 : vector<16x16x128xf32>
    %50 = vector.extract_strided_slice %24 {offsets = [0, 0, 0], sizes = [16, 16, 128], strides = [1, 1, 1]} : vector<20x16x128xf32> to vector<16x16x128xf32>
    %51 = vector.extract_strided_slice %26 {offsets = [4, 0], sizes = [1, 128], strides = [1, 1]} : vector<25x128xf32> to vector<1x128xf32>
    %52 = vector.shape_cast %51 : vector<1x128xf32> to vector<1x1x128xf32>
    %53 = vector.broadcast %52 : vector<1x1x128xf32> to vector<16x16x128xf32>
    %54 = arith.mulf %50, %53 : vector<16x16x128xf32>
    %55 = arith.addf %49, %54 : vector<16x16x128xf32>
    %56 = vector.extract_strided_slice %20 {offsets = [1, 0, 0], sizes = [16, 16, 128], strides = [1, 1, 1]} : vector<20x16x128xf32> to vector<16x16x128xf32>
    %57 = vector.extract_strided_slice %26 {offsets = [5, 0], sizes = [1, 128], strides = [1, 1]} : vector<25x128xf32> to vector<1x128xf32>
    %58 = vector.shape_cast %57 : vector<1x128xf32> to vector<1x1x128xf32>
    %59 = vector.broadcast %58 : vector<1x1x128xf32> to vector<16x16x128xf32>
    %60 = arith.mulf %56, %59 : vector<16x16x128xf32>
    %61 = arith.addf %55, %60 : vector<16x16x128xf32>
    %62 = vector.extract_strided_slice %21 {offsets = [1, 0, 0], sizes = [16, 16, 128], strides = [1, 1, 1]} : vector<20x16x128xf32> to vector<16x16x128xf32>
    %63 = vector.extract_strided_slice %26 {offsets = [6, 0], sizes = [1, 128], strides = [1, 1]} : vector<25x128xf32> to vector<1x128xf32>
    %64 = vector.shape_cast %63 : vector<1x128xf32> to vector<1x1x128xf32>
    %65 = vector.broadcast %64 : vector<1x1x128xf32> to vector<16x16x128xf32>
    %66 = arith.mulf %62, %65 : vector<16x16x128xf32>
    %67 = arith.addf %61, %66 : vector<16x16x128xf32>
    %68 = vector.extract_strided_slice %22 {offsets = [1, 0, 0], sizes = [16, 16, 128], strides = [1, 1, 1]} : vector<20x16x128xf32> to vector<16x16x128xf32>
    %69 = vector.extract_strided_slice %26 {offsets = [7, 0], sizes = [1, 128], strides = [1, 1]} : vector<25x128xf32> to vector<1x128xf32>
    %70 = vector.shape_cast %69 : vector<1x128xf32> to vector<1x1x128xf32>
    %71 = vector.broadcast %70 : vector<1x1x128xf32> to vector<16x16x128xf32>
    %72 = arith.mulf %68, %71 : vector<16x16x128xf32>
    %73 = arith.addf %67, %72 : vector<16x16x128xf32>
    %74 = vector.extract_strided_slice %23 {offsets = [1, 0, 0], sizes = [16, 16, 128], strides = [1, 1, 1]} : vector<20x16x128xf32> to vector<16x16x128xf32>
    %75 = vector.extract_strided_slice %26 {offsets = [8, 0], sizes = [1, 128], strides = [1, 1]} : vector<25x128xf32> to vector<1x128xf32>
    %76 = vector.shape_cast %75 : vector<1x128xf32> to vector<1x1x128xf32>
    %77 = vector.broadcast %76 : vector<1x1x128xf32> to vector<16x16x128xf32>
    %78 = arith.mulf %74, %77 : vector<16x16x128xf32>
    %79 = arith.addf %73, %78 : vector<16x16x128xf32>
    %80 = vector.extract_strided_slice %24 {offsets = [1, 0, 0], sizes = [16, 16, 128], strides = [1, 1, 1]} : vector<20x16x128xf32> to vector<16x16x128xf32>
    %81 = vector.extract_strided_slice %26 {offsets = [9, 0], sizes = [1, 128], strides = [1, 1]} : vector<25x128xf32> to vector<1x128xf32>
    %82 = vector.shape_cast %81 : vector<1x128xf32> to vector<1x1x128xf32>
    %83 = vector.broadcast %82 : vector<1x1x128xf32> to vector<16x16x128xf32>
    %84 = arith.mulf %80, %83 : vector<16x16x128xf32>
    %85 = arith.addf %79, %84 : vector<16x16x128xf32>
    %86 = vector.extract_strided_slice %20 {offsets = [2, 0, 0], sizes = [16, 16, 128], strides = [1, 1, 1]} : vector<20x16x128xf32> to vector<16x16x128xf32>
    %87 = vector.extract_strided_slice %26 {offsets = [10, 0], sizes = [1, 128], strides = [1, 1]} : vector<25x128xf32> to vector<1x128xf32>
    %88 = vector.shape_cast %87 : vector<1x128xf32> to vector<1x1x128xf32>
    %89 = vector.broadcast %88 : vector<1x1x128xf32> to vector<16x16x128xf32>
    %90 = arith.mulf %86, %89 : vector<16x16x128xf32>
    %91 = arith.addf %85, %90 : vector<16x16x128xf32>
    %92 = vector.extract_strided_slice %21 {offsets = [2, 0, 0], sizes = [16, 16, 128], strides = [1, 1, 1]} : vector<20x16x128xf32> to vector<16x16x128xf32>
    %93 = vector.extract_strided_slice %26 {offsets = [11, 0], sizes = [1, 128], strides = [1, 1]} : vector<25x128xf32> to vector<1x128xf32>
    %94 = vector.shape_cast %93 : vector<1x128xf32> to vector<1x1x128xf32>
    %95 = vector.broadcast %94 : vector<1x1x128xf32> to vector<16x16x128xf32>
    %96 = arith.mulf %92, %95 : vector<16x16x128xf32>
    %97 = arith.addf %91, %96 : vector<16x16x128xf32>
    %98 = vector.extract_strided_slice %22 {offsets = [2, 0, 0], sizes = [16, 16, 128], strides = [1, 1, 1]} : vector<20x16x128xf32> to vector<16x16x128xf32>
    %99 = vector.extract_strided_slice %26 {offsets = [12, 0], sizes = [1, 128], strides = [1, 1]} : vector<25x128xf32> to vector<1x128xf32>
    %100 = vector.shape_cast %99 : vector<1x128xf32> to vector<1x1x128xf32>
    %101 = vector.broadcast %100 : vector<1x1x128xf32> to vector<16x16x128xf32>
    %102 = arith.mulf %98, %101 : vector<16x16x128xf32>
    %103 = arith.addf %97, %102 : vector<16x16x128xf32>
    %104 = vector.extract_strided_slice %23 {offsets = [2, 0, 0], sizes = [16, 16, 128], strides = [1, 1, 1]} : vector<20x16x128xf32> to vector<16x16x128xf32>
    %105 = vector.extract_strided_slice %26 {offsets = [13, 0], sizes = [1, 128], strides = [1, 1]} : vector<25x128xf32> to vector<1x128xf32>
    %106 = vector.shape_cast %105 : vector<1x128xf32> to vector<1x1x128xf32>
    %107 = vector.broadcast %106 : vector<1x1x128xf32> to vector<16x16x128xf32>
    %108 = arith.mulf %104, %107 : vector<16x16x128xf32>
    %109 = arith.addf %103, %108 : vector<16x16x128xf32>
    %110 = vector.extract_strided_slice %24 {offsets = [2, 0, 0], sizes = [16, 16, 128], strides = [1, 1, 1]} : vector<20x16x128xf32> to vector<16x16x128xf32>
    %111 = vector.extract_strided_slice %26 {offsets = [14, 0], sizes = [1, 128], strides = [1, 1]} : vector<25x128xf32> to vector<1x128xf32>
    %112 = vector.shape_cast %111 : vector<1x128xf32> to vector<1x1x128xf32>
    %113 = vector.broadcast %112 : vector<1x1x128xf32> to vector<16x16x128xf32>
    %114 = arith.mulf %110, %113 : vector<16x16x128xf32>
    %115 = arith.addf %109, %114 : vector<16x16x128xf32>
    %116 = vector.extract_strided_slice %20 {offsets = [3, 0, 0], sizes = [16, 16, 128], strides = [1, 1, 1]} : vector<20x16x128xf32> to vector<16x16x128xf32>
    %117 = vector.extract_strided_slice %26 {offsets = [15, 0], sizes = [1, 128], strides = [1, 1]} : vector<25x128xf32> to vector<1x128xf32>
    %118 = vector.shape_cast %117 : vector<1x128xf32> to vector<1x1x128xf32>
    %119 = vector.broadcast %118 : vector<1x1x128xf32> to vector<16x16x128xf32>
    %120 = arith.mulf %116, %119 : vector<16x16x128xf32>
    %121 = arith.addf %115, %120 : vector<16x16x128xf32>
    %122 = vector.extract_strided_slice %21 {offsets = [3, 0, 0], sizes = [16, 16, 128], strides = [1, 1, 1]} : vector<20x16x128xf32> to vector<16x16x128xf32>
    %123 = vector.extract_strided_slice %26 {offsets = [16, 0], sizes = [1, 128], strides = [1, 1]} : vector<25x128xf32> to vector<1x128xf32>
    %124 = vector.shape_cast %123 : vector<1x128xf32> to vector<1x1x128xf32>
    %125 = vector.broadcast %124 : vector<1x1x128xf32> to vector<16x16x128xf32>
    %126 = arith.mulf %122, %125 : vector<16x16x128xf32>
    %127 = arith.addf %121, %126 : vector<16x16x128xf32>
    %128 = vector.extract_strided_slice %22 {offsets = [3, 0, 0], sizes = [16, 16, 128], strides = [1, 1, 1]} : vector<20x16x128xf32> to vector<16x16x128xf32>
    %129 = vector.extract_strided_slice %26 {offsets = [17, 0], sizes = [1, 128], strides = [1, 1]} : vector<25x128xf32> to vector<1x128xf32>
    %130 = vector.shape_cast %129 : vector<1x128xf32> to vector<1x1x128xf32>
    %131 = vector.broadcast %130 : vector<1x1x128xf32> to vector<16x16x128xf32>
    %132 = arith.mulf %128, %131 : vector<16x16x128xf32>
    %133 = arith.addf %127, %132 : vector<16x16x128xf32>
    %134 = vector.extract_strided_slice %23 {offsets = [3, 0, 0], sizes = [16, 16, 128], strides = [1, 1, 1]} : vector<20x16x128xf32> to vector<16x16x128xf32>
    %135 = vector.extract_strided_slice %26 {offsets = [18, 0], sizes = [1, 128], strides = [1, 1]} : vector<25x128xf32> to vector<1x128xf32>
    %136 = vector.shape_cast %135 : vector<1x128xf32> to vector<1x1x128xf32>
    %137 = vector.broadcast %136 : vector<1x1x128xf32> to vector<16x16x128xf32>
    %138 = arith.mulf %134, %137 : vector<16x16x128xf32>
    %139 = arith.addf %133, %138 : vector<16x16x128xf32>
    %140 = vector.extract_strided_slice %24 {offsets = [3, 0, 0], sizes = [16, 16, 128], strides = [1, 1, 1]} : vector<20x16x128xf32> to vector<16x16x128xf32>
    %141 = vector.extract_strided_slice %26 {offsets = [19, 0], sizes = [1, 128], strides = [1, 1]} : vector<25x128xf32> to vector<1x128xf32>
    %142 = vector.shape_cast %141 : vector<1x128xf32> to vector<1x1x128xf32>
    %143 = vector.broadcast %142 : vector<1x1x128xf32> to vector<16x16x128xf32>
    %144 = arith.mulf %140, %143 : vector<16x16x128xf32>
    %145 = arith.addf %139, %144 : vector<16x16x128xf32>
    %146 = vector.extract_strided_slice %20 {offsets = [4, 0, 0], sizes = [16, 16, 128], strides = [1, 1, 1]} : vector<20x16x128xf32> to vector<16x16x128xf32>
    %147 = vector.extract_strided_slice %26 {offsets = [20, 0], sizes = [1, 128], strides = [1, 1]} : vector<25x128xf32> to vector<1x128xf32>
    %148 = vector.shape_cast %147 : vector<1x128xf32> to vector<1x1x128xf32>
    %149 = vector.broadcast %148 : vector<1x1x128xf32> to vector<16x16x128xf32>
    %150 = arith.mulf %146, %149 : vector<16x16x128xf32>
    %151 = arith.addf %145, %150 : vector<16x16x128xf32>
    %152 = vector.extract_strided_slice %21 {offsets = [4, 0, 0], sizes = [16, 16, 128], strides = [1, 1, 1]} : vector<20x16x128xf32> to vector<16x16x128xf32>
    %153 = vector.extract_strided_slice %26 {offsets = [21, 0], sizes = [1, 128], strides = [1, 1]} : vector<25x128xf32> to vector<1x128xf32>
    %154 = vector.shape_cast %153 : vector<1x128xf32> to vector<1x1x128xf32>
    %155 = vector.broadcast %154 : vector<1x1x128xf32> to vector<16x16x128xf32>
    %156 = arith.mulf %152, %155 : vector<16x16x128xf32>
    %157 = arith.addf %151, %156 : vector<16x16x128xf32>
    %158 = vector.extract_strided_slice %22 {offsets = [4, 0, 0], sizes = [16, 16, 128], strides = [1, 1, 1]} : vector<20x16x128xf32> to vector<16x16x128xf32>
    %159 = vector.extract_strided_slice %26 {offsets = [22, 0], sizes = [1, 128], strides = [1, 1]} : vector<25x128xf32> to vector<1x128xf32>
    %160 = vector.shape_cast %159 : vector<1x128xf32> to vector<1x1x128xf32>
    %161 = vector.broadcast %160 : vector<1x1x128xf32> to vector<16x16x128xf32>
    %162 = arith.mulf %158, %161 : vector<16x16x128xf32>
    %163 = arith.addf %157, %162 : vector<16x16x128xf32>
    %164 = vector.extract_strided_slice %23 {offsets = [4, 0, 0], sizes = [16, 16, 128], strides = [1, 1, 1]} : vector<20x16x128xf32> to vector<16x16x128xf32>
    %165 = vector.extract_strided_slice %26 {offsets = [23, 0], sizes = [1, 128], strides = [1, 1]} : vector<25x128xf32> to vector<1x128xf32>
    %166 = vector.shape_cast %165 : vector<1x128xf32> to vector<1x1x128xf32>
    %167 = vector.broadcast %166 : vector<1x1x128xf32> to vector<16x16x128xf32>
    %168 = arith.mulf %164, %167 : vector<16x16x128xf32>
    %169 = arith.addf %163, %168 : vector<16x16x128xf32>
    %170 = vector.extract_strided_slice %24 {offsets = [4, 0, 0], sizes = [16, 16, 128], strides = [1, 1, 1]} : vector<20x16x128xf32> to vector<16x16x128xf32>
    %171 = vector.extract_strided_slice %26 {offsets = [24, 0], sizes = [1, 128], strides = [1, 1]} : vector<25x128xf32> to vector<1x128xf32>
    %172 = vector.shape_cast %171 : vector<1x128xf32> to vector<1x1x128xf32>
    %173 = vector.broadcast %172 : vector<1x1x128xf32> to vector<16x16x128xf32>
    %174 = arith.mulf %170, %173 : vector<16x16x128xf32>
    %175 = arith.addf %169, %174 : vector<16x16x128xf32>
    %c0_11 = arith.constant 0 : index
    %c0_12 = arith.constant 0 : index
    %c0_13 = arith.constant 0 : index
    %176 = vector.load %arg5[%c0_11, %c0_12, %c0_13] : memref<2x1x128xf32, #tpu.memory_space<vmem>>, vector<1x1x128xf32>
    %177 = vector.shape_cast %176 : vector<1x1x128xf32> to vector<1x128xf32>
    %178 = vector.shape_cast %177 : vector<1x128xf32> to vector<1x1x128xf32>
    %179 = vector.broadcast %178 : vector<1x1x128xf32> to vector<16x16x128xf32>
    %180 = arith.addf %175, %179 : vector<16x16x128xf32>
    %181 = vector.shape_cast %180 : vector<16x16x128xf32> to vector<256x128xf32>
    %c0_14 = arith.constant 0 : index
    %c0_15 = arith.constant 0 : index
    %c0_16 = arith.constant 0 : index
    %182 = vector.load %arg6[%c0_14, %c0_15, %c0_16] : memref<2x128x128xf32, #tpu.memory_space<vmem>>, vector<1x128x128xf32>
    %183 = vector.shape_cast %182 : vector<1x128x128xf32> to vector<128x128xf32>
    %cst_17 = arith.constant dense<0.000000e+00> : vector<256x128xf32>
    %184 = tpu.matmul %181, %183, %cst_17 {dimension_numbers = #tpu.dot_dimension_numbers<[1], [0], [0], [1], [0, 0, 1, 1], [], []>} : vector<256x128xf32>, vector<128x128xf32>, vector<256x128xf32> -> vector<256x128xf32>
    %185 = arith.addf %1, %184 : vector<256x128xf32>
    %c0_18 = arith.constant 0 : index
    %c0_19 = arith.constant 0 : index
    %c0_20 = arith.constant 0 : index
    %186 = vector.load %arg7[%c0_18, %c0_19, %c0_20] : memref<2x1x128xf32, #tpu.memory_space<vmem>>, vector<1x1x128xf32>
    %187 = vector.shape_cast %186 : vector<1x1x128xf32> to vector<1x128xf32>
    %188 = vector.broadcast %187 : vector<1x128xf32> to vector<256x128xf32>
    %189 = arith.addf %185, %188 : vector<256x128xf32>
    %c0_21 = arith.constant 0 : index
    %c0_22 = arith.constant 0 : index
    %c0_23 = arith.constant 0 : index
    %190 = vector.load %arg8[%c0_21, %c0_22, %c0_23] : memref<2x128x512xf32, #tpu.memory_space<vmem>>, vector<1x128x512xf32>
    %191 = vector.shape_cast %190 : vector<1x128x512xf32> to vector<128x512xf32>
    %cst_24 = arith.constant dense<0.000000e+00> : vector<256x512xf32>
    %192 = tpu.matmul %189, %191, %cst_24 {dimension_numbers = #tpu.dot_dimension_numbers<[1], [0], [0], [1], [0, 0, 1, 1], [], []>} : vector<256x128xf32>, vector<128x512xf32>, vector<256x512xf32> -> vector<256x512xf32>
    %c0_25 = arith.constant 0 : index
    %c0_26 = arith.constant 0 : index
    %c0_27 = arith.constant 0 : index
    %193 = vector.load %arg9[%c0_25, %c0_26, %c0_27] : memref<2x1x512xf32, #tpu.memory_space<vmem>>, vector<1x1x512xf32>
    %194 = vector.shape_cast %193 : vector<1x1x512xf32> to vector<1x512xf32>
    %195 = vector.broadcast %194 : vector<1x512xf32> to vector<256x512xf32>
    %196 = arith.addf %192, %195 : vector<256x512xf32>
    %cst_28 = arith.constant 0.000000e+00 : f32
    %197 = vector.broadcast %cst_28 : f32 to vector<256x512xf32>
    %198 = arith.maximumf %196, %197 : vector<256x512xf32>
    %c0_29 = arith.constant 0 : index
    %c0_30 = arith.constant 0 : index
    %c0_31 = arith.constant 0 : index
    %199 = vector.load %arg10[%c0_29, %c0_30, %c0_31] : memref<2x512x128xf32, #tpu.memory_space<vmem>>, vector<1x512x128xf32>
    %200 = vector.shape_cast %199 : vector<1x512x128xf32> to vector<512x128xf32>
    %cst_32 = arith.constant dense<0.000000e+00> : vector<256x128xf32>
    %201 = tpu.matmul %198, %200, %cst_32 {dimension_numbers = #tpu.dot_dimension_numbers<[1], [0], [0], [1], [0, 0, 1, 1], [], []>} : vector<256x512xf32>, vector<512x128xf32>, vector<256x128xf32> -> vector<256x128xf32>
    %202 = arith.addf %189, %201 : vector<256x128xf32>
    %c0_33 = arith.constant 0 : index
    %c0_34 = arith.constant 0 : index
    %c0_35 = arith.constant 0 : index
    %203 = vector.load %arg11[%c0_33, %c0_34, %c0_35] : memref<2x1x128xf32, #tpu.memory_space<vmem>>, vector<1x1x128xf32>
    %204 = vector.shape_cast %203 : vector<1x1x128xf32> to vector<1x128xf32>
    %205 = vector.broadcast %204 : vector<1x128xf32> to vector<256x128xf32>
    %206 = arith.addf %202, %205 : vector<256x128xf32>
    %c64_i32 = arith.constant 64 : i32
    %207 = tpu.dynamic_rotate %206 by %c64_i32 dim 1 : vector<256x128xf32>, i32 -> vector<256x128xf32>
    %c0_36 = arith.constant 0 : index
    %c0_37 = arith.constant 0 : index
    %c0_38 = arith.constant 0 : index
    %208 = vector.load %arg12[%c0_36, %c0_37, %c0_38] : memref<2x1x128xf32, #tpu.memory_space<vmem>>, vector<1x1x128xf32>
    %209 = vector.shape_cast %208 : vector<1x1x128xf32> to vector<1x128xf32>
    %210 = vector.broadcast %209 : vector<1x128xf32> to vector<256x128xf32>
    %211 = arith.mulf %207, %210 : vector<256x128xf32>
    %212 = arith.addf %206, %211 : vector<256x128xf32>
    %c1 = arith.constant 1 : index
    %c0_39 = arith.constant 0 : index
    %c0_40 = arith.constant 0 : index
    %213 = vector.load %arg2[%c1, %c0_39, %c0_40] : memref<2x128x128xf32, #tpu.memory_space<vmem>>, vector<1x128x128xf32>
    %214 = vector.shape_cast %213 : vector<1x128x128xf32> to vector<128x128xf32>
    %cst_41 = arith.constant dense<0.000000e+00> : vector<256x128xf32>
    %215 = tpu.matmul %212, %214, %cst_41 {dimension_numbers = #tpu.dot_dimension_numbers<[1], [0], [0], [1], [0, 0, 1, 1], [], []>} : vector<256x128xf32>, vector<128x128xf32>, vector<256x128xf32> -> vector<256x128xf32>
    %c1_42 = arith.constant 1 : index
    %c0_43 = arith.constant 0 : index
    %c0_44 = arith.constant 0 : index
    %216 = vector.load %arg3[%c1_42, %c0_43, %c0_44] : memref<2x1x128xf32, #tpu.memory_space<vmem>>, vector<1x1x128xf32>
    %217 = vector.shape_cast %216 : vector<1x1x128xf32> to vector<1x128xf32>
    %218 = vector.broadcast %217 : vector<1x128xf32> to vector<256x128xf32>
    %219 = arith.addf %215, %218 : vector<256x128xf32>
    %220 = vector.shape_cast %219 : vector<256x128xf32> to vector<16x16x128xf32>
    %221 = vector.extract_strided_slice %220 {offsets = [2, 0, 0], sizes = [1, 16, 128], strides = [1, 1, 1]} : vector<16x16x128xf32> to vector<1x16x128xf32>
    %222 = vector.extract_strided_slice %220 {offsets = [1, 0, 0], sizes = [1, 16, 128], strides = [1, 1, 1]} : vector<16x16x128xf32> to vector<1x16x128xf32>
    %223 = vector.extract_strided_slice %220 {offsets = [14, 0, 0], sizes = [1, 16, 128], strides = [1, 1, 1]} : vector<16x16x128xf32> to vector<1x16x128xf32>
    %224 = vector.extract_strided_slice %220 {offsets = [13, 0, 0], sizes = [1, 16, 128], strides = [1, 1, 1]} : vector<16x16x128xf32> to vector<1x16x128xf32>
    %225 = tpu.concatenate %221, %222, %220, %223, %224 in 0 : vector<1x16x128xf32>, vector<1x16x128xf32>, vector<16x16x128xf32>, vector<1x16x128xf32>, vector<1x16x128xf32> -> vector<20x16x128xf32>
    %226 = vector.extract_strided_slice %225 {offsets = [0, 2, 0], sizes = [20, 1, 128], strides = [1, 1, 1]} : vector<20x16x128xf32> to vector<20x1x128xf32>
    %227 = vector.extract_strided_slice %225 {offsets = [0, 1, 0], sizes = [20, 1, 128], strides = [1, 1, 1]} : vector<20x16x128xf32> to vector<20x1x128xf32>
    %228 = vector.extract_strided_slice %225 {offsets = [0, 14, 0], sizes = [20, 1, 128], strides = [1, 1, 1]} : vector<20x16x128xf32> to vector<20x1x128xf32>
    %229 = vector.extract_strided_slice %225 {offsets = [0, 13, 0], sizes = [20, 1, 128], strides = [1, 1, 1]} : vector<20x16x128xf32> to vector<20x1x128xf32>
    %230 = tpu.concatenate %226, %227, %225, %228, %229 in 1 : vector<20x1x128xf32>, vector<20x1x128xf32>, vector<20x16x128xf32>, vector<20x1x128xf32>, vector<20x1x128xf32> -> vector<20x20x128xf32>
    %231 = vector.extract_strided_slice %230 {offsets = [0, 0, 0], sizes = [20, 16, 128], strides = [1, 1, 1]} : vector<20x20x128xf32> to vector<20x16x128xf32>
    %232 = vector.extract_strided_slice %230 {offsets = [0, 1, 0], sizes = [20, 16, 128], strides = [1, 1, 1]} : vector<20x20x128xf32> to vector<20x16x128xf32>
    %233 = vector.extract_strided_slice %230 {offsets = [0, 2, 0], sizes = [20, 16, 128], strides = [1, 1, 1]} : vector<20x20x128xf32> to vector<20x16x128xf32>
    %234 = vector.extract_strided_slice %230 {offsets = [0, 3, 0], sizes = [20, 16, 128], strides = [1, 1, 1]} : vector<20x20x128xf32> to vector<20x16x128xf32>
    %235 = vector.extract_strided_slice %230 {offsets = [0, 4, 0], sizes = [20, 16, 128], strides = [1, 1, 1]} : vector<20x20x128xf32> to vector<20x16x128xf32>
    %c1_45 = arith.constant 1 : index
    %c0_46 = arith.constant 0 : index
    %c0_47 = arith.constant 0 : index
    %236 = vector.load %arg4[%c1_45, %c0_46, %c0_47] : memref<2x25x128xf32, #tpu.memory_space<vmem>>, vector<1x25x128xf32>
    %237 = vector.shape_cast %236 : vector<1x25x128xf32> to vector<25x128xf32>
    %238 = vector.extract_strided_slice %231 {offsets = [0, 0, 0], sizes = [16, 16, 128], strides = [1, 1, 1]} : vector<20x16x128xf32> to vector<16x16x128xf32>
    %239 = vector.extract_strided_slice %237 {offsets = [0, 0], sizes = [1, 128], strides = [1, 1]} : vector<25x128xf32> to vector<1x128xf32>
    %240 = vector.shape_cast %239 : vector<1x128xf32> to vector<1x1x128xf32>
    %241 = vector.broadcast %240 : vector<1x1x128xf32> to vector<16x16x128xf32>
    %242 = arith.mulf %238, %241 : vector<16x16x128xf32>
    %243 = vector.extract_strided_slice %232 {offsets = [0, 0, 0], sizes = [16, 16, 128], strides = [1, 1, 1]} : vector<20x16x128xf32> to vector<16x16x128xf32>
    %244 = vector.extract_strided_slice %237 {offsets = [1, 0], sizes = [1, 128], strides = [1, 1]} : vector<25x128xf32> to vector<1x128xf32>
    %245 = vector.shape_cast %244 : vector<1x128xf32> to vector<1x1x128xf32>
    %246 = vector.broadcast %245 : vector<1x1x128xf32> to vector<16x16x128xf32>
    %247 = arith.mulf %243, %246 : vector<16x16x128xf32>
    %248 = arith.addf %242, %247 : vector<16x16x128xf32>
    %249 = vector.extract_strided_slice %233 {offsets = [0, 0, 0], sizes = [16, 16, 128], strides = [1, 1, 1]} : vector<20x16x128xf32> to vector<16x16x128xf32>
    %250 = vector.extract_strided_slice %237 {offsets = [2, 0], sizes = [1, 128], strides = [1, 1]} : vector<25x128xf32> to vector<1x128xf32>
    %251 = vector.shape_cast %250 : vector<1x128xf32> to vector<1x1x128xf32>
    %252 = vector.broadcast %251 : vector<1x1x128xf32> to vector<16x16x128xf32>
    %253 = arith.mulf %249, %252 : vector<16x16x128xf32>
    %254 = arith.addf %248, %253 : vector<16x16x128xf32>
    %255 = vector.extract_strided_slice %234 {offsets = [0, 0, 0], sizes = [16, 16, 128], strides = [1, 1, 1]} : vector<20x16x128xf32> to vector<16x16x128xf32>
    %256 = vector.extract_strided_slice %237 {offsets = [3, 0], sizes = [1, 128], strides = [1, 1]} : vector<25x128xf32> to vector<1x128xf32>
    %257 = vector.shape_cast %256 : vector<1x128xf32> to vector<1x1x128xf32>
    %258 = vector.broadcast %257 : vector<1x1x128xf32> to vector<16x16x128xf32>
    %259 = arith.mulf %255, %258 : vector<16x16x128xf32>
    %260 = arith.addf %254, %259 : vector<16x16x128xf32>
    %261 = vector.extract_strided_slice %235 {offsets = [0, 0, 0], sizes = [16, 16, 128], strides = [1, 1, 1]} : vector<20x16x128xf32> to vector<16x16x128xf32>
    %262 = vector.extract_strided_slice %237 {offsets = [4, 0], sizes = [1, 128], strides = [1, 1]} : vector<25x128xf32> to vector<1x128xf32>
    %263 = vector.shape_cast %262 : vector<1x128xf32> to vector<1x1x128xf32>
    %264 = vector.broadcast %263 : vector<1x1x128xf32> to vector<16x16x128xf32>
    %265 = arith.mulf %261, %264 : vector<16x16x128xf32>
    %266 = arith.addf %260, %265 : vector<16x16x128xf32>
    %267 = vector.extract_strided_slice %231 {offsets = [1, 0, 0], sizes = [16, 16, 128], strides = [1, 1, 1]} : vector<20x16x128xf32> to vector<16x16x128xf32>
    %268 = vector.extract_strided_slice %237 {offsets = [5, 0], sizes = [1, 128], strides = [1, 1]} : vector<25x128xf32> to vector<1x128xf32>
    %269 = vector.shape_cast %268 : vector<1x128xf32> to vector<1x1x128xf32>
    %270 = vector.broadcast %269 : vector<1x1x128xf32> to vector<16x16x128xf32>
    %271 = arith.mulf %267, %270 : vector<16x16x128xf32>
    %272 = arith.addf %266, %271 : vector<16x16x128xf32>
    %273 = vector.extract_strided_slice %232 {offsets = [1, 0, 0], sizes = [16, 16, 128], strides = [1, 1, 1]} : vector<20x16x128xf32> to vector<16x16x128xf32>
    %274 = vector.extract_strided_slice %237 {offsets = [6, 0], sizes = [1, 128], strides = [1, 1]} : vector<25x128xf32> to vector<1x128xf32>
    %275 = vector.shape_cast %274 : vector<1x128xf32> to vector<1x1x128xf32>
    %276 = vector.broadcast %275 : vector<1x1x128xf32> to vector<16x16x128xf32>
    %277 = arith.mulf %273, %276 : vector<16x16x128xf32>
    %278 = arith.addf %272, %277 : vector<16x16x128xf32>
    %279 = vector.extract_strided_slice %233 {offsets = [1, 0, 0], sizes = [16, 16, 128], strides = [1, 1, 1]} : vector<20x16x128xf32> to vector<16x16x128xf32>
    %280 = vector.extract_strided_slice %237 {offsets = [7, 0], sizes = [1, 128], strides = [1, 1]} : vector<25x128xf32> to vector<1x128xf32>
    %281 = vector.shape_cast %280 : vector<1x128xf32> to vector<1x1x128xf32>
    %282 = vector.broadcast %281 : vector<1x1x128xf32> to vector<16x16x128xf32>
    %283 = arith.mulf %279, %282 : vector<16x16x128xf32>
    %284 = arith.addf %278, %283 : vector<16x16x128xf32>
    %285 = vector.extract_strided_slice %234 {offsets = [1, 0, 0], sizes = [16, 16, 128], strides = [1, 1, 1]} : vector<20x16x128xf32> to vector<16x16x128xf32>
    %286 = vector.extract_strided_slice %237 {offsets = [8, 0], sizes = [1, 128], strides = [1, 1]} : vector<25x128xf32> to vector<1x128xf32>
    %287 = vector.shape_cast %286 : vector<1x128xf32> to vector<1x1x128xf32>
    %288 = vector.broadcast %287 : vector<1x1x128xf32> to vector<16x16x128xf32>
    %289 = arith.mulf %285, %288 : vector<16x16x128xf32>
    %290 = arith.addf %284, %289 : vector<16x16x128xf32>
    %291 = vector.extract_strided_slice %235 {offsets = [1, 0, 0], sizes = [16, 16, 128], strides = [1, 1, 1]} : vector<20x16x128xf32> to vector<16x16x128xf32>
    %292 = vector.extract_strided_slice %237 {offsets = [9, 0], sizes = [1, 128], strides = [1, 1]} : vector<25x128xf32> to vector<1x128xf32>
    %293 = vector.shape_cast %292 : vector<1x128xf32> to vector<1x1x128xf32>
    %294 = vector.broadcast %293 : vector<1x1x128xf32> to vector<16x16x128xf32>
    %295 = arith.mulf %291, %294 : vector<16x16x128xf32>
    %296 = arith.addf %290, %295 : vector<16x16x128xf32>
    %297 = vector.extract_strided_slice %231 {offsets = [2, 0, 0], sizes = [16, 16, 128], strides = [1, 1, 1]} : vector<20x16x128xf32> to vector<16x16x128xf32>
    %298 = vector.extract_strided_slice %237 {offsets = [10, 0], sizes = [1, 128], strides = [1, 1]} : vector<25x128xf32> to vector<1x128xf32>
    %299 = vector.shape_cast %298 : vector<1x128xf32> to vector<1x1x128xf32>
    %300 = vector.broadcast %299 : vector<1x1x128xf32> to vector<16x16x128xf32>
    %301 = arith.mulf %297, %300 : vector<16x16x128xf32>
    %302 = arith.addf %296, %301 : vector<16x16x128xf32>
    %303 = vector.extract_strided_slice %232 {offsets = [2, 0, 0], sizes = [16, 16, 128], strides = [1, 1, 1]} : vector<20x16x128xf32> to vector<16x16x128xf32>
    %304 = vector.extract_strided_slice %237 {offsets = [11, 0], sizes = [1, 128], strides = [1, 1]} : vector<25x128xf32> to vector<1x128xf32>
    %305 = vector.shape_cast %304 : vector<1x128xf32> to vector<1x1x128xf32>
    %306 = vector.broadcast %305 : vector<1x1x128xf32> to vector<16x16x128xf32>
    %307 = arith.mulf %303, %306 : vector<16x16x128xf32>
    %308 = arith.addf %302, %307 : vector<16x16x128xf32>
    %309 = vector.extract_strided_slice %233 {offsets = [2, 0, 0], sizes = [16, 16, 128], strides = [1, 1, 1]} : vector<20x16x128xf32> to vector<16x16x128xf32>
    %310 = vector.extract_strided_slice %237 {offsets = [12, 0], sizes = [1, 128], strides = [1, 1]} : vector<25x128xf32> to vector<1x128xf32>
    %311 = vector.shape_cast %310 : vector<1x128xf32> to vector<1x1x128xf32>
    %312 = vector.broadcast %311 : vector<1x1x128xf32> to vector<16x16x128xf32>
    %313 = arith.mulf %309, %312 : vector<16x16x128xf32>
    %314 = arith.addf %308, %313 : vector<16x16x128xf32>
    %315 = vector.extract_strided_slice %234 {offsets = [2, 0, 0], sizes = [16, 16, 128], strides = [1, 1, 1]} : vector<20x16x128xf32> to vector<16x16x128xf32>
    %316 = vector.extract_strided_slice %237 {offsets = [13, 0], sizes = [1, 128], strides = [1, 1]} : vector<25x128xf32> to vector<1x128xf32>
    %317 = vector.shape_cast %316 : vector<1x128xf32> to vector<1x1x128xf32>
    %318 = vector.broadcast %317 : vector<1x1x128xf32> to vector<16x16x128xf32>
    %319 = arith.mulf %315, %318 : vector<16x16x128xf32>
    %320 = arith.addf %314, %319 : vector<16x16x128xf32>
    %321 = vector.extract_strided_slice %235 {offsets = [2, 0, 0], sizes = [16, 16, 128], strides = [1, 1, 1]} : vector<20x16x128xf32> to vector<16x16x128xf32>
    %322 = vector.extract_strided_slice %237 {offsets = [14, 0], sizes = [1, 128], strides = [1, 1]} : vector<25x128xf32> to vector<1x128xf32>
    %323 = vector.shape_cast %322 : vector<1x128xf32> to vector<1x1x128xf32>
    %324 = vector.broadcast %323 : vector<1x1x128xf32> to vector<16x16x128xf32>
    %325 = arith.mulf %321, %324 : vector<16x16x128xf32>
    %326 = arith.addf %320, %325 : vector<16x16x128xf32>
    %327 = vector.extract_strided_slice %231 {offsets = [3, 0, 0], sizes = [16, 16, 128], strides = [1, 1, 1]} : vector<20x16x128xf32> to vector<16x16x128xf32>
    %328 = vector.extract_strided_slice %237 {offsets = [15, 0], sizes = [1, 128], strides = [1, 1]} : vector<25x128xf32> to vector<1x128xf32>
    %329 = vector.shape_cast %328 : vector<1x128xf32> to vector<1x1x128xf32>
    %330 = vector.broadcast %329 : vector<1x1x128xf32> to vector<16x16x128xf32>
    %331 = arith.mulf %327, %330 : vector<16x16x128xf32>
    %332 = arith.addf %326, %331 : vector<16x16x128xf32>
    %333 = vector.extract_strided_slice %232 {offsets = [3, 0, 0], sizes = [16, 16, 128], strides = [1, 1, 1]} : vector<20x16x128xf32> to vector<16x16x128xf32>
    %334 = vector.extract_strided_slice %237 {offsets = [16, 0], sizes = [1, 128], strides = [1, 1]} : vector<25x128xf32> to vector<1x128xf32>
    %335 = vector.shape_cast %334 : vector<1x128xf32> to vector<1x1x128xf32>
    %336 = vector.broadcast %335 : vector<1x1x128xf32> to vector<16x16x128xf32>
    %337 = arith.mulf %333, %336 : vector<16x16x128xf32>
    %338 = arith.addf %332, %337 : vector<16x16x128xf32>
    %339 = vector.extract_strided_slice %233 {offsets = [3, 0, 0], sizes = [16, 16, 128], strides = [1, 1, 1]} : vector<20x16x128xf32> to vector<16x16x128xf32>
    %340 = vector.extract_strided_slice %237 {offsets = [17, 0], sizes = [1, 128], strides = [1, 1]} : vector<25x128xf32> to vector<1x128xf32>
    %341 = vector.shape_cast %340 : vector<1x128xf32> to vector<1x1x128xf32>
    %342 = vector.broadcast %341 : vector<1x1x128xf32> to vector<16x16x128xf32>
    %343 = arith.mulf %339, %342 : vector<16x16x128xf32>
    %344 = arith.addf %338, %343 : vector<16x16x128xf32>
    %345 = vector.extract_strided_slice %234 {offsets = [3, 0, 0], sizes = [16, 16, 128], strides = [1, 1, 1]} : vector<20x16x128xf32> to vector<16x16x128xf32>
    %346 = vector.extract_strided_slice %237 {offsets = [18, 0], sizes = [1, 128], strides = [1, 1]} : vector<25x128xf32> to vector<1x128xf32>
    %347 = vector.shape_cast %346 : vector<1x128xf32> to vector<1x1x128xf32>
    %348 = vector.broadcast %347 : vector<1x1x128xf32> to vector<16x16x128xf32>
    %349 = arith.mulf %345, %348 : vector<16x16x128xf32>
    %350 = arith.addf %344, %349 : vector<16x16x128xf32>
    %351 = vector.extract_strided_slice %235 {offsets = [3, 0, 0], sizes = [16, 16, 128], strides = [1, 1, 1]} : vector<20x16x128xf32> to vector<16x16x128xf32>
    %352 = vector.extract_strided_slice %237 {offsets = [19, 0], sizes = [1, 128], strides = [1, 1]} : vector<25x128xf32> to vector<1x128xf32>
    %353 = vector.shape_cast %352 : vector<1x128xf32> to vector<1x1x128xf32>
    %354 = vector.broadcast %353 : vector<1x1x128xf32> to vector<16x16x128xf32>
    %355 = arith.mulf %351, %354 : vector<16x16x128xf32>
    %356 = arith.addf %350, %355 : vector<16x16x128xf32>
    %357 = vector.extract_strided_slice %231 {offsets = [4, 0, 0], sizes = [16, 16, 128], strides = [1, 1, 1]} : vector<20x16x128xf32> to vector<16x16x128xf32>
    %358 = vector.extract_strided_slice %237 {offsets = [20, 0], sizes = [1, 128], strides = [1, 1]} : vector<25x128xf32> to vector<1x128xf32>
    %359 = vector.shape_cast %358 : vector<1x128xf32> to vector<1x1x128xf32>
    %360 = vector.broadcast %359 : vector<1x1x128xf32> to vector<16x16x128xf32>
    %361 = arith.mulf %357, %360 : vector<16x16x128xf32>
    %362 = arith.addf %356, %361 : vector<16x16x128xf32>
    %363 = vector.extract_strided_slice %232 {offsets = [4, 0, 0], sizes = [16, 16, 128], strides = [1, 1, 1]} : vector<20x16x128xf32> to vector<16x16x128xf32>
    %364 = vector.extract_strided_slice %237 {offsets = [21, 0], sizes = [1, 128], strides = [1, 1]} : vector<25x128xf32> to vector<1x128xf32>
    %365 = vector.shape_cast %364 : vector<1x128xf32> to vector<1x1x128xf32>
    %366 = vector.broadcast %365 : vector<1x1x128xf32> to vector<16x16x128xf32>
    %367 = arith.mulf %363, %366 : vector<16x16x128xf32>
    %368 = arith.addf %362, %367 : vector<16x16x128xf32>
    %369 = vector.extract_strided_slice %233 {offsets = [4, 0, 0], sizes = [16, 16, 128], strides = [1, 1, 1]} : vector<20x16x128xf32> to vector<16x16x128xf32>
    %370 = vector.extract_strided_slice %237 {offsets = [22, 0], sizes = [1, 128], strides = [1, 1]} : vector<25x128xf32> to vector<1x128xf32>
    %371 = vector.shape_cast %370 : vector<1x128xf32> to vector<1x1x128xf32>
    %372 = vector.broadcast %371 : vector<1x1x128xf32> to vector<16x16x128xf32>
    %373 = arith.mulf %369, %372 : vector<16x16x128xf32>
    %374 = arith.addf %368, %373 : vector<16x16x128xf32>
    %375 = vector.extract_strided_slice %234 {offsets = [4, 0, 0], sizes = [16, 16, 128], strides = [1, 1, 1]} : vector<20x16x128xf32> to vector<16x16x128xf32>
    %376 = vector.extract_strided_slice %237 {offsets = [23, 0], sizes = [1, 128], strides = [1, 1]} : vector<25x128xf32> to vector<1x128xf32>
    %377 = vector.shape_cast %376 : vector<1x128xf32> to vector<1x1x128xf32>
    %378 = vector.broadcast %377 : vector<1x1x128xf32> to vector<16x16x128xf32>
    %379 = arith.mulf %375, %378 : vector<16x16x128xf32>
    %380 = arith.addf %374, %379 : vector<16x16x128xf32>
    %381 = vector.extract_strided_slice %235 {offsets = [4, 0, 0], sizes = [16, 16, 128], strides = [1, 1, 1]} : vector<20x16x128xf32> to vector<16x16x128xf32>
    %382 = vector.extract_strided_slice %237 {offsets = [24, 0], sizes = [1, 128], strides = [1, 1]} : vector<25x128xf32> to vector<1x128xf32>
    %383 = vector.shape_cast %382 : vector<1x128xf32> to vector<1x1x128xf32>
    %384 = vector.broadcast %383 : vector<1x1x128xf32> to vector<16x16x128xf32>
    %385 = arith.mulf %381, %384 : vector<16x16x128xf32>
    %386 = arith.addf %380, %385 : vector<16x16x128xf32>
    %c1_48 = arith.constant 1 : index
    %c0_49 = arith.constant 0 : index
    %c0_50 = arith.constant 0 : index
    %387 = vector.load %arg5[%c1_48, %c0_49, %c0_50] : memref<2x1x128xf32, #tpu.memory_space<vmem>>, vector<1x1x128xf32>
    %388 = vector.shape_cast %387 : vector<1x1x128xf32> to vector<1x128xf32>
    %389 = vector.shape_cast %388 : vector<1x128xf32> to vector<1x1x128xf32>
    %390 = vector.broadcast %389 : vector<1x1x128xf32> to vector<16x16x128xf32>
    %391 = arith.addf %386, %390 : vector<16x16x128xf32>
    %392 = vector.shape_cast %391 : vector<16x16x128xf32> to vector<256x128xf32>
    %c1_51 = arith.constant 1 : index
    %c0_52 = arith.constant 0 : index
    %c0_53 = arith.constant 0 : index
    %393 = vector.load %arg6[%c1_51, %c0_52, %c0_53] : memref<2x128x128xf32, #tpu.memory_space<vmem>>, vector<1x128x128xf32>
    %394 = vector.shape_cast %393 : vector<1x128x128xf32> to vector<128x128xf32>
    %cst_54 = arith.constant dense<0.000000e+00> : vector<256x128xf32>
    %395 = tpu.matmul %392, %394, %cst_54 {dimension_numbers = #tpu.dot_dimension_numbers<[1], [0], [0], [1], [0, 0, 1, 1], [], []>} : vector<256x128xf32>, vector<128x128xf32>, vector<256x128xf32> -> vector<256x128xf32>
    %396 = arith.addf %212, %395 : vector<256x128xf32>
    %c1_55 = arith.constant 1 : index
    %c0_56 = arith.constant 0 : index
    %c0_57 = arith.constant 0 : index
    %397 = vector.load %arg7[%c1_55, %c0_56, %c0_57] : memref<2x1x128xf32, #tpu.memory_space<vmem>>, vector<1x1x128xf32>
    %398 = vector.shape_cast %397 : vector<1x1x128xf32> to vector<1x128xf32>
    %399 = vector.broadcast %398 : vector<1x128xf32> to vector<256x128xf32>
    %400 = arith.addf %396, %399 : vector<256x128xf32>
    %c1_58 = arith.constant 1 : index
    %c0_59 = arith.constant 0 : index
    %c0_60 = arith.constant 0 : index
    %401 = vector.load %arg8[%c1_58, %c0_59, %c0_60] : memref<2x128x512xf32, #tpu.memory_space<vmem>>, vector<1x128x512xf32>
    %402 = vector.shape_cast %401 : vector<1x128x512xf32> to vector<128x512xf32>
    %cst_61 = arith.constant dense<0.000000e+00> : vector<256x512xf32>
    %403 = tpu.matmul %400, %402, %cst_61 {dimension_numbers = #tpu.dot_dimension_numbers<[1], [0], [0], [1], [0, 0, 1, 1], [], []>} : vector<256x128xf32>, vector<128x512xf32>, vector<256x512xf32> -> vector<256x512xf32>
    %c1_62 = arith.constant 1 : index
    %c0_63 = arith.constant 0 : index
    %c0_64 = arith.constant 0 : index
    %404 = vector.load %arg9[%c1_62, %c0_63, %c0_64] : memref<2x1x512xf32, #tpu.memory_space<vmem>>, vector<1x1x512xf32>
    %405 = vector.shape_cast %404 : vector<1x1x512xf32> to vector<1x512xf32>
    %406 = vector.broadcast %405 : vector<1x512xf32> to vector<256x512xf32>
    %407 = arith.addf %403, %406 : vector<256x512xf32>
    %cst_65 = arith.constant 0.000000e+00 : f32
    %408 = vector.broadcast %cst_65 : f32 to vector<256x512xf32>
    %409 = arith.maximumf %407, %408 : vector<256x512xf32>
    %c1_66 = arith.constant 1 : index
    %c0_67 = arith.constant 0 : index
    %c0_68 = arith.constant 0 : index
    %410 = vector.load %arg10[%c1_66, %c0_67, %c0_68] : memref<2x512x128xf32, #tpu.memory_space<vmem>>, vector<1x512x128xf32>
    %411 = vector.shape_cast %410 : vector<1x512x128xf32> to vector<512x128xf32>
    %cst_69 = arith.constant dense<0.000000e+00> : vector<256x128xf32>
    %412 = tpu.matmul %409, %411, %cst_69 {dimension_numbers = #tpu.dot_dimension_numbers<[1], [0], [0], [1], [0, 0, 1, 1], [], []>} : vector<256x512xf32>, vector<512x128xf32>, vector<256x128xf32> -> vector<256x128xf32>
    %413 = arith.addf %400, %412 : vector<256x128xf32>
    %c1_70 = arith.constant 1 : index
    %c0_71 = arith.constant 0 : index
    %c0_72 = arith.constant 0 : index
    %414 = vector.load %arg11[%c1_70, %c0_71, %c0_72] : memref<2x1x128xf32, #tpu.memory_space<vmem>>, vector<1x1x128xf32>
    %415 = vector.shape_cast %414 : vector<1x1x128xf32> to vector<1x128xf32>
    %416 = vector.broadcast %415 : vector<1x128xf32> to vector<256x128xf32>
    %417 = arith.addf %413, %416 : vector<256x128xf32>
    %418 = vector.shape_cast %417 : vector<256x128xf32> to vector<16x16x128xf32>
    %c0_73 = arith.constant 0 : index
    %c0_74 = arith.constant 0 : index
    %c0_75 = arith.constant 0 : index
    %419 = vector.load %arg13[%c0_73, %c0_74, %c0_75] : memref<16x16x128xf32, #tpu.memory_space<vmem>>, vector<16x16x128xf32>
    tpu.vector_store %arg13[%c0_73, %c0_74, %c0_75], %418 {strides = array<i32>} : memref<16x16x128xf32, #tpu.memory_space<vmem>>, vector<16x16x128xf32>,
    return
  }
  func.func @transform_0(%arg0: i32) -> (i32, i32, i32) {
    %c0_i32 = arith.constant 0 : i32
    %c0_i32_0 = arith.constant 0 : i32
    %c0_i32_1 = arith.constant 0 : i32
    %c0_i32_2 = arith.constant 0 : i32
    return %c0_i32, %c0_i32_0, %c0_i32_1 : i32, i32, i32
  }
  func.func @transform_1(%arg0: i32) -> (i32, i32, i32) {
    %c0_i32 = arith.constant 0 : i32
    %c0_i32_0 = arith.constant 0 : i32
    %c0_i32_1 = arith.constant 0 : i32
    %c0_i32_2 = arith.constant 0 : i32
    return %c0_i32, %c0_i32_0, %c0_i32_1 : i32, i32, i32
  }
  func.func @transform_2(%arg0: i32) -> (i32, i32, i32) {
    %c0_i32 = arith.constant 0 : i32
    %c0_i32_0 = arith.constant 0 : i32
    %c0_i32_1 = arith.constant 0 : i32
    %c0_i32_2 = arith.constant 0 : i32
    return %c0_i32, %c0_i32_0, %c0_i32_1 : i32, i32, i32
  }
  func.func @transform_3(%arg0: i32) -> (i32, i32, i32) {
    %c0_i32 = arith.constant 0 : i32
    %c0_i32_0 = arith.constant 0 : i32
    %c0_i32_1 = arith.constant 0 : i32
    %c0_i32_2 = arith.constant 0 : i32
    return %c0_i32, %c0_i32_0, %c0_i32_1 : i32, i32, i32
  }
  func.func @transform_4(%arg0: i32) -> (i32, i32, i32) {
    %c0_i32 = arith.constant 0 : i32
    %c0_i32_0 = arith.constant 0 : i32
    %c0_i32_1 = arith.constant 0 : i32
    %c0_i32_2 = arith.constant 0 : i32
    return %c0_i32, %c0_i32_0, %c0_i32_1 : i32, i32, i32
  }
  func.func @transform_5(%arg0: i32) -> (i32, i32, i32) {
    %c0_i32 = arith.constant 0 : i32
    %c0_i32_0 = arith.constant 0 : i32
    %c0_i32_1 = arith.constant 0 : i32
    %c0_i32_2 = arith.constant 0 : i32
    return %c0_i32, %c0_i32_0, %c0_i32_1 : i32, i32, i32
  }
  func.func @transform_6(%arg0: i32) -> (i32, i32, i32) {
    %c0_i32 = arith.constant 0 : i32
    %c0_i32_0 = arith.constant 0 : i32
    %c0_i32_1 = arith.constant 0 : i32
    %c0_i32_2 = arith.constant 0 : i32
    return %c0_i32, %c0_i32_0, %c0_i32_1 : i32, i32, i32
  }
  func.func @transform_7(%arg0: i32) -> (i32, i32, i32) {
    %c0_i32 = arith.constant 0 : i32
    %c0_i32_0 = arith.constant 0 : i32
    %c0_i32_1 = arith.constant 0 : i32
    %c0_i32_2 = arith.constant 0 : i32
    return %c0_i32, %c0_i32_0, %c0_i32_1 : i32, i32, i32
  }
  func.func @transform_8(%arg0: i32) -> (i32, i32, i32) {
    %c0_i32 = arith.constant 0 : i32
    %c0_i32_0 = arith.constant 0 : i32
    %c0_i32_1 = arith.constant 0 : i32
    %c0_i32_2 = arith.constant 0 : i32
    return %c0_i32, %c0_i32_0, %c0_i32_1 : i32, i32, i32
  }
  func.func @transform_9(%arg0: i32) -> (i32, i32, i32) {
    %c0_i32 = arith.constant 0 : i32
    %c0_i32_0 = arith.constant 0 : i32
    %c0_i32_1 = arith.constant 0 : i32
    %c0_i32_2 = arith.constant 0 : i32
    return %c0_i32, %c0_i32_0, %c0_i32_1 : i32, i32, i32
  }
  func.func @transform_10(%arg0: i32) -> (i32, i32, i32) {
    %c0_i32 = arith.constant 0 : i32
    %c0_i32_0 = arith.constant 0 : i32
    %c0_i32_1 = arith.constant 0 : i32
    %c0_i32_2 = arith.constant 0 : i32
    return %c0_i32, %c0_i32_0, %c0_i32_1 : i32, i32, i32
  }
  func.func @transform_11(%arg0: i32) -> (i32, i32, i32) {
    %c0_i32 = arith.constant 0 : i32
    %c0_i32_0 = arith.constant 0 : i32
    %c0_i32_1 = arith.constant 0 : i32
    %c0_i32_2 = arith.constant 0 : i32
    return %c0_i32, %c0_i32_0, %c0_i32_1 : i32, i32, i32
  }
  func.func @transform_12(%arg0: i32) -> (i32, i32, i32) {
    %c0_i32 = arith.constant 0 : i32
    %c0_i32_0 = arith.constant 0 : i32
    %c0_i32_1 = arith.constant 0 : i32
    %c0_i32_2 = arith.constant 0 : i32
    return %c0_i32, %c0_i32_0, %c0_i32_1 : i32, i32, i32
  }
}

</mosaic_0001>

<llo_original>
// kernel: mul.1
$region0: #{mul.1}
  #allocation0 [shape = 's32[1]{0}', space=sflag, size = 0x4, scoped, tag = 'scoped memory for mul.1']
  %s0 = inlined_call_operand.<no memory space> [shape: f32[], index: 0, kind: input, shape index: {}]
  %s1 = inlined_call_operand.vmem [shape: f32[64], index: 1, kind: output, shape index: {}]
  %v2 = vstv %s0
  %3 = vst [vmem:[%s1] sm:$0x1] %v2

// kernel: basic_layer_forward.1
$region0: #{basic_layer_forward.1}
  #allocation0 [shape = 'u32[]', space=smem, size = 0x4, offset = 0x4, fixed_abs, tag = 'smem constant byte address 0x4 - core index']
  #allocation1 [shape = 'u32[144,128]{1,0:T(1,128)}', space=vmem, size = 0x12000, scoped, tag = 'internal scratch']
  %s0 = inlined_call_operand.vmem [shape: f32[16,16,128], index: 0, kind: input, shape index: {}]
  %s1 = inlined_call_operand.vmem [shape: f32[2,128,128], index: 1, kind: input, shape index: {}]
  %s2 = inlined_call_operand.vmem [shape: f32[2,1,128], index: 2, kind: input, shape index: {}]
  %s3 = inlined_call_operand.vmem [shape: f32[2,25,128], index: 3, kind: input, shape index: {}]
  %s4 = inlined_call_operand.vmem [shape: f32[2,1,128], index: 4, kind: input, shape index: {}]
  %s5 = inlined_call_operand.vmem [shape: f32[2,128,128], index: 5, kind: input, shape index: {}]
  %s6 = inlined_call_operand.vmem [shape: f32[2,1,128], index: 6, kind: input, shape index: {}]
  %s7 = inlined_call_operand.vmem [shape: f32[2,128,512], index: 7, kind: input, shape index: {}]
  %s8 = inlined_call_operand.vmem [shape: f32[2,1,512], index: 8, kind: input, shape index: {}]
  %s9 = inlined_call_operand.vmem [shape: f32[2,512,128], index: 9, kind: input, shape index: {}]
  %s10 = inlined_call_operand.vmem [shape: f32[2,1,128], index: 10, kind: input, shape index: {}]
  %s11 = inlined_call_operand.vmem [shape: f32[2,1,128], index: 11, kind: input, shape index: {}]
  %s12 = inlined_call_operand.vmem [shape: f32[16,16,128], index: 12, kind: output, shape index: {}]
  %s13 = sld [smem:[#allocation0]]
  $region58: #{basic_layer_forward.1} parent=0
    _
  %s15 = ssub.s32 1, %s13
  %s16 = scalar_select 0, %s15, %s13
  // Predicated region
  $region2: #{basic_layer_forward.1} parent=0 // pred_check
    _
  $region3: #{basic_layer_forward.1} parent=0 // pred_check_branch
    %18 = sbr.rel (0) target = $region5
  $region4: #{basic_layer_forward.1} parent=0 // pred_region
    _
  $region5: #{basic_layer_forward.1} parent=0 // pred_fallthru
    _
  // Predicated region
  $region6: #{basic_layer_forward.1} parent=0 // pred_check
    _
  $region7: #{basic_layer_forward.1} parent=0 // pred_check_branch
    %20 = sbr.rel (0) target = $region9
  $region8: #{basic_layer_forward.1} parent=0 // pred_region
    _
  $region9: #{basic_layer_forward.1} parent=0 // pred_fallthru
    _
  // Predicated region
  $region10: #{basic_layer_forward.1} parent=0 // pred_check
    _
  $region11: #{basic_layer_forward.1} parent=0 // pred_check_branch
    %22 = sbr.rel (0) target = $region13
  $region12: #{basic_layer_forward.1} parent=0 // pred_region
    _
  $region13: #{basic_layer_forward.1} parent=0 // pred_fallthru
    _
  // Predicated region
  $region14: #{basic_layer_forward.1} parent=0 // pred_check
    _
  $region15: #{basic_layer_forward.1} parent=0 // pred_check_branch
    %24 = sbr.rel (0) target = $region17
  $region16: #{basic_layer_forward.1} parent=0 // pred_region
    _
  $region17: #{basic_layer_forward.1} parent=0 // pred_fallthru
    _
  // Predicated region
  $region18: #{basic_layer_forward.1} parent=0 // pred_check
    _
  $region19: #{basic_layer_forward.1} parent=0 // pred_check_branch
    %26 = sbr.rel (0) target = $region21
  $region20: #{basic_layer_forward.1} parent=0 // pred_region
    _
  $region21: #{basic_layer_forward.1} parent=0 // pred_fallthru
    _
  // Predicated region
  $region22: #{basic_layer_forward.1} parent=0 // pred_check
    _
  $region23: #{basic_layer_forward.1} parent=0 // pred_check_branch
    %28 = sbr.rel (0) target = $region25
  $region24: #{basic_layer_forward.1} parent=0 // pred_region
    _
  $region25: #{basic_layer_forward.1} parent=0 // pred_fallthru
    _
  // Predicated region
  $region26: #{basic_layer_forward.1} parent=0 // pred_check
    _
  $region27: #{basic_layer_forward.1} parent=0 // pred_check_branch
    %30 = sbr.rel (0) target = $region29
  $region28: #{basic_layer_forward.1} parent=0 // pred_region
    _
  $region29: #{basic_layer_forward.1} parent=0 // pred_fallthru
    _
  // Predicated region
  $region30: #{basic_layer_forward.1} parent=0 // pred_check
    _
  $region31: #{basic_layer_forward.1} parent=0 // pred_check_branch
    %32 = sbr.rel (0) target = $region33
  $region32: #{basic_layer_forward.1} parent=0 // pred_region
    _
  $region33: #{basic_layer_forward.1} parent=0 // pred_fallthru
    _
  // Predicated region
  $region34: #{basic_layer_forward.1} parent=0 // pred_check
    _
  $region35: #{basic_layer_forward.1} parent=0 // pred_check_branch
    %34 = sbr.rel (0) target = $region37
  $region36: #{basic_layer_forward.1} parent=0 // pred_region
    _
  $region37: #{basic_layer_forward.1} parent=0 // pred_fallthru
    _
  // Predicated region
  $region38: #{basic_layer_forward.1} parent=0 // pred_check
    _
  $region39: #{basic_layer_forward.1} parent=0 // pred_check_branch
    %36 = sbr.rel (0) target = $region41
  $region40: #{basic_layer_forward.1} parent=0 // pred_region
    _
  $region41: #{basic_layer_forward.1} parent=0 // pred_fallthru
    _
  // Predicated region
  $region42: #{basic_layer_forward.1} parent=0 // pred_check
    _
  $region43: #{basic_layer_forward.1} parent=0 // pred_check_branch
    %38 = sbr.rel (0) target = $region45
  $region44: #{basic_layer_forward.1} parent=0 // pred_region
    _
  $region45: #{basic_layer_forward.1} parent=0 // pred_fallthru
    _
  // Predicated region
  $region46: #{basic_layer_forward.1} parent=0 // pred_check
    _
  $region47: #{basic_layer_forward.1} parent=0 // pred_check_branch
    %40 = sbr.rel (0) target = $region49
  $region48: #{basic_layer_forward.1} parent=0 // pred_region
    _
  $region49: #{basic_layer_forward.1} parent=0 // pred_fallthru
    _
  %v41 = vld [vmem:[%s0] sm:$0xff]
  %v42 = vld [vmem:[%s0 + $0x8] sm:$0xff]
  %v43 = vld [vmem:[%s0 + $0x10] sm:$0xff]
  %v44 = vld [vmem:[%s0 + $0x18] sm:$0xff]
  %v45 = vld [vmem:[%s0 + $0x20] sm:$0xff]
  %v46 = vld [vmem:[%s0 + $0x28] sm:$0xff]
  %v47 = vld [vmem:[%s0 + $0x30] sm:$0xff]
  %v48 = vld [vmem:[%s0 + $0x38] sm:$0xff]
  %v49 = vld [vmem:[%s0 + $0x40] sm:$0xff]
  %v50 = vld [vmem:[%s0 + $0x48] sm:$0xff]
  %v51 = vld [vmem:[%s0 + $0x50] sm:$0xff]
  %v52 = vld [vmem:[%s0 + $0x58] sm:$0xff]
  %v53 = vld [vmem:[%s0 + $0x60] sm:$0xff]
  %v54 = vld [vmem:[%s0 + $0x68] sm:$0xff]
  %v55 = vld [vmem:[%s0 + $0x70] sm:$0xff]
  %v56 = vld [vmem:[%s0 + $0x78] sm:$0xff]
  %v57 = vld [vmem:[%s0 + $0x80] sm:$0xff]
  %v58 = vld [vmem:[%s0 + $0x88] sm:$0xff]
  %v59 = vld [vmem:[%s0 + $0x90] sm:$0xff]
  %v60 = vld [vmem:[%s0 + $0x98] sm:$0xff]
  %v61 = vld [vmem:[%s0 + $0xa0] sm:$0xff]
  %v62 = vld [vmem:[%s0 + $0xa8] sm:$0xff]
  %v63 = vld [vmem:[%s0 + $0xb0] sm:$0xff]
  %v64 = vld [vmem:[%s0 + $0xb8] sm:$0xff]
  %v65 = vld [vmem:[%s0 + $0xc0] sm:$0xff]
  %v66 = vld [vmem:[%s0 + $0xc8] sm:$0xff]
  %v67 = vld [vmem:[%s0 + $0xd0] sm:$0xff]
  %v68 = vld [vmem:[%s0 + $0xd8] sm:$0xff]
  %v69 = vld [vmem:[%s0 + $0xe0] sm:$0xff]
  %v70 = vld [vmem:[%s0 + $0xe8] sm:$0xff]
  %v71 = vld [vmem:[%s0 + $0xf0] sm:$0xff]
  %v72 = vld [vmem:[%s0 + $0xf8] sm:$0xff]
  %v73 = vld [vmem:[%s1] sm:$0xff]
  %v74 = vld [vmem:[%s1 + $0x8] sm:$0xff]
  %v75 = vld [vmem:[%s1 + $0x10] sm:$0xff]
  %v76 = vld [vmem:[%s1 + $0x18] sm:$0xff]
  %v77 = vld [vmem:[%s1 + $0x20] sm:$0xff]
  %v78 = vld [vmem:[%s1 + $0x28] sm:$0xff]
  %v79 = vld [vmem:[%s1 + $0x30] sm:$0xff]
  %v80 = vld [vmem:[%s1 + $0x38] sm:$0xff]
  %v81 = vld [vmem:[%s1 + $0x40] sm:$0xff]
  %v82 = vld [vmem:[%s1 + $0x48] sm:$0xff]
  %v83 = vld [vmem:[%s1 + $0x50] sm:$0xff]
  %v84 = vld [vmem:[%s1 + $0x58] sm:$0xff]
  %v85 = vld [vmem:[%s1 + $0x60] sm:$0xff]
  %v86 = vld [vmem:[%s1 + $0x68] sm:$0xff]
  %v87 = vld [vmem:[%s1 + $0x70] sm:$0xff]
  %v88 = vld [vmem:[%s1 + $0x78] sm:$0xff]
  %v89 = vld [vmem:[%s2] sm:$0x1]
  %v91 = vlaneseq
  %v92 = vshrl.u32 %v91, 7
  %v93 = vsub.s32 0, %v92
  %v94 = vrot.slane %v89, %v93
  %96 = vmatprep.subr.mxu0 0.0
  %97 = vmatpush1.msra.mxu0 %v88
  %98 = vmatprep.subr.mxu0 0.0
  %99 = vmatpush1.msra.mxu0 %v87
  %100 = vmatprep.subr.mxu0 0.0
  %101 = vmatpush1.msra.mxu0 %v86
  %102 = vmatprep.subr.mxu0 0.0
  %103 = vmatpush1.msra.mxu0 %v85
  %104 = vmatprep.subr.mxu0 0.0
  %105 = vmatpush1.msra.mxu0 %v84
  %106 = vmatprep.subr.mxu0 0.0
  %107 = vmatpush1.msra.mxu0 %v83
  %108 = vmatprep.subr.mxu0 0.0
  %109 = vmatpush1.msra.mxu0 %v82
  %110 = vmatprep.subr.mxu0 0.0
  %111 = vmatpush1.msra.mxu0 %v81
  %112 = vmatprep.subr.mxu0 0.0
  %113 = vmatpush1.msra.mxu0 %v80
  %114 = vmatprep.subr.mxu0 0.0
  %115 = vmatpush1.msra.mxu0 %v79
  %116 = vmatprep.subr.mxu0 0.0
  %117 = vmatpush1.msra.mxu0 %v78
  %118 = vmatprep.subr.mxu0 0.0
  %119 = vmatpush1.msra.mxu0 %v77
  %120 = vmatprep.subr.mxu0 0.0
  %121 = vmatpush1.msra.mxu0 %v76
  %122 = vmatprep.subr.mxu0 0.0
  %123 = vmatpush1.msra.mxu0 %v75
  %124 = vmatprep.subr.mxu0 0.0
  %125 = vmatpush1.msra.mxu0 %v74
  %126 = vmatprep.subr.mxu0 0.0
  %127 = vmatpush1.msra.mxu0 %v73
  %128 = vmatprep.subr.mxu0 0.0
  %129 = vmatpush2.msra.mxu0 0.0
  %130 = vmatprep.subr.mxu0 0.0
  %131 = vmatpush2.msra.mxu0 0.0
  %132 = vmatprep.subr.mxu0 0.0
  %133 = vmatpush2.msra.mxu0 0.0
  %134 = vmatprep.subr.mxu0 0.0
  %135 = vmatpush2.msra.mxu0 0.0
  %136 = vmatprep.subr.mxu0 0.0
  %137 = vmatpush2.msra.mxu0 0.0
  %138 = vmatprep.subr.mxu0 0.0
  %139 = vmatpush2.msra.mxu0 0.0
  %140 = vmatprep.subr.mxu0 0.0
  %141 = vmatpush2.msra.mxu0 0.0
  %142 = vmatprep.subr.mxu0 0.0
  %143 = vmatpush2.msra.mxu0 0.0
  %144 = vmatprep.subr.mxu0 0.0
  %145 = vmatpush2.msra.mxu0 0.0
  %146 = vmatprep.subr.mxu0 0.0
  %147 = vmatpush2.msra.mxu0 0.0
  %148 = vmatprep.subr.mxu0 0.0
  %149 = vmatpush2.msra.mxu0 0.0
  %150 = vmatprep.subr.mxu0 0.0
  %151 = vmatpush2.msra.mxu0 0.0
  %152 = vmatprep.subr.mxu0 0.0
  %153 = vmatpush2.msra.mxu0 0.0
  %154 = vmatprep.subr.mxu0 0.0
  %155 = vmatpush2.msra.mxu0 0.0
  %156 = vmatprep.subr.mxu0 0.0
  %157 = vmatpush2.msra.mxu0 0.0
  %158 = vmatprep.subr.mxu0 0.0
  %159 = vmatpush2.msra.mxu0 0.0
  %160 = vmatprep.mubr.f32.mxu0 0.0
  %161 = vmatmul.mubr.f32.gmra.mxu0 %v41
  %v162 = vpop.f32.mrf.mxu0
  %v163 = vadd.f32 %v94, %v162
  %v164 = vpop.f32.mrf.mxu0
  %165 = vmatprep.mubr.f32.mxu0 0.0
  %166 = vmatmul.mubr.f32.gmra.mxu0 %v42
  %v167 = vpop.f32.mrf.mxu0
  %v168 = vadd.f32 %v94, %v167
  %v169 = vpop.f32.mrf.mxu0
  %170 = vmatprep.mubr.f32.mxu0 0.0
  %171 = vmatmul.mubr.f32.gmra.mxu0 %v43
  %v172 = vpop.f32.mrf.mxu0
  %v173 = vadd.f32 %v94, %v172
  %v174 = vpop.f32.mrf.mxu0
  %175 = vmatprep.mubr.f32.mxu0 0.0
  %176 = vmatmul.mubr.f32.gmra.mxu0 %v44
  %v177 = vpop.f32.mrf.mxu0
  %v178 = vadd.f32 %v94, %v177
  %v179 = vpop.f32.mrf.mxu0
  %180 = vmatprep.mubr.f32.mxu0 0.0
  %181 = vmatmul.mubr.f32.gmra.mxu0 %v45
  %v182 = vpop.f32.mrf.mxu0
  %v183 = vadd.f32 %v94, %v182
  %v184 = vpop.f32.mrf.mxu0
  %185 = vmatprep.mubr.f32.mxu0 0.0
  %186 = vmatmul.mubr.f32.gmra.mxu0 %v46
  %v187 = vpop.f32.mrf.mxu0
  %v188 = vadd.f32 %v94, %v187
  %v189 = vpop.f32.mrf.mxu0
  %190 = vmatprep.mubr.f32.mxu0 0.0
  %191 = vmatmul.mubr.f32.gmra.mxu0 %v47
  %v192 = vpop.f32.mrf.mxu0
  %v193 = vadd.f32 %v94, %v192
  %v194 = vpop.f32.mrf.mxu0
  %195 = vmatprep.mubr.f32.mxu0 0.0
  %196 = vmatmul.mubr.f32.gmra.mxu0 %v48
  %v197 = vpop.f32.mrf.mxu0
  %v198 = vadd.f32 %v94, %v197
  %v199 = vpop.f32.mrf.mxu0
  %200 = vmatprep.mubr.f32.mxu0 0.0
  %201 = vmatmul.mubr.f32.gmra.mxu0 %v49
  %v202 = vpop.f32.mrf.mxu0
  %v203 = vadd.f32 %v94, %v202
  %v204 = vpop.f32.mrf.mxu0
  %205 = vmatprep.mubr.f32.mxu0 0.0
  %206 = vmatmul.mubr.f32.gmra.mxu0 %v50
  %v207 = vpop.f32.mrf.mxu0
  %v208 = vadd.f32 %v94, %v207
  %v209 = vpop.f32.mrf.mxu0
  %210 = vmatprep.mubr.f32.mxu0 0.0
  %211 = vmatmul.mubr.f32.gmra.mxu0 %v51
  %v212 = vpop.f32.mrf.mxu0
  %v213 = vadd.f32 %v94, %v212
  %v214 = vpop.f32.mrf.mxu0
  %215 = vmatprep.mubr.f32.mxu0 0.0
  %216 = vmatmul.mubr.f32.gmra.mxu0 %v52
  %v217 = vpop.f32.mrf.mxu0
  %v218 = vadd.f32 %v94, %v217
  %v219 = vpop.f32.mrf.mxu0
  %220 = vmatprep.mubr.f32.mxu0 0.0
  %221 = vmatmul.mubr.f32.gmra.mxu0 %v53
  %v222 = vpop.f32.mrf.mxu0
  %v223 = vadd.f32 %v94, %v222
  %v224 = vpop.f32.mrf.mxu0
  %225 = vmatprep.mubr.f32.mxu0 0.0
  %226 = vmatmul.mubr.f32.gmra.mxu0 %v54
  %v227 = vpop.f32.mrf.mxu0
  %v228 = vadd.f32 %v94, %v227
  %v229 = vpop.f32.mrf.mxu0
  %230 = vmatprep.mubr.f32.mxu0 0.0
  %231 = vmatmul.mubr.f32.gmra.mxu0 %v55
  %v232 = vpop.f32.mrf.mxu0
  %v233 = vadd.f32 %v94, %v232
  %v234 = vpop.f32.mrf.mxu0
  %235 = vmatprep.mubr.f32.mxu0 0.0
  %236 = vmatmul.mubr.f32.gmra.mxu0 %v56
  %v237 = vpop.f32.mrf.mxu0
  %v238 = vadd.f32 %v94, %v237
  %v239 = vpop.f32.mrf.mxu0
  %240 = vmatprep.mubr.f32.mxu0 0.0
  %241 = vmatmul.mubr.f32.gmra.mxu0 %v57
  %v242 = vpop.f32.mrf.mxu0
  %v243 = vadd.f32 %v94, %v242
  %v244 = vpop.f32.mrf.mxu0
  %245 = vmatprep.mubr.f32.mxu0 0.0
  %246 = vmatmul.mubr.f32.gmra.mxu0 %v58
  %v247 = vpop.f32.mrf.mxu0
  %v248 = vadd.f32 %v94, %v247
  %v249 = vpop.f32.mrf.mxu0
  %250 = vmatprep.mubr.f32.mxu0 0.0
  %251 = vmatmul.mubr.f32.gmra.mxu0 %v59
  %v252 = vpop.f32.mrf.mxu0
  %v253 = vadd.f32 %v94, %v252
  %v254 = vpop.f32.mrf.mxu0
  %255 = vmatprep.mubr.f32.mxu0 0.0
  %256 = vmatmul.mubr.f32.gmra.mxu0 %v60
  %v257 = vpop.f32.mrf.mxu0
  %v258 = vadd.f32 %v94, %v257
  %v259 = vpop.f32.mrf.mxu0
  %260 = vmatprep.mubr.f32.mxu0 0.0
  %261 = vmatmul.mubr.f32.gmra.mxu0 %v61
  %v262 = vpop.f32.mrf.mxu0
  %v263 = vadd.f32 %v94, %v262
  %v264 = vpop.f32.mrf.mxu0
  %265 = vmatprep.mubr.f32.mxu0 0.0
  %266 = vmatmul.mubr.f32.gmra.mxu0 %v62
  %v267 = vpop.f32.mrf.mxu0
  %v268 = vadd.f32 %v94, %v267
  %v269 = vpop.f32.mrf.mxu0
  %270 = vmatprep.mubr.f32.mxu0 0.0
  %271 = vmatmul.mubr.f32.gmra.mxu0 %v63
  %v272 = vpop.f32.mrf.mxu0
  %v273 = vadd.f32 %v94, %v272
  %v274 = vpop.f32.mrf.mxu0
  %275 = vmatprep.mubr.f32.mxu0 0.0
  %276 = vmatmul.mubr.f32.gmra.mxu0 %v64
  %v277 = vpop.f32.mrf.mxu0
  %v278 = vadd.f32 %v94, %v277
  %v279 = vpop.f32.mrf.mxu0
  %280 = vmatprep.mubr.f32.mxu0 0.0
  %281 = vmatmul.mubr.f32.gmra.mxu0 %v65
  %v282 = vpop.f32.mrf.mxu0
  %v283 = vadd.f32 %v94, %v282
  %v284 = vpop.f32.mrf.mxu0
  %285 = vmatprep.mubr.f32.mxu0 0.0
  %286 = vmatmul.mubr.f32.gmra.mxu0 %v66
  %v287 = vpop.f32.mrf.mxu0
  %v288 = vadd.f32 %v94, %v287
  %v289 = vpop.f32.mrf.mxu0
  %290 = vmatprep.mubr.f32.mxu0 0.0
  %291 = vmatmul.mubr.f32.gmra.mxu0 %v67
  %v292 = vpop.f32.mrf.mxu0
  %v293 = vadd.f32 %v94, %v292
  %v294 = vpop.f32.mrf.mxu0
  %295 = vmatprep.mubr.f32.mxu0 0.0
  %296 = vmatmul.mubr.f32.gmra.mxu0 %v68
  %v297 = vpop.f32.mrf.mxu0
  %v298 = vadd.f32 %v94, %v297
  %v299 = vpop.f32.mrf.mxu0
  %300 = vmatprep.mubr.f32.mxu0 0.0
  %301 = vmatmul.mubr.f32.gmra.mxu0 %v69
  %v302 = vpop.f32.mrf.mxu0
  %v303 = vadd.f32 %v94, %v302
  %v304 = vpop.f32.mrf.mxu0
  %305 = vmatprep.mubr.f32.mxu0 0.0
  %306 = vmatmul.mubr.f32.gmra.mxu0 %v70
  %v307 = vpop.f32.mrf.mxu0
  %v308 = vadd.f32 %v94, %v307
  %v309 = vpop.f32.mrf.mxu0
  %310 = vmatprep.mubr.f32.mxu0 0.0
  %311 = vmatmul.mubr.f32.gmra.mxu0 %v71
  %v312 = vpop.f32.mrf.mxu0
  %v313 = vadd.f32 %v94, %v312
  %v314 = vpop.f32.mrf.mxu0
  %315 = vmatprep.mubr.f32.mxu0 0.0
  %316 = vmatmul.mubr.f32.gmra.mxu0 %v72
  %v317 = vpop.f32.mrf.mxu0
  %v318 = vadd.f32 %v94, %v317
  %v319 = vpop.f32.mrf.mxu0
  %320 = vdwg.mxu0
  %v337 = vrot.slane %v183, 2
  %v338 = vrot.slane %v173, 2
  %v339 = vrot.slane %v163, 2
  %v340 = vrot.slane %v193, 2
  %v341 = vrot.slane %v203, 2
  %v342 = vrot.slane %v213, 2
  %v343 = vrot.slane %v223, 2
  %v344 = vrot.slane %v233, 2
  %v345 = vrot.slane %v243, 2
  %v346 = vrot.slane %v253, 2
  %v347 = vrot.slane %v263, 2
  %v348 = vrot.slane %v273, 2
  %v349 = vrot.slane %v283, 2
  %v350 = vrot.slane %v293, 2
  %v351 = vrot.slane %v303, 2
  %v352 = vrot.slane %v313, 2
  %vm385 = vcmask 1041408
  %v386 = vrot.slane %v183, 6
  %v387 = vrot.slane %v188, 6
  %v388 = vsel %vm385, %v386, %v387
  %v389 = vrot.slane %v173, 6
  %v390 = vrot.slane %v178, 6
  %v391 = vsel %vm385, %v389, %v390
  %v392 = vrot.slane %v163, 6
  %v393 = vrot.slane %v168, 6
  %v394 = vsel %vm385, %v392, %v393
  %v395 = vrot.slane %v193, 6
  %v396 = vrot.slane %v198, 6
  %v397 = vsel %vm385, %v395, %v396
  %v398 = vrot.slane %v203, 6
  %v399 = vrot.slane %v208, 6
  %v400 = vsel %vm385, %v398, %v399
  %v401 = vrot.slane %v213, 6
  %v402 = vrot.slane %v218, 6
  %v403 = vsel %vm385, %v401, %v402
  %v404 = vrot.slane %v223, 6
  %v405 = vrot.slane %v228, 6
  %v406 = vsel %vm385, %v404, %v405
  %v407 = vrot.slane %v233, 6
  %v408 = vrot.slane %v238, 6
  %v409 = vsel %vm385, %v407, %v408
  %v410 = vrot.slane %v243, 6
  %v411 = vrot.slane %v248, 6
  %v412 = vsel %vm385, %v410, %v411
  %v413 = vrot.slane %v253, 6
  %v414 = vrot.slane %v258, 6
  %v415 = vsel %vm385, %v413, %v414
  %v416 = vrot.slane %v263, 6
  %v417 = vrot.slane %v268, 6
  %v418 = vsel %vm385, %v416, %v417
  %v419 = vrot.slane %v273, 6
  %v420 = vrot.slane %v278, 6
  %v421 = vsel %vm385, %v419, %v420
  %v422 = vrot.slane %v283, 6
  %v423 = vrot.slane %v288, 6
  %v424 = vsel %vm385, %v422, %v423
  %v425 = vrot.slane %v293, 6
  %v426 = vrot.slane %v298, 6
  %v427 = vsel %vm385, %v425, %v426
  %v428 = vrot.slane %v303, 6
  %v429 = vrot.slane %v308, 6
  %v430 = vsel %vm385, %v428, %v429
  %v431 = vrot.slane %v313, 6
  %v432 = vrot.slane %v318, 6
  %v433 = vsel %vm385, %v431, %v432
  %v482 = vrot.slane %v188, 4
  %v483 = vrot.slane %v178, 4
  %v484 = vrot.slane %v168, 4
  %v485 = vrot.slane %v198, 4
  %v486 = vrot.slane %v208, 4
  %v487 = vrot.slane %v218, 4
  %v488 = vrot.slane %v228, 4
  %v489 = vrot.slane %v238, 4
  %v490 = vrot.slane %v248, 4
  %v491 = vrot.slane %v258, 4
  %v492 = vrot.slane %v268, 4
  %v493 = vrot.slane %v278, 4
  %v494 = vrot.slane %v288, 4
  %v495 = vrot.slane %v298, 4
  %v496 = vrot.slane %v308, 4
  %v497 = vrot.slane %v318, 4
  %v514 = vrot.slane %v188, 2
  %v515 = vrot.slane %v178, 2
  %v516 = vrot.slane %v168, 2
  %v517 = vrot.slane %v198, 2
  %v518 = vrot.slane %v208, 2
  %v519 = vrot.slane %v218, 2
  %v520 = vrot.slane %v228, 2
  %v521 = vrot.slane %v238, 2
  %v522 = vrot.slane %v248, 2
  %v523 = vrot.slane %v258, 2
  %v524 = vrot.slane %v268, 2
  %v525 = vrot.slane %v278, 2
  %v526 = vrot.slane %v288, 2
  %v527 = vrot.slane %v298, 2
  %v528 = vrot.slane %v308, 2
  %v529 = vrot.slane %v318, 2
  %vm546 = vcmask 1040384
  %v547 = vsel %vm546, %v337, %v183
  %v548 = vsel %vm546, %v338, %v173
  %v549 = vsel %vm546, %v339, %v163
  %v550 = vsel %vm546, %v340, %v193
  %v551 = vsel %vm546, %v341, %v203
  %v552 = vsel %vm546, %v342, %v213
  %v553 = vsel %vm546, %v343, %v223
  %v554 = vsel %vm546, %v344, %v233
  %v555 = vsel %vm546, %v345, %v243
  %v556 = vsel %vm546, %v346, %v253
  %v557 = vsel %vm546, %v347, %v263
  %v558 = vsel %vm546, %v348, %v273
  %v559 = vsel %vm546, %v349, %v283
  %v560 = vsel %vm546, %v350, %v293
  %v561 = vsel %vm546, %v351, %v303
  %v562 = vsel %vm546, %v352, %v313
  %v563 = vsel %vm385, %v547, %v386
  %v564 = vsel %vm385, %v548, %v389
  %v565 = vsel %vm385, %v549, %v392
  %v566 = vsel %vm385, %v550, %v395
  %v567 = vsel %vm385, %v551, %v398
  %v568 = vsel %vm385, %v552, %v401
  %v569 = vsel %vm385, %v553, %v404
  %v570 = vsel %vm385, %v554, %v407
  %v571 = vsel %vm385, %v555, %v410
  %v572 = vsel %vm385, %v556, %v413
  %v573 = vsel %vm385, %v557, %v416
  %v574 = vsel %vm385, %v558, %v419
  %v575 = vsel %vm385, %v559, %v422
  %v576 = vsel %vm385, %v560, %v425
  %v577 = vsel %vm385, %v561, %v428
  %v578 = vsel %vm385, %v562, %v431
  %v579 = vsel %vm385, %v387, %v482
  %v580 = vsel %vm385, %v390, %v483
  %v581 = vsel %vm385, %v393, %v484
  %v582 = vsel %vm385, %v396, %v485
  %v583 = vsel %vm385, %v399, %v486
  %v584 = vsel %vm385, %v402, %v487
  %v585 = vsel %vm385, %v405, %v488
  %v586 = vsel %vm385, %v408, %v489
  %v587 = vsel %vm385, %v411, %v490
  %v588 = vsel %vm385, %v414, %v491
  %v589 = vsel %vm385, %v417, %v492
  %v590 = vsel %vm385, %v420, %v493
  %v591 = vsel %vm385, %v423, %v494
  %v592 = vsel %vm385, %v426, %v495
  %v593 = vsel %vm385, %v429, %v496
  %v594 = vsel %vm385, %v432, %v497
  %vm595 = vcmask 1042432
  %v596 = vsel %vm595, %v579, %v514
  %v597 = vsel %vm595, %v580, %v515
  %v598 = vsel %vm595, %v581, %v516
  %v599 = vsel %vm595, %v582, %v517
  %v600 = vsel %vm595, %v583, %v518
  %v601 = vsel %vm595, %v584, %v519
  %v602 = vsel %vm595, %v585, %v520
  %v603 = vsel %vm595, %v586, %v521
  %v604 = vsel %vm595, %v587, %v522
  %v605 = vsel %vm595, %v588, %v523
  %v606 = vsel %vm595, %v589, %v524
  %v607 = vsel %vm595, %v590, %v525
  %v608 = vsel %vm595, %v591, %v526
  %v609 = vsel %vm595, %v592, %v527
  %v610 = vsel %vm595, %v593, %v528
  %v611 = vsel %vm595, %v594, %v529
  %v612 = vld [vmem:[%s3] sm:$0xff]
  %v613 = vld [vmem:[%s3 + $0x8] sm:$0xff]
  %v614 = vld [vmem:[%s3 + $0x10] sm:$0xff]
  %v615 = vld [vmem:[%s3 + $0x18] sm:$0x1]
  %v616 = vlaneseq
  %v617 = vshrl.u32 %v616, 7
  %v618 = vsub.s32 0, %v617
  %v619 = vrot.slane %v612, %v618
  %v620 = vmul.f32 %v563, %v619
  %v621 = vmul.f32 %v388, %v619
  %v622 = vmul.f32 %v564, %v619
  %v623 = vmul.f32 %v391, %v619
  %v624 = vmul.f32 %v565, %v619
  %v625 = vmul.f32 %v394, %v619
  %v626 = vmul.f32 %v566, %v619
  %v627 = vmul.f32 %v397, %v619
  %v628 = vmul.f32 %v567, %v619
  %v629 = vmul.f32 %v400, %v619
  %v630 = vmul.f32 %v568, %v619
  %v631 = vmul.f32 %v403, %v619
  %v632 = vmul.f32 %v569, %v619
  %v633 = vmul.f32 %v406, %v619
  %v634 = vmul.f32 %v570, %v619
  %v635 = vmul.f32 %v409, %v619
  %v636 = vmul.f32 %v571, %v619
  %v637 = vmul.f32 %v412, %v619
  %v638 = vmul.f32 %v572, %v619
  %v639 = vmul.f32 %v415, %v619
  %v640 = vmul.f32 %v573, %v619
  %v641 = vmul.f32 %v418, %v619
  %v642 = vmul.f32 %v574, %v619
  %v643 = vmul.f32 %v421, %v619
  %v644 = vmul.f32 %v575, %v619
  %v645 = vmul.f32 %v424, %v619
  %v646 = vmul.f32 %v576, %v619
  %v647 = vmul.f32 %v427, %v619
  %v648 = vlaneseq
  %v649 = vshrl.u32 %v648, 7
  %v650 = vsub.s32 1, %v649
  %v651 = vrot.slane %v612, %v650
  %v652 = vmul.f32 %v563, %v651
  %v653 = vmul.f32 %v388, %v651
  %v654 = vmul.f32 %v596, %v651
  %v655 = vmul.f32 %v564, %v651
  %v656 = vmul.f32 %v391, %v651
  %v657 = vmul.f32 %v597, %v651
  %v658 = vmul.f32 %v565, %v651
  %v659 = vmul.f32 %v394, %v651
  %v660 = vmul.f32 %v598, %v651
  %v661 = vmul.f32 %v566, %v651
  %v662 = vmul.f32 %v397, %v651
  %v663 = vmul.f32 %v599, %v651
  %v664 = vmul.f32 %v567, %v651
  %v665 = vmul.f32 %v400, %v651
  %v666 = vmul.f32 %v600, %v651
  %v667 = vmul.f32 %v568, %v651
  %v668 = vmul.f32 %v403, %v651
  %v669 = vmul.f32 %v601, %v651
  %v670 = vmul.f32 %v569, %v651
  %v671 = vmul.f32 %v406, %v651
  %v672 = vmul.f32 %v602, %v651
  %v673 = vmul.f32 %v570, %v651
  %v674 = vmul.f32 %v409, %v651
  %v675 = vmul.f32 %v603, %v651
  %v676 = vmul.f32 %v571, %v651
  %v677 = vmul.f32 %v412, %v651
  %v678 = vmul.f32 %v604, %v651
  %v679 = vmul.f32 %v572, %v651
  %v680 = vmul.f32 %v415, %v651
  %v681 = vmul.f32 %v605, %v651
  %v682 = vmul.f32 %v573, %v651
  %v683 = vmul.f32 %v418, %v651
  %v684 = vmul.f32 %v606, %v651
  %v685 = vmul.f32 %v574, %v651
  %v686 = vmul.f32 %v421, %v651
  %v687 = vmul.f32 %v607, %v651
  %v688 = vmul.f32 %v575, %v651
  %v689 = vmul.f32 %v424, %v651
  %v690 = vmul.f32 %v608, %v651
  %v691 = vmul.f32 %v576, %v651
  %v692 = vmul.f32 %v427, %v651
  %v693 = vmul.f32 %v609, %v651
  %vm736 = vcmask 1046528
  %v737 = vrot.slane %v652, 1
  %v738 = vrot.slane %v653, 1
  %v739 = vsel %vm736, %v737, %v738
  %v740 = vrot.slane %v654, 1
  %v741 = vsel %vm736, %v738, %v740
  %v742 = vrot.slane %v655, 1
  %v743 = vrot.slane %v656, 1
  %v744 = vsel %vm736, %v742, %v743
  %v745 = vrot.slane %v657, 1
  %v746 = vsel %vm736, %v743, %v745
  %v747 = vrot.slane %v658, 1
  %v748 = vrot.slane %v659, 1
  %v749 = vsel %vm736, %v747, %v748
  %v750 = vrot.slane %v660, 1
  %v751 = vsel %vm736, %v748, %v750
  %v752 = vrot.slane %v661, 1
  %v753 = vrot.slane %v662, 1
  %v754 = vsel %vm736, %v752, %v753
  %v755 = vrot.slane %v663, 1
  %v756 = vsel %vm736, %v753, %v755
  %v757 = vrot.slane %v664, 1
  %v758 = vrot.slane %v665, 1
  %v759 = vsel %vm736, %v757, %v758
  %v760 = vrot.slane %v666, 1
  %v761 = vsel %vm736, %v758, %v760
  %v762 = vrot.slane %v667, 1
  %v763 = vrot.slane %v668, 1
  %v764 = vsel %vm736, %v762, %v763
  %v765 = vrot.slane %v669, 1
  %v766 = vsel %vm736, %v763, %v765
  %v767 = vrot.slane %v670, 1
  %v768 = vrot.slane %v671, 1
  %v769 = vsel %vm736, %v767, %v768
  %v770 = vrot.slane %v672, 1
  %v771 = vsel %vm736, %v768, %v770
  %v772 = vrot.slane %v673, 1
  %v773 = vrot.slane %v674, 1
  %v774 = vsel %vm736, %v772, %v773
  %v775 = vrot.slane %v675, 1
  %v776 = vsel %vm736, %v773, %v775
  %v777 = vrot.slane %v676, 1
  %v778 = vrot.slane %v677, 1
  %v779 = vsel %vm736, %v777, %v778
  %v780 = vrot.slane %v678, 1
  %v781 = vsel %vm736, %v778, %v780
  %v782 = vrot.slane %v679, 1
  %v783 = vrot.slane %v680, 1
  %v784 = vsel %vm736, %v782, %v783
  %v785 = vrot.slane %v681, 1
  %v786 = vsel %vm736, %v783, %v785
  %v787 = vrot.slane %v682, 1
  %v788 = vrot.slane %v683, 1
  %v789 = vsel %vm736, %v787, %v788
  %v790 = vrot.slane %v684, 1
  %v791 = vsel %vm736, %v788, %v790
  %v792 = vrot.slane %v685, 1
  %v793 = vrot.slane %v686, 1
  %v794 = vsel %vm736, %v792, %v793
  %v795 = vrot.slane %v687, 1
  %v796 = vsel %vm736, %v793, %v795
  %v797 = vrot.slane %v688, 1
  %v798 = vrot.slane %v689, 1
  %v799 = vsel %vm736, %v797, %v798
  %v800 = vrot.slane %v690, 1
  %v801 = vsel %vm736, %v798, %v800
  %v802 = vrot.slane %v691, 1
  %v803 = vrot.slane %v692, 1
  %v804 = vsel %vm736, %v802, %v803
  %v805 = vrot.slane %v693, 1
  %v806 = vsel %vm736, %v803, %v805
  %v835 = vadd.f32 %v620, %v739
  %v836 = vadd.f32 %v621, %v741
  %v837 = vadd.f32 %v622, %v744
  %v838 = vadd.f32 %v623, %v746
  %v839 = vadd.f32 %v624, %v749
  %v840 = vadd.f32 %v625, %v751
  %v841 = vadd.f32 %v626, %v754
  %v842 = vadd.f32 %v627, %v756
  %v843 = vadd.f32 %v628, %v759
  %v844 = vadd.f32 %v629, %v761
  %v845 = vadd.f32 %v630, %v764
  %v846 = vadd.f32 %v631, %v766
  %v847 = vadd.f32 %v632, %v769
  %v848 = vadd.f32 %v633, %v771
  %v849 = vadd.f32 %v634, %v774
  %v850 = vadd.f32 %v635, %v776
  %v851 = vadd.f32 %v636, %v779
  %v852 = vadd.f32 %v637, %v781
  %v853 = vadd.f32 %v638, %v784
  %v854 = vadd.f32 %v639, %v786
  %v855 = vadd.f32 %v640, %v789
  %v856 = vadd.f32 %v641, %v791
  %v857 = vadd.f32 %v642, %v794
  %v858 = vadd.f32 %v643, %v796
  %v859 = vadd.f32 %v644, %v799
  %v860 = vadd.f32 %v645, %v801
  %v861 = vadd.f32 %v646, %v804
  %v862 = vadd.f32 %v647, %v806
  %v863 = vlaneseq
  %v864 = vshrl.u32 %v863, 7
  %v865 = vsub.s32 2, %v864
  %v866 = vrot.slane %v612, %v865
  %v867 = vmul.f32 %v563, %v866
  %v868 = vmul.f32 %v388, %v866
  %v869 = vmul.f32 %v596, %v866
  %v870 = vmul.f32 %v564, %v866
  %v871 = vmul.f32 %v391, %v866
  %v872 = vmul.f32 %v597, %v866
  %v873 = vmul.f32 %v565, %v866
  %v874 = vmul.f32 %v394, %v866
  %v875 = vmul.f32 %v598, %v866
  %v876 = vmul.f32 %v566, %v866
  %v877 = vmul.f32 %v397, %v866
  %v878 = vmul.f32 %v599, %v866
  %v879 = vmul.f32 %v567, %v866
  %v880 = vmul.f32 %v400, %v866
  %v881 = vmul.f32 %v600, %v866
  %v882 = vmul.f32 %v568, %v866
  %v883 = vmul.f32 %v403, %v866
  %v884 = vmul.f32 %v601, %v866
  %v885 = vmul.f32 %v569, %v866
  %v886 = vmul.f32 %v406, %v866
  %v887 = vmul.f32 %v602, %v866
  %v888 = vmul.f32 %v570, %v866
  %v889 = vmul.f32 %v409, %v866
  %v890 = vmul.f32 %v603, %v866
  %v891 = vmul.f32 %v571, %v866
  %v892 = vmul.f32 %v412, %v866
  %v893 = vmul.f32 %v604, %v866
  %v894 = vmul.f32 %v572, %v866
  %v895 = vmul.f32 %v415, %v866
  %v896 = vmul.f32 %v605, %v866
  %v897 = vmul.f32 %v573, %v866
  %v898 = vmul.f32 %v418, %v866
  %v899 = vmul.f32 %v606, %v866
  %v900 = vmul.f32 %v574, %v866
  %v901 = vmul.f32 %v421, %v866
  %v902 = vmul.f32 %v607, %v866
  %v903 = vmul.f32 %v575, %v866
  %v904 = vmul.f32 %v424, %v866
  %v905 = vmul.f32 %v608, %v866
  %v906 = vmul.f32 %v576, %v866
  %v907 = vmul.f32 %v427, %v866
  %v908 = vmul.f32 %v609, %v866
  %vm951 = vcmask 1045504
  %v952 = vrot.slane %v867, 2
  %v953 = vrot.slane %v868, 2
  %v954 = vsel %vm951, %v952, %v953
  %v955 = vrot.slane %v869, 2
  %v956 = vsel %vm951, %v953, %v955
  %v957 = vrot.slane %v870, 2
  %v958 = vrot.slane %v871, 2
  %v959 = vsel %vm951, %v957, %v958
  %v960 = vrot.slane %v872, 2
  %v961 = vsel %vm951, %v958, %v960
  %v962 = vrot.slane %v873, 2
  %v963 = vrot.slane %v874, 2
  %v964 = vsel %vm951, %v962, %v963
  %v965 = vrot.slane %v875, 2
  %v966 = vsel %vm951, %v963, %v965
  %v967 = vrot.slane %v876, 2
  %v968 = vrot.slane %v877, 2
  %v969 = vsel %vm951, %v967, %v968
  %v970 = vrot.slane %v878, 2
  %v971 = vsel %vm951, %v968, %v970
  %v972 = vrot.slane %v879, 2
  %v973 = vrot.slane %v880, 2
  %v974 = vsel %vm951, %v972, %v973
  %v975 = vrot.slane %v881, 2
  %v976 = vsel %vm951, %v973, %v975
  %v977 = vrot.slane %v882, 2
  %v978 = vrot.slane %v883, 2
  %v979 = vsel %vm951, %v977, %v978
  %v980 = vrot.slane %v884, 2
  %v981 = vsel %vm951, %v978, %v980
  %v982 = vrot.slane %v885, 2
  %v983 = vrot.slane %v886, 2
  %v984 = vsel %vm951, %v982, %v983
  %v985 = vrot.slane %v887, 2
  %v986 = vsel %vm951, %v983, %v985
  %v987 = vrot.slane %v888, 2
  %v988 = vrot.slane %v889, 2
  %v989 = vsel %vm951, %v987, %v988
  %v990 = vrot.slane %v890, 2
  %v991 = vsel %vm951, %v988, %v990
  %v992 = vrot.slane %v891, 2
  %v993 = vrot.slane %v892, 2
  %v994 = vsel %vm951, %v992, %v993
  %v995 = vrot.slane %v893, 2
  %v996 = vsel %vm951, %v993, %v995
  %v997 = vrot.slane %v894, 2
  %v998 = vrot.slane %v895, 2
  %v999 = vsel %vm951, %v997, %v998
  %v1000 = vrot.slane %v896, 2
  %v1001 = vsel %vm951, %v998, %v1000
  %v1002 = vrot.slane %v897, 2
  %v1003 = vrot.slane %v898, 2
  %v1004 = vsel %vm951, %v1002, %v1003
  %v1005 = vrot.slane %v899, 2
  %v1006 = vsel %vm951, %v1003, %v1005
  %v1007 = vrot.slane %v900, 2
  %v1008 = vrot.slane %v901, 2
  %v1009 = vsel %vm951, %v1007, %v1008
  %v1010 = vrot.slane %v902, 2
  %v1011 = vsel %vm951, %v1008, %v1010
  %v1012 = vrot.slane %v903, 2
  %v1013 = vrot.slane %v904, 2
  %v1014 = vsel %vm951, %v1012, %v1013
  %v1015 = vrot.slane %v905, 2
  %v1016 = vsel %vm951, %v1013, %v1015
  %v1017 = vrot.slane %v906, 2
  %v1018 = vrot.slane %v907, 2
  %v1019 = vsel %vm951, %v1017, %v1018
  %v1020 = vrot.slane %v908, 2
  %v1021 = vsel %vm951, %v1018, %v1020
  %v1050 = vadd.f32 %v835, %v954
  %v1051 = vadd.f32 %v836, %v956
  %v1052 = vadd.f32 %v837, %v959
  %v1053 = vadd.f32 %v838, %v961
  %v1054 = vadd.f32 %v839, %v964
  %v1055 = vadd.f32 %v840, %v966
  %v1056 = vadd.f32 %v841, %v969
  %v1057 = vadd.f32 %v842, %v971
  %v1058 = vadd.f32 %v843, %v974
  %v1059 = vadd.f32 %v844, %v976
  %v1060 = vadd.f32 %v845, %v979
  %v1061 = vadd.f32 %v846, %v981
  %v1062 = vadd.f32 %v847, %v984
  %v1063 = vadd.f32 %v848, %v986
  %v1064 = vadd.f32 %v849, %v989
  %v1065 = vadd.f32 %v850, %v991
  %v1066 = vadd.f32 %v851, %v994
  %v1067 = vadd.f32 %v852, %v996
  %v1068 = vadd.f32 %v853, %v999
  %v1069 = vadd.f32 %v854, %v1001
  %v1070 = vadd.f32 %v855, %v1004
  %v1071 = vadd.f32 %v856, %v1006
  %v1072 = vadd.f32 %v857, %v1009
  %v1073 = vadd.f32 %v858, %v1011
  %v1074 = vadd.f32 %v859, %v1014
  %v1075 = vadd.f32 %v860, %v1016
  %v1076 = vadd.f32 %v861, %v1019
  %v1077 = vadd.f32 %v862, %v1021
  %v1078 = vlaneseq
  %v1079 = vshrl.u32 %v1078, 7
  %v1080 = vsub.s32 3, %v1079
  %v1081 = vrot.slane %v612, %v1080
  %v1082 = vmul.f32 %v563, %v1081
  %v1083 = vmul.f32 %v388, %v1081
  %v1084 = vmul.f32 %v596, %v1081
  %v1085 = vmul.f32 %v564, %v1081
  %v1086 = vmul.f32 %v391, %v1081
  %v1087 = vmul.f32 %v597, %v1081
  %v1088 = vmul.f32 %v565, %v1081
  %v1089 = vmul.f32 %v394, %v1081
  %v1090 = vmul.f32 %v598, %v1081
  %v1091 = vmul.f32 %v566, %v1081
  %v1092 = vmul.f32 %v397, %v1081
  %v1093 = vmul.f32 %v599, %v1081
  %v1094 = vmul.f32 %v567, %v1081
  %v1095 = vmul.f32 %v400, %v1081
  %v1096 = vmul.f32 %v600, %v1081
  %v1097 = vmul.f32 %v568, %v1081
  %v1098 = vmul.f32 %v403, %v1081
  %v1099 = vmul.f32 %v601, %v1081
  %v1100 = vmul.f32 %v569, %v1081
  %v1101 = vmul.f32 %v406, %v1081
  %v1102 = vmul.f32 %v602, %v1081
  %v1103 = vmul.f32 %v570, %v1081
  %v1104 = vmul.f32 %v409, %v1081
  %v1105 = vmul.f32 %v603, %v1081
  %v1106 = vmul.f32 %v571, %v1081
  %v1107 = vmul.f32 %v412, %v1081
  %v1108 = vmul.f32 %v604, %v1081
  %v1109 = vmul.f32 %v572, %v1081
  %v1110 = vmul.f32 %v415, %v1081
  %v1111 = vmul.f32 %v605, %v1081
  %v1112 = vmul.f32 %v573, %v1081
  %v1113 = vmul.f32 %v418, %v1081
  %v1114 = vmul.f32 %v606, %v1081
  %v1115 = vmul.f32 %v574, %v1081
  %v1116 = vmul.f32 %v421, %v1081
  %v1117 = vmul.f32 %v607, %v1081
  %v1118 = vmul.f32 %v575, %v1081
  %v1119 = vmul.f32 %v424, %v1081
  %v1120 = vmul.f32 %v608, %v1081
  %v1121 = vmul.f32 %v576, %v1081
  %v1122 = vmul.f32 %v427, %v1081
  %v1123 = vmul.f32 %v609, %v1081
  %vm1166 = vcmask 1044480
  %v1167 = vrot.slane %v1082, 3
  %v1168 = vrot.slane %v1083, 3
  %v1169 = vsel %vm1166, %v1167, %v1168
  %v1170 = vrot.slane %v1084, 3
  %v1171 = vsel %vm1166, %v1168, %v1170
  %v1172 = vrot.slane %v1085, 3
  %v1173 = vrot.slane %v1086, 3
  %v1174 = vsel %vm1166, %v1172, %v1173
  %v1175 = vrot.slane %v1087, 3
  %v1176 = vsel %vm1166, %v1173, %v1175
  %v1177 = vrot.slane %v1088, 3
  %v1178 = vrot.slane %v1089, 3
  %v1179 = vsel %vm1166, %v1177, %v1178
  %v1180 = vrot.slane %v1090, 3
  %v1181 = vsel %vm1166, %v1178, %v1180
  %v1182 = vrot.slane %v1091, 3
  %v1183 = vrot.slane %v1092, 3
  %v1184 = vsel %vm1166, %v1182, %v1183
  %v1185 = vrot.slane %v1093, 3
  %v1186 = vsel %vm1166, %v1183, %v1185
  %v1187 = vrot.slane %v1094, 3
  %v1188 = vrot.slane %v1095, 3
  %v1189 = vsel %vm1166, %v1187, %v1188
  %v1190 = vrot.slane %v1096, 3
  %v1191 = vsel %vm1166, %v1188, %v1190
  %v1192 = vrot.slane %v1097, 3
  %v1193 = vrot.slane %v1098, 3
  %v1194 = vsel %vm1166, %v1192, %v1193
  %v1195 = vrot.slane %v1099, 3
  %v1196 = vsel %vm1166, %v1193, %v1195
  %v1197 = vrot.slane %v1100, 3
  %v1198 = vrot.slane %v1101, 3
  %v1199 = vsel %vm1166, %v1197, %v1198
  %v1200 = vrot.slane %v1102, 3
  %v1201 = vsel %vm1166, %v1198, %v1200
  %v1202 = vrot.slane %v1103, 3
  %v1203 = vrot.slane %v1104, 3
  %v1204 = vsel %vm1166, %v1202, %v1203
  %v1205 = vrot.slane %v1105, 3
  %v1206 = vsel %vm1166, %v1203, %v1205
  %v1207 = vrot.slane %v1106, 3
  %v1208 = vrot.slane %v1107, 3
  %v1209 = vsel %vm1166, %v1207, %v1208
  %v1210 = vrot.slane %v1108, 3
  %v1211 = vsel %vm1166, %v1208, %v1210
  %v1212 = vrot.slane %v1109, 3
  %v1213 = vrot.slane %v1110, 3
  %v1214 = vsel %vm1166, %v1212, %v1213
  %v1215 = vrot.slane %v1111, 3
  %v1216 = vsel %vm1166, %v1213, %v1215
  %v1217 = vrot.slane %v1112, 3
  %v1218 = vrot.slane %v1113, 3
  %v1219 = vsel %vm1166, %v1217, %v1218
  %v1220 = vrot.slane %v1114, 3
  %v1221 = vsel %vm1166, %v1218, %v1220
  %v1222 = vrot.slane %v1115, 3
  %v1223 = vrot.slane %v1116, 3
  %v1224 = vsel %vm1166, %v1222, %v1223
  %v1225 = vrot.slane %v1117, 3
  %v1226 = vsel %vm1166, %v1223, %v1225
  %v1227 = vrot.slane %v1118, 3
  %v1228 = vrot.slane %v1119, 3
  %v1229 = vsel %vm1166, %v1227, %v1228
  %v1230 = vrot.slane %v1120, 3
  %v1231 = vsel %vm1166, %v1228, %v1230
  %v1232 = vrot.slane %v1121, 3
  %v1233 = vrot.slane %v1122, 3
  %v1234 = vsel %vm1166, %v1232, %v1233
  %v1235 = vrot.slane %v1123, 3
  %v1236 = vsel %vm1166, %v1233, %v1235
  %v1265 = vadd.f32 %v1050, %v1169
  %v1266 = vadd.f32 %v1051, %v1171
  %v1267 = vadd.f32 %v1052, %v1174
  %v1268 = vadd.f32 %v1053, %v1176
  %v1269 = vadd.f32 %v1054, %v1179
  %v1270 = vadd.f32 %v1055, %v1181
  %v1271 = vadd.f32 %v1056, %v1184
  %v1272 = vadd.f32 %v1057, %v1186
  %v1273 = vadd.f32 %v1058, %v1189
  %v1274 = vadd.f32 %v1059, %v1191
  %v1275 = vadd.f32 %v1060, %v1194
  %v1276 = vadd.f32 %v1061, %v1196
  %v1277 = vadd.f32 %v1062, %v1199
  %v1278 = vadd.f32 %v1063, %v1201
  %v1279 = vadd.f32 %v1064, %v1204
  %v1280 = vadd.f32 %v1065, %v1206
  %v1281 = vadd.f32 %v1066, %v1209
  %v1282 = vadd.f32 %v1067, %v1211
  %v1283 = vadd.f32 %v1068, %v1214
  %v1284 = vadd.f32 %v1069, %v1216
  %v1285 = vadd.f32 %v1070, %v1219
  %v1286 = vadd.f32 %v1071, %v1221
  %v1287 = vadd.f32 %v1072, %v1224
  %v1288 = vadd.f32 %v1073, %v1226
  %v1289 = vadd.f32 %v1074, %v1229
  %v1290 = vadd.f32 %v1075, %v1231
  %v1291 = vadd.f32 %v1076, %v1234
  %v1292 = vadd.f32 %v1077, %v1236
  %v1293 = vlaneseq
  %v1294 = vshrl.u32 %v1293, 7
  %v1295 = vsub.s32 4, %v1294
  %v1296 = vrot.slane %v612, %v1295
  %v1297 = vmul.f32 %v563, %v1296
  %v1298 = vmul.f32 %v388, %v1296
  %v1299 = vmul.f32 %v596, %v1296
  %v1300 = vmul.f32 %v564, %v1296
  %v1301 = vmul.f32 %v391, %v1296
  %v1302 = vmul.f32 %v597, %v1296
  %v1303 = vmul.f32 %v565, %v1296
  %v1304 = vmul.f32 %v394, %v1296
  %v1305 = vmul.f32 %v598, %v1296
  %v1306 = vmul.f32 %v566, %v1296
  %v1307 = vmul.f32 %v397, %v1296
  %v1308 = vmul.f32 %v599, %v1296
  %v1309 = vmul.f32 %v567, %v1296
  %v1310 = vmul.f32 %v400, %v1296
  %v1311 = vmul.f32 %v600, %v1296
  %v1312 = vmul.f32 %v568, %v1296
  %v1313 = vmul.f32 %v403, %v1296
  %v1314 = vmul.f32 %v601, %v1296
  %v1315 = vmul.f32 %v569, %v1296
  %v1316 = vmul.f32 %v406, %v1296
  %v1317 = vmul.f32 %v602, %v1296
  %v1318 = vmul.f32 %v570, %v1296
  %v1319 = vmul.f32 %v409, %v1296
  %v1320 = vmul.f32 %v603, %v1296
  %v1321 = vmul.f32 %v571, %v1296
  %v1322 = vmul.f32 %v412, %v1296
  %v1323 = vmul.f32 %v604, %v1296
  %v1324 = vmul.f32 %v572, %v1296
  %v1325 = vmul.f32 %v415, %v1296
  %v1326 = vmul.f32 %v605, %v1296
  %v1327 = vmul.f32 %v573, %v1296
  %v1328 = vmul.f32 %v418, %v1296
  %v1329 = vmul.f32 %v606, %v1296
  %v1330 = vmul.f32 %v574, %v1296
  %v1331 = vmul.f32 %v421, %v1296
  %v1332 = vmul.f32 %v607, %v1296
  %v1333 = vmul.f32 %v575, %v1296
  %v1334 = vmul.f32 %v424, %v1296
  %v1335 = vmul.f32 %v608, %v1296
  %v1336 = vmul.f32 %v576, %v1296
  %v1337 = vmul.f32 %v427, %v1296
  %v1338 = vmul.f32 %v609, %v1296
  %vm1381 = vcmask 1043456
  %v1382 = vrot.slane %v1297, 4
  %v1383 = vrot.slane %v1298, 4
  %v1384 = vsel %vm1381, %v1382, %v1383
  %v1385 = vrot.slane %v1299, 4
  %v1386 = vsel %vm1381, %v1383, %v1385
  %v1387 = vrot.slane %v1300, 4
  %v1388 = vrot.slane %v1301, 4
  %v1389 = vsel %vm1381, %v1387, %v1388
  %v1390 = vrot.slane %v1302, 4
  %v1391 = vsel %vm1381, %v1388, %v1390
  %v1392 = vrot.slane %v1303, 4
  %v1393 = vrot.slane %v1304, 4
  %v1394 = vsel %vm1381, %v1392, %v1393
  %v1395 = vrot.slane %v1305, 4
  %v1396 = vsel %vm1381, %v1393, %v1395
  %v1397 = vrot.slane %v1306, 4
  %v1398 = vrot.slane %v1307, 4
  %v1399 = vsel %vm1381, %v1397, %v1398
  %v1400 = vrot.slane %v1308, 4
  %v1401 = vsel %vm1381, %v1398, %v1400
  %v1402 = vrot.slane %v1309, 4
  %v1403 = vrot.slane %v1310, 4
  %v1404 = vsel %vm1381, %v1402, %v1403
  %v1405 = vrot.slane %v1311, 4
  %v1406 = vsel %vm1381, %v1403, %v1405
  %v1407 = vrot.slane %v1312, 4
  %v1408 = vrot.slane %v1313, 4
  %v1409 = vsel %vm1381, %v1407, %v1408
  %v1410 = vrot.slane %v1314, 4
  %v1411 = vsel %vm1381, %v1408, %v1410
  %v1412 = vrot.slane %v1315, 4
  %v1413 = vrot.slane %v1316, 4
  %v1414 = vsel %vm1381, %v1412, %v1413
  %v1415 = vrot.slane %v1317, 4
  %v1416 = vsel %vm1381, %v1413, %v1415
  %v1417 = vrot.slane %v1318, 4
  %v1418 = vrot.slane %v1319, 4
  %v1419 = vsel %vm1381, %v1417, %v1418
  %v1420 = vrot.slane %v1320, 4
  %v1421 = vsel %vm1381, %v1418, %v1420
  %v1422 = vrot.slane %v1321, 4
  %v1423 = vrot.slane %v1322, 4
  %v1424 = vsel %vm1381, %v1422, %v1423
  %v1425 = vrot.slane %v1323, 4
  %v1426 = vsel %vm1381, %v1423, %v1425
  %v1427 = vrot.slane %v1324, 4
  %v1428 = vrot.slane %v1325, 4
  %v1429 = vsel %vm1381, %v1427, %v1428
  %v1430 = vrot.slane %v1326, 4
  %v1431 = vsel %vm1381, %v1428, %v1430
  %v1432 = vrot.slane %v1327, 4
  %v1433 = vrot.slane %v1328, 4
  %v1434 = vsel %vm1381, %v1432, %v1433
  %v1435 = vrot.slane %v1329, 4
  %v1436 = vsel %vm1381, %v1433, %v1435
  %v1437 = vrot.slane %v1330, 4
  %v1438 = vrot.slane %v1331, 4
  %v1439 = vsel %vm1381, %v1437, %v1438
  %v1440 = vrot.slane %v1332, 4
  %v1441 = vsel %vm1381, %v1438, %v1440
  %v1442 = vrot.slane %v1333, 4
  %v1443 = vrot.slane %v1334, 4
  %v1444 = vsel %vm1381, %v1442, %v1443
  %v1445 = vrot.slane %v1335, 4
  %v1446 = vsel %vm1381, %v1443, %v1445
  %v1447 = vrot.slane %v1336, 4
  %v1448 = vrot.slane %v1337, 4
  %v1449 = vsel %vm1381, %v1447, %v1448
  %v1450 = vrot.slane %v1338, 4
  %v1451 = vsel %vm1381, %v1448, %v1450
  %v1480 = vadd.f32 %v1265, %v1384
  %v1481 = vadd.f32 %v1266, %v1386
  %v1482 = vadd.f32 %v1267, %v1389
  %v1483 = vadd.f32 %v1268, %v1391
  %v1484 = vadd.f32 %v1269, %v1394
  %v1485 = vadd.f32 %v1270, %v1396
  %v1486 = vadd.f32 %v1271, %v1399
  %v1487 = vadd.f32 %v1272, %v1401
  %v1488 = vadd.f32 %v1273, %v1404
  %v1489 = vadd.f32 %v1274, %v1406
  %v1490 = vadd.f32 %v1275, %v1409
  %v1491 = vadd.f32 %v1276, %v1411
  %v1492 = vadd.f32 %v1277, %v1414
  %v1493 = vadd.f32 %v1278, %v1416
  %v1494 = vadd.f32 %v1279, %v1419
  %v1495 = vadd.f32 %v1280, %v1421
  %v1496 = vadd.f32 %v1281, %v1424
  %v1497 = vadd.f32 %v1282, %v1426
  %v1498 = vadd.f32 %v1283, %v1429
  %v1499 = vadd.f32 %v1284, %v1431
  %v1500 = vadd.f32 %v1285, %v1434
  %v1501 = vadd.f32 %v1286, %v1436
  %v1502 = vadd.f32 %v1287, %v1439
  %v1503 = vadd.f32 %v1288, %v1441
  %v1504 = vadd.f32 %v1289, %v1444
  %v1505 = vadd.f32 %v1290, %v1446
  %v1506 = vadd.f32 %v1291, %v1449
  %v1507 = vadd.f32 %v1292, %v1451
  %v1508 = vlaneseq
  %v1509 = vshrl.u32 %v1508, 7
  %v1510 = vsub.s32 5, %v1509
  %v1511 = vrot.slane %v612, %v1510
  %v1512 = vmul.f32 %v564, %v1511
  %v1513 = vmul.f32 %v391, %v1511
  %v1514 = vmul.f32 %v565, %v1511
  %v1515 = vmul.f32 %v394, %v1511
  %v1516 = vmul.f32 %v563, %v1511
  %v1517 = vmul.f32 %v388, %v1511
  %v1518 = vmul.f32 %v566, %v1511
  %v1519 = vmul.f32 %v397, %v1511
  %v1520 = vmul.f32 %v567, %v1511
  %v1521 = vmul.f32 %v400, %v1511
  %v1522 = vmul.f32 %v568, %v1511
  %v1523 = vmul.f32 %v403, %v1511
  %v1524 = vmul.f32 %v569, %v1511
  %v1525 = vmul.f32 %v406, %v1511
  %v1526 = vmul.f32 %v570, %v1511
  %v1527 = vmul.f32 %v409, %v1511
  %v1528 = vmul.f32 %v571, %v1511
  %v1529 = vmul.f32 %v412, %v1511
  %v1530 = vmul.f32 %v572, %v1511
  %v1531 = vmul.f32 %v415, %v1511
  %v1532 = vmul.f32 %v573, %v1511
  %v1533 = vmul.f32 %v418, %v1511
  %v1534 = vmul.f32 %v574, %v1511
  %v1535 = vmul.f32 %v421, %v1511
  %v1536 = vmul.f32 %v575, %v1511
  %v1537 = vmul.f32 %v424, %v1511
  %v1538 = vmul.f32 %v576, %v1511
  %v1539 = vmul.f32 %v427, %v1511
  %v1540 = vmul.f32 %v577, %v1511
  %v1541 = vmul.f32 %v430, %v1511
  %v1542 = vadd.f32 %v1480, %v1512
  %v1543 = vadd.f32 %v1481, %v1513
  %v1544 = vadd.f32 %v1482, %v1514
  %v1545 = vadd.f32 %v1483, %v1515
  %v1546 = vadd.f32 %v1484, %v1512
  %v1547 = vadd.f32 %v1485, %v1513
  %v1548 = vadd.f32 %v1482, %v1516
  %v1549 = vadd.f32 %v1483, %v1517
  %v1550 = vadd.f32 %v1480, %v1518
  %v1551 = vadd.f32 %v1481, %v1519
  %v1552 = vadd.f32 %v1486, %v1520
  %v1553 = vadd.f32 %v1487, %v1521
  %v1554 = vadd.f32 %v1488, %v1522
  %v1555 = vadd.f32 %v1489, %v1523
  %v1556 = vadd.f32 %v1490, %v1524
  %v1557 = vadd.f32 %v1491, %v1525
  %v1558 = vadd.f32 %v1492, %v1526
  %v1559 = vadd.f32 %v1493, %v1527
  %v1560 = vadd.f32 %v1494, %v1528
  %v1561 = vadd.f32 %v1495, %v1529
  %v1562 = vadd.f32 %v1496, %v1530
  %v1563 = vadd.f32 %v1497, %v1531
  %v1564 = vadd.f32 %v1498, %v1532
  %v1565 = vadd.f32 %v1499, %v1533
  %v1566 = vadd.f32 %v1500, %v1534
  %v1567 = vadd.f32 %v1501, %v1535
  %v1568 = vadd.f32 %v1502, %v1536
  %v1569 = vadd.f32 %v1503, %v1537
  %v1570 = vadd.f32 %v1504, %v1538
  %v1571 = vadd.f32 %v1505, %v1539
  %v1572 = vadd.f32 %v1506, %v1540
  %v1573 = vadd.f32 %v1507, %v1541
  %v1574 = vlaneseq
  %v1575 = vshrl.u32 %v1574, 7
  %v1576 = vsub.s32 6, %v1575
  %v1577 = vrot.slane %v612, %v1576
  %v1578 = vmul.f32 %v564, %v1577
  %v1579 = vmul.f32 %v391, %v1577
  %v1580 = vmul.f32 %v597, %v1577
  %v1581 = vmul.f32 %v565, %v1577
  %v1582 = vmul.f32 %v394, %v1577
  %v1583 = vmul.f32 %v598, %v1577
  %v1584 = vmul.f32 %v563, %v1577
  %v1585 = vmul.f32 %v388, %v1577
  %v1586 = vmul.f32 %v596, %v1577
  %v1587 = vmul.f32 %v566, %v1577
  %v1588 = vmul.f32 %v397, %v1577
  %v1589 = vmul.f32 %v599, %v1577
  %v1590 = vmul.f32 %v567, %v1577
  %v1591 = vmul.f32 %v400, %v1577
  %v1592 = vmul.f32 %v600, %v1577
  %v1593 = vmul.f32 %v568, %v1577
  %v1594 = vmul.f32 %v403, %v1577
  %v1595 = vmul.f32 %v601, %v1577
  %v1596 = vmul.f32 %v569, %v1577
  %v1597 = vmul.f32 %v406, %v1577
  %v1598 = vmul.f32 %v602, %v1577
  %v1599 = vmul.f32 %v570, %v1577
  %v1600 = vmul.f32 %v409, %v1577
  %v1601 = vmul.f32 %v603, %v1577
  %v1602 = vmul.f32 %v571, %v1577
  %v1603 = vmul.f32 %v412, %v1577
  %v1604 = vmul.f32 %v604, %v1577
  %v1605 = vmul.f32 %v572, %v1577
  %v1606 = vmul.f32 %v415, %v1577
  %v1607 = vmul.f32 %v605, %v1577
  %v1608 = vmul.f32 %v573, %v1577
  %v1609 = vmul.f32 %v418, %v1577
  %v1610 = vmul.f32 %v606, %v1577
  %v1611 = vmul.f32 %v574, %v1577
  %v1612 = vmul.f32 %v421, %v1577
  %v1613 = vmul.f32 %v607, %v1577
  %v1614 = vmul.f32 %v575, %v1577
  %v1615 = vmul.f32 %v424, %v1577
  %v1616 = vmul.f32 %v608, %v1577
  %v1617 = vmul.f32 %v576, %v1577
  %v1618 = vmul.f32 %v427, %v1577
  %v1619 = vmul.f32 %v609, %v1577
  %v1620 = vmul.f32 %v577, %v1577
  %v1621 = vmul.f32 %v430, %v1577
  %v1622 = vmul.f32 %v610, %v1577
  %v1668 = vrot.slane %v1578, 1
  %v1669 = vrot.slane %v1579, 1
  %v1670 = vsel %vm736, %v1668, %v1669
  %v1671 = vrot.slane %v1580, 1
  %v1672 = vsel %vm736, %v1669, %v1671
  %v1673 = vrot.slane %v1581, 1
  %v1674 = vrot.slane %v1582, 1
  %v1675 = vsel %vm736, %v1673, %v1674
  %v1676 = vrot.slane %v1583, 1
  %v1677 = vsel %vm736, %v1674, %v1676
  %v1678 = vrot.slane %v1584, 1
  %v1679 = vrot.slane %v1585, 1
  %v1680 = vsel %vm736, %v1678, %v1679
  %v1681 = vrot.slane %v1586, 1
  %v1682 = vsel %vm736, %v1679, %v1681
  %v1683 = vrot.slane %v1587, 1
  %v1684 = vrot.slane %v1588, 1
  %v1685 = vsel %vm736, %v1683, %v1684
  %v1686 = vrot.slane %v1589, 1
  %v1687 = vsel %vm736, %v1684, %v1686
  %v1688 = vrot.slane %v1590, 1
  %v1689 = vrot.slane %v1591, 1
  %v1690 = vsel %vm736, %v1688, %v1689
  %v1691 = vrot.slane %v1592, 1
  %v1692 = vsel %vm736, %v1689, %v1691
  %v1693 = vrot.slane %v1593, 1
  %v1694 = vrot.slane %v1594, 1
  %v1695 = vsel %vm736, %v1693, %v1694
  %v1696 = vrot.slane %v1595, 1
  %v1697 = vsel %vm736, %v1694, %v1696
  %v1698 = vrot.slane %v1596, 1
  %v1699 = vrot.slane %v1597, 1
  %v1700 = vsel %vm736, %v1698, %v1699
  %v1701 = vrot.slane %v1598, 1
  %v1702 = vsel %vm736, %v1699, %v1701
  %v1703 = vrot.slane %v1599, 1
  %v1704 = vrot.slane %v1600, 1
  %v1705 = vsel %vm736, %v1703, %v1704
  %v1706 = vrot.slane %v1601, 1
  %v1707 = vsel %vm736, %v1704, %v1706
  %v1708 = vrot.slane %v1602, 1
  %v1709 = vrot.slane %v1603, 1
  %v1710 = vsel %vm736, %v1708, %v1709
  %v1711 = vrot.slane %v1604, 1
  %v1712 = vsel %vm736, %v1709, %v1711
  %v1713 = vrot.slane %v1605, 1
  %v1714 = vrot.slane %v1606, 1
  %v1715 = vsel %vm736, %v1713, %v1714
  %v1716 = vrot.slane %v1607, 1
  %v1717 = vsel %vm736, %v1714, %v1716
  %v1718 = vrot.slane %v1608, 1
  %v1719 = vrot.slane %v1609, 1
  %v1720 = vsel %vm736, %v1718, %v1719
  %v1721 = vrot.slane %v1610, 1
  %v1722 = vsel %vm736, %v1719, %v1721
  %v1723 = vrot.slane %v1611, 1
  %v1724 = vrot.slane %v1612, 1
  %v1725 = vsel %vm736, %v1723, %v1724
  %v1726 = vrot.slane %v1613, 1
  %v1727 = vsel %vm736, %v1724, %v1726
  %v1728 = vrot.slane %v1614, 1
  %v1729 = vrot.slane %v1615, 1
  %v1730 = vsel %vm736, %v1728, %v1729
  %v1731 = vrot.slane %v1616, 1
  %v1732 = vsel %vm736, %v1729, %v1731
  %v1733 = vrot.slane %v1617, 1
  %v1734 = vrot.slane %v1618, 1
  %v1735 = vsel %vm736, %v1733, %v1734
  %v1736 = vrot.slane %v1619, 1
  %v1737 = vsel %vm736, %v1734, %v1736
  %v1738 = vrot.slane %v1620, 1
  %v1739 = vrot.slane %v1621, 1
  %v1740 = vsel %vm736, %v1738, %v1739
  %v1741 = vrot.slane %v1622, 1
  %v1742 = vsel %vm736, %v1739, %v1741
  %v1773 = vadd.f32 %v1542, %v1670
  %v1774 = vadd.f32 %v1543, %v1672
  %v1775 = vadd.f32 %v1544, %v1675
  %v1776 = vadd.f32 %v1545, %v1677
  %v1777 = vadd.f32 %v1546, %v1670
  %v1778 = vadd.f32 %v1547, %v1672
  %v1779 = vadd.f32 %v1548, %v1680
  %v1780 = vadd.f32 %v1549, %v1682
  %v1781 = vadd.f32 %v1550, %v1685
  %v1782 = vadd.f32 %v1551, %v1687
  %v1783 = vadd.f32 %v1552, %v1690
  %v1784 = vadd.f32 %v1553, %v1692
  %v1785 = vadd.f32 %v1554, %v1695
  %v1786 = vadd.f32 %v1555, %v1697
  %v1787 = vadd.f32 %v1556, %v1700
  %v1788 = vadd.f32 %v1557, %v1702
  %v1789 = vadd.f32 %v1558, %v1705
  %v1790 = vadd.f32 %v1559, %v1707
  %v1791 = vadd.f32 %v1560, %v1710
  %v1792 = vadd.f32 %v1561, %v1712
  %v1793 = vadd.f32 %v1562, %v1715
  %v1794 = vadd.f32 %v1563, %v1717
  %v1795 = vadd.f32 %v1564, %v1720
  %v1796 = vadd.f32 %v1565, %v1722
  %v1797 = vadd.f32 %v1566, %v1725
  %v1798 = vadd.f32 %v1567, %v1727
  %v1799 = vadd.f32 %v1568, %v1730
  %v1800 = vadd.f32 %v1569, %v1732
  %v1801 = vadd.f32 %v1570, %v1735
  %v1802 = vadd.f32 %v1571, %v1737
  %v1803 = vadd.f32 %v1572, %v1740
  %v1804 = vadd.f32 %v1573, %v1742
  %v1805 = vlaneseq
  %v1806 = vshrl.u32 %v1805, 7
  %v1807 = vsub.s32 7, %v1806
  %v1808 = vrot.slane %v612, %v1807
  %v1809 = vmul.f32 %v564, %v1808
  %v1810 = vmul.f32 %v391, %v1808
  %v1811 = vmul.f32 %v597, %v1808
  %v1812 = vmul.f32 %v565, %v1808
  %v1813 = vmul.f32 %v394, %v1808
  %v1814 = vmul.f32 %v598, %v1808
  %v1815 = vmul.f32 %v563, %v1808
  %v1816 = vmul.f32 %v388, %v1808
  %v1817 = vmul.f32 %v596, %v1808
  %v1818 = vmul.f32 %v566, %v1808
  %v1819 = vmul.f32 %v397, %v1808
  %v1820 = vmul.f32 %v599, %v1808
  %v1821 = vmul.f32 %v567, %v1808
  %v1822 = vmul.f32 %v400, %v1808
  %v1823 = vmul.f32 %v600, %v1808
  %v1824 = vmul.f32 %v568, %v1808
  %v1825 = vmul.f32 %v403, %v1808
  %v1826 = vmul.f32 %v601, %v1808
  %v1827 = vmul.f32 %v569, %v1808
  %v1828 = vmul.f32 %v406, %v1808
  %v1829 = vmul.f32 %v602, %v1808
  %v1830 = vmul.f32 %v570, %v1808
  %v1831 = vmul.f32 %v409, %v1808
  %v1832 = vmul.f32 %v603, %v1808
  %v1833 = vmul.f32 %v571, %v1808
  %v1834 = vmul.f32 %v412, %v1808
  %v1835 = vmul.f32 %v604, %v1808
  %v1836 = vmul.f32 %v572, %v1808
  %v1837 = vmul.f32 %v415, %v1808
  %v1838 = vmul.f32 %v605, %v1808
  %v1839 = vmul.f32 %v573, %v1808
  %v1840 = vmul.f32 %v418, %v1808
  %v1841 = vmul.f32 %v606, %v1808
  %v1842 = vmul.f32 %v574, %v1808
  %v1843 = vmul.f32 %v421, %v1808
  %v1844 = vmul.f32 %v607, %v1808
  %v1845 = vmul.f32 %v575, %v1808
  %v1846 = vmul.f32 %v424, %v1808
  %v1847 = vmul.f32 %v608, %v1808
  %v1848 = vmul.f32 %v576, %v1808
  %v1849 = vmul.f32 %v427, %v1808
  %v1850 = vmul.f32 %v609, %v1808
  %v1851 = vmul.f32 %v577, %v1808
  %v1852 = vmul.f32 %v430, %v1808
  %v1853 = vmul.f32 %v610, %v1808
  %v1899 = vrot.slane %v1809, 2
  %v1900 = vrot.slane %v1810, 2
  %v1901 = vsel %vm951, %v1899, %v1900
  %v1902 = vrot.slane %v1811, 2
  %v1903 = vsel %vm951, %v1900, %v1902
  %v1904 = vrot.slane %v1812, 2
  %v1905 = vrot.slane %v1813, 2
  %v1906 = vsel %vm951, %v1904, %v1905
  %v1907 = vrot.slane %v1814, 2
  %v1908 = vsel %vm951, %v1905, %v1907
  %v1909 = vrot.slane %v1815, 2
  %v1910 = vrot.slane %v1816, 2
  %v1911 = vsel %vm951, %v1909, %v1910
  %v1912 = vrot.slane %v1817, 2
  %v1913 = vsel %vm951, %v1910, %v1912
  %v1914 = vrot.slane %v1818, 2
  %v1915 = vrot.slane %v1819, 2
  %v1916 = vsel %vm951, %v1914, %v1915
  %v1917 = vrot.slane %v1820, 2
  %v1918 = vsel %vm951, %v1915, %v1917
  %v1919 = vrot.slane %v1821, 2
  %v1920 = vrot.slane %v1822, 2
  %v1921 = vsel %vm951, %v1919, %v1920
  %v1922 = vrot.slane %v1823, 2
  %v1923 = vsel %vm951, %v1920, %v1922
  %v1924 = vrot.slane %v1824, 2
  %v1925 = vrot.slane %v1825, 2
  %v1926 = vsel %vm951, %v1924, %v1925
  %v1927 = vrot.slane %v1826, 2
  %v1928 = vsel %vm951, %v1925, %v1927
  %v1929 = vrot.slane %v1827, 2
  %v1930 = vrot.slane %v1828, 2
  %v1931 = vsel %vm951, %v1929, %v1930
  %v1932 = vrot.slane %v1829, 2
  %v1933 = vsel %vm951, %v1930, %v1932
  %v1934 = vrot.slane %v1830, 2
  %v1935 = vrot.slane %v1831, 2
  %v1936 = vsel %vm951, %v1934, %v1935
  %v1937 = vrot.slane %v1832, 2
  %v1938 = vsel %vm951, %v1935, %v1937
  %v1939 = vrot.slane %v1833, 2
  %v1940 = vrot.slane %v1834, 2
  %v1941 = vsel %vm951, %v1939, %v1940
  %v1942 = vrot.slane %v1835, 2
  %v1943 = vsel %vm951, %v1940, %v1942
  %v1944 = vrot.slane %v1836, 2
  %v1945 = vrot.slane %v1837, 2
  %v1946 = vsel %vm951, %v1944, %v1945
  %v1947 = vrot.slane %v1838, 2
  %v1948 = vsel %vm951, %v1945, %v1947
  %v1949 = vrot.slane %v1839, 2
  %v1950 = vrot.slane %v1840, 2
  %v1951 = vsel %vm951, %v1949, %v1950
  %v1952 = vrot.slane %v1841, 2
  %v1953 = vsel %vm951, %v1950, %v1952
  %v1954 = vrot.slane %v1842, 2
  %v1955 = vrot.slane %v1843, 2
  %v1956 = vsel %vm951, %v1954, %v1955
  %v1957 = vrot.slane %v1844, 2
  %v1958 = vsel %vm951, %v1955, %v1957
  %v1959 = vrot.slane %v1845, 2
  %v1960 = vrot.slane %v1846, 2
  %v1961 = vsel %vm951, %v1959, %v1960
  %v1962 = vrot.slane %v1847, 2
  %v1963 = vsel %vm951, %v1960, %v1962
  %v1964 = vrot.slane %v1848, 2
  %v1965 = vrot.slane %v1849, 2
  %v1966 = vsel %vm951, %v1964, %v1965
  %v1967 = vrot.slane %v1850, 2
  %v1968 = vsel %vm951, %v1965, %v1967
  %v1969 = vrot.slane %v1851, 2
  %v1970 = vrot.slane %v1852, 2
  %v1971 = vsel %vm951, %v1969, %v1970
  %v1972 = vrot.slane %v1853, 2
  %v1973 = vsel %vm951, %v1970, %v1972
  %v2004 = vadd.f32 %v1773, %v1901
  %v2005 = vadd.f32 %v1774, %v1903
  %v2006 = vadd.f32 %v1775, %v1906
  %v2007 = vadd.f32 %v1776, %v1908
  %v2008 = vadd.f32 %v1777, %v1901
  %v2009 = vadd.f32 %v1778, %v1903
  %v2010 = vadd.f32 %v1779, %v1911
  %v2011 = vadd.f32 %v1780, %v1913
  %v2012 = vadd.f32 %v1781, %v1916
  %v2013 = vadd.f32 %v1782, %v1918
  %v2014 = vadd.f32 %v1783, %v1921
  %v2015 = vadd.f32 %v1784, %v1923
  %v2016 = vadd.f32 %v1785, %v1926
  %v2017 = vadd.f32 %v1786, %v1928
  %v2018 = vadd.f32 %v1787, %v1931
  %v2019 = vadd.f32 %v1788, %v1933
  %v2020 = vadd.f32 %v1789, %v1936
  %v2021 = vadd.f32 %v1790, %v1938
  %v2022 = vadd.f32 %v1791, %v1941
  %v2023 = vadd.f32 %v1792, %v1943
  %v2024 = vadd.f32 %v1793, %v1946
  %v2025 = vadd.f32 %v1794, %v1948
  %v2026 = vadd.f32 %v1795, %v1951
  %v2027 = vadd.f32 %v1796, %v1953
  %v2028 = vadd.f32 %v1797, %v1956
  %v2029 = vadd.f32 %v1798, %v1958
  %v2030 = vadd.f32 %v1799, %v1961
  %v2031 = vadd.f32 %v1800, %v1963
  %v2032 = vadd.f32 %v1801, %v1966
  %v2033 = vadd.f32 %v1802, %v1968
  %v2034 = vadd.f32 %v1803, %v1971
  %v2035 = vadd.f32 %v1804, %v1973
  %v2036 = vlaneseq
  %v2037 = vshrl.u32 %v2036, 7
  %v2038 = vsub.s32 0, %v2037
  %v2039 = vrot.slane %v613, %v2038
  %v2040 = vmul.f32 %v564, %v2039
  %v2041 = vmul.f32 %v391, %v2039
  %v2042 = vmul.f32 %v597, %v2039
  %v2043 = vmul.f32 %v565, %v2039
  %v2044 = vmul.f32 %v394, %v2039
  %v2045 = vmul.f32 %v598, %v2039
  %v2046 = vmul.f32 %v563, %v2039
  %v2047 = vmul.f32 %v388, %v2039
  %v2048 = vmul.f32 %v596, %v2039
  %v2049 = vmul.f32 %v566, %v2039
  %v2050 = vmul.f32 %v397, %v2039
  %v2051 = vmul.f32 %v599, %v2039
  %v2052 = vmul.f32 %v567, %v2039
  %v2053 = vmul.f32 %v400, %v2039
  %v2054 = vmul.f32 %v600, %v2039
  %v2055 = vmul.f32 %v568, %v2039
  %v2056 = vmul.f32 %v403, %v2039
  %v2057 = vmul.f32 %v601, %v2039
  %v2058 = vmul.f32 %v569, %v2039
  %v2059 = vmul.f32 %v406, %v2039
  %v2060 = vmul.f32 %v602, %v2039
  %v2061 = vmul.f32 %v570, %v2039
  %v2062 = vmul.f32 %v409, %v2039
  %v2063 = vmul.f32 %v603, %v2039
  %v2064 = vmul.f32 %v571, %v2039
  %v2065 = vmul.f32 %v412, %v2039
  %v2066 = vmul.f32 %v604, %v2039
  %v2067 = vmul.f32 %v572, %v2039
  %v2068 = vmul.f32 %v415, %v2039
  %v2069 = vmul.f32 %v605, %v2039
  %v2070 = vmul.f32 %v573, %v2039
  %v2071 = vmul.f32 %v418, %v2039
  %v2072 = vmul.f32 %v606, %v2039
  %v2073 = vmul.f32 %v574, %v2039
  %v2074 = vmul.f32 %v421, %v2039
  %v2075 = vmul.f32 %v607, %v2039
  %v2076 = vmul.f32 %v575, %v2039
  %v2077 = vmul.f32 %v424, %v2039
  %v2078 = vmul.f32 %v608, %v2039
  %v2079 = vmul.f32 %v576, %v2039
  %v2080 = vmul.f32 %v427, %v2039
  %v2081 = vmul.f32 %v609, %v2039
  %v2082 = vmul.f32 %v577, %v2039
  %v2083 = vmul.f32 %v430, %v2039
  %v2084 = vmul.f32 %v610, %v2039
  %v2130 = vrot.slane %v2040, 3
  %v2131 = vrot.slane %v2041, 3
  %v2132 = vsel %vm1166, %v2130, %v2131
  %v2133 = vrot.slane %v2042, 3
  %v2134 = vsel %vm1166, %v2131, %v2133
  %v2135 = vrot.slane %v2043, 3
  %v2136 = vrot.slane %v2044, 3
  %v2137 = vsel %vm1166, %v2135, %v2136
  %v2138 = vrot.slane %v2045, 3
  %v2139 = vsel %vm1166, %v2136, %v2138
  %v2140 = vrot.slane %v2046, 3
  %v2141 = vrot.slane %v2047, 3
  %v2142 = vsel %vm1166, %v2140, %v2141
  %v2143 = vrot.slane %v2048, 3
  %v2144 = vsel %vm1166, %v2141, %v2143
  %v2145 = vrot.slane %v2049, 3
  %v2146 = vrot.slane %v2050, 3
  %v2147 = vsel %vm1166, %v2145, %v2146
  %v2148 = vrot.slane %v2051, 3
  %v2149 = vsel %vm1166, %v2146, %v2148
  %v2150 = vrot.slane %v2052, 3
  %v2151 = vrot.slane %v2053, 3
  %v2152 = vsel %vm1166, %v2150, %v2151
  %v2153 = vrot.slane %v2054, 3
  %v2154 = vsel %vm1166, %v2151, %v2153
  %v2155 = vrot.slane %v2055, 3
  %v2156 = vrot.slane %v2056, 3
  %v2157 = vsel %vm1166, %v2155, %v2156
  %v2158 = vrot.slane %v2057, 3
  %v2159 = vsel %vm1166, %v2156, %v2158
  %v2160 = vrot.slane %v2058, 3
  %v2161 = vrot.slane %v2059, 3
  %v2162 = vsel %vm1166, %v2160, %v2161
  %v2163 = vrot.slane %v2060, 3
  %v2164 = vsel %vm1166, %v2161, %v2163
  %v2165 = vrot.slane %v2061, 3
  %v2166 = vrot.slane %v2062, 3
  %v2167 = vsel %vm1166, %v2165, %v2166
  %v2168 = vrot.slane %v2063, 3
  %v2169 = vsel %vm1166, %v2166, %v2168
  %v2170 = vrot.slane %v2064, 3
  %v2171 = vrot.slane %v2065, 3
  %v2172 = vsel %vm1166, %v2170, %v2171
  %v2173 = vrot.slane %v2066, 3
  %v2174 = vsel %vm1166, %v2171, %v2173
  %v2175 = vrot.slane %v2067, 3
  %v2176 = vrot.slane %v2068, 3
  %v2177 = vsel %vm1166, %v2175, %v2176
  %v2178 = vrot.slane %v2069, 3
  %v2179 = vsel %vm1166, %v2176, %v2178
  %v2180 = vrot.slane %v2070, 3
  %v2181 = vrot.slane %v2071, 3
  %v2182 = vsel %vm1166, %v2180, %v2181
  %v2183 = vrot.slane %v2072, 3
  %v2184 = vsel %vm1166, %v2181, %v2183
  %v2185 = vrot.slane %v2073, 3
  %v2186 = vrot.slane %v2074, 3
  %v2187 = vsel %vm1166, %v2185, %v2186
  %v2188 = vrot.slane %v2075, 3
  %v2189 = vsel %vm1166, %v2186, %v2188
  %v2190 = vrot.slane %v2076, 3
  %v2191 = vrot.slane %v2077, 3
  %v2192 = vsel %vm1166, %v2190, %v2191
  %v2193 = vrot.slane %v2078, 3
  %v2194 = vsel %vm1166, %v2191, %v2193
  %v2195 = vrot.slane %v2079, 3
  %v2196 = vrot.slane %v2080, 3
  %v2197 = vsel %vm1166, %v2195, %v2196
  %v2198 = vrot.slane %v2081, 3
  %v2199 = vsel %vm1166, %v2196, %v2198
  %v2200 = vrot.slane %v2082, 3
  %v2201 = vrot.slane %v2083, 3
  %v2202 = vsel %vm1166, %v2200, %v2201
  %v2203 = vrot.slane %v2084, 3
  %v2204 = vsel %vm1166, %v2201, %v2203
  %v2235 = vadd.f32 %v2004, %v2132
  %v2236 = vadd.f32 %v2005, %v2134
  %v2237 = vadd.f32 %v2006, %v2137
  %v2238 = vadd.f32 %v2007, %v2139
  %v2239 = vadd.f32 %v2008, %v2132
  %v2240 = vadd.f32 %v2009, %v2134
  %v2241 = vadd.f32 %v2010, %v2142
  %v2242 = vadd.f32 %v2011, %v2144
  %v2243 = vadd.f32 %v2012, %v2147
  %v2244 = vadd.f32 %v2013, %v2149
  %v2245 = vadd.f32 %v2014, %v2152
  %v2246 = vadd.f32 %v2015, %v2154
  %v2247 = vadd.f32 %v2016, %v2157
  %v2248 = vadd.f32 %v2017, %v2159
  %v2249 = vadd.f32 %v2018, %v2162
  %v2250 = vadd.f32 %v2019, %v2164
  %v2251 = vadd.f32 %v2020, %v2167
  %v2252 = vadd.f32 %v2021, %v2169
  %v2253 = vadd.f32 %v2022, %v2172
  %v2254 = vadd.f32 %v2023, %v2174
  %v2255 = vadd.f32 %v2024, %v2177
  %v2256 = vadd.f32 %v2025, %v2179
  %v2257 = vadd.f32 %v2026, %v2182
  %v2258 = vadd.f32 %v2027, %v2184
  %v2259 = vadd.f32 %v2028, %v2187
  %v2260 = vadd.f32 %v2029, %v2189
  %v2261 = vadd.f32 %v2030, %v2192
  %v2262 = vadd.f32 %v2031, %v2194
  %v2263 = vadd.f32 %v2032, %v2197
  %v2264 = vadd.f32 %v2033, %v2199
  %v2265 = vadd.f32 %v2034, %v2202
  %v2266 = vadd.f32 %v2035, %v2204
  %v2267 = vlaneseq
  %v2268 = vshrl.u32 %v2267, 7
  %v2269 = vsub.s32 1, %v2268
  %v2270 = vrot.slane %v613, %v2269
  %v2271 = vmul.f32 %v564, %v2270
  %v2272 = vmul.f32 %v391, %v2270
  %v2273 = vmul.f32 %v597, %v2270
  %v2274 = vmul.f32 %v565, %v2270
  %v2275 = vmul.f32 %v394, %v2270
  %v2276 = vmul.f32 %v598, %v2270
  %v2277 = vmul.f32 %v563, %v2270
  %v2278 = vmul.f32 %v388, %v2270
  %v2279 = vmul.f32 %v596, %v2270
  %v2280 = vmul.f32 %v566, %v2270
  %v2281 = vmul.f32 %v397, %v2270
  %v2282 = vmul.f32 %v599, %v2270
  %v2283 = vmul.f32 %v567, %v2270
  %v2284 = vmul.f32 %v400, %v2270
  %v2285 = vmul.f32 %v600, %v2270
  %v2286 = vmul.f32 %v568, %v2270
  %v2287 = vmul.f32 %v403, %v2270
  %v2288 = vmul.f32 %v601, %v2270
  %v2289 = vmul.f32 %v569, %v2270
  %v2290 = vmul.f32 %v406, %v2270
  %v2291 = vmul.f32 %v602, %v2270
  %v2292 = vmul.f32 %v570, %v2270
  %v2293 = vmul.f32 %v409, %v2270
  %v2294 = vmul.f32 %v603, %v2270
  %v2295 = vmul.f32 %v571, %v2270
  %v2296 = vmul.f32 %v412, %v2270
  %v2297 = vmul.f32 %v604, %v2270
  %v2298 = vmul.f32 %v572, %v2270
  %v2299 = vmul.f32 %v415, %v2270
  %v2300 = vmul.f32 %v605, %v2270
  %v2301 = vmul.f32 %v573, %v2270
  %v2302 = vmul.f32 %v418, %v2270
  %v2303 = vmul.f32 %v606, %v2270
  %v2304 = vmul.f32 %v574, %v2270
  %v2305 = vmul.f32 %v421, %v2270
  %v2306 = vmul.f32 %v607, %v2270
  %v2307 = vmul.f32 %v575, %v2270
  %v2308 = vmul.f32 %v424, %v2270
  %v2309 = vmul.f32 %v608, %v2270
  %v2310 = vmul.f32 %v576, %v2270
  %v2311 = vmul.f32 %v427, %v2270
  %v2312 = vmul.f32 %v609, %v2270
  %v2313 = vmul.f32 %v577, %v2270
  %v2314 = vmul.f32 %v430, %v2270
  %v2315 = vmul.f32 %v610, %v2270
  %v2361 = vrot.slane %v2271, 4
  %v2362 = vrot.slane %v2272, 4
  %v2363 = vsel %vm1381, %v2361, %v2362
  %v2364 = vrot.slane %v2273, 4
  %v2365 = vsel %vm1381, %v2362, %v2364
  %v2366 = vrot.slane %v2274, 4
  %v2367 = vrot.slane %v2275, 4
  %v2368 = vsel %vm1381, %v2366, %v2367
  %v2369 = vrot.slane %v2276, 4
  %v2370 = vsel %vm1381, %v2367, %v2369
  %v2371 = vrot.slane %v2277, 4
  %v2372 = vrot.slane %v2278, 4
  %v2373 = vsel %vm1381, %v2371, %v2372
  %v2374 = vrot.slane %v2279, 4
  %v2375 = vsel %vm1381, %v2372, %v2374
  %v2376 = vrot.slane %v2280, 4
  %v2377 = vrot.slane %v2281, 4
  %v2378 = vsel %vm1381, %v2376, %v2377
  %v2379 = vrot.slane %v2282, 4
  %v2380 = vsel %vm1381, %v2377, %v2379
  %v2381 = vrot.slane %v2283, 4
  %v2382 = vrot.slane %v2284, 4
  %v2383 = vsel %vm1381, %v2381, %v2382
  %v2384 = vrot.slane %v2285, 4
  %v2385 = vsel %vm1381, %v2382, %v2384
  %v2386 = vrot.slane %v2286, 4
  %v2387 = vrot.slane %v2287, 4
  %v2388 = vsel %vm1381, %v2386, %v2387
  %v2389 = vrot.slane %v2288, 4
  %v2390 = vsel %vm1381, %v2387, %v2389
  %v2391 = vrot.slane %v2289, 4
  %v2392 = vrot.slane %v2290, 4
  %v2393 = vsel %vm1381, %v2391, %v2392
  %v2394 = vrot.slane %v2291, 4
  %v2395 = vsel %vm1381, %v2392, %v2394
  %v2396 = vrot.slane %v2292, 4
  %v2397 = vrot.slane %v2293, 4
  %v2398 = vsel %vm1381, %v2396, %v2397
  %v2399 = vrot.slane %v2294, 4
  %v2400 = vsel %vm1381, %v2397, %v2399
  %v2401 = vrot.slane %v2295, 4
  %v2402 = vrot.slane %v2296, 4
  %v2403 = vsel %vm1381, %v2401, %v2402
  %v2404 = vrot.slane %v2297, 4
  %v2405 = vsel %vm1381, %v2402, %v2404
  %v2406 = vrot.slane %v2298, 4
  %v2407 = vrot.slane %v2299, 4
  %v2408 = vsel %vm1381, %v2406, %v2407
  %v2409 = vrot.slane %v2300, 4
  %v2410 = vsel %vm1381, %v2407, %v2409
  %v2411 = vrot.slane %v2301, 4
  %v2412 = vrot.slane %v2302, 4
  %v2413 = vsel %vm1381, %v2411, %v2412
  %v2414 = vrot.slane %v2303, 4
  %v2415 = vsel %vm1381, %v2412, %v2414
  %v2416 = vrot.slane %v2304, 4
  %v2417 = vrot.slane %v2305, 4
  %v2418 = vsel %vm1381, %v2416, %v2417
  %v2419 = vrot.slane %v2306, 4
  %v2420 = vsel %vm1381, %v2417, %v2419
  %v2421 = vrot.slane %v2307, 4
  %v2422 = vrot.slane %v2308, 4
  %v2423 = vsel %vm1381, %v2421, %v2422
  %v2424 = vrot.slane %v2309, 4
  %v2425 = vsel %vm1381, %v2422, %v2424
  %v2426 = vrot.slane %v2310, 4
  %v2427 = vrot.slane %v2311, 4
  %v2428 = vsel %vm1381, %v2426, %v2427
  %v2429 = vrot.slane %v2312, 4
  %v2430 = vsel %vm1381, %v2427, %v2429
  %v2431 = vrot.slane %v2313, 4
  %v2432 = vrot.slane %v2314, 4
  %v2433 = vsel %vm1381, %v2431, %v2432
  %v2434 = vrot.slane %v2315, 4
  %v2435 = vsel %vm1381, %v2432, %v2434
  %v2466 = vadd.f32 %v2235, %v2363
  %v2467 = vadd.f32 %v2236, %v2365
  %v2468 = vadd.f32 %v2237, %v2368
  %v2469 = vadd.f32 %v2238, %v2370
  %v2470 = vadd.f32 %v2239, %v2363
  %v2471 = vadd.f32 %v2240, %v2365
  %v2472 = vadd.f32 %v2241, %v2373
  %v2473 = vadd.f32 %v2242, %v2375
  %v2474 = vadd.f32 %v2243, %v2378
  %v2475 = vadd.f32 %v2244, %v2380
  %v2476 = vadd.f32 %v2245, %v2383
  %v2477 = vadd.f32 %v2246, %v2385
  %v2478 = vadd.f32 %v2247, %v2388
  %v2479 = vadd.f32 %v2248, %v2390
  %v2480 = vadd.f32 %v2249, %v2393
  %v2481 = vadd.f32 %v2250, %v2395
  %v2482 = vadd.f32 %v2251, %v2398
  %v2483 = vadd.f32 %v2252, %v2400
  %v2484 = vadd.f32 %v2253, %v2403
  %v2485 = vadd.f32 %v2254, %v2405
  %v2486 = vadd.f32 %v2255, %v2408
  %v2487 = vadd.f32 %v2256, %v2410
  %v2488 = vadd.f32 %v2257, %v2413
  %v2489 = vadd.f32 %v2258, %v2415
  %v2490 = vadd.f32 %v2259, %v2418
  %v2491 = vadd.f32 %v2260, %v2420
  %v2492 = vadd.f32 %v2261, %v2423
  %v2493 = vadd.f32 %v2262, %v2425
  %v2494 = vadd.f32 %v2263, %v2428
  %v2495 = vadd.f32 %v2264, %v2430
  %v2496 = vadd.f32 %v2265, %v2433
  %v2497 = vadd.f32 %v2266, %v2435
  %v2498 = vlaneseq
  %v2499 = vshrl.u32 %v2498, 7
  %v2500 = vsub.s32 2, %v2499
  %v2501 = vrot.slane %v613, %v2500
  %v2502 = vmul.f32 %v565, %v2501
  %v2503 = vmul.f32 %v394, %v2501
  %v2504 = vmul.f32 %v564, %v2501
  %v2505 = vmul.f32 %v391, %v2501
  %v2506 = vmul.f32 %v563, %v2501
  %v2507 = vmul.f32 %v388, %v2501
  %v2508 = vmul.f32 %v566, %v2501
  %v2509 = vmul.f32 %v397, %v2501
  %v2510 = vmul.f32 %v567, %v2501
  %v2511 = vmul.f32 %v400, %v2501
  %v2512 = vmul.f32 %v568, %v2501
  %v2513 = vmul.f32 %v403, %v2501
  %v2514 = vmul.f32 %v569, %v2501
  %v2515 = vmul.f32 %v406, %v2501
  %v2516 = vmul.f32 %v570, %v2501
  %v2517 = vmul.f32 %v409, %v2501
  %v2518 = vmul.f32 %v571, %v2501
  %v2519 = vmul.f32 %v412, %v2501
  %v2520 = vmul.f32 %v572, %v2501
  %v2521 = vmul.f32 %v415, %v2501
  %v2522 = vmul.f32 %v573, %v2501
  %v2523 = vmul.f32 %v418, %v2501
  %v2524 = vmul.f32 %v574, %v2501
  %v2525 = vmul.f32 %v421, %v2501
  %v2526 = vmul.f32 %v575, %v2501
  %v2527 = vmul.f32 %v424, %v2501
  %v2528 = vmul.f32 %v576, %v2501
  %v2529 = vmul.f32 %v427, %v2501
  %v2530 = vmul.f32 %v577, %v2501
  %v2531 = vmul.f32 %v430, %v2501
  %v2532 = vmul.f32 %v578, %v2501
  %v2533 = vmul.f32 %v433, %v2501
  %v2534 = vadd.f32 %v2466, %v2502
  %v2535 = vadd.f32 %v2467, %v2503
  %v2536 = vadd.f32 %v2468, %v2504
  %v2537 = vadd.f32 %v2469, %v2505
  %v2538 = vadd.f32 %v2470, %v2506
  %v2539 = vadd.f32 %v2471, %v2507
  %v2540 = vadd.f32 %v2472, %v2508
  %v2541 = vadd.f32 %v2473, %v2509
  %v2542 = vadd.f32 %v2474, %v2510
  %v2543 = vadd.f32 %v2475, %v2511
  %v2544 = vadd.f32 %v2476, %v2512
  %v2545 = vadd.f32 %v2477, %v2513
  %v2546 = vadd.f32 %v2478, %v2514
  %v2547 = vadd.f32 %v2479, %v2515
  %v2548 = vadd.f32 %v2480, %v2516
  %v2549 = vadd.f32 %v2481, %v2517
  %v2550 = vadd.f32 %v2482, %v2518
  %v2551 = vadd.f32 %v2483, %v2519
  %v2552 = vadd.f32 %v2484, %v2520
  %v2553 = vadd.f32 %v2485, %v2521
  %v2554 = vadd.f32 %v2486, %v2522
  %v2555 = vadd.f32 %v2487, %v2523
  %v2556 = vadd.f32 %v2488, %v2524
  %v2557 = vadd.f32 %v2489, %v2525
  %v2558 = vadd.f32 %v2490, %v2526
  %v2559 = vadd.f32 %v2491, %v2527
  %v2560 = vadd.f32 %v2492, %v2528
  %v2561 = vadd.f32 %v2493, %v2529
  %v2562 = vadd.f32 %v2494, %v2530
  %v2563 = vadd.f32 %v2495, %v2531
  %v2564 = vadd.f32 %v2496, %v2532
  %v2565 = vadd.f32 %v2497, %v2533
  %v2566 = vlaneseq
  %v2567 = vshrl.u32 %v2566, 7
  %v2568 = vsub.s32 3, %v2567
  %v2569 = vrot.slane %v613, %v2568
  %v2570 = vmul.f32 %v565, %v2569
  %v2571 = vmul.f32 %v394, %v2569
  %v2572 = vmul.f32 %v598, %v2569
  %v2573 = vmul.f32 %v564, %v2569
  %v2574 = vmul.f32 %v391, %v2569
  %v2575 = vmul.f32 %v597, %v2569
  %v2576 = vmul.f32 %v563, %v2569
  %v2577 = vmul.f32 %v388, %v2569
  %v2578 = vmul.f32 %v596, %v2569
  %v2579 = vmul.f32 %v566, %v2569
  %v2580 = vmul.f32 %v397, %v2569
  %v2581 = vmul.f32 %v599, %v2569
  %v2582 = vmul.f32 %v567, %v2569
  %v2583 = vmul.f32 %v400, %v2569
  %v2584 = vmul.f32 %v600, %v2569
  %v2585 = vmul.f32 %v568, %v2569
  %v2586 = vmul.f32 %v403, %v2569
  %v2587 = vmul.f32 %v601, %v2569
  %v2588 = vmul.f32 %v569, %v2569
  %v2589 = vmul.f32 %v406, %v2569
  %v2590 = vmul.f32 %v602, %v2569
  %v2591 = vmul.f32 %v570, %v2569
  %v2592 = vmul.f32 %v409, %v2569
  %v2593 = vmul.f32 %v603, %v2569
  %v2594 = vmul.f32 %v571, %v2569
  %v2595 = vmul.f32 %v412, %v2569
  %v2596 = vmul.f32 %v604, %v2569
  %v2597 = vmul.f32 %v572, %v2569
  %v2598 = vmul.f32 %v415, %v2569
  %v2599 = vmul.f32 %v605, %v2569
  %v2600 = vmul.f32 %v573, %v2569
  %v2601 = vmul.f32 %v418, %v2569
  %v2602 = vmul.f32 %v606, %v2569
  %v2603 = vmul.f32 %v574, %v2569
  %v2604 = vmul.f32 %v421, %v2569
  %v2605 = vmul.f32 %v607, %v2569
  %v2606 = vmul.f32 %v575, %v2569
  %v2607 = vmul.f32 %v424, %v2569
  %v2608 = vmul.f32 %v608, %v2569
  %v2609 = vmul.f32 %v576, %v2569
  %v2610 = vmul.f32 %v427, %v2569
  %v2611 = vmul.f32 %v609, %v2569
  %v2612 = vmul.f32 %v577, %v2569
  %v2613 = vmul.f32 %v430, %v2569
  %v2614 = vmul.f32 %v610, %v2569
  %v2615 = vmul.f32 %v578, %v2569
  %v2616 = vmul.f32 %v433, %v2569
  %v2617 = vmul.f32 %v611, %v2569
  %v2666 = vrot.slane %v2570, 1
  %v2667 = vrot.slane %v2571, 1
  %v2668 = vsel %vm736, %v2666, %v2667
  %v2669 = vrot.slane %v2572, 1
  %v2670 = vsel %vm736, %v2667, %v2669
  %v2671 = vrot.slane %v2573, 1
  %v2672 = vrot.slane %v2574, 1
  %v2673 = vsel %vm736, %v2671, %v2672
  %v2674 = vrot.slane %v2575, 1
  %v2675 = vsel %vm736, %v2672, %v2674
  %v2676 = vrot.slane %v2576, 1
  %v2677 = vrot.slane %v2577, 1
  %v2678 = vsel %vm736, %v2676, %v2677
  %v2679 = vrot.slane %v2578, 1
  %v2680 = vsel %vm736, %v2677, %v2679
  %v2681 = vrot.slane %v2579, 1
  %v2682 = vrot.slane %v2580, 1
  %v2683 = vsel %vm736, %v2681, %v2682
  %v2684 = vrot.slane %v2581, 1
  %v2685 = vsel %vm736, %v2682, %v2684
  %v2686 = vrot.slane %v2582, 1
  %v2687 = vrot.slane %v2583, 1
  %v2688 = vsel %vm736, %v2686, %v2687
  %v2689 = vrot.slane %v2584, 1
  %v2690 = vsel %vm736, %v2687, %v2689
  %v2691 = vrot.slane %v2585, 1
  %v2692 = vrot.slane %v2586, 1
  %v2693 = vsel %vm736, %v2691, %v2692
  %v2694 = vrot.slane %v2587, 1
  %v2695 = vsel %vm736, %v2692, %v2694
  %v2696 = vrot.slane %v2588, 1
  %v2697 = vrot.slane %v2589, 1
  %v2698 = vsel %vm736, %v2696, %v2697
  %v2699 = vrot.slane %v2590, 1
  %v2700 = vsel %vm736, %v2697, %v2699
  %v2701 = vrot.slane %v2591, 1
  %v2702 = vrot.slane %v2592, 1
  %v2703 = vsel %vm736, %v2701, %v2702
  %v2704 = vrot.slane %v2593, 1
  %v2705 = vsel %vm736, %v2702, %v2704
  %v2706 = vrot.slane %v2594, 1
  %v2707 = vrot.slane %v2595, 1
  %v2708 = vsel %vm736, %v2706, %v2707
  %v2709 = vrot.slane %v2596, 1
  %v2710 = vsel %vm736, %v2707, %v2709
  %v2711 = vrot.slane %v2597, 1
  %v2712 = vrot.slane %v2598, 1
  %v2713 = vsel %vm736, %v2711, %v2712
  %v2714 = vrot.slane %v2599, 1
  %v2715 = vsel %vm736, %v2712, %v2714
  %v2716 = vrot.slane %v2600, 1
  %v2717 = vrot.slane %v2601, 1
  %v2718 = vsel %vm736, %v2716, %v2717
  %v2719 = vrot.slane %v2602, 1
  %v2720 = vsel %vm736, %v2717, %v2719
  %v2721 = vrot.slane %v2603, 1
  %v2722 = vrot.slane %v2604, 1
  %v2723 = vsel %vm736, %v2721, %v2722
  %v2724 = vrot.slane %v2605, 1
  %v2725 = vsel %vm736, %v2722, %v2724
  %v2726 = vrot.slane %v2606, 1
  %v2727 = vrot.slane %v2607, 1
  %v2728 = vsel %vm736, %v2726, %v2727
  %v2729 = vrot.slane %v2608, 1
  %v2730 = vsel %vm736, %v2727, %v2729
  %v2731 = vrot.slane %v2609, 1
  %v2732 = vrot.slane %v2610, 1
  %v2733 = vsel %vm736, %v2731, %v2732
  %v2734 = vrot.slane %v2611, 1
  %v2735 = vsel %vm736, %v2732, %v2734
  %v2736 = vrot.slane %v2612, 1
  %v2737 = vrot.slane %v2613, 1
  %v2738 = vsel %vm736, %v2736, %v2737
  %v2739 = vrot.slane %v2614, 1
  %v2740 = vsel %vm736, %v2737, %v2739
  %v2741 = vrot.slane %v2615, 1
  %v2742 = vrot.slane %v2616, 1
  %v2743 = vsel %vm736, %v2741, %v2742
  %v2744 = vrot.slane %v2617, 1
  %v2745 = vsel %vm736, %v2742, %v2744
  %v2778 = vadd.f32 %v2534, %v2668
  %v2779 = vadd.f32 %v2535, %v2670
  %v2780 = vadd.f32 %v2536, %v2673
  %v2781 = vadd.f32 %v2537, %v2675
  %v2782 = vadd.f32 %v2538, %v2678
  %v2783 = vadd.f32 %v2539, %v2680
  %v2784 = vadd.f32 %v2540, %v2683
  %v2785 = vadd.f32 %v2541, %v2685
  %v2786 = vadd.f32 %v2542, %v2688
  %v2787 = vadd.f32 %v2543, %v2690
  %v2788 = vadd.f32 %v2544, %v2693
  %v2789 = vadd.f32 %v2545, %v2695
  %v2790 = vadd.f32 %v2546, %v2698
  %v2791 = vadd.f32 %v2547, %v2700
  %v2792 = vadd.f32 %v2548, %v2703
  %v2793 = vadd.f32 %v2549, %v2705
  %v2794 = vadd.f32 %v2550, %v2708
  %v2795 = vadd.f32 %v2551, %v2710
  %v2796 = vadd.f32 %v2552, %v2713
  %v2797 = vadd.f32 %v2553, %v2715
  %v2798 = vadd.f32 %v2554, %v2718
  %v2799 = vadd.f32 %v2555, %v2720
  %v2800 = vadd.f32 %v2556, %v2723
  %v2801 = vadd.f32 %v2557, %v2725
  %v2802 = vadd.f32 %v2558, %v2728
  %v2803 = vadd.f32 %v2559, %v2730
  %v2804 = vadd.f32 %v2560, %v2733
  %v2805 = vadd.f32 %v2561, %v2735
  %v2806 = vadd.f32 %v2562, %v2738
  %v2807 = vadd.f32 %v2563, %v2740
  %v2808 = vadd.f32 %v2564, %v2743
  %v2809 = vadd.f32 %v2565, %v2745
  %v2810 = vlaneseq
  %v2811 = vshrl.u32 %v2810, 7
  %v2812 = vsub.s32 4, %v2811
  %v2813 = vrot.slane %v613, %v2812
  %v2814 = vmul.f32 %v565, %v2813
  %v2815 = vmul.f32 %v394, %v2813
  %v2816 = vmul.f32 %v598, %v2813
  %v2817 = vmul.f32 %v564, %v2813
  %v2818 = vmul.f32 %v391, %v2813
  %v2819 = vmul.f32 %v597, %v2813
  %v2820 = vmul.f32 %v563, %v2813
  %v2821 = vmul.f32 %v388, %v2813
  %v2822 = vmul.f32 %v596, %v2813
  %v2823 = vmul.f32 %v566, %v2813
  %v2824 = vmul.f32 %v397, %v2813
  %v2825 = vmul.f32 %v599, %v2813
  %v2826 = vmul.f32 %v567, %v2813
  %v2827 = vmul.f32 %v400, %v2813
  %v2828 = vmul.f32 %v600, %v2813
  %v2829 = vmul.f32 %v568, %v2813
  %v2830 = vmul.f32 %v403, %v2813
  %v2831 = vmul.f32 %v601, %v2813
  %v2832 = vmul.f32 %v569, %v2813
  %v2833 = vmul.f32 %v406, %v2813
  %v2834 = vmul.f32 %v602, %v2813
  %v2835 = vmul.f32 %v570, %v2813
  %v2836 = vmul.f32 %v409, %v2813
  %v2837 = vmul.f32 %v603, %v2813
  %v2838 = vmul.f32 %v571, %v2813
  %v2839 = vmul.f32 %v412, %v2813
  %v2840 = vmul.f32 %v604, %v2813
  %v2841 = vmul.f32 %v572, %v2813
  %v2842 = vmul.f32 %v415, %v2813
  %v2843 = vmul.f32 %v605, %v2813
  %v2844 = vmul.f32 %v573, %v2813
  %v2845 = vmul.f32 %v418, %v2813
  %v2846 = vmul.f32 %v606, %v2813
  %v2847 = vmul.f32 %v574, %v2813
  %v2848 = vmul.f32 %v421, %v2813
  %v2849 = vmul.f32 %v607, %v2813
  %v2850 = vmul.f32 %v575, %v2813
  %v2851 = vmul.f32 %v424, %v2813
  %v2852 = vmul.f32 %v608, %v2813
  %v2853 = vmul.f32 %v576, %v2813
  %v2854 = vmul.f32 %v427, %v2813
  %v2855 = vmul.f32 %v609, %v2813
  %v2856 = vmul.f32 %v577, %v2813
  %v2857 = vmul.f32 %v430, %v2813
  %v2858 = vmul.f32 %v610, %v2813
  %v2859 = vmul.f32 %v578, %v2813
  %v2860 = vmul.f32 %v433, %v2813
  %v2861 = vmul.f32 %v611, %v2813
  %v2910 = vrot.slane %v2814, 2
  %v2911 = vrot.slane %v2815, 2
  %v2912 = vsel %vm951, %v2910, %v2911
  %v2913 = vrot.slane %v2816, 2
  %v2914 = vsel %vm951, %v2911, %v2913
  %v2915 = vrot.slane %v2817, 2
  %v2916 = vrot.slane %v2818, 2
  %v2917 = vsel %vm951, %v2915, %v2916
  %v2918 = vrot.slane %v2819, 2
  %v2919 = vsel %vm951, %v2916, %v2918
  %v2920 = vrot.slane %v2820, 2
  %v2921 = vrot.slane %v2821, 2
  %v2922 = vsel %vm951, %v2920, %v2921
  %v2923 = vrot.slane %v2822, 2
  %v2924 = vsel %vm951, %v2921, %v2923
  %v2925 = vrot.slane %v2823, 2
  %v2926 = vrot.slane %v2824, 2
  %v2927 = vsel %vm951, %v2925, %v2926
  %v2928 = vrot.slane %v2825, 2
  %v2929 = vsel %vm951, %v2926, %v2928
  %v2930 = vrot.slane %v2826, 2
  %v2931 = vrot.slane %v2827, 2
  %v2932 = vsel %vm951, %v2930, %v2931
  %v2933 = vrot.slane %v2828, 2
  %v2934 = vsel %vm951, %v2931, %v2933
  %v2935 = vrot.slane %v2829, 2
  %v2936 = vrot.slane %v2830, 2
  %v2937 = vsel %vm951, %v2935, %v2936
  %v2938 = vrot.slane %v2831, 2
  %v2939 = vsel %vm951, %v2936, %v2938
  %v2940 = vrot.slane %v2832, 2
  %v2941 = vrot.slane %v2833, 2
  %v2942 = vsel %vm951, %v2940, %v2941
  %v2943 = vrot.slane %v2834, 2
  %v2944 = vsel %vm951, %v2941, %v2943
  %v2945 = vrot.slane %v2835, 2
  %v2946 = vrot.slane %v2836, 2
  %v2947 = vsel %vm951, %v2945, %v2946
  %v2948 = vrot.slane %v2837, 2
  %v2949 = vsel %vm951, %v2946, %v2948
  %v2950 = vrot.slane %v2838, 2
  %v2951 = vrot.slane %v2839, 2
  %v2952 = vsel %vm951, %v2950, %v2951
  %v2953 = vrot.slane %v2840, 2
  %v2954 = vsel %vm951, %v2951, %v2953
  %v2955 = vrot.slane %v2841, 2
  %v2956 = vrot.slane %v2842, 2
  %v2957 = vsel %vm951, %v2955, %v2956
  %v2958 = vrot.slane %v2843, 2
  %v2959 = vsel %vm951, %v2956, %v2958
  %v2960 = vrot.slane %v2844, 2
  %v2961 = vrot.slane %v2845, 2
  %v2962 = vsel %vm951, %v2960, %v2961
  %v2963 = vrot.slane %v2846, 2
  %v2964 = vsel %vm951, %v2961, %v2963
  %v2965 = vrot.slane %v2847, 2
  %v2966 = vrot.slane %v2848, 2
  %v2967 = vsel %vm951, %v2965, %v2966
  %v2968 = vrot.slane %v2849, 2
  %v2969 = vsel %vm951, %v2966, %v2968
  %v2970 = vrot.slane %v2850, 2
  %v2971 = vrot.slane %v2851, 2
  %v2972 = vsel %vm951, %v2970, %v2971
  %v2973 = vrot.slane %v2852, 2
  %v2974 = vsel %vm951, %v2971, %v2973
  %v2975 = vrot.slane %v2853, 2
  %v2976 = vrot.slane %v2854, 2
  %v2977 = vsel %vm951, %v2975, %v2976
  %v2978 = vrot.slane %v2855, 2
  %v2979 = vsel %vm951, %v2976, %v2978
  %v2980 = vrot.slane %v2856, 2
  %v2981 = vrot.slane %v2857, 2
  %v2982 = vsel %vm951, %v2980, %v2981
  %v2983 = vrot.slane %v2858, 2
  %v2984 = vsel %vm951, %v2981, %v2983
  %v2985 = vrot.slane %v2859, 2
  %v2986 = vrot.slane %v2860, 2
  %v2987 = vsel %vm951, %v2985, %v2986
  %v2988 = vrot.slane %v2861, 2
  %v2989 = vsel %vm951, %v2986, %v2988
  %v3022 = vadd.f32 %v2778, %v2912
  %v3023 = vadd.f32 %v2779, %v2914
  %v3024 = vadd.f32 %v2780, %v2917
  %v3025 = vadd.f32 %v2781, %v2919
  %v3026 = vadd.f32 %v2782, %v2922
  %v3027 = vadd.f32 %v2783, %v2924
  %v3028 = vadd.f32 %v2784, %v2927
  %v3029 = vadd.f32 %v2785, %v2929
  %v3030 = vadd.f32 %v2786, %v2932
  %v3031 = vadd.f32 %v2787, %v2934
  %v3032 = vadd.f32 %v2788, %v2937
  %v3033 = vadd.f32 %v2789, %v2939
  %v3034 = vadd.f32 %v2790, %v2942
  %v3035 = vadd.f32 %v2791, %v2944
  %v3036 = vadd.f32 %v2792, %v2947
  %v3037 = vadd.f32 %v2793, %v2949
  %v3038 = vadd.f32 %v2794, %v2952
  %v3039 = vadd.f32 %v2795, %v2954
  %v3040 = vadd.f32 %v2796, %v2957
  %v3041 = vadd.f32 %v2797, %v2959
  %v3042 = vadd.f32 %v2798, %v2962
  %v3043 = vadd.f32 %v2799, %v2964
  %v3044 = vadd.f32 %v2800, %v2967
  %v3045 = vadd.f32 %v2801, %v2969
  %v3046 = vadd.f32 %v2802, %v2972
  %v3047 = vadd.f32 %v2803, %v2974
  %v3048 = vadd.f32 %v2804, %v2977
  %v3049 = vadd.f32 %v2805, %v2979
  %v3050 = vadd.f32 %v2806, %v2982
  %v3051 = vadd.f32 %v2807, %v2984
  %v3052 = vadd.f32 %v2808, %v2987
  %v3053 = vadd.f32 %v2809, %v2989
  %v3054 = vlaneseq
  %v3055 = vshrl.u32 %v3054, 7
  %v3056 = vsub.s32 5, %v3055
  %v3057 = vrot.slane %v613, %v3056
  %v3058 = vmul.f32 %v565, %v3057
  %v3059 = vmul.f32 %v394, %v3057
  %v3060 = vmul.f32 %v598, %v3057
  %v3061 = vmul.f32 %v564, %v3057
  %v3062 = vmul.f32 %v391, %v3057
  %v3063 = vmul.f32 %v597, %v3057
  %v3064 = vmul.f32 %v563, %v3057
  %v3065 = vmul.f32 %v388, %v3057
  %v3066 = vmul.f32 %v596, %v3057
  %v3067 = vmul.f32 %v566, %v3057
  %v3068 = vmul.f32 %v397, %v3057
  %v3069 = vmul.f32 %v599, %v3057
  %v3070 = vmul.f32 %v567, %v3057
  %v3071 = vmul.f32 %v400, %v3057
  %v3072 = vmul.f32 %v600, %v3057
  %v3073 = vmul.f32 %v568, %v3057
  %v3074 = vmul.f32 %v403, %v3057
  %v3075 = vmul.f32 %v601, %v3057
  %v3076 = vmul.f32 %v569, %v3057
  %v3077 = vmul.f32 %v406, %v3057
  %v3078 = vmul.f32 %v602, %v3057
  %v3079 = vmul.f32 %v570, %v3057
  %v3080 = vmul.f32 %v409, %v3057
  %v3081 = vmul.f32 %v603, %v3057
  %v3082 = vmul.f32 %v571, %v3057
  %v3083 = vmul.f32 %v412, %v3057
  %v3084 = vmul.f32 %v604, %v3057
  %v3085 = vmul.f32 %v572, %v3057
  %v3086 = vmul.f32 %v415, %v3057
  %v3087 = vmul.f32 %v605, %v3057
  %v3088 = vmul.f32 %v573, %v3057
  %v3089 = vmul.f32 %v418, %v3057
  %v3090 = vmul.f32 %v606, %v3057
  %v3091 = vmul.f32 %v574, %v3057
  %v3092 = vmul.f32 %v421, %v3057
  %v3093 = vmul.f32 %v607, %v3057
  %v3094 = vmul.f32 %v575, %v3057
  %v3095 = vmul.f32 %v424, %v3057
  %v3096 = vmul.f32 %v608, %v3057
  %v3097 = vmul.f32 %v576, %v3057
  %v3098 = vmul.f32 %v427, %v3057
  %v3099 = vmul.f32 %v609, %v3057
  %v3100 = vmul.f32 %v577, %v3057
  %v3101 = vmul.f32 %v430, %v3057
  %v3102 = vmul.f32 %v610, %v3057
  %v3103 = vmul.f32 %v578, %v3057
  %v3104 = vmul.f32 %v433, %v3057
  %v3105 = vmul.f32 %v611, %v3057
  %v3154 = vrot.slane %v3058, 3
  %v3155 = vrot.slane %v3059, 3
  %v3156 = vsel %vm1166, %v3154, %v3155
  %v3157 = vrot.slane %v3060, 3
  %v3158 = vsel %vm1166, %v3155, %v3157
  %v3159 = vrot.slane %v3061, 3
  %v3160 = vrot.slane %v3062, 3
  %v3161 = vsel %vm1166, %v3159, %v3160
  %v3162 = vrot.slane %v3063, 3
  %v3163 = vsel %vm1166, %v3160, %v3162
  %v3164 = vrot.slane %v3064, 3
  %v3165 = vrot.slane %v3065, 3
  %v3166 = vsel %vm1166, %v3164, %v3165
  %v3167 = vrot.slane %v3066, 3
  %v3168 = vsel %vm1166, %v3165, %v3167
  %v3169 = vrot.slane %v3067, 3
  %v3170 = vrot.slane %v3068, 3
  %v3171 = vsel %vm1166, %v3169, %v3170
  %v3172 = vrot.slane %v3069, 3
  %v3173 = vsel %vm1166, %v3170, %v3172
  %v3174 = vrot.slane %v3070, 3
  %v3175 = vrot.slane %v3071, 3
  %v3176 = vsel %vm1166, %v3174, %v3175
  %v3177 = vrot.slane %v3072, 3
  %v3178 = vsel %vm1166, %v3175, %v3177
  %v3179 = vrot.slane %v3073, 3
  %v3180 = vrot.slane %v3074, 3
  %v3181 = vsel %vm1166, %v3179, %v3180
  %v3182 = vrot.slane %v3075, 3
  %v3183 = vsel %vm1166, %v3180, %v3182
  %v3184 = vrot.slane %v3076, 3
  %v3185 = vrot.slane %v3077, 3
  %v3186 = vsel %vm1166, %v3184, %v3185
  %v3187 = vrot.slane %v3078, 3
  %v3188 = vsel %vm1166, %v3185, %v3187
  %v3189 = vrot.slane %v3079, 3
  %v3190 = vrot.slane %v3080, 3
  %v3191 = vsel %vm1166, %v3189, %v3190
  %v3192 = vrot.slane %v3081, 3
  %v3193 = vsel %vm1166, %v3190, %v3192
  %v3194 = vrot.slane %v3082, 3
  %v3195 = vrot.slane %v3083, 3
  %v3196 = vsel %vm1166, %v3194, %v3195
  %v3197 = vrot.slane %v3084, 3
  %v3198 = vsel %vm1166, %v3195, %v3197
  %v3199 = vrot.slane %v3085, 3
  %v3200 = vrot.slane %v3086, 3
  %v3201 = vsel %vm1166, %v3199, %v3200
  %v3202 = vrot.slane %v3087, 3
  %v3203 = vsel %vm1166, %v3200, %v3202
  %v3204 = vrot.slane %v3088, 3
  %v3205 = vrot.slane %v3089, 3
  %v3206 = vsel %vm1166, %v3204, %v3205
  %v3207 = vrot.slane %v3090, 3
  %v3208 = vsel %vm1166, %v3205, %v3207
  %v3209 = vrot.slane %v3091, 3
  %v3210 = vrot.slane %v3092, 3
  %v3211 = vsel %vm1166, %v3209, %v3210
  %v3212 = vrot.slane %v3093, 3
  %v3213 = vsel %vm1166, %v3210, %v3212
  %v3214 = vrot.slane %v3094, 3
  %v3215 = vrot.slane %v3095, 3
  %v3216 = vsel %vm1166, %v3214, %v3215
  %v3217 = vrot.slane %v3096, 3
  %v3218 = vsel %vm1166, %v3215, %v3217
  %v3219 = vrot.slane %v3097, 3
  %v3220 = vrot.slane %v3098, 3
  %v3221 = vsel %vm1166, %v3219, %v3220
  %v3222 = vrot.slane %v3099, 3
  %v3223 = vsel %vm1166, %v3220, %v3222
  %v3224 = vrot.slane %v3100, 3
  %v3225 = vrot.slane %v3101, 3
  %v3226 = vsel %vm1166, %v3224, %v3225
  %v3227 = vrot.slane %v3102, 3
  %v3228 = vsel %vm1166, %v3225, %v3227
  %v3229 = vrot.slane %v3103, 3
  %v3230 = vrot.slane %v3104, 3
  %v3231 = vsel %vm1166, %v3229, %v3230
  %v3232 = vrot.slane %v3105, 3
  %v3233 = vsel %vm1166, %v3230, %v3232
  %v3266 = vadd.f32 %v3022, %v3156
  %v3267 = vadd.f32 %v3023, %v3158
  %v3268 = vadd.f32 %v3024, %v3161
  %v3269 = vadd.f32 %v3025, %v3163
  %v3270 = vadd.f32 %v3026, %v3166
  %v3271 = vadd.f32 %v3027, %v3168
  %v3272 = vadd.f32 %v3028, %v3171
  %v3273 = vadd.f32 %v3029, %v3173
  %v3274 = vadd.f32 %v3030, %v3176
  %v3275 = vadd.f32 %v3031, %v3178
  %v3276 = vadd.f32 %v3032, %v3181
  %v3277 = vadd.f32 %v3033, %v3183
  %v3278 = vadd.f32 %v3034, %v3186
  %v3279 = vadd.f32 %v3035, %v3188
  %v3280 = vadd.f32 %v3036, %v3191
  %v3281 = vadd.f32 %v3037, %v3193
  %v3282 = vadd.f32 %v3038, %v3196
  %v3283 = vadd.f32 %v3039, %v3198
  %v3284 = vadd.f32 %v3040, %v3201
  %v3285 = vadd.f32 %v3041, %v3203
  %v3286 = vadd.f32 %v3042, %v3206
  %v3287 = vadd.f32 %v3043, %v3208
  %v3288 = vadd.f32 %v3044, %v3211
  %v3289 = vadd.f32 %v3045, %v3213
  %v3290 = vadd.f32 %v3046, %v3216
  %v3291 = vadd.f32 %v3047, %v3218
  %v3292 = vadd.f32 %v3048, %v3221
  %v3293 = vadd.f32 %v3049, %v3223
  %v3294 = vadd.f32 %v3050, %v3226
  %v3295 = vadd.f32 %v3051, %v3228
  %v3296 = vadd.f32 %v3052, %v3231
  %v3297 = vadd.f32 %v3053, %v3233
  %v3298 = vlaneseq
  %v3299 = vshrl.u32 %v3298, 7
  %v3300 = vsub.s32 6, %v3299
  %v3301 = vrot.slane %v613, %v3300
  %v3302 = vmul.f32 %v565, %v3301
  %v3303 = vmul.f32 %v394, %v3301
  %v3304 = vmul.f32 %v598, %v3301
  %v3305 = vmul.f32 %v564, %v3301
  %v3306 = vmul.f32 %v391, %v3301
  %v3307 = vmul.f32 %v597, %v3301
  %v3308 = vmul.f32 %v563, %v3301
  %v3309 = vmul.f32 %v388, %v3301
  %v3310 = vmul.f32 %v596, %v3301
  %v3311 = vmul.f32 %v566, %v3301
  %v3312 = vmul.f32 %v397, %v3301
  %v3313 = vmul.f32 %v599, %v3301
  %v3314 = vmul.f32 %v567, %v3301
  %v3315 = vmul.f32 %v400, %v3301
  %v3316 = vmul.f32 %v600, %v3301
  %v3317 = vmul.f32 %v568, %v3301
  %v3318 = vmul.f32 %v403, %v3301
  %v3319 = vmul.f32 %v601, %v3301
  %v3320 = vmul.f32 %v569, %v3301
  %v3321 = vmul.f32 %v406, %v3301
  %v3322 = vmul.f32 %v602, %v3301
  %v3323 = vmul.f32 %v570, %v3301
  %v3324 = vmul.f32 %v409, %v3301
  %v3325 = vmul.f32 %v603, %v3301
  %v3326 = vmul.f32 %v571, %v3301
  %v3327 = vmul.f32 %v412, %v3301
  %v3328 = vmul.f32 %v604, %v3301
  %v3329 = vmul.f32 %v572, %v3301
  %v3330 = vmul.f32 %v415, %v3301
  %v3331 = vmul.f32 %v605, %v3301
  %v3332 = vmul.f32 %v573, %v3301
  %v3333 = vmul.f32 %v418, %v3301
  %v3334 = vmul.f32 %v606, %v3301
  %v3335 = vmul.f32 %v574, %v3301
  %v3336 = vmul.f32 %v421, %v3301
  %v3337 = vmul.f32 %v607, %v3301
  %v3338 = vmul.f32 %v575, %v3301
  %v3339 = vmul.f32 %v424, %v3301
  %v3340 = vmul.f32 %v608, %v3301
  %v3341 = vmul.f32 %v576, %v3301
  %v3342 = vmul.f32 %v427, %v3301
  %v3343 = vmul.f32 %v609, %v3301
  %v3344 = vmul.f32 %v577, %v3301
  %v3345 = vmul.f32 %v430, %v3301
  %v3346 = vmul.f32 %v610, %v3301
  %v3347 = vmul.f32 %v578, %v3301
  %v3348 = vmul.f32 %v433, %v3301
  %v3349 = vmul.f32 %v611, %v3301
  %v3398 = vrot.slane %v3302, 4
  %v3399 = vrot.slane %v3303, 4
  %v3400 = vsel %vm1381, %v3398, %v3399
  %v3401 = vrot.slane %v3304, 4
  %v3402 = vsel %vm1381, %v3399, %v3401
  %v3403 = vrot.slane %v3305, 4
  %v3404 = vrot.slane %v3306, 4
  %v3405 = vsel %vm1381, %v3403, %v3404
  %v3406 = vrot.slane %v3307, 4
  %v3407 = vsel %vm1381, %v3404, %v3406
  %v3408 = vrot.slane %v3308, 4
  %v3409 = vrot.slane %v3309, 4
  %v3410 = vsel %vm1381, %v3408, %v3409
  %v3411 = vrot.slane %v3310, 4
  %v3412 = vsel %vm1381, %v3409, %v3411
  %v3413 = vrot.slane %v3311, 4
  %v3414 = vrot.slane %v3312, 4
  %v3415 = vsel %vm1381, %v3413, %v3414
  %v3416 = vrot.slane %v3313, 4
  %v3417 = vsel %vm1381, %v3414, %v3416
  %v3418 = vrot.slane %v3314, 4
  %v3419 = vrot.slane %v3315, 4
  %v3420 = vsel %vm1381, %v3418, %v3419
  %v3421 = vrot.slane %v3316, 4
  %v3422 = vsel %vm1381, %v3419, %v3421
  %v3423 = vrot.slane %v3317, 4
  %v3424 = vrot.slane %v3318, 4
  %v3425 = vsel %vm1381, %v3423, %v3424
  %v3426 = vrot.slane %v3319, 4
  %v3427 = vsel %vm1381, %v3424, %v3426
  %v3428 = vrot.slane %v3320, 4
  %v3429 = vrot.slane %v3321, 4
  %v3430 = vsel %vm1381, %v3428, %v3429
  %v3431 = vrot.slane %v3322, 4
  %v3432 = vsel %vm1381, %v3429, %v3431
  %v3433 = vrot.slane %v3323, 4
  %v3434 = vrot.slane %v3324, 4
  %v3435 = vsel %vm1381, %v3433, %v3434
  %v3436 = vrot.slane %v3325, 4
  %v3437 = vsel %vm1381, %v3434, %v3436
  %v3438 = vrot.slane %v3326, 4
  %v3439 = vrot.slane %v3327, 4
  %v3440 = vsel %vm1381, %v3438, %v3439
  %v3441 = vrot.slane %v3328, 4
  %v3442 = vsel %vm1381, %v3439, %v3441
  %v3443 = vrot.slane %v3329, 4
  %v3444 = vrot.slane %v3330, 4
  %v3445 = vsel %vm1381, %v3443, %v3444
  %v3446 = vrot.slane %v3331, 4
  %v3447 = vsel %vm1381, %v3444, %v3446
  %v3448 = vrot.slane %v3332, 4
  %v3449 = vrot.slane %v3333, 4
  %v3450 = vsel %vm1381, %v3448, %v3449
  %v3451 = vrot.slane %v3334, 4
  %v3452 = vsel %vm1381, %v3449, %v3451
  %v3453 = vrot.slane %v3335, 4
  %v3454 = vrot.slane %v3336, 4
  %v3455 = vsel %vm1381, %v3453, %v3454
  %v3456 = vrot.slane %v3337, 4
  %v3457 = vsel %vm1381, %v3454, %v3456
  %v3458 = vrot.slane %v3338, 4
  %v3459 = vrot.slane %v3339, 4
  %v3460 = vsel %vm1381, %v3458, %v3459
  %v3461 = vrot.slane %v3340, 4
  %v3462 = vsel %vm1381, %v3459, %v3461
  %v3463 = vrot.slane %v3341, 4
  %v3464 = vrot.slane %v3342, 4
  %v3465 = vsel %vm1381, %v3463, %v3464
  %v3466 = vrot.slane %v3343, 4
  %v3467 = vsel %vm1381, %v3464, %v3466
  %v3468 = vrot.slane %v3344, 4
  %v3469 = vrot.slane %v3345, 4
  %v3470 = vsel %vm1381, %v3468, %v3469
  %v3471 = vrot.slane %v3346, 4
  %v3472 = vsel %vm1381, %v3469, %v3471
  %v3473 = vrot.slane %v3347, 4
  %v3474 = vrot.slane %v3348, 4
  %v3475 = vsel %vm1381, %v3473, %v3474
  %v3476 = vrot.slane %v3349, 4
  %v3477 = vsel %vm1381, %v3474, %v3476
  %v3510 = vadd.f32 %v3266, %v3400
  %v3511 = vadd.f32 %v3267, %v3402
  %v3512 = vadd.f32 %v3268, %v3405
  %v3513 = vadd.f32 %v3269, %v3407
  %v3514 = vadd.f32 %v3270, %v3410
  %v3515 = vadd.f32 %v3271, %v3412
  %v3516 = vadd.f32 %v3272, %v3415
  %v3517 = vadd.f32 %v3273, %v3417
  %v3518 = vadd.f32 %v3274, %v3420
  %v3519 = vadd.f32 %v3275, %v3422
  %v3520 = vadd.f32 %v3276, %v3425
  %v3521 = vadd.f32 %v3277, %v3427
  %v3522 = vadd.f32 %v3278, %v3430
  %v3523 = vadd.f32 %v3279, %v3432
  %v3524 = vadd.f32 %v3280, %v3435
  %v3525 = vadd.f32 %v3281, %v3437
  %v3526 = vadd.f32 %v3282, %v3440
  %v3527 = vadd.f32 %v3283, %v3442
  %v3528 = vadd.f32 %v3284, %v3445
  %v3529 = vadd.f32 %v3285, %v3447
  %v3530 = vadd.f32 %v3286, %v3450
  %v3531 = vadd.f32 %v3287, %v3452
  %v3532 = vadd.f32 %v3288, %v3455
  %v3533 = vadd.f32 %v3289, %v3457
  %v3534 = vadd.f32 %v3290, %v3460
  %v3535 = vadd.f32 %v3291, %v3462
  %v3536 = vadd.f32 %v3292, %v3465
  %v3537 = vadd.f32 %v3293, %v3467
  %v3538 = vadd.f32 %v3294, %v3470
  %v3539 = vadd.f32 %v3295, %v3472
  %v3540 = vadd.f32 %v3296, %v3475
  %v3541 = vadd.f32 %v3297, %v3477
  %v3542 = vlaneseq
  %v3543 = vshrl.u32 %v3542, 7
  %v3544 = vsub.s32 7, %v3543
  %v3545 = vrot.slane %v613, %v3544
  %v3546 = vmul.f32 %v564, %v3545
  %v3547 = vmul.f32 %v391, %v3545
  %v3548 = vmul.f32 %v563, %v3545
  %v3549 = vmul.f32 %v388, %v3545
  %v3550 = vmul.f32 %v566, %v3545
  %v3551 = vmul.f32 %v397, %v3545
  %v3552 = vmul.f32 %v567, %v3545
  %v3553 = vmul.f32 %v400, %v3545
  %v3554 = vmul.f32 %v568, %v3545
  %v3555 = vmul.f32 %v403, %v3545
  %v3556 = vmul.f32 %v569, %v3545
  %v3557 = vmul.f32 %v406, %v3545
  %v3558 = vmul.f32 %v570, %v3545
  %v3559 = vmul.f32 %v409, %v3545
  %v3560 = vmul.f32 %v571, %v3545
  %v3561 = vmul.f32 %v412, %v3545
  %v3562 = vmul.f32 %v572, %v3545
  %v3563 = vmul.f32 %v415, %v3545
  %v3564 = vmul.f32 %v573, %v3545
  %v3565 = vmul.f32 %v418, %v3545
  %v3566 = vmul.f32 %v574, %v3545
  %v3567 = vmul.f32 %v421, %v3545
  %v3568 = vmul.f32 %v575, %v3545
  %v3569 = vmul.f32 %v424, %v3545
  %v3570 = vmul.f32 %v576, %v3545
  %v3571 = vmul.f32 %v427, %v3545
  %v3572 = vmul.f32 %v577, %v3545
  %v3573 = vmul.f32 %v430, %v3545
  %v3574 = vmul.f32 %v578, %v3545
  %v3575 = vmul.f32 %v433, %v3545
  %v3576 = vadd.f32 %v3510, %v3546
  %v3577 = vadd.f32 %v3511, %v3547
  %v3578 = vadd.f32 %v3512, %v3548
  %v3579 = vadd.f32 %v3513, %v3549
  %v3580 = vadd.f32 %v3514, %v3550
  %v3581 = vadd.f32 %v3515, %v3551
  %v3582 = vadd.f32 %v3516, %v3552
  %v3583 = vadd.f32 %v3517, %v3553
  %v3584 = vadd.f32 %v3518, %v3554
  %v3585 = vadd.f32 %v3519, %v3555
  %v3586 = vadd.f32 %v3520, %v3556
  %v3587 = vadd.f32 %v3521, %v3557
  %v3588 = vadd.f32 %v3522, %v3558
  %v3589 = vadd.f32 %v3523, %v3559
  %v3590 = vadd.f32 %v3524, %v3560
  %v3591 = vadd.f32 %v3525, %v3561
  %v3592 = vadd.f32 %v3526, %v3562
  %v3593 = vadd.f32 %v3527, %v3563
  %v3594 = vadd.f32 %v3528, %v3564
  %v3595 = vadd.f32 %v3529, %v3565
  %v3596 = vadd.f32 %v3530, %v3566
  %v3597 = vadd.f32 %v3531, %v3567
  %v3598 = vadd.f32 %v3532, %v3568
  %v3599 = vadd.f32 %v3533, %v3569
  %v3600 = vadd.f32 %v3534, %v3570
  %v3601 = vadd.f32 %v3535, %v3571
  %v3602 = vadd.f32 %v3536, %v3572
  %v3603 = vadd.f32 %v3537, %v3573
  %v3604 = vadd.f32 %v3538, %v3574
  %v3605 = vadd.f32 %v3539, %v3575
  %v3606 = vadd.f32 %v3540, %v3572
  %v3607 = vadd.f32 %v3541, %v3573
  %v3608 = vlaneseq
  %v3609 = vshrl.u32 %v3608, 7
  %v3610 = vsub.s32 0, %v3609
  %v3611 = vrot.slane %v614, %v3610
  %v3612 = vmul.f32 %v564, %v3611
  %v3613 = vmul.f32 %v391, %v3611
  %v3614 = vmul.f32 %v597, %v3611
  %v3615 = vmul.f32 %v563, %v3611
  %v3616 = vmul.f32 %v388, %v3611
  %v3617 = vmul.f32 %v596, %v3611
  %v3618 = vmul.f32 %v566, %v3611
  %v3619 = vmul.f32 %v397, %v3611
  %v3620 = vmul.f32 %v599, %v3611
  %v3621 = vmul.f32 %v567, %v3611
  %v3622 = vmul.f32 %v400, %v3611
  %v3623 = vmul.f32 %v600, %v3611
  %v3624 = vmul.f32 %v568, %v3611
  %v3625 = vmul.f32 %v403, %v3611
  %v3626 = vmul.f32 %v601, %v3611
  %v3627 = vmul.f32 %v569, %v3611
  %v3628 = vmul.f32 %v406, %v3611
  %v3629 = vmul.f32 %v602, %v3611
  %v3630 = vmul.f32 %v570, %v3611
  %v3631 = vmul.f32 %v409, %v3611
  %v3632 = vmul.f32 %v603, %v3611
  %v3633 = vmul.f32 %v571, %v3611
  %v3634 = vmul.f32 %v412, %v3611
  %v3635 = vmul.f32 %v604, %v3611
  %v3636 = vmul.f32 %v572, %v3611
  %v3637 = vmul.f32 %v415, %v3611
  %v3638 = vmul.f32 %v605, %v3611
  %v3639 = vmul.f32 %v573, %v3611
  %v3640 = vmul.f32 %v418, %v3611
  %v3641 = vmul.f32 %v606, %v3611
  %v3642 = vmul.f32 %v574, %v3611
  %v3643 = vmul.f32 %v421, %v3611
  %v3644 = vmul.f32 %v607, %v3611
  %v3645 = vmul.f32 %v575, %v3611
  %v3646 = vmul.f32 %v424, %v3611
  %v3647 = vmul.f32 %v608, %v3611
  %v3648 = vmul.f32 %v576, %v3611
  %v3649 = vmul.f32 %v427, %v3611
  %v3650 = vmul.f32 %v609, %v3611
  %v3651 = vmul.f32 %v577, %v3611
  %v3652 = vmul.f32 %v430, %v3611
  %v3653 = vmul.f32 %v610, %v3611
  %v3654 = vmul.f32 %v578, %v3611
  %v3655 = vmul.f32 %v433, %v3611
  %v3656 = vmul.f32 %v611, %v3611
  %v3702 = vrot.slane %v3612, 1
  %v3703 = vrot.slane %v3613, 1
  %v3704 = vsel %vm736, %v3702, %v3703
  %v3705 = vrot.slane %v3614, 1
  %v3706 = vsel %vm736, %v3703, %v3705
  %v3707 = vrot.slane %v3615, 1
  %v3708 = vrot.slane %v3616, 1
  %v3709 = vsel %vm736, %v3707, %v3708
  %v3710 = vrot.slane %v3617, 1
  %v3711 = vsel %vm736, %v3708, %v3710
  %v3712 = vrot.slane %v3618, 1
  %v3713 = vrot.slane %v3619, 1
  %v3714 = vsel %vm736, %v3712, %v3713
  %v3715 = vrot.slane %v3620, 1
  %v3716 = vsel %vm736, %v3713, %v3715
  %v3717 = vrot.slane %v3621, 1
  %v3718 = vrot.slane %v3622, 1
  %v3719 = vsel %vm736, %v3717, %v3718
  %v3720 = vrot.slane %v3623, 1
  %v3721 = vsel %vm736, %v3718, %v3720
  %v3722 = vrot.slane %v3624, 1
  %v3723 = vrot.slane %v3625, 1
  %v3724 = vsel %vm736, %v3722, %v3723
  %v3725 = vrot.slane %v3626, 1
  %v3726 = vsel %vm736, %v3723, %v3725
  %v3727 = vrot.slane %v3627, 1
  %v3728 = vrot.slane %v3628, 1
  %v3729 = vsel %vm736, %v3727, %v3728
  %v3730 = vrot.slane %v3629, 1
  %v3731 = vsel %vm736, %v3728, %v3730
  %v3732 = vrot.slane %v3630, 1
  %v3733 = vrot.slane %v3631, 1
  %v3734 = vsel %vm736, %v3732, %v3733
  %v3735 = vrot.slane %v3632, 1
  %v3736 = vsel %vm736, %v3733, %v3735
  %v3737 = vrot.slane %v3633, 1
  %v3738 = vrot.slane %v3634, 1
  %v3739 = vsel %vm736, %v3737, %v3738
  %v3740 = vrot.slane %v3635, 1
  %v3741 = vsel %vm736, %v3738, %v3740
  %v3742 = vrot.slane %v3636, 1
  %v3743 = vrot.slane %v3637, 1
  %v3744 = vsel %vm736, %v3742, %v3743
  %v3745 = vrot.slane %v3638, 1
  %v3746 = vsel %vm736, %v3743, %v3745
  %v3747 = vrot.slane %v3639, 1
  %v3748 = vrot.slane %v3640, 1
  %v3749 = vsel %vm736, %v3747, %v3748
  %v3750 = vrot.slane %v3641, 1
  %v3751 = vsel %vm736, %v3748, %v3750
  %v3752 = vrot.slane %v3642, 1
  %v3753 = vrot.slane %v3643, 1
  %v3754 = vsel %vm736, %v3752, %v3753
  %v3755 = vrot.slane %v3644, 1
  %v3756 = vsel %vm736, %v3753, %v3755
  %v3757 = vrot.slane %v3645, 1
  %v3758 = vrot.slane %v3646, 1
  %v3759 = vsel %vm736, %v3757, %v3758
  %v3760 = vrot.slane %v3647, 1
  %v3761 = vsel %vm736, %v3758, %v3760
  %v3762 = vrot.slane %v3648, 1
  %v3763 = vrot.slane %v3649, 1
  %v3764 = vsel %vm736, %v3762, %v3763
  %v3765 = vrot.slane %v3650, 1
  %v3766 = vsel %vm736, %v3763, %v3765
  %v3767 = vrot.slane %v3651, 1
  %v3768 = vrot.slane %v3652, 1
  %v3769 = vsel %vm736, %v3767, %v3768
  %v3770 = vrot.slane %v3653, 1
  %v3771 = vsel %vm736, %v3768, %v3770
  %v3772 = vrot.slane %v3654, 1
  %v3773 = vrot.slane %v3655, 1
  %v3774 = vsel %vm736, %v3772, %v3773
  %v3775 = vrot.slane %v3656, 1
  %v3776 = vsel %vm736, %v3773, %v3775
  %v3807 = vadd.f32 %v3576, %v3704
  %v3808 = vadd.f32 %v3577, %v3706
  %v3809 = vadd.f32 %v3578, %v3709
  %v3810 = vadd.f32 %v3579, %v3711
  %v3811 = vadd.f32 %v3580, %v3714
  %v3812 = vadd.f32 %v3581, %v3716
  %v3813 = vadd.f32 %v3582, %v3719
  %v3814 = vadd.f32 %v3583, %v3721
  %v3815 = vadd.f32 %v3584, %v3724
  %v3816 = vadd.f32 %v3585, %v3726
  %v3817 = vadd.f32 %v3586, %v3729
  %v3818 = vadd.f32 %v3587, %v3731
  %v3819 = vadd.f32 %v3588, %v3734
  %v3820 = vadd.f32 %v3589, %v3736
  %v3821 = vadd.f32 %v3590, %v3739
  %v3822 = vadd.f32 %v3591, %v3741
  %v3823 = vadd.f32 %v3592, %v3744
  %v3824 = vadd.f32 %v3593, %v3746
  %v3825 = vadd.f32 %v3594, %v3749
  %v3826 = vadd.f32 %v3595, %v3751
  %v3827 = vadd.f32 %v3596, %v3754
  %v3828 = vadd.f32 %v3597, %v3756
  %v3829 = vadd.f32 %v3598, %v3759
  %v3830 = vadd.f32 %v3599, %v3761
  %v3831 = vadd.f32 %v3600, %v3764
  %v3832 = vadd.f32 %v3601, %v3766
  %v3833 = vadd.f32 %v3602, %v3769
  %v3834 = vadd.f32 %v3603, %v3771
  %v3835 = vadd.f32 %v3604, %v3774
  %v3836 = vadd.f32 %v3605, %v3776
  %v3837 = vadd.f32 %v3606, %v3769
  %v3838 = vadd.f32 %v3607, %v3771
  %v3839 = vlaneseq
  %v3840 = vshrl.u32 %v3839, 7
  %v3841 = vsub.s32 1, %v3840
  %v3842 = vrot.slane %v614, %v3841
  %v3843 = vmul.f32 %v564, %v3842
  %v3844 = vmul.f32 %v391, %v3842
  %v3845 = vmul.f32 %v597, %v3842
  %v3846 = vmul.f32 %v563, %v3842
  %v3847 = vmul.f32 %v388, %v3842
  %v3848 = vmul.f32 %v596, %v3842
  %v3849 = vmul.f32 %v566, %v3842
  %v3850 = vmul.f32 %v397, %v3842
  %v3851 = vmul.f32 %v599, %v3842
  %v3852 = vmul.f32 %v567, %v3842
  %v3853 = vmul.f32 %v400, %v3842
  %v3854 = vmul.f32 %v600, %v3842
  %v3855 = vmul.f32 %v568, %v3842
  %v3856 = vmul.f32 %v403, %v3842
  %v3857 = vmul.f32 %v601, %v3842
  %v3858 = vmul.f32 %v569, %v3842
  %v3859 = vmul.f32 %v406, %v3842
  %v3860 = vmul.f32 %v602, %v3842
  %v3861 = vmul.f32 %v570, %v3842
  %v3862 = vmul.f32 %v409, %v3842
  %v3863 = vmul.f32 %v603, %v3842
  %v3864 = vmul.f32 %v571, %v3842
  %v3865 = vmul.f32 %v412, %v3842
  %v3866 = vmul.f32 %v604, %v3842
  %v3867 = vmul.f32 %v572, %v3842
  %v3868 = vmul.f32 %v415, %v3842
  %v3869 = vmul.f32 %v605, %v3842
  %v3870 = vmul.f32 %v573, %v3842
  %v3871 = vmul.f32 %v418, %v3842
  %v3872 = vmul.f32 %v606, %v3842
  %v3873 = vmul.f32 %v574, %v3842
  %v3874 = vmul.f32 %v421, %v3842
  %v3875 = vmul.f32 %v607, %v3842
  %v3876 = vmul.f32 %v575, %v3842
  %v3877 = vmul.f32 %v424, %v3842
  %v3878 = vmul.f32 %v608, %v3842
  %v3879 = vmul.f32 %v576, %v3842
  %v3880 = vmul.f32 %v427, %v3842
  %v3881 = vmul.f32 %v609, %v3842
  %v3882 = vmul.f32 %v577, %v3842
  %v3883 = vmul.f32 %v430, %v3842
  %v3884 = vmul.f32 %v610, %v3842
  %v3885 = vmul.f32 %v578, %v3842
  %v3886 = vmul.f32 %v433, %v3842
  %v3887 = vmul.f32 %v611, %v3842
  %v3933 = vrot.slane %v3843, 2
  %v3934 = vrot.slane %v3844, 2
  %v3935 = vsel %vm951, %v3933, %v3934
  %v3936 = vrot.slane %v3845, 2
  %v3937 = vsel %vm951, %v3934, %v3936
  %v3938 = vrot.slane %v3846, 2
  %v3939 = vrot.slane %v3847, 2
  %v3940 = vsel %vm951, %v3938, %v3939
  %v3941 = vrot.slane %v3848, 2
  %v3942 = vsel %vm951, %v3939, %v3941
  %v3943 = vrot.slane %v3849, 2
  %v3944 = vrot.slane %v3850, 2
  %v3945 = vsel %vm951, %v3943, %v3944
  %v3946 = vrot.slane %v3851, 2
  %v3947 = vsel %vm951, %v3944, %v3946
  %v3948 = vrot.slane %v3852, 2
  %v3949 = vrot.slane %v3853, 2
  %v3950 = vsel %vm951, %v3948, %v3949
  %v3951 = vrot.slane %v3854, 2
  %v3952 = vsel %vm951, %v3949, %v3951
  %v3953 = vrot.slane %v3855, 2
  %v3954 = vrot.slane %v3856, 2
  %v3955 = vsel %vm951, %v3953, %v3954
  %v3956 = vrot.slane %v3857, 2
  %v3957 = vsel %vm951, %v3954, %v3956
  %v3958 = vrot.slane %v3858, 2
  %v3959 = vrot.slane %v3859, 2
  %v3960 = vsel %vm951, %v3958, %v3959
  %v3961 = vrot.slane %v3860, 2
  %v3962 = vsel %vm951, %v3959, %v3961
  %v3963 = vrot.slane %v3861, 2
  %v3964 = vrot.slane %v3862, 2
  %v3965 = vsel %vm951, %v3963, %v3964
  %v3966 = vrot.slane %v3863, 2
  %v3967 = vsel %vm951, %v3964, %v3966
  %v3968 = vrot.slane %v3864, 2
  %v3969 = vrot.slane %v3865, 2
  %v3970 = vsel %vm951, %v3968, %v3969
  %v3971 = vrot.slane %v3866, 2
  %v3972 = vsel %vm951, %v3969, %v3971
  %v3973 = vrot.slane %v3867, 2
  %v3974 = vrot.slane %v3868, 2
  %v3975 = vsel %vm951, %v3973, %v3974
  %v3976 = vrot.slane %v3869, 2
  %v3977 = vsel %vm951, %v3974, %v3976
  %v3978 = vrot.slane %v3870, 2
  %v3979 = vrot.slane %v3871, 2
  %v3980 = vsel %vm951, %v3978, %v3979
  %v3981 = vrot.slane %v3872, 2
  %v3982 = vsel %vm951, %v3979, %v3981
  %v3983 = vrot.slane %v3873, 2
  %v3984 = vrot.slane %v3874, 2
  %v3985 = vsel %vm951, %v3983, %v3984
  %v3986 = vrot.slane %v3875, 2
  %v3987 = vsel %vm951, %v3984, %v3986
  %v3988 = vrot.slane %v3876, 2
  %v3989 = vrot.slane %v3877, 2
  %v3990 = vsel %vm951, %v3988, %v3989
  %v3991 = vrot.slane %v3878, 2
  %v3992 = vsel %vm951, %v3989, %v3991
  %v3993 = vrot.slane %v3879, 2
  %v3994 = vrot.slane %v3880, 2
  %v3995 = vsel %vm951, %v3993, %v3994
  %v3996 = vrot.slane %v3881, 2
  %v3997 = vsel %vm951, %v3994, %v3996
  %v3998 = vrot.slane %v3882, 2
  %v3999 = vrot.slane %v3883, 2
  %v4000 = vsel %vm951, %v3998, %v3999
  %v4001 = vrot.slane %v3884, 2
  %v4002 = vsel %vm951, %v3999, %v4001
  %v4003 = vrot.slane %v3885, 2
  %v4004 = vrot.slane %v3886, 2
  %v4005 = vsel %vm951, %v4003, %v4004
  %v4006 = vrot.slane %v3887, 2
  %v4007 = vsel %vm951, %v4004, %v4006
  %v4038 = vadd.f32 %v3807, %v3935
  %v4039 = vadd.f32 %v3808, %v3937
  %v4040 = vadd.f32 %v3809, %v3940
  %v4041 = vadd.f32 %v3810, %v3942
  %v4042 = vadd.f32 %v3811, %v3945
  %v4043 = vadd.f32 %v3812, %v3947
  %v4044 = vadd.f32 %v3813, %v3950
  %v4045 = vadd.f32 %v3814, %v3952
  %v4046 = vadd.f32 %v3815, %v3955
  %v4047 = vadd.f32 %v3816, %v3957
  %v4048 = vadd.f32 %v3817, %v3960
  %v4049 = vadd.f32 %v3818, %v3962
  %v4050 = vadd.f32 %v3819, %v3965
  %v4051 = vadd.f32 %v3820, %v3967
  %v4052 = vadd.f32 %v3821, %v3970
  %v4053 = vadd.f32 %v3822, %v3972
  %v4054 = vadd.f32 %v3823, %v3975
  %v4055 = vadd.f32 %v3824, %v3977
  %v4056 = vadd.f32 %v3825, %v3980
  %v4057 = vadd.f32 %v3826, %v3982
  %v4058 = vadd.f32 %v3827, %v3985
  %v4059 = vadd.f32 %v3828, %v3987
  %v4060 = vadd.f32 %v3829, %v3990
  %v4061 = vadd.f32 %v3830, %v3992
  %v4062 = vadd.f32 %v3831, %v3995
  %v4063 = vadd.f32 %v3832, %v3997
  %v4064 = vadd.f32 %v3833, %v4000
  %v4065 = vadd.f32 %v3834, %v4002
  %v4066 = vadd.f32 %v3835, %v4005
  %v4067 = vadd.f32 %v3836, %v4007
  %v4068 = vadd.f32 %v3837, %v4000
  %v4069 = vadd.f32 %v3838, %v4002
  %v4070 = vlaneseq
  %v4071 = vshrl.u32 %v4070, 7
  %v4072 = vsub.s32 2, %v4071
  %v4073 = vrot.slane %v614, %v4072
  %v4074 = vmul.f32 %v564, %v4073
  %v4075 = vmul.f32 %v391, %v4073
  %v4076 = vmul.f32 %v597, %v4073
  %v4077 = vmul.f32 %v563, %v4073
  %v4078 = vmul.f32 %v388, %v4073
  %v4079 = vmul.f32 %v596, %v4073
  %v4080 = vmul.f32 %v566, %v4073
  %v4081 = vmul.f32 %v397, %v4073
  %v4082 = vmul.f32 %v599, %v4073
  %v4083 = vmul.f32 %v567, %v4073
  %v4084 = vmul.f32 %v400, %v4073
  %v4085 = vmul.f32 %v600, %v4073
  %v4086 = vmul.f32 %v568, %v4073
  %v4087 = vmul.f32 %v403, %v4073
  %v4088 = vmul.f32 %v601, %v4073
  %v4089 = vmul.f32 %v569, %v4073
  %v4090 = vmul.f32 %v406, %v4073
  %v4091 = vmul.f32 %v602, %v4073
  %v4092 = vmul.f32 %v570, %v4073
  %v4093 = vmul.f32 %v409, %v4073
  %v4094 = vmul.f32 %v603, %v4073
  %v4095 = vmul.f32 %v571, %v4073
  %v4096 = vmul.f32 %v412, %v4073
  %v4097 = vmul.f32 %v604, %v4073
  %v4098 = vmul.f32 %v572, %v4073
  %v4099 = vmul.f32 %v415, %v4073
  %v4100 = vmul.f32 %v605, %v4073
  %v4101 = vmul.f32 %v573, %v4073
  %v4102 = vmul.f32 %v418, %v4073
  %v4103 = vmul.f32 %v606, %v4073
  %v4104 = vmul.f32 %v574, %v4073
  %v4105 = vmul.f32 %v421, %v4073
  %v4106 = vmul.f32 %v607, %v4073
  %v4107 = vmul.f32 %v575, %v4073
  %v4108 = vmul.f32 %v424, %v4073
  %v4109 = vmul.f32 %v608, %v4073
  %v4110 = vmul.f32 %v576, %v4073
  %v4111 = vmul.f32 %v427, %v4073
  %v4112 = vmul.f32 %v609, %v4073
  %v4113 = vmul.f32 %v577, %v4073
  %v4114 = vmul.f32 %v430, %v4073
  %v4115 = vmul.f32 %v610, %v4073
  %v4116 = vmul.f32 %v578, %v4073
  %v4117 = vmul.f32 %v433, %v4073
  %v4118 = vmul.f32 %v611, %v4073
  %v4164 = vrot.slane %v4074, 3
  %v4165 = vrot.slane %v4075, 3
  %v4166 = vsel %vm1166, %v4164, %v4165
  %v4167 = vrot.slane %v4076, 3
  %v4168 = vsel %vm1166, %v4165, %v4167
  %v4169 = vrot.slane %v4077, 3
  %v4170 = vrot.slane %v4078, 3
  %v4171 = vsel %vm1166, %v4169, %v4170
  %v4172 = vrot.slane %v4079, 3
  %v4173 = vsel %vm1166, %v4170, %v4172
  %v4174 = vrot.slane %v4080, 3
  %v4175 = vrot.slane %v4081, 3
  %v4176 = vsel %vm1166, %v4174, %v4175
  %v4177 = vrot.slane %v4082, 3
  %v4178 = vsel %vm1166, %v4175, %v4177
  %v4179 = vrot.slane %v4083, 3
  %v4180 = vrot.slane %v4084, 3
  %v4181 = vsel %vm1166, %v4179, %v4180
  %v4182 = vrot.slane %v4085, 3
  %v4183 = vsel %vm1166, %v4180, %v4182
  %v4184 = vrot.slane %v4086, 3
  %v4185 = vrot.slane %v4087, 3
  %v4186 = vsel %vm1166, %v4184, %v4185
  %v4187 = vrot.slane %v4088, 3
  %v4188 = vsel %vm1166, %v4185, %v4187
  %v4189 = vrot.slane %v4089, 3
  %v4190 = vrot.slane %v4090, 3
  %v4191 = vsel %vm1166, %v4189, %v4190
  %v4192 = vrot.slane %v4091, 3
  %v4193 = vsel %vm1166, %v4190, %v4192
  %v4194 = vrot.slane %v4092, 3
  %v4195 = vrot.slane %v4093, 3
  %v4196 = vsel %vm1166, %v4194, %v4195
  %v4197 = vrot.slane %v4094, 3
  %v4198 = vsel %vm1166, %v4195, %v4197
  %v4199 = vrot.slane %v4095, 3
  %v4200 = vrot.slane %v4096, 3
  %v4201 = vsel %vm1166, %v4199, %v4200
  %v4202 = vrot.slane %v4097, 3
  %v4203 = vsel %vm1166, %v4200, %v4202
  %v4204 = vrot.slane %v4098, 3
  %v4205 = vrot.slane %v4099, 3
  %v4206 = vsel %vm1166, %v4204, %v4205
  %v4207 = vrot.slane %v4100, 3
  %v4208 = vsel %vm1166, %v4205, %v4207
  %v4209 = vrot.slane %v4101, 3
  %v4210 = vrot.slane %v4102, 3
  %v4211 = vsel %vm1166, %v4209, %v4210
  %v4212 = vrot.slane %v4103, 3
  %v4213 = vsel %vm1166, %v4210, %v4212
  %v4214 = vrot.slane %v4104, 3
  %v4215 = vrot.slane %v4105, 3
  %v4216 = vsel %vm1166, %v4214, %v4215
  %v4217 = vrot.slane %v4106, 3
  %v4218 = vsel %vm1166, %v4215, %v4217
  %v4219 = vrot.slane %v4107, 3
  %v4220 = vrot.slane %v4108, 3
  %v4221 = vsel %vm1166, %v4219, %v4220
  %v4222 = vrot.slane %v4109, 3
  %v4223 = vsel %vm1166, %v4220, %v4222
  %v4224 = vrot.slane %v4110, 3
  %v4225 = vrot.slane %v4111, 3
  %v4226 = vsel %vm1166, %v4224, %v4225
  %v4227 = vrot.slane %v4112, 3
  %v4228 = vsel %vm1166, %v4225, %v4227
  %v4229 = vrot.slane %v4113, 3
  %v4230 = vrot.slane %v4114, 3
  %v4231 = vsel %vm1166, %v4229, %v4230
  %v4232 = vrot.slane %v4115, 3
  %v4233 = vsel %vm1166, %v4230, %v4232
  %v4234 = vrot.slane %v4116, 3
  %v4235 = vrot.slane %v4117, 3
  %v4236 = vsel %vm1166, %v4234, %v4235
  %v4237 = vrot.slane %v4118, 3
  %v4238 = vsel %vm1166, %v4235, %v4237
  %v4269 = vadd.f32 %v4038, %v4166
  %v4270 = vadd.f32 %v4039, %v4168
  %v4271 = vadd.f32 %v4040, %v4171
  %v4272 = vadd.f32 %v4041, %v4173
  %v4273 = vadd.f32 %v4042, %v4176
  %v4274 = vadd.f32 %v4043, %v4178
  %v4275 = vadd.f32 %v4044, %v4181
  %v4276 = vadd.f32 %v4045, %v4183
  %v4277 = vadd.f32 %v4046, %v4186
  %v4278 = vadd.f32 %v4047, %v4188
  %v4279 = vadd.f32 %v4048, %v4191
  %v4280 = vadd.f32 %v4049, %v4193
  %v4281 = vadd.f32 %v4050, %v4196
  %v4282 = vadd.f32 %v4051, %v4198
  %v4283 = vadd.f32 %v4052, %v4201
  %v4284 = vadd.f32 %v4053, %v4203
  %v4285 = vadd.f32 %v4054, %v4206
  %v4286 = vadd.f32 %v4055, %v4208
  %v4287 = vadd.f32 %v4056, %v4211
  %v4288 = vadd.f32 %v4057, %v4213
  %v4289 = vadd.f32 %v4058, %v4216
  %v4290 = vadd.f32 %v4059, %v4218
  %v4291 = vadd.f32 %v4060, %v4221
  %v4292 = vadd.f32 %v4061, %v4223
  %v4293 = vadd.f32 %v4062, %v4226
  %v4294 = vadd.f32 %v4063, %v4228
  %v4295 = vadd.f32 %v4064, %v4231
  %v4296 = vadd.f32 %v4065, %v4233
  %v4297 = vadd.f32 %v4066, %v4236
  %v4298 = vadd.f32 %v4067, %v4238
  %v4299 = vadd.f32 %v4068, %v4231
  %v4300 = vadd.f32 %v4069, %v4233
  %v4301 = vlaneseq
  %v4302 = vshrl.u32 %v4301, 7
  %v4303 = vsub.s32 3, %v4302
  %v4304 = vrot.slane %v614, %v4303
  %v4305 = vmul.f32 %v564, %v4304
  %v4306 = vmul.f32 %v391, %v4304
  %v4307 = vmul.f32 %v597, %v4304
  %v4308 = vmul.f32 %v563, %v4304
  %v4309 = vmul.f32 %v388, %v4304
  %v4310 = vmul.f32 %v596, %v4304
  %v4311 = vmul.f32 %v566, %v4304
  %v4312 = vmul.f32 %v397, %v4304
  %v4313 = vmul.f32 %v599, %v4304
  %v4314 = vmul.f32 %v567, %v4304
  %v4315 = vmul.f32 %v400, %v4304
  %v4316 = vmul.f32 %v600, %v4304
  %v4317 = vmul.f32 %v568, %v4304
  %v4318 = vmul.f32 %v403, %v4304
  %v4319 = vmul.f32 %v601, %v4304
  %v4320 = vmul.f32 %v569, %v4304
  %v4321 = vmul.f32 %v406, %v4304
  %v4322 = vmul.f32 %v602, %v4304
  %v4323 = vmul.f32 %v570, %v4304
  %v4324 = vmul.f32 %v409, %v4304
  %v4325 = vmul.f32 %v603, %v4304
  %v4326 = vmul.f32 %v571, %v4304
  %v4327 = vmul.f32 %v412, %v4304
  %v4328 = vmul.f32 %v604, %v4304
  %v4329 = vmul.f32 %v572, %v4304
  %v4330 = vmul.f32 %v415, %v4304
  %v4331 = vmul.f32 %v605, %v4304
  %v4332 = vmul.f32 %v573, %v4304
  %v4333 = vmul.f32 %v418, %v4304
  %v4334 = vmul.f32 %v606, %v4304
  %v4335 = vmul.f32 %v574, %v4304
  %v4336 = vmul.f32 %v421, %v4304
  %v4337 = vmul.f32 %v607, %v4304
  %v4338 = vmul.f32 %v575, %v4304
  %v4339 = vmul.f32 %v424, %v4304
  %v4340 = vmul.f32 %v608, %v4304
  %v4341 = vmul.f32 %v576, %v4304
  %v4342 = vmul.f32 %v427, %v4304
  %v4343 = vmul.f32 %v609, %v4304
  %v4344 = vmul.f32 %v577, %v4304
  %v4345 = vmul.f32 %v430, %v4304
  %v4346 = vmul.f32 %v610, %v4304
  %v4347 = vmul.f32 %v578, %v4304
  %v4348 = vmul.f32 %v433, %v4304
  %v4349 = vmul.f32 %v611, %v4304
  %v4395 = vrot.slane %v4305, 4
  %v4396 = vrot.slane %v4306, 4
  %v4397 = vsel %vm1381, %v4395, %v4396
  %v4398 = vrot.slane %v4307, 4
  %v4399 = vsel %vm1381, %v4396, %v4398
  %v4400 = vrot.slane %v4308, 4
  %v4401 = vrot.slane %v4309, 4
  %v4402 = vsel %vm1381, %v4400, %v4401
  %v4403 = vrot.slane %v4310, 4
  %v4404 = vsel %vm1381, %v4401, %v4403
  %v4405 = vrot.slane %v4311, 4
  %v4406 = vrot.slane %v4312, 4
  %v4407 = vsel %vm1381, %v4405, %v4406
  %v4408 = vrot.slane %v4313, 4
  %v4409 = vsel %vm1381, %v4406, %v4408
  %v4410 = vrot.slane %v4314, 4
  %v4411 = vrot.slane %v4315, 4
  %v4412 = vsel %vm1381, %v4410, %v4411
  %v4413 = vrot.slane %v4316, 4
  %v4414 = vsel %vm1381, %v4411, %v4413
  %v4415 = vrot.slane %v4317, 4
  %v4416 = vrot.slane %v4318, 4
  %v4417 = vsel %vm1381, %v4415, %v4416
  %v4418 = vrot.slane %v4319, 4
  %v4419 = vsel %vm1381, %v4416, %v4418
  %v4420 = vrot.slane %v4320, 4
  %v4421 = vrot.slane %v4321, 4
  %v4422 = vsel %vm1381, %v4420, %v4421
  %v4423 = vrot.slane %v4322, 4
  %v4424 = vsel %vm1381, %v4421, %v4423
  %v4425 = vrot.slane %v4323, 4
  %v4426 = vrot.slane %v4324, 4
  %v4427 = vsel %vm1381, %v4425, %v4426
  %v4428 = vrot.slane %v4325, 4
  %v4429 = vsel %vm1381, %v4426, %v4428
  %v4430 = vrot.slane %v4326, 4
  %v4431 = vrot.slane %v4327, 4
  %v4432 = vsel %vm1381, %v4430, %v4431
  %v4433 = vrot.slane %v4328, 4
  %v4434 = vsel %vm1381, %v4431, %v4433
  %v4435 = vrot.slane %v4329, 4
  %v4436 = vrot.slane %v4330, 4
  %v4437 = vsel %vm1381, %v4435, %v4436
  %v4438 = vrot.slane %v4331, 4
  %v4439 = vsel %vm1381, %v4436, %v4438
  %v4440 = vrot.slane %v4332, 4
  %v4441 = vrot.slane %v4333, 4
  %v4442 = vsel %vm1381, %v4440, %v4441
  %v4443 = vrot.slane %v4334, 4
  %v4444 = vsel %vm1381, %v4441, %v4443
  %v4445 = vrot.slane %v4335, 4
  %v4446 = vrot.slane %v4336, 4
  %v4447 = vsel %vm1381, %v4445, %v4446
  %v4448 = vrot.slane %v4337, 4
  %v4449 = vsel %vm1381, %v4446, %v4448
  %v4450 = vrot.slane %v4338, 4
  %v4451 = vrot.slane %v4339, 4
  %v4452 = vsel %vm1381, %v4450, %v4451
  %v4453 = vrot.slane %v4340, 4
  %v4454 = vsel %vm1381, %v4451, %v4453
  %v4455 = vrot.slane %v4341, 4
  %v4456 = vrot.slane %v4342, 4
  %v4457 = vsel %vm1381, %v4455, %v4456
  %v4458 = vrot.slane %v4343, 4
  %v4459 = vsel %vm1381, %v4456, %v4458
  %v4460 = vrot.slane %v4344, 4
  %v4461 = vrot.slane %v4345, 4
  %v4462 = vsel %vm1381, %v4460, %v4461
  %v4463 = vrot.slane %v4346, 4
  %v4464 = vsel %vm1381, %v4461, %v4463
  %v4465 = vrot.slane %v4347, 4
  %v4466 = vrot.slane %v4348, 4
  %v4467 = vsel %vm1381, %v4465, %v4466
  %v4468 = vrot.slane %v4349, 4
  %v4469 = vsel %vm1381, %v4466, %v4468
  %v4500 = vadd.f32 %v4269, %v4397
  %v4501 = vadd.f32 %v4270, %v4399
  %v4502 = vadd.f32 %v4271, %v4402
  %v4503 = vadd.f32 %v4272, %v4404
  %v4504 = vadd.f32 %v4273, %v4407
  %v4505 = vadd.f32 %v4274, %v4409
  %v4506 = vadd.f32 %v4275, %v4412
  %v4507 = vadd.f32 %v4276, %v4414
  %v4508 = vadd.f32 %v4277, %v4417
  %v4509 = vadd.f32 %v4278, %v4419
  %v4510 = vadd.f32 %v4279, %v4422
  %v4511 = vadd.f32 %v4280, %v4424
  %v4512 = vadd.f32 %v4281, %v4427
  %v4513 = vadd.f32 %v4282, %v4429
  %v4514 = vadd.f32 %v4283, %v4432
  %v4515 = vadd.f32 %v4284, %v4434
  %v4516 = vadd.f32 %v4285, %v4437
  %v4517 = vadd.f32 %v4286, %v4439
  %v4518 = vadd.f32 %v4287, %v4442
  %v4519 = vadd.f32 %v4288, %v4444
  %v4520 = vadd.f32 %v4289, %v4447
  %v4521 = vadd.f32 %v4290, %v4449
  %v4522 = vadd.f32 %v4291, %v4452
  %v4523 = vadd.f32 %v4292, %v4454
  %v4524 = vadd.f32 %v4293, %v4457
  %v4525 = vadd.f32 %v4294, %v4459
  %v4526 = vadd.f32 %v4295, %v4462
  %v4527 = vadd.f32 %v4296, %v4464
  %v4528 = vadd.f32 %v4297, %v4467
  %v4529 = vadd.f32 %v4298, %v4469
  %v4530 = vadd.f32 %v4299, %v4462
  %v4531 = vadd.f32 %v4300, %v4464
  %v4532 = vlaneseq
  %v4533 = vshrl.u32 %v4532, 7
  %v4534 = vsub.s32 4, %v4533
  %v4535 = vrot.slane %v614, %v4534
  %v4536 = vmul.f32 %v563, %v4535
  %v4537 = vmul.f32 %v388, %v4535
  %v4538 = vmul.f32 %v566, %v4535
  %v4539 = vmul.f32 %v397, %v4535
  %v4540 = vmul.f32 %v567, %v4535
  %v4541 = vmul.f32 %v400, %v4535
  %v4542 = vmul.f32 %v568, %v4535
  %v4543 = vmul.f32 %v403, %v4535
  %v4544 = vmul.f32 %v569, %v4535
  %v4545 = vmul.f32 %v406, %v4535
  %v4546 = vmul.f32 %v570, %v4535
  %v4547 = vmul.f32 %v409, %v4535
  %v4548 = vmul.f32 %v571, %v4535
  %v4549 = vmul.f32 %v412, %v4535
  %v4550 = vmul.f32 %v572, %v4535
  %v4551 = vmul.f32 %v415, %v4535
  %v4552 = vmul.f32 %v573, %v4535
  %v4553 = vmul.f32 %v418, %v4535
  %v4554 = vmul.f32 %v574, %v4535
  %v4555 = vmul.f32 %v421, %v4535
  %v4556 = vmul.f32 %v575, %v4535
  %v4557 = vmul.f32 %v424, %v4535
  %v4558 = vmul.f32 %v576, %v4535
  %v4559 = vmul.f32 %v427, %v4535
  %v4560 = vmul.f32 %v577, %v4535
  %v4561 = vmul.f32 %v430, %v4535
  %v4562 = vmul.f32 %v578, %v4535
  %v4563 = vmul.f32 %v433, %v4535
  %v4564 = vadd.f32 %v4500, %v4536
  %v4565 = vadd.f32 %v4501, %v4537
  %v4566 = vadd.f32 %v4502, %v4538
  %v4567 = vadd.f32 %v4503, %v4539
  %v4568 = vadd.f32 %v4504, %v4540
  %v4569 = vadd.f32 %v4505, %v4541
  %v4570 = vadd.f32 %v4506, %v4542
  %v4571 = vadd.f32 %v4507, %v4543
  %v4572 = vadd.f32 %v4508, %v4544
  %v4573 = vadd.f32 %v4509, %v4545
  %v4574 = vadd.f32 %v4510, %v4546
  %v4575 = vadd.f32 %v4511, %v4547
  %v4576 = vadd.f32 %v4512, %v4548
  %v4577 = vadd.f32 %v4513, %v4549
  %v4578 = vadd.f32 %v4514, %v4550
  %v4579 = vadd.f32 %v4515, %v4551
  %v4580 = vadd.f32 %v4516, %v4552
  %v4581 = vadd.f32 %v4517, %v4553
  %v4582 = vadd.f32 %v4518, %v4554
  %v4583 = vadd.f32 %v4519, %v4555
  %v4584 = vadd.f32 %v4520, %v4556
  %v4585 = vadd.f32 %v4521, %v4557
  %v4586 = vadd.f32 %v4522, %v4558
  %v4587 = vadd.f32 %v4523, %v4559
  %v4588 = vadd.f32 %v4524, %v4560
  %v4589 = vadd.f32 %v4525, %v4561
  %v4590 = vadd.f32 %v4526, %v4562
  %v4591 = vadd.f32 %v4527, %v4563
  %v4592 = vadd.f32 %v4528, %v4560
  %v4593 = vadd.f32 %v4529, %v4561
  %v4594 = vadd.f32 %v4530, %v4558
  %v4595 = vadd.f32 %v4531, %v4559
  %v4596 = vlaneseq
  %v4597 = vshrl.u32 %v4596, 7
  %v4598 = vsub.s32 5, %v4597
  %v4599 = vrot.slane %v614, %v4598
  %v4600 = vmul.f32 %v563, %v4599
  %v4601 = vmul.f32 %v388, %v4599
  %v4602 = vmul.f32 %v596, %v4599
  %v4603 = vmul.f32 %v566, %v4599
  %v4604 = vmul.f32 %v397, %v4599
  %v4605 = vmul.f32 %v599, %v4599
  %v4606 = vmul.f32 %v567, %v4599
  %v4607 = vmul.f32 %v400, %v4599
  %v4608 = vmul.f32 %v600, %v4599
  %v4609 = vmul.f32 %v568, %v4599
  %v4610 = vmul.f32 %v403, %v4599
  %v4611 = vmul.f32 %v601, %v4599
  %v4612 = vmul.f32 %v569, %v4599
  %v4613 = vmul.f32 %v406, %v4599
  %v4614 = vmul.f32 %v602, %v4599
  %v4615 = vmul.f32 %v570, %v4599
  %v4616 = vmul.f32 %v409, %v4599
  %v4617 = vmul.f32 %v603, %v4599
  %v4618 = vmul.f32 %v571, %v4599
  %v4619 = vmul.f32 %v412, %v4599
  %v4620 = vmul.f32 %v604, %v4599
  %v4621 = vmul.f32 %v572, %v4599
  %v4622 = vmul.f32 %v415, %v4599
  %v4623 = vmul.f32 %v605, %v4599
  %v4624 = vmul.f32 %v573, %v4599
  %v4625 = vmul.f32 %v418, %v4599
  %v4626 = vmul.f32 %v606, %v4599
  %v4627 = vmul.f32 %v574, %v4599
  %v4628 = vmul.f32 %v421, %v4599
  %v4629 = vmul.f32 %v607, %v4599
  %v4630 = vmul.f32 %v575, %v4599
  %v4631 = vmul.f32 %v424, %v4599
  %v4632 = vmul.f32 %v608, %v4599
  %v4633 = vmul.f32 %v576, %v4599
  %v4634 = vmul.f32 %v427, %v4599
  %v4635 = vmul.f32 %v609, %v4599
  %v4636 = vmul.f32 %v577, %v4599
  %v4637 = vmul.f32 %v430, %v4599
  %v4638 = vmul.f32 %v610, %v4599
  %v4639 = vmul.f32 %v578, %v4599
  %v4640 = vmul.f32 %v433, %v4599
  %v4641 = vmul.f32 %v611, %v4599
  %v4684 = vrot.slane %v4600, 1
  %v4685 = vrot.slane %v4601, 1
  %v4686 = vsel %vm736, %v4684, %v4685
  %v4687 = vrot.slane %v4602, 1
  %v4688 = vsel %vm736, %v4685, %v4687
  %v4689 = vrot.slane %v4603, 1
  %v4690 = vrot.slane %v4604, 1
  %v4691 = vsel %vm736, %v4689, %v4690
  %v4692 = vrot.slane %v4605, 1
  %v4693 = vsel %vm736, %v4690, %v4692
  %v4694 = vrot.slane %v4606, 1
  %v4695 = vrot.slane %v4607, 1
  %v4696 = vsel %vm736, %v4694, %v4695
  %v4697 = vrot.slane %v4608, 1
  %v4698 = vsel %vm736, %v4695, %v4697
  %v4699 = vrot.slane %v4609, 1
  %v4700 = vrot.slane %v4610, 1
  %v4701 = vsel %vm736, %v4699, %v4700
  %v4702 = vrot.slane %v4611, 1
  %v4703 = vsel %vm736, %v4700, %v4702
  %v4704 = vrot.slane %v4612, 1
  %v4705 = vrot.slane %v4613, 1
  %v4706 = vsel %vm736, %v4704, %v4705
  %v4707 = vrot.slane %v4614, 1
  %v4708 = vsel %vm736, %v4705, %v4707
  %v4709 = vrot.slane %v4615, 1
  %v4710 = vrot.slane %v4616, 1
  %v4711 = vsel %vm736, %v4709, %v4710
  %v4712 = vrot.slane %v4617, 1
  %v4713 = vsel %vm736, %v4710, %v4712
  %v4714 = vrot.slane %v4618, 1
  %v4715 = vrot.slane %v4619, 1
  %v4716 = vsel %vm736, %v4714, %v4715
  %v4717 = vrot.slane %v4620, 1
  %v4718 = vsel %vm736, %v4715, %v4717
  %v4719 = vrot.slane %v4621, 1
  %v4720 = vrot.slane %v4622, 1
  %v4721 = vsel %vm736, %v4719, %v4720
  %v4722 = vrot.slane %v4623, 1
  %v4723 = vsel %vm736, %v4720, %v4722
  %v4724 = vrot.slane %v4624, 1
  %v4725 = vrot.slane %v4625, 1
  %v4726 = vsel %vm736, %v4724, %v4725
  %v4727 = vrot.slane %v4626, 1
  %v4728 = vsel %vm736, %v4725, %v4727
  %v4729 = vrot.slane %v4627, 1
  %v4730 = vrot.slane %v4628, 1
  %v4731 = vsel %vm736, %v4729, %v4730
  %v4732 = vrot.slane %v4629, 1
  %v4733 = vsel %vm736, %v4730, %v4732
  %v4734 = vrot.slane %v4630, 1
  %v4735 = vrot.slane %v4631, 1
  %v4736 = vsel %vm736, %v4734, %v4735
  %v4737 = vrot.slane %v4632, 1
  %v4738 = vsel %vm736, %v4735, %v4737
  %v4739 = vrot.slane %v4633, 1
  %v4740 = vrot.slane %v4634, 1
  %v4741 = vsel %vm736, %v4739, %v4740
  %v4742 = vrot.slane %v4635, 1
  %v4743 = vsel %vm736, %v4740, %v4742
  %v4744 = vrot.slane %v4636, 1
  %v4745 = vrot.slane %v4637, 1
  %v4746 = vsel %vm736, %v4744, %v4745
  %v4747 = vrot.slane %v4638, 1
  %v4748 = vsel %vm736, %v4745, %v4747
  %v4749 = vrot.slane %v4639, 1
  %v4750 = vrot.slane %v4640, 1
  %v4751 = vsel %vm736, %v4749, %v4750
  %v4752 = vrot.slane %v4641, 1
  %v4753 = vsel %vm736, %v4750, %v4752
  %v4782 = vadd.f32 %v4564, %v4686
  %v4783 = vadd.f32 %v4565, %v4688
  %v4784 = vadd.f32 %v4566, %v4691
  %v4785 = vadd.f32 %v4567, %v4693
  %v4786 = vadd.f32 %v4568, %v4696
  %v4787 = vadd.f32 %v4569, %v4698
  %v4788 = vadd.f32 %v4570, %v4701
  %v4789 = vadd.f32 %v4571, %v4703
  %v4790 = vadd.f32 %v4572, %v4706
  %v4791 = vadd.f32 %v4573, %v4708
  %v4792 = vadd.f32 %v4574, %v4711
  %v4793 = vadd.f32 %v4575, %v4713
  %v4794 = vadd.f32 %v4576, %v4716
  %v4795 = vadd.f32 %v4577, %v4718
  %v4796 = vadd.f32 %v4578, %v4721
  %v4797 = vadd.f32 %v4579, %v4723
  %v4798 = vadd.f32 %v4580, %v4726
  %v4799 = vadd.f32 %v4581, %v4728
  %v4800 = vadd.f32 %v4582, %v4731
  %v4801 = vadd.f32 %v4583, %v4733
  %v4802 = vadd.f32 %v4584, %v4736
  %v4803 = vadd.f32 %v4585, %v4738
  %v4804 = vadd.f32 %v4586, %v4741
  %v4805 = vadd.f32 %v4587, %v4743
  %v4806 = vadd.f32 %v4588, %v4746
  %v4807 = vadd.f32 %v4589, %v4748
  %v4808 = vadd.f32 %v4590, %v4751
  %v4809 = vadd.f32 %v4591, %v4753
  %v4810 = vadd.f32 %v4592, %v4746
  %v4811 = vadd.f32 %v4593, %v4748
  %v4812 = vadd.f32 %v4594, %v4741
  %v4813 = vadd.f32 %v4595, %v4743
  %v4814 = vlaneseq
  %v4815 = vshrl.u32 %v4814, 7
  %v4816 = vsub.s32 6, %v4815
  %v4817 = vrot.slane %v614, %v4816
  %v4818 = vmul.f32 %v563, %v4817
  %v4819 = vmul.f32 %v388, %v4817
  %v4820 = vmul.f32 %v596, %v4817
  %v4821 = vmul.f32 %v566, %v4817
  %v4822 = vmul.f32 %v397, %v4817
  %v4823 = vmul.f32 %v599, %v4817
  %v4824 = vmul.f32 %v567, %v4817
  %v4825 = vmul.f32 %v400, %v4817
  %v4826 = vmul.f32 %v600, %v4817
  %v4827 = vmul.f32 %v568, %v4817
  %v4828 = vmul.f32 %v403, %v4817
  %v4829 = vmul.f32 %v601, %v4817
  %v4830 = vmul.f32 %v569, %v4817
  %v4831 = vmul.f32 %v406, %v4817
  %v4832 = vmul.f32 %v602, %v4817
  %v4833 = vmul.f32 %v570, %v4817
  %v4834 = vmul.f32 %v409, %v4817
  %v4835 = vmul.f32 %v603, %v4817
  %v4836 = vmul.f32 %v571, %v4817
  %v4837 = vmul.f32 %v412, %v4817
  %v4838 = vmul.f32 %v604, %v4817
  %v4839 = vmul.f32 %v572, %v4817
  %v4840 = vmul.f32 %v415, %v4817
  %v4841 = vmul.f32 %v605, %v4817
  %v4842 = vmul.f32 %v573, %v4817
  %v4843 = vmul.f32 %v418, %v4817
  %v4844 = vmul.f32 %v606, %v4817
  %v4845 = vmul.f32 %v574, %v4817
  %v4846 = vmul.f32 %v421, %v4817
  %v4847 = vmul.f32 %v607, %v4817
  %v4848 = vmul.f32 %v575, %v4817
  %v4849 = vmul.f32 %v424, %v4817
  %v4850 = vmul.f32 %v608, %v4817
  %v4851 = vmul.f32 %v576, %v4817
  %v4852 = vmul.f32 %v427, %v4817
  %v4853 = vmul.f32 %v609, %v4817
  %v4854 = vmul.f32 %v577, %v4817
  %v4855 = vmul.f32 %v430, %v4817
  %v4856 = vmul.f32 %v610, %v4817
  %v4857 = vmul.f32 %v578, %v4817
  %v4858 = vmul.f32 %v433, %v4817
  %v4859 = vmul.f32 %v611, %v4817
  %v4902 = vrot.slane %v4818, 2
  %v4903 = vrot.slane %v4819, 2
  %v4904 = vsel %vm951, %v4902, %v4903
  %v4905 = vrot.slane %v4820, 2
  %v4906 = vsel %vm951, %v4903, %v4905
  %v4907 = vrot.slane %v4821, 2
  %v4908 = vrot.slane %v4822, 2
  %v4909 = vsel %vm951, %v4907, %v4908
  %v4910 = vrot.slane %v4823, 2
  %v4911 = vsel %vm951, %v4908, %v4910
  %v4912 = vrot.slane %v4824, 2
  %v4913 = vrot.slane %v4825, 2
  %v4914 = vsel %vm951, %v4912, %v4913
  %v4915 = vrot.slane %v4826, 2
  %v4916 = vsel %vm951, %v4913, %v4915
  %v4917 = vrot.slane %v4827, 2
  %v4918 = vrot.slane %v4828, 2
  %v4919 = vsel %vm951, %v4917, %v4918
  %v4920 = vrot.slane %v4829, 2
  %v4921 = vsel %vm951, %v4918, %v4920
  %v4922 = vrot.slane %v4830, 2
  %v4923 = vrot.slane %v4831, 2
  %v4924 = vsel %vm951, %v4922, %v4923
  %v4925 = vrot.slane %v4832, 2
  %v4926 = vsel %vm951, %v4923, %v4925
  %v4927 = vrot.slane %v4833, 2
  %v4928 = vrot.slane %v4834, 2
  %v4929 = vsel %vm951, %v4927, %v4928
  %v4930 = vrot.slane %v4835, 2
  %v4931 = vsel %vm951, %v4928, %v4930
  %v4932 = vrot.slane %v4836, 2
  %v4933 = vrot.slane %v4837, 2
  %v4934 = vsel %vm951, %v4932, %v4933
  %v4935 = vrot.slane %v4838, 2
  %v4936 = vsel %vm951, %v4933, %v4935
  %v4937 = vrot.slane %v4839, 2
  %v4938 = vrot.slane %v4840, 2
  %v4939 = vsel %vm951, %v4937, %v4938
  %v4940 = vrot.slane %v4841, 2
  %v4941 = vsel %vm951, %v4938, %v4940
  %v4942 = vrot.slane %v4842, 2
  %v4943 = vrot.slane %v4843, 2
  %v4944 = vsel %vm951, %v4942, %v4943
  %v4945 = vrot.slane %v4844, 2
  %v4946 = vsel %vm951, %v4943, %v4945
  %v4947 = vrot.slane %v4845, 2
  %v4948 = vrot.slane %v4846, 2
  %v4949 = vsel %vm951, %v4947, %v4948
  %v4950 = vrot.slane %v4847, 2
  %v4951 = vsel %vm951, %v4948, %v4950
  %v4952 = vrot.slane %v4848, 2
  %v4953 = vrot.slane %v4849, 2
  %v4954 = vsel %vm951, %v4952, %v4953
  %v4955 = vrot.slane %v4850, 2
  %v4956 = vsel %vm951, %v4953, %v4955
  %v4957 = vrot.slane %v4851, 2
  %v4958 = vrot.slane %v4852, 2
  %v4959 = vsel %vm951, %v4957, %v4958
  %v4960 = vrot.slane %v4853, 2
  %v4961 = vsel %vm951, %v4958, %v4960
  %v4962 = vrot.slane %v4854, 2
  %v4963 = vrot.slane %v4855, 2
  %v4964 = vsel %vm951, %v4962, %v4963
  %v4965 = vrot.slane %v4856, 2
  %v4966 = vsel %vm951, %v4963, %v4965
  %v4967 = vrot.slane %v4857, 2
  %v4968 = vrot.slane %v4858, 2
  %v4969 = vsel %vm951, %v4967, %v4968
  %v4970 = vrot.slane %v4859, 2
  %v4971 = vsel %vm951, %v4968, %v4970
  %v5000 = vadd.f32 %v4782, %v4904
  %v5001 = vadd.f32 %v4783, %v4906
  %v5002 = vadd.f32 %v4784, %v4909
  %v5003 = vadd.f32 %v4785, %v4911
  %v5004 = vadd.f32 %v4786, %v4914
  %v5005 = vadd.f32 %v4787, %v4916
  %v5006 = vadd.f32 %v4788, %v4919
  %v5007 = vadd.f32 %v4789, %v4921
  %v5008 = vadd.f32 %v4790, %v4924
  %v5009 = vadd.f32 %v4791, %v4926
  %v5010 = vadd.f32 %v4792, %v4929
  %v5011 = vadd.f32 %v4793, %v4931
  %v5012 = vadd.f32 %v4794, %v4934
  %v5013 = vadd.f32 %v4795, %v4936
  %v5014 = vadd.f32 %v4796, %v4939
  %v5015 = vadd.f32 %v4797, %v4941
  %v5016 = vadd.f32 %v4798, %v4944
  %v5017 = vadd.f32 %v4799, %v4946
  %v5018 = vadd.f32 %v4800, %v4949
  %v5019 = vadd.f32 %v4801, %v4951
  %v5020 = vadd.f32 %v4802, %v4954
  %v5021 = vadd.f32 %v4803, %v4956
  %v5022 = vadd.f32 %v4804, %v4959
  %v5023 = vadd.f32 %v4805, %v4961
  %v5024 = vadd.f32 %v4806, %v4964
  %v5025 = vadd.f32 %v4807, %v4966
  %v5026 = vadd.f32 %v4808, %v4969
  %v5027 = vadd.f32 %v4809, %v4971
  %v5028 = vadd.f32 %v4810, %v4964
  %v5029 = vadd.f32 %v4811, %v4966
  %v5030 = vadd.f32 %v4812, %v4959
  %v5031 = vadd.f32 %v4813, %v4961
  %v5032 = vlaneseq
  %v5033 = vshrl.u32 %v5032, 7
  %v5034 = vsub.s32 7, %v5033
  %v5035 = vrot.slane %v614, %v5034
  %v5036 = vmul.f32 %v563, %v5035
  %v5037 = vmul.f32 %v388, %v5035
  %v5038 = vmul.f32 %v596, %v5035
  %v5039 = vmul.f32 %v566, %v5035
  %v5040 = vmul.f32 %v397, %v5035
  %v5041 = vmul.f32 %v599, %v5035
  %v5042 = vmul.f32 %v567, %v5035
  %v5043 = vmul.f32 %v400, %v5035
  %v5044 = vmul.f32 %v600, %v5035
  %v5045 = vmul.f32 %v568, %v5035
  %v5046 = vmul.f32 %v403, %v5035
  %v5047 = vmul.f32 %v601, %v5035
  %v5048 = vmul.f32 %v569, %v5035
  %v5049 = vmul.f32 %v406, %v5035
  %v5050 = vmul.f32 %v602, %v5035
  %v5051 = vmul.f32 %v570, %v5035
  %v5052 = vmul.f32 %v409, %v5035
  %v5053 = vmul.f32 %v603, %v5035
  %v5054 = vmul.f32 %v571, %v5035
  %v5055 = vmul.f32 %v412, %v5035
  %v5056 = vmul.f32 %v604, %v5035
  %v5057 = vmul.f32 %v572, %v5035
  %v5058 = vmul.f32 %v415, %v5035
  %v5059 = vmul.f32 %v605, %v5035
  %v5060 = vmul.f32 %v573, %v5035
  %v5061 = vmul.f32 %v418, %v5035
  %v5062 = vmul.f32 %v606, %v5035
  %v5063 = vmul.f32 %v574, %v5035
  %v5064 = vmul.f32 %v421, %v5035
  %v5065 = vmul.f32 %v607, %v5035
  %v5066 = vmul.f32 %v575, %v5035
  %v5067 = vmul.f32 %v424, %v5035
  %v5068 = vmul.f32 %v608, %v5035
  %v5069 = vmul.f32 %v576, %v5035
  %v5070 = vmul.f32 %v427, %v5035
  %v5071 = vmul.f32 %v609, %v5035
  %v5072 = vmul.f32 %v577, %v5035
  %v5073 = vmul.f32 %v430, %v5035
  %v5074 = vmul.f32 %v610, %v5035
  %v5075 = vmul.f32 %v578, %v5035
  %v5076 = vmul.f32 %v433, %v5035
  %v5077 = vmul.f32 %v611, %v5035
  %v5120 = vrot.slane %v5036, 3
  %v5121 = vrot.slane %v5037, 3
  %v5122 = vsel %vm1166, %v5120, %v5121
  %v5123 = vrot.slane %v5038, 3
  %v5124 = vsel %vm1166, %v5121, %v5123
  %v5125 = vrot.slane %v5039, 3
  %v5126 = vrot.slane %v5040, 3
  %v5127 = vsel %vm1166, %v5125, %v5126
  %v5128 = vrot.slane %v5041, 3
  %v5129 = vsel %vm1166, %v5126, %v5128
  %v5130 = vrot.slane %v5042, 3
  %v5131 = vrot.slane %v5043, 3
  %v5132 = vsel %vm1166, %v5130, %v5131
  %v5133 = vrot.slane %v5044, 3
  %v5134 = vsel %vm1166, %v5131, %v5133
  %v5135 = vrot.slane %v5045, 3
  %v5136 = vrot.slane %v5046, 3
  %v5137 = vsel %vm1166, %v5135, %v5136
  %v5138 = vrot.slane %v5047, 3
  %v5139 = vsel %vm1166, %v5136, %v5138
  %v5140 = vrot.slane %v5048, 3
  %v5141 = vrot.slane %v5049, 3
  %v5142 = vsel %vm1166, %v5140, %v5141
  %v5143 = vrot.slane %v5050, 3
  %v5144 = vsel %vm1166, %v5141, %v5143
  %v5145 = vrot.slane %v5051, 3
  %v5146 = vrot.slane %v5052, 3
  %v5147 = vsel %vm1166, %v5145, %v5146
  %v5148 = vrot.slane %v5053, 3
  %v5149 = vsel %vm1166, %v5146, %v5148
  %v5150 = vrot.slane %v5054, 3
  %v5151 = vrot.slane %v5055, 3
  %v5152 = vsel %vm1166, %v5150, %v5151
  %v5153 = vrot.slane %v5056, 3
  %v5154 = vsel %vm1166, %v5151, %v5153
  %v5155 = vrot.slane %v5057, 3
  %v5156 = vrot.slane %v5058, 3
  %v5157 = vsel %vm1166, %v5155, %v5156
  %v5158 = vrot.slane %v5059, 3
  %v5159 = vsel %vm1166, %v5156, %v5158
  %v5160 = vrot.slane %v5060, 3
  %v5161 = vrot.slane %v5061, 3
  %v5162 = vsel %vm1166, %v5160, %v5161
  %v5163 = vrot.slane %v5062, 3
  %v5164 = vsel %vm1166, %v5161, %v5163
  %v5165 = vrot.slane %v5063, 3
  %v5166 = vrot.slane %v5064, 3
  %v5167 = vsel %vm1166, %v5165, %v5166
  %v5168 = vrot.slane %v5065, 3
  %v5169 = vsel %vm1166, %v5166, %v5168
  %v5170 = vrot.slane %v5066, 3
  %v5171 = vrot.slane %v5067, 3
  %v5172 = vsel %vm1166, %v5170, %v5171
  %v5173 = vrot.slane %v5068, 3
  %v5174 = vsel %vm1166, %v5171, %v5173
  %v5175 = vrot.slane %v5069, 3
  %v5176 = vrot.slane %v5070, 3
  %v5177 = vsel %vm1166, %v5175, %v5176
  %v5178 = vrot.slane %v5071, 3
  %v5179 = vsel %vm1166, %v5176, %v5178
  %v5180 = vrot.slane %v5072, 3
  %v5181 = vrot.slane %v5073, 3
  %v5182 = vsel %vm1166, %v5180, %v5181
  %v5183 = vrot.slane %v5074, 3
  %v5184 = vsel %vm1166, %v5181, %v5183
  %v5185 = vrot.slane %v5075, 3
  %v5186 = vrot.slane %v5076, 3
  %v5187 = vsel %vm1166, %v5185, %v5186
  %v5188 = vrot.slane %v5077, 3
  %v5189 = vsel %vm1166, %v5186, %v5188
  %v5218 = vadd.f32 %v5000, %v5122
  %v5219 = vadd.f32 %v5001, %v5124
  %v5220 = vadd.f32 %v5002, %v5127
  %v5221 = vadd.f32 %v5003, %v5129
  %v5222 = vadd.f32 %v5004, %v5132
  %v5223 = vadd.f32 %v5005, %v5134
  %v5224 = vadd.f32 %v5006, %v5137
  %v5225 = vadd.f32 %v5007, %v5139
  %v5226 = vadd.f32 %v5008, %v5142
  %v5227 = vadd.f32 %v5009, %v5144
  %v5228 = vadd.f32 %v5010, %v5147
  %v5229 = vadd.f32 %v5011, %v5149
  %v5230 = vadd.f32 %v5012, %v5152
  %v5231 = vadd.f32 %v5013, %v5154
  %v5232 = vadd.f32 %v5014, %v5157
  %v5233 = vadd.f32 %v5015, %v5159
  %v5234 = vadd.f32 %v5016, %v5162
  %v5235 = vadd.f32 %v5017, %v5164
  %v5236 = vadd.f32 %v5018, %v5167
  %v5237 = vadd.f32 %v5019, %v5169
  %v5238 = vadd.f32 %v5020, %v5172
  %v5239 = vadd.f32 %v5021, %v5174
  %v5240 = vadd.f32 %v5022, %v5177
  %v5241 = vadd.f32 %v5023, %v5179
  %v5242 = vadd.f32 %v5024, %v5182
  %v5243 = vadd.f32 %v5025, %v5184
  %v5244 = vadd.f32 %v5026, %v5187
  %v5245 = vadd.f32 %v5027, %v5189
  %v5246 = vadd.f32 %v5028, %v5182
  %v5247 = vadd.f32 %v5029, %v5184
  %v5248 = vadd.f32 %v5030, %v5177
  %v5249 = vadd.f32 %v5031, %v5179
  %v5250 = vlaneseq
  %v5251 = vshrl.u32 %v5250, 7
  %v5252 = vsub.s32 0, %v5251
  %v5253 = vrot.slane %v615, %v5252
  %v5254 = vmul.f32 %v563, %v5253
  %v5255 = vmul.f32 %v388, %v5253
  %v5256 = vmul.f32 %v596, %v5253
  %v5257 = vmul.f32 %v566, %v5253
  %v5258 = vmul.f32 %v397, %v5253
  %v5259 = vmul.f32 %v599, %v5253
  %v5260 = vmul.f32 %v567, %v5253
  %v5261 = vmul.f32 %v400, %v5253
  %v5262 = vmul.f32 %v600, %v5253
  %v5263 = vmul.f32 %v568, %v5253
  %v5264 = vmul.f32 %v403, %v5253
  %v5265 = vmul.f32 %v601, %v5253
  %v5266 = vmul.f32 %v569, %v5253
  %v5267 = vmul.f32 %v406, %v5253
  %v5268 = vmul.f32 %v602, %v5253
  %v5269 = vmul.f32 %v570, %v5253
  %v5270 = vmul.f32 %v409, %v5253
  %v5271 = vmul.f32 %v603, %v5253
  %v5272 = vmul.f32 %v571, %v5253
  %v5273 = vmul.f32 %v412, %v5253
  %v5274 = vmul.f32 %v604, %v5253
  %v5275 = vmul.f32 %v572, %v5253
  %v5276 = vmul.f32 %v415, %v5253
  %v5277 = vmul.f32 %v605, %v5253
  %v5278 = vmul.f32 %v573, %v5253
  %v5279 = vmul.f32 %v418, %v5253
  %v5280 = vmul.f32 %v606, %v5253
  %v5281 = vmul.f32 %v574, %v5253
  %v5282 = vmul.f32 %v421, %v5253
  %v5283 = vmul.f32 %v607, %v5253
  %v5284 = vmul.f32 %v575, %v5253
  %v5285 = vmul.f32 %v424, %v5253
  %v5286 = vmul.f32 %v608, %v5253
  %v5287 = vmul.f32 %v576, %v5253
  %v5288 = vmul.f32 %v427, %v5253
  %v5289 = vmul.f32 %v609, %v5253
  %v5290 = vmul.f32 %v577, %v5253
  %v5291 = vmul.f32 %v430, %v5253
  %v5292 = vmul.f32 %v610, %v5253
  %v5293 = vmul.f32 %v578, %v5253
  %v5294 = vmul.f32 %v433, %v5253
  %v5295 = vmul.f32 %v611, %v5253
  %v5338 = vrot.slane %v5254, 4
  %v5339 = vrot.slane %v5255, 4
  %v5340 = vsel %vm1381, %v5338, %v5339
  %v5341 = vrot.slane %v5256, 4
  %v5342 = vsel %vm1381, %v5339, %v5341
  %v5343 = vrot.slane %v5257, 4
  %v5344 = vrot.slane %v5258, 4
  %v5345 = vsel %vm1381, %v5343, %v5344
  %v5346 = vrot.slane %v5259, 4
  %v5347 = vsel %vm1381, %v5344, %v5346
  %v5348 = vrot.slane %v5260, 4
  %v5349 = vrot.slane %v5261, 4
  %v5350 = vsel %vm1381, %v5348, %v5349
  %v5351 = vrot.slane %v5262, 4
  %v5352 = vsel %vm1381, %v5349, %v5351
  %v5353 = vrot.slane %v5263, 4
  %v5354 = vrot.slane %v5264, 4
  %v5355 = vsel %vm1381, %v5353, %v5354
  %v5356 = vrot.slane %v5265, 4
  %v5357 = vsel %vm1381, %v5354, %v5356
  %v5358 = vrot.slane %v5266, 4
  %v5359 = vrot.slane %v5267, 4
  %v5360 = vsel %vm1381, %v5358, %v5359
  %v5361 = vrot.slane %v5268, 4
  %v5362 = vsel %vm1381, %v5359, %v5361
  %v5363 = vrot.slane %v5269, 4
  %v5364 = vrot.slane %v5270, 4
  %v5365 = vsel %vm1381, %v5363, %v5364
  %v5366 = vrot.slane %v5271, 4
  %v5367 = vsel %vm1381, %v5364, %v5366
  %v5368 = vrot.slane %v5272, 4
  %v5369 = vrot.slane %v5273, 4
  %v5370 = vsel %vm1381, %v5368, %v5369
  %v5371 = vrot.slane %v5274, 4
  %v5372 = vsel %vm1381, %v5369, %v5371
  %v5373 = vrot.slane %v5275, 4
  %v5374 = vrot.slane %v5276, 4
  %v5375 = vsel %vm1381, %v5373, %v5374
  %v5376 = vrot.slane %v5277, 4
  %v5377 = vsel %vm1381, %v5374, %v5376
  %v5378 = vrot.slane %v5278, 4
  %v5379 = vrot.slane %v5279, 4
  %v5380 = vsel %vm1381, %v5378, %v5379
  %v5381 = vrot.slane %v5280, 4
  %v5382 = vsel %vm1381, %v5379, %v5381
  %v5383 = vrot.slane %v5281, 4
  %v5384 = vrot.slane %v5282, 4
  %v5385 = vsel %vm1381, %v5383, %v5384
  %v5386 = vrot.slane %v5283, 4
  %v5387 = vsel %vm1381, %v5384, %v5386
  %v5388 = vrot.slane %v5284, 4
  %v5389 = vrot.slane %v5285, 4
  %v5390 = vsel %vm1381, %v5388, %v5389
  %v5391 = vrot.slane %v5286, 4
  %v5392 = vsel %vm1381, %v5389, %v5391
  %v5393 = vrot.slane %v5287, 4
  %v5394 = vrot.slane %v5288, 4
  %v5395 = vsel %vm1381, %v5393, %v5394
  %v5396 = vrot.slane %v5289, 4
  %v5397 = vsel %vm1381, %v5394, %v5396
  %v5398 = vrot.slane %v5290, 4
  %v5399 = vrot.slane %v5291, 4
  %v5400 = vsel %vm1381, %v5398, %v5399
  %v5401 = vrot.slane %v5292, 4
  %v5402 = vsel %vm1381, %v5399, %v5401
  %v5403 = vrot.slane %v5293, 4
  %v5404 = vrot.slane %v5294, 4
  %v5405 = vsel %vm1381, %v5403, %v5404
  %v5406 = vrot.slane %v5295, 4
  %v5407 = vsel %vm1381, %v5404, %v5406
  %v5436 = vadd.f32 %v5218, %v5340
  %v5437 = vadd.f32 %v5219, %v5342
  %v5438 = vadd.f32 %v5220, %v5345
  %v5439 = vadd.f32 %v5221, %v5347
  %v5440 = vadd.f32 %v5222, %v5350
  %v5441 = vadd.f32 %v5223, %v5352
  %v5442 = vadd.f32 %v5224, %v5355
  %v5443 = vadd.f32 %v5225, %v5357
  %v5444 = vadd.f32 %v5226, %v5360
  %v5445 = vadd.f32 %v5227, %v5362
  %v5446 = vadd.f32 %v5228, %v5365
  %v5447 = vadd.f32 %v5229, %v5367
  %v5448 = vadd.f32 %v5230, %v5370
  %v5449 = vadd.f32 %v5231, %v5372
  %v5450 = vadd.f32 %v5232, %v5375
  %v5451 = vadd.f32 %v5233, %v5377
  %v5452 = vadd.f32 %v5234, %v5380
  %v5453 = vadd.f32 %v5235, %v5382
  %v5454 = vadd.f32 %v5236, %v5385
  %v5455 = vadd.f32 %v5237, %v5387
  %v5456 = vadd.f32 %v5238, %v5390
  %v5457 = vadd.f32 %v5239, %v5392
  %v5458 = vadd.f32 %v5240, %v5395
  %v5459 = vadd.f32 %v5241, %v5397
  %v5460 = vadd.f32 %v5242, %v5400
  %v5461 = vadd.f32 %v5243, %v5402
  %v5462 = vadd.f32 %v5244, %v5405
  %v5463 = vadd.f32 %v5245, %v5407
  %v5464 = vadd.f32 %v5246, %v5400
  %v5465 = vadd.f32 %v5247, %v5402
  %v5466 = vadd.f32 %v5248, %v5395
  %v5467 = vadd.f32 %v5249, %v5397
  %v5468 = vld [vmem:[%s4] sm:$0x1]
  %v5470 = vlaneseq
  %v5471 = vshrl.u32 %v5470, 7
  %v5472 = vsub.s32 0, %v5471
  %v5473 = vrot.slane %v5468, %v5472
  %v5475 = vadd.f32 %v5436, %v5473
  %v5476 = vadd.f32 %v5437, %v5473
  %v5477 = vadd.f32 %v5438, %v5473
  %v5478 = vadd.f32 %v5439, %v5473
  %v5479 = vadd.f32 %v5440, %v5473
  %v5480 = vadd.f32 %v5441, %v5473
  %v5481 = vadd.f32 %v5442, %v5473
  %v5482 = vadd.f32 %v5443, %v5473
  %v5483 = vadd.f32 %v5444, %v5473
  %v5484 = vadd.f32 %v5445, %v5473
  %v5485 = vadd.f32 %v5446, %v5473
  %v5486 = vadd.f32 %v5447, %v5473
  %v5487 = vadd.f32 %v5448, %v5473
  %v5488 = vadd.f32 %v5449, %v5473
  %v5489 = vadd.f32 %v5450, %v5473
  %v5490 = vadd.f32 %v5451, %v5473
  %v5491 = vadd.f32 %v5452, %v5473
  %v5492 = vadd.f32 %v5453, %v5473
  %v5493 = vadd.f32 %v5454, %v5473
  %v5494 = vadd.f32 %v5455, %v5473
  %v5495 = vadd.f32 %v5456, %v5473
  %v5496 = vadd.f32 %v5457, %v5473
  %v5497 = vadd.f32 %v5458, %v5473
  %v5498 = vadd.f32 %v5459, %v5473
  %v5499 = vadd.f32 %v5460, %v5473
  %v5500 = vadd.f32 %v5461, %v5473
  %v5501 = vadd.f32 %v5462, %v5473
  %v5502 = vadd.f32 %v5463, %v5473
  %v5503 = vadd.f32 %v5464, %v5473
  %v5504 = vadd.f32 %v5465, %v5473
  %v5505 = vadd.f32 %v5466, %v5473
  %v5506 = vadd.f32 %v5467, %v5473
  %v5507 = vld [vmem:[%s5] sm:$0xff]
  %v5508 = vld [vmem:[%s5 + $0x8] sm:$0xff]
  %v5509 = vld [vmem:[%s5 + $0x10] sm:$0xff]
  %v5510 = vld [vmem:[%s5 + $0x18] sm:$0xff]
  %v5511 = vld [vmem:[%s5 + $0x20] sm:$0xff]
  %v5512 = vld [vmem:[%s5 + $0x28] sm:$0xff]
  %v5513 = vld [vmem:[%s5 + $0x30] sm:$0xff]
  %v5514 = vld [vmem:[%s5 + $0x38] sm:$0xff]
  %v5515 = vld [vmem:[%s5 + $0x40] sm:$0xff]
  %v5516 = vld [vmem:[%s5 + $0x48] sm:$0xff]
  %v5517 = vld [vmem:[%s5 + $0x50] sm:$0xff]
  %v5518 = vld [vmem:[%s5 + $0x58] sm:$0xff]
  %v5519 = vld [vmem:[%s5 + $0x60] sm:$0xff]
  %v5520 = vld [vmem:[%s5 + $0x68] sm:$0xff]
  %v5521 = vld [vmem:[%s5 + $0x70] sm:$0xff]
  %v5522 = vld [vmem:[%s5 + $0x78] sm:$0xff]
  %5523 = vmatprep.subr.mxu0 0.0
  %5524 = vmatpush1.msra.mxu0 %v5522
  %5525 = vmatprep.subr.mxu0 0.0
  %5526 = vmatpush1.msra.mxu0 %v5521
  %5527 = vmatprep.subr.mxu0 0.0
  %5528 = vmatpush1.msra.mxu0 %v5520
  %5529 = vmatprep.subr.mxu0 0.0
  %5530 = vmatpush1.msra.mxu0 %v5519
  %5531 = vmatprep.subr.mxu0 0.0
  %5532 = vmatpush1.msra.mxu0 %v5518
  %5533 = vmatprep.subr.mxu0 0.0
  %5534 = vmatpush1.msra.mxu0 %v5517
  %5535 = vmatprep.subr.mxu0 0.0
  %5536 = vmatpush1.msra.mxu0 %v5516
  %5537 = vmatprep.subr.mxu0 0.0
  %5538 = vmatpush1.msra.mxu0 %v5515
  %5539 = vmatprep.subr.mxu0 0.0
  %5540 = vmatpush1.msra.mxu0 %v5514
  %5541 = vmatprep.subr.mxu0 0.0
  %5542 = vmatpush1.msra.mxu0 %v5513
  %5543 = vmatprep.subr.mxu0 0.0
  %5544 = vmatpush1.msra.mxu0 %v5512
  %5545 = vmatprep.subr.mxu0 0.0
  %5546 = vmatpush1.msra.mxu0 %v5511
  %5547 = vmatprep.subr.mxu0 0.0
  %5548 = vmatpush1.msra.mxu0 %v5510
  %5549 = vmatprep.subr.mxu0 0.0
  %5550 = vmatpush1.msra.mxu0 %v5509
  %5551 = vmatprep.subr.mxu0 0.0
  %5552 = vmatpush1.msra.mxu0 %v5508
  %5553 = vmatprep.subr.mxu0 0.0
  %5554 = vmatpush1.msra.mxu0 %v5507
  %5555 = vmatprep.subr.mxu0 0.0
  %5556 = vmatpush2.msra.mxu0 0.0
  %5557 = vmatprep.subr.mxu0 0.0
  %5558 = vmatpush2.msra.mxu0 0.0
  %5559 = vmatprep.subr.mxu0 0.0
  %5560 = vmatpush2.msra.mxu0 0.0
  %5561 = vmatprep.subr.mxu0 0.0
  %5562 = vmatpush2.msra.mxu0 0.0
  %5563 = vmatprep.subr.mxu0 0.0
  %5564 = vmatpush2.msra.mxu0 0.0
  %5565 = vmatprep.subr.mxu0 0.0
  %5566 = vmatpush2.msra.mxu0 0.0
  %5567 = vmatprep.subr.mxu0 0.0
  %5568 = vmatpush2.msra.mxu0 0.0
  %5569 = vmatprep.subr.mxu0 0.0
  %5570 = vmatpush2.msra.mxu0 0.0
  %5571 = vmatprep.subr.mxu0 0.0
  %5572 = vmatpush2.msra.mxu0 0.0
  %5573 = vmatprep.subr.mxu0 0.0
  %5574 = vmatpush2.msra.mxu0 0.0
  %5575 = vmatprep.subr.mxu0 0.0
  %5576 = vmatpush2.msra.mxu0 0.0
  %5577 = vmatprep.subr.mxu0 0.0
  %5578 = vmatpush2.msra.mxu0 0.0
  %5579 = vmatprep.subr.mxu0 0.0
  %5580 = vmatpush2.msra.mxu0 0.0
  %5581 = vmatprep.subr.mxu0 0.0
  %5582 = vmatpush2.msra.mxu0 0.0
  %5583 = vmatprep.subr.mxu0 0.0
  %5584 = vmatpush2.msra.mxu0 0.0
  %5585 = vmatprep.subr.mxu0 0.0
  %5586 = vmatpush2.msra.mxu0 0.0
  %5587 = vmatprep.mubr.f32.mxu0 0.0
  %5588 = vmatmul.mubr.f32.gmra.mxu0 %v5475
  %v5589 = vpop.f32.mrf.mxu0
  %v5590 = vadd.f32 0.0, %v5589
  %v5591 = vpop.f32.mrf.mxu0
  %5592 = vmatprep.mubr.f32.mxu0 0.0
  %5593 = vmatmul.mubr.f32.gmra.mxu0 %v5476
  %v5594 = vpop.f32.mrf.mxu0
  %v5595 = vadd.f32 0.0, %v5594
  %v5596 = vpop.f32.mrf.mxu0
  %5597 = vmatprep.mubr.f32.mxu0 0.0
  %5598 = vmatmul.mubr.f32.gmra.mxu0 %v5477
  %v5599 = vpop.f32.mrf.mxu0
  %v5600 = vadd.f32 0.0, %v5599
  %v5601 = vpop.f32.mrf.mxu0
  %5602 = vmatprep.mubr.f32.mxu0 0.0
  %5603 = vmatmul.mubr.f32.gmra.mxu0 %v5478
  %v5604 = vpop.f32.mrf.mxu0
  %v5605 = vadd.f32 0.0, %v5604
  %v5606 = vpop.f32.mrf.mxu0
  %5607 = vmatprep.mubr.f32.mxu0 0.0
  %5608 = vmatmul.mubr.f32.gmra.mxu0 %v5479
  %v5609 = vpop.f32.mrf.mxu0
  %v5610 = vadd.f32 0.0, %v5609
  %v5611 = vpop.f32.mrf.mxu0
  %5612 = vmatprep.mubr.f32.mxu0 0.0
  %5613 = vmatmul.mubr.f32.gmra.mxu0 %v5480
  %v5614 = vpop.f32.mrf.mxu0
  %v5615 = vadd.f32 0.0, %v5614
  %v5616 = vpop.f32.mrf.mxu0
  %5617 = vmatprep.mubr.f32.mxu0 0.0
  %5618 = vmatmul.mubr.f32.gmra.mxu0 %v5481
  %v5619 = vpop.f32.mrf.mxu0
  %v5620 = vadd.f32 0.0, %v5619
  %v5621 = vpop.f32.mrf.mxu0
  %5622 = vmatprep.mubr.f32.mxu0 0.0
  %5623 = vmatmul.mubr.f32.gmra.mxu0 %v5482
  %v5624 = vpop.f32.mrf.mxu0
  %v5625 = vadd.f32 0.0, %v5624
  %v5626 = vpop.f32.mrf.mxu0
  %5627 = vmatprep.mubr.f32.mxu0 0.0
  %5628 = vmatmul.mubr.f32.gmra.mxu0 %v5483
  %v5629 = vpop.f32.mrf.mxu0
  %v5630 = vadd.f32 0.0, %v5629
  %v5631 = vpop.f32.mrf.mxu0
  %5632 = vmatprep.mubr.f32.mxu0 0.0
  %5633 = vmatmul.mubr.f32.gmra.mxu0 %v5484
  %v5634 = vpop.f32.mrf.mxu0
  %v5635 = vadd.f32 0.0, %v5634
  %v5636 = vpop.f32.mrf.mxu0
  %5637 = vmatprep.mubr.f32.mxu0 0.0
  %5638 = vmatmul.mubr.f32.gmra.mxu0 %v5485
  %v5639 = vpop.f32.mrf.mxu0
  %v5640 = vadd.f32 0.0, %v5639
  %v5641 = vpop.f32.mrf.mxu0
  %5642 = vmatprep.mubr.f32.mxu0 0.0
  %5643 = vmatmul.mubr.f32.gmra.mxu0 %v5486
  %v5644 = vpop.f32.mrf.mxu0
  %v5645 = vadd.f32 0.0, %v5644
  %v5646 = vpop.f32.mrf.mxu0
  %5647 = vmatprep.mubr.f32.mxu0 0.0
  %5648 = vmatmul.mubr.f32.gmra.mxu0 %v5487
  %v5649 = vpop.f32.mrf.mxu0
  %v5650 = vadd.f32 0.0, %v5649
  %v5651 = vpop.f32.mrf.mxu0
  %5652 = vmatprep.mubr.f32.mxu0 0.0
  %5653 = vmatmul.mubr.f32.gmra.mxu0 %v5488
  %v5654 = vpop.f32.mrf.mxu0
  %v5655 = vadd.f32 0.0, %v5654
  %v5656 = vpop.f32.mrf.mxu0
  %5657 = vmatprep.mubr.f32.mxu0 0.0
  %5658 = vmatmul.mubr.f32.gmra.mxu0 %v5489
  %v5659 = vpop.f32.mrf.mxu0
  %v5660 = vadd.f32 0.0, %v5659
  %v5661 = vpop.f32.mrf.mxu0
  %5662 = vmatprep.mubr.f32.mxu0 0.0
  %5663 = vmatmul.mubr.f32.gmra.mxu0 %v5490
  %v5664 = vpop.f32.mrf.mxu0
  %v5665 = vadd.f32 0.0, %v5664
  %v5666 = vpop.f32.mrf.mxu0
  %5667 = vmatprep.mubr.f32.mxu0 0.0
  %5668 = vmatmul.mubr.f32.gmra.mxu0 %v5491
  %v5669 = vpop.f32.mrf.mxu0
  %v5670 = vadd.f32 0.0, %v5669
  %v5671 = vpop.f32.mrf.mxu0
  %5672 = vmatprep.mubr.f32.mxu0 0.0
  %5673 = vmatmul.mubr.f32.gmra.mxu0 %v5492
  %v5674 = vpop.f32.mrf.mxu0
  %v5675 = vadd.f32 0.0, %v5674
  %v5676 = vpop.f32.mrf.mxu0
  %5677 = vmatprep.mubr.f32.mxu0 0.0
  %5678 = vmatmul.mubr.f32.gmra.mxu0 %v5493
  %v5679 = vpop.f32.mrf.mxu0
  %v5680 = vadd.f32 0.0, %v5679
  %v5681 = vpop.f32.mrf.mxu0
  %5682 = vmatprep.mubr.f32.mxu0 0.0
  %5683 = vmatmul.mubr.f32.gmra.mxu0 %v5494
  %v5684 = vpop.f32.mrf.mxu0
  %v5685 = vadd.f32 0.0, %v5684
  %v5686 = vpop.f32.mrf.mxu0
  %5687 = vmatprep.mubr.f32.mxu0 0.0
  %5688 = vmatmul.mubr.f32.gmra.mxu0 %v5495
  %v5689 = vpop.f32.mrf.mxu0
  %v5690 = vadd.f32 0.0, %v5689
  %v5691 = vpop.f32.mrf.mxu0
  %5692 = vmatprep.mubr.f32.mxu0 0.0
  %5693 = vmatmul.mubr.f32.gmra.mxu0 %v5496
  %v5694 = vpop.f32.mrf.mxu0
  %v5695 = vadd.f32 0.0, %v5694
  %v5696 = vpop.f32.mrf.mxu0
  %5697 = vmatprep.mubr.f32.mxu0 0.0
  %5698 = vmatmul.mubr.f32.gmra.mxu0 %v5497
  %v5699 = vpop.f32.mrf.mxu0
  %v5700 = vadd.f32 0.0, %v5699
  %v5701 = vpop.f32.mrf.mxu0
  %5702 = vmatprep.mubr.f32.mxu0 0.0
  %5703 = vmatmul.mubr.f32.gmra.mxu0 %v5498
  %v5704 = vpop.f32.mrf.mxu0
  %v5705 = vadd.f32 0.0, %v5704
  %v5706 = vpop.f32.mrf.mxu0
  %5707 = vmatprep.mubr.f32.mxu0 0.0
  %5708 = vmatmul.mubr.f32.gmra.mxu0 %v5499
  %v5709 = vpop.f32.mrf.mxu0
  %v5710 = vadd.f32 0.0, %v5709
  %v5711 = vpop.f32.mrf.mxu0
  %5712 = vmatprep.mubr.f32.mxu0 0.0
  %5713 = vmatmul.mubr.f32.gmra.mxu0 %v5500
  %v5714 = vpop.f32.mrf.mxu0
  %v5715 = vadd.f32 0.0, %v5714
  %v5716 = vpop.f32.mrf.mxu0
  %5717 = vmatprep.mubr.f32.mxu0 0.0
  %5718 = vmatmul.mubr.f32.gmra.mxu0 %v5501
  %v5719 = vpop.f32.mrf.mxu0
  %v5720 = vadd.f32 0.0, %v5719
  %v5721 = vpop.f32.mrf.mxu0
  %5722 = vmatprep.mubr.f32.mxu0 0.0
  %5723 = vmatmul.mubr.f32.gmra.mxu0 %v5502
  %v5724 = vpop.f32.mrf.mxu0
  %v5725 = vadd.f32 0.0, %v5724
  %v5726 = vpop.f32.mrf.mxu0
  %5727 = vmatprep.mubr.f32.mxu0 0.0
  %5728 = vmatmul.mubr.f32.gmra.mxu0 %v5503
  %v5729 = vpop.f32.mrf.mxu0
  %v5730 = vadd.f32 0.0, %v5729
  %v5731 = vpop.f32.mrf.mxu0
  %5732 = vmatprep.mubr.f32.mxu0 0.0
  %5733 = vmatmul.mubr.f32.gmra.mxu0 %v5504
  %v5734 = vpop.f32.mrf.mxu0
  %v5735 = vadd.f32 0.0, %v5734
  %v5736 = vpop.f32.mrf.mxu0
  %5737 = vmatprep.mubr.f32.mxu0 0.0
  %5738 = vmatmul.mubr.f32.gmra.mxu0 %v5505
  %v5739 = vpop.f32.mrf.mxu0
  %v5740 = vadd.f32 0.0, %v5739
  %v5741 = vpop.f32.mrf.mxu0
  %5742 = vmatprep.mubr.f32.mxu0 0.0
  %5743 = vmatmul.mubr.f32.gmra.mxu0 %v5506
  %v5744 = vpop.f32.mrf.mxu0
  %v5745 = vadd.f32 0.0, %v5744
  %v5746 = vpop.f32.mrf.mxu0
  %5747 = vdwg.mxu0
  %v5748 = vadd.f32 %v41, %v5590
  %v5749 = vadd.f32 %v42, %v5595
  %v5750 = vadd.f32 %v43, %v5600
  %v5751 = vadd.f32 %v44, %v5605
  %v5752 = vadd.f32 %v45, %v5610
  %v5753 = vadd.f32 %v46, %v5615
  %v5754 = vadd.f32 %v47, %v5620
  %v5755 = vadd.f32 %v48, %v5625
  %v5756 = vadd.f32 %v49, %v5630
  %v5757 = vadd.f32 %v50, %v5635
  %v5758 = vadd.f32 %v51, %v5640
  %v5759 = vadd.f32 %v52, %v5645
  %v5760 = vadd.f32 %v53, %v5650
  %v5761 = vadd.f32 %v54, %v5655
  %v5762 = vadd.f32 %v55, %v5660
  %v5763 = vadd.f32 %v56, %v5665
  %v5764 = vadd.f32 %v57, %v5670
  %v5765 = vadd.f32 %v58, %v5675
  %v5766 = vadd.f32 %v59, %v5680
  %v5767 = vadd.f32 %v60, %v5685
  %v5768 = vadd.f32 %v61, %v5690
  %v5769 = vadd.f32 %v62, %v5695
  %v5770 = vadd.f32 %v63, %v5700
  %v5771 = vadd.f32 %v64, %v5705
  %v5772 = vadd.f32 %v65, %v5710
  %v5773 = vadd.f32 %v66, %v5715
  %v5774 = vadd.f32 %v67, %v5720
  %v5775 = vadd.f32 %v68, %v5725
  %v5776 = vadd.f32 %v69, %v5730
  %v5777 = vadd.f32 %v70, %v5735
  %v5778 = vadd.f32 %v71, %v5740
  %v5779 = vadd.f32 %v72, %v5745
  %v5780 = vld [vmem:[%s6] sm:$0x1]
  %v5782 = vlaneseq
  %v5783 = vshrl.u32 %v5782, 7
  %v5784 = vsub.s32 0, %v5783
  %v5785 = vrot.slane %v5780, %v5784
  %v5787 = vadd.f32 %v5748, %v5785
  %v5788 = vadd.f32 %v5749, %v5785
  %v5789 = vadd.f32 %v5750, %v5785
  %v5790 = vadd.f32 %v5751, %v5785
  %v5791 = vadd.f32 %v5752, %v5785
  %v5792 = vadd.f32 %v5753, %v5785
  %v5793 = vadd.f32 %v5754, %v5785
  %v5794 = vadd.f32 %v5755, %v5785
  %v5795 = vadd.f32 %v5756, %v5785
  %v5796 = vadd.f32 %v5757, %v5785
  %v5797 = vadd.f32 %v5758, %v5785
  %v5798 = vadd.f32 %v5759, %v5785
  %v5799 = vadd.f32 %v5760, %v5785
  %v5800 = vadd.f32 %v5761, %v5785
  %v5801 = vadd.f32 %v5762, %v5785
  %v5802 = vadd.f32 %v5763, %v5785
  %v5803 = vadd.f32 %v5764, %v5785
  %v5804 = vadd.f32 %v5765, %v5785
  %v5805 = vadd.f32 %v5766, %v5785
  %v5806 = vadd.f32 %v5767, %v5785
  %v5807 = vadd.f32 %v5768, %v5785
  %v5808 = vadd.f32 %v5769, %v5785
  %v5809 = vadd.f32 %v5770, %v5785
  %v5810 = vadd.f32 %v5771, %v5785
  %v5811 = vadd.f32 %v5772, %v5785
  %v5812 = vadd.f32 %v5773, %v5785
  %v5813 = vadd.f32 %v5774, %v5785
  %v5814 = vadd.f32 %v5775, %v5785
  %v5815 = vadd.f32 %v5776, %v5785
  %v5816 = vadd.f32 %v5777, %v5785
  %v5817 = vadd.f32 %v5778, %v5785
  %v5818 = vadd.f32 %v5779, %v5785
  %v5819 = vld [vmem:[%s7] sm:$0xff]
  %v5820 = vld [vmem:[%s7 + $0x8] sm:$0xff]
  %v5821 = vld [vmem:[%s7 + $0x10] sm:$0xff]
  %v5822 = vld [vmem:[%s7 + $0x18] sm:$0xff]
  %v5823 = vld [vmem:[%s7 + $0x20] sm:$0xff]
  %v5824 = vld [vmem:[%s7 + $0x28] sm:$0xff]
  %v5825 = vld [vmem:[%s7 + $0x30] sm:$0xff]
  %v5826 = vld [vmem:[%s7 + $0x38] sm:$0xff]
  %v5827 = vld [vmem:[%s7 + $0x40] sm:$0xff]
  %v5828 = vld [vmem:[%s7 + $0x48] sm:$0xff]
  %v5829 = vld [vmem:[%s7 + $0x50] sm:$0xff]
  %v5830 = vld [vmem:[%s7 + $0x58] sm:$0xff]
  %v5831 = vld [vmem:[%s7 + $0x60] sm:$0xff]
  %v5832 = vld [vmem:[%s7 + $0x68] sm:$0xff]
  %v5833 = vld [vmem:[%s7 + $0x70] sm:$0xff]
  %v5834 = vld [vmem:[%s7 + $0x78] sm:$0xff]
  %v5835 = vld [vmem:[%s7 + $0x80] sm:$0xff]
  %v5836 = vld [vmem:[%s7 + $0x88] sm:$0xff]
  %v5837 = vld [vmem:[%s7 + $0x90] sm:$0xff]
  %v5838 = vld [vmem:[%s7 + $0x98] sm:$0xff]
  %v5839 = vld [vmem:[%s7 + $0xa0] sm:$0xff]
  %v5840 = vld [vmem:[%s7 + $0xa8] sm:$0xff]
  %v5841 = vld [vmem:[%s7 + $0xb0] sm:$0xff]
  %v5842 = vld [vmem:[%s7 + $0xb8] sm:$0xff]
  %v5843 = vld [vmem:[%s7 + $0xc0] sm:$0xff]
  %v5844 = vld [vmem:[%s7 + $0xc8] sm:$0xff]
  %v5845 = vld [vmem:[%s7 + $0xd0] sm:$0xff]
  %v5846 = vld [vmem:[%s7 + $0xd8] sm:$0xff]
  %v5847 = vld [vmem:[%s7 + $0xe0] sm:$0xff]
  %v5848 = vld [vmem:[%s7 + $0xe8] sm:$0xff]
  %v5849 = vld [vmem:[%s7 + $0xf0] sm:$0xff]
  %v5850 = vld [vmem:[%s7 + $0xf8] sm:$0xff]
  %v5851 = vld [vmem:[%s7 + $0x100] sm:$0xff]
  %v5852 = vld [vmem:[%s7 + $0x108] sm:$0xff]
  %v5853 = vld [vmem:[%s7 + $0x110] sm:$0xff]
  %v5854 = vld [vmem:[%s7 + $0x118] sm:$0xff]
  %v5855 = vld [vmem:[%s7 + $0x120] sm:$0xff]
  %v5856 = vld [vmem:[%s7 + $0x128] sm:$0xff]
  %v5857 = vld [vmem:[%s7 + $0x130] sm:$0xff]
  %v5858 = vld [vmem:[%s7 + $0x138] sm:$0xff]
  %v5859 = vld [vmem:[%s7 + $0x140] sm:$0xff]
  %v5860 = vld [vmem:[%s7 + $0x148] sm:$0xff]
  %v5861 = vld [vmem:[%s7 + $0x150] sm:$0xff]
  %v5862 = vld [vmem:[%s7 + $0x158] sm:$0xff]
  %v5863 = vld [vmem:[%s7 + $0x160] sm:$0xff]
  %v5864 = vld [vmem:[%s7 + $0x168] sm:$0xff]
  %v5865 = vld [vmem:[%s7 + $0x170] sm:$0xff]
  %v5866 = vld [vmem:[%s7 + $0x178] sm:$0xff]
  %v5867 = vld [vmem:[%s7 + $0x180] sm:$0xff]
  %v5868 = vld [vmem:[%s7 + $0x188] sm:$0xff]
  %v5869 = vld [vmem:[%s7 + $0x190] sm:$0xff]
  %v5870 = vld [vmem:[%s7 + $0x198] sm:$0xff]
  %v5871 = vld [vmem:[%s7 + $0x1a0] sm:$0xff]
  %v5872 = vld [vmem:[%s7 + $0x1a8] sm:$0xff]
  %v5873 = vld [vmem:[%s7 + $0x1b0] sm:$0xff]
  %v5874 = vld [vmem:[%s7 + $0x1b8] sm:$0xff]
  %v5875 = vld [vmem:[%s7 + $0x1c0] sm:$0xff]
  %v5876 = vld [vmem:[%s7 + $0x1c8] sm:$0xff]
  %v5877 = vld [vmem:[%s7 + $0x1d0] sm:$0xff]
  %v5878 = vld [vmem:[%s7 + $0x1d8] sm:$0xff]
  %v5879 = vld [vmem:[%s7 + $0x1e0] sm:$0xff]
  %v5880 = vld [vmem:[%s7 + $0x1e8] sm:$0xff]
  %v5881 = vld [vmem:[%s7 + $0x1f0] sm:$0xff]
  %v5882 = vld [vmem:[%s7 + $0x1f8] sm:$0xff]
  %v5883 = vld [vmem:[%s8] sm:$0xf]
  %v5885 = vlaneseq
  %v5886 = vshrl.u32 %v5885, 7
  %v5887 = vsub.s32 0, %v5886
  %v5888 = vrot.slane %v5883, %v5887
  %v5889 = vlaneseq
  %v5890 = vshrl.u32 %v5889, 7
  %v5891 = vsub.s32 1, %v5890
  %v5892 = vrot.slane %v5883, %v5891
  %v5893 = vlaneseq
  %v5894 = vshrl.u32 %v5893, 7
  %v5895 = vsub.s32 2, %v5894
  %v5896 = vrot.slane %v5883, %v5895
  %v5897 = vlaneseq
  %v5898 = vshrl.u32 %v5897, 7
  %v5899 = vsub.s32 3, %v5898
  %v5900 = vrot.slane %v5883, %v5899
  %5905 = vmatprep.subr.mxu0 %v5880
  %5906 = vmatpush1.msra.mxu0 %v5879
  %5907 = vmatprep.subr.mxu0 %v5876
  %5908 = vmatpush1.msra.mxu0 %v5875
  %5909 = vmatprep.subr.mxu0 %v5872
  %5910 = vmatpush1.msra.mxu0 %v5871
  %5911 = vmatprep.subr.mxu0 %v5868
  %5912 = vmatpush1.msra.mxu0 %v5867
  %5913 = vmatprep.subr.mxu0 %v5864
  %5914 = vmatpush1.msra.mxu0 %v5863
  %5915 = vmatprep.subr.mxu0 %v5860
  %5916 = vmatpush1.msra.mxu0 %v5859
  %5917 = vmatprep.subr.mxu0 %v5856
  %5918 = vmatpush1.msra.mxu0 %v5855
  %5919 = vmatprep.subr.mxu0 %v5852
  %5920 = vmatpush1.msra.mxu0 %v5851
  %5921 = vmatprep.subr.mxu0 %v5848
  %5922 = vmatpush1.msra.mxu0 %v5847
  %5923 = vmatprep.subr.mxu0 %v5844
  %5924 = vmatpush1.msra.mxu0 %v5843
  %5925 = vmatprep.subr.mxu0 %v5840
  %5926 = vmatpush1.msra.mxu0 %v5839
  %5927 = vmatprep.subr.mxu0 %v5836
  %5928 = vmatpush1.msra.mxu0 %v5835
  %5929 = vmatprep.subr.mxu0 %v5832
  %5930 = vmatpush1.msra.mxu0 %v5831
  %5931 = vmatprep.subr.mxu0 %v5828
  %5932 = vmatpush1.msra.mxu0 %v5827
  %5933 = vmatprep.subr.mxu0 %v5824
  %5934 = vmatpush1.msra.mxu0 %v5823
  %5935 = vmatprep.subr.mxu0 %v5820
  %5936 = vmatpush1.msra.mxu0 %v5819
  %5937 = vmatprep.subr.mxu0 0.0
  %5938 = vmatpush2.msra.mxu0 0.0
  %5939 = vmatprep.subr.mxu0 0.0
  %5940 = vmatpush2.msra.mxu0 0.0
  %5941 = vmatprep.subr.mxu0 0.0
  %5942 = vmatpush2.msra.mxu0 0.0
  %5943 = vmatprep.subr.mxu0 0.0
  %5944 = vmatpush2.msra.mxu0 0.0
  %5945 = vmatprep.subr.mxu0 0.0
  %5946 = vmatpush2.msra.mxu0 0.0
  %5947 = vmatprep.subr.mxu0 0.0
  %5948 = vmatpush2.msra.mxu0 0.0
  %5949 = vmatprep.subr.mxu0 0.0
  %5950 = vmatpush2.msra.mxu0 0.0
  %5951 = vmatprep.subr.mxu0 0.0
  %5952 = vmatpush2.msra.mxu0 0.0
  %5953 = vmatprep.subr.mxu0 0.0
  %5954 = vmatpush2.msra.mxu0 0.0
  %5955 = vmatprep.subr.mxu0 0.0
  %5956 = vmatpush2.msra.mxu0 0.0
  %5957 = vmatprep.subr.mxu0 0.0
  %5958 = vmatpush2.msra.mxu0 0.0
  %5959 = vmatprep.subr.mxu0 0.0
  %5960 = vmatpush2.msra.mxu0 0.0
  %5961 = vmatprep.subr.mxu0 0.0
  %5962 = vmatpush2.msra.mxu0 0.0
  %5963 = vmatprep.subr.mxu0 0.0
  %5964 = vmatpush2.msra.mxu0 0.0
  %5965 = vmatprep.subr.mxu0 0.0
  %5966 = vmatpush2.msra.mxu0 0.0
  %5967 = vmatprep.subr.mxu0 0.0
  %5968 = vmatpush2.msra.mxu0 0.0
  %5969 = vmatprep.mubr.f32.mxu0 0.0
  %5970 = vmatmul.mubr.f32.gmra.mxu0 %v5787
  %v5971 = vpop.f32.mrf.mxu0
  %v5972 = vadd.f32 %v5888, %v5971
  %v5973 = vpop.f32.mrf.mxu0
  %v5974 = vadd.f32 %v5892, %v5973
  %5975 = vmatprep.mubr.f32.mxu0 0.0
  %5976 = vmatmul.mubr.f32.gmra.mxu0 %v5788
  %v5977 = vpop.f32.mrf.mxu0
  %v5978 = vadd.f32 %v5888, %v5977
  %v5979 = vpop.f32.mrf.mxu0
  %v5980 = vadd.f32 %v5892, %v5979
  %5981 = vmatprep.mubr.f32.mxu0 0.0
  %5982 = vmatmul.mubr.f32.gmra.mxu0 %v5789
  %v5983 = vpop.f32.mrf.mxu0
  %v5984 = vadd.f32 %v5888, %v5983
  %v5985 = vpop.f32.mrf.mxu0
  %v5986 = vadd.f32 %v5892, %v5985
  %5987 = vmatprep.mubr.f32.mxu0 0.0
  %5988 = vmatmul.mubr.f32.gmra.mxu0 %v5790
  %v5989 = vpop.f32.mrf.mxu0
  %v5990 = vadd.f32 %v5888, %v5989
  %v5991 = vpop.f32.mrf.mxu0
  %v5992 = vadd.f32 %v5892, %v5991
  %5993 = vmatprep.mubr.f32.mxu0 0.0
  %5994 = vmatmul.mubr.f32.gmra.mxu0 %v5791
  %v5995 = vpop.f32.mrf.mxu0
  %v5996 = vadd.f32 %v5888, %v5995
  %v5997 = vpop.f32.mrf.mxu0
  %v5998 = vadd.f32 %v5892, %v5997
  %5999 = vmatprep.mubr.f32.mxu0 0.0
  %6000 = vmatmul.mubr.f32.gmra.mxu0 %v5792
  %v6001 = vpop.f32.mrf.mxu0
  %v6002 = vadd.f32 %v5888, %v6001
  %v6003 = vpop.f32.mrf.mxu0
  %v6004 = vadd.f32 %v5892, %v6003
  %6005 = vmatprep.mubr.f32.mxu0 0.0
  %6006 = vmatmul.mubr.f32.gmra.mxu0 %v5793
  %v6007 = vpop.f32.mrf.mxu0
  %v6008 = vadd.f32 %v5888, %v6007
  %v6009 = vpop.f32.mrf.mxu0
  %v6010 = vadd.f32 %v5892, %v6009
  %6011 = vmatprep.mubr.f32.mxu0 0.0
  %6012 = vmatmul.mubr.f32.gmra.mxu0 %v5794
  %v6013 = vpop.f32.mrf.mxu0
  %v6014 = vadd.f32 %v5888, %v6013
  %v6015 = vpop.f32.mrf.mxu0
  %v6016 = vadd.f32 %v5892, %v6015
  %6017 = vmatprep.mubr.f32.mxu0 0.0
  %6018 = vmatmul.mubr.f32.gmra.mxu0 %v5795
  %v6019 = vpop.f32.mrf.mxu0
  %v6020 = vadd.f32 %v5888, %v6019
  %v6021 = vpop.f32.mrf.mxu0
  %v6022 = vadd.f32 %v5892, %v6021
  %6023 = vmatprep.mubr.f32.mxu0 0.0
  %6024 = vmatmul.mubr.f32.gmra.mxu0 %v5796
  %v6025 = vpop.f32.mrf.mxu0
  %v6026 = vadd.f32 %v5888, %v6025
  %v6027 = vpop.f32.mrf.mxu0
  %v6028 = vadd.f32 %v5892, %v6027
  %6029 = vmatprep.mubr.f32.mxu0 0.0
  %6030 = vmatmul.mubr.f32.gmra.mxu0 %v5797
  %v6031 = vpop.f32.mrf.mxu0
  %v6032 = vadd.f32 %v5888, %v6031
  %v6033 = vpop.f32.mrf.mxu0
  %v6034 = vadd.f32 %v5892, %v6033
  %6035 = vmatprep.mubr.f32.mxu0 0.0
  %6036 = vmatmul.mubr.f32.gmra.mxu0 %v5798
  %v6037 = vpop.f32.mrf.mxu0
  %v6038 = vadd.f32 %v5888, %v6037
  %v6039 = vpop.f32.mrf.mxu0
  %v6040 = vadd.f32 %v5892, %v6039
  %6041 = vmatprep.mubr.f32.mxu0 0.0
  %6042 = vmatmul.mubr.f32.gmra.mxu0 %v5799
  %v6043 = vpop.f32.mrf.mxu0
  %v6044 = vadd.f32 %v5888, %v6043
  %v6045 = vpop.f32.mrf.mxu0
  %v6046 = vadd.f32 %v5892, %v6045
  %6047 = vmatprep.mubr.f32.mxu0 0.0
  %6048 = vmatmul.mubr.f32.gmra.mxu0 %v5800
  %v6049 = vpop.f32.mrf.mxu0
  %v6050 = vadd.f32 %v5888, %v6049
  %v6051 = vpop.f32.mrf.mxu0
  %v6052 = vadd.f32 %v5892, %v6051
  %6053 = vmatprep.mubr.f32.mxu0 0.0
  %6054 = vmatmul.mubr.f32.gmra.mxu0 %v5801
  %v6055 = vpop.f32.mrf.mxu0
  %v6056 = vadd.f32 %v5888, %v6055
  %v6057 = vpop.f32.mrf.mxu0
  %v6058 = vadd.f32 %v5892, %v6057
  %6059 = vmatprep.mubr.f32.mxu0 0.0
  %6060 = vmatmul.mubr.f32.gmra.mxu0 %v5802
  %v6061 = vpop.f32.mrf.mxu0
  %v6062 = vadd.f32 %v5888, %v6061
  %v6063 = vpop.f32.mrf.mxu0
  %v6064 = vadd.f32 %v5892, %v6063
  %6065 = vmatprep.mubr.f32.mxu0 0.0
  %6066 = vmatmul.mubr.f32.gmra.mxu0 %v5803
  %v6067 = vpop.f32.mrf.mxu0
  %v6068 = vadd.f32 %v5888, %v6067
  %v6069 = vpop.f32.mrf.mxu0
  %v6070 = vadd.f32 %v5892, %v6069
  %6071 = vmatprep.mubr.f32.mxu0 0.0
  %6072 = vmatmul.mubr.f32.gmra.mxu0 %v5804
  %v6073 = vpop.f32.mrf.mxu0
  %v6074 = vadd.f32 %v5888, %v6073
  %v6075 = vpop.f32.mrf.mxu0
  %v6076 = vadd.f32 %v5892, %v6075
  %6077 = vmatprep.mubr.f32.mxu0 0.0
  %6078 = vmatmul.mubr.f32.gmra.mxu0 %v5805
  %v6079 = vpop.f32.mrf.mxu0
  %v6080 = vadd.f32 %v5888, %v6079
  %v6081 = vpop.f32.mrf.mxu0
  %v6082 = vadd.f32 %v5892, %v6081
  %6083 = vmatprep.mubr.f32.mxu0 0.0
  %6084 = vmatmul.mubr.f32.gmra.mxu0 %v5806
  %v6085 = vpop.f32.mrf.mxu0
  %v6086 = vadd.f32 %v5888, %v6085
  %v6087 = vpop.f32.mrf.mxu0
  %v6088 = vadd.f32 %v5892, %v6087
  %6089 = vmatprep.mubr.f32.mxu0 0.0
  %6090 = vmatmul.mubr.f32.gmra.mxu0 %v5807
  %v6091 = vpop.f32.mrf.mxu0
  %v6092 = vadd.f32 %v5888, %v6091
  %v6093 = vpop.f32.mrf.mxu0
  %v6094 = vadd.f32 %v5892, %v6093
  %6095 = vmatprep.mubr.f32.mxu0 0.0
  %6096 = vmatmul.mubr.f32.gmra.mxu0 %v5808
  %v6097 = vpop.f32.mrf.mxu0
  %v6098 = vadd.f32 %v5888, %v6097
  %v6099 = vpop.f32.mrf.mxu0
  %v6100 = vadd.f32 %v5892, %v6099
  %6101 = vmatprep.mubr.f32.mxu0 0.0
  %6102 = vmatmul.mubr.f32.gmra.mxu0 %v5809
  %v6103 = vpop.f32.mrf.mxu0
  %v6104 = vadd.f32 %v5888, %v6103
  %v6105 = vpop.f32.mrf.mxu0
  %v6106 = vadd.f32 %v5892, %v6105
  %6107 = vmatprep.mubr.f32.mxu0 0.0
  %6108 = vmatmul.mubr.f32.gmra.mxu0 %v5810
  %v6109 = vpop.f32.mrf.mxu0
  %v6110 = vadd.f32 %v5888, %v6109
  %v6111 = vpop.f32.mrf.mxu0
  %v6112 = vadd.f32 %v5892, %v6111
  %6113 = vmatprep.mubr.f32.mxu0 0.0
  %6114 = vmatmul.mubr.f32.gmra.mxu0 %v5811
  %v6115 = vpop.f32.mrf.mxu0
  %v6116 = vadd.f32 %v5888, %v6115
  %v6117 = vpop.f32.mrf.mxu0
  %v6118 = vadd.f32 %v5892, %v6117
  %6119 = vmatprep.mubr.f32.mxu0 0.0
  %6120 = vmatmul.mubr.f32.gmra.mxu0 %v5812
  %v6121 = vpop.f32.mrf.mxu0
  %v6122 = vadd.f32 %v5888, %v6121
  %v6123 = vpop.f32.mrf.mxu0
  %v6124 = vadd.f32 %v5892, %v6123
  %6125 = vmatprep.mubr.f32.mxu0 0.0
  %6126 = vmatmul.mubr.f32.gmra.mxu0 %v5813
  %v6127 = vpop.f32.mrf.mxu0
  %v6128 = vadd.f32 %v5888, %v6127
  %v6129 = vpop.f32.mrf.mxu0
  %v6130 = vadd.f32 %v5892, %v6129
  %6131 = vmatprep.mubr.f32.mxu0 0.0
  %6132 = vmatmul.mubr.f32.gmra.mxu0 %v5814
  %v6133 = vpop.f32.mrf.mxu0
  %v6134 = vadd.f32 %v5888, %v6133
  %v6135 = vpop.f32.mrf.mxu0
  %v6136 = vadd.f32 %v5892, %v6135
  %6137 = vmatprep.mubr.f32.mxu0 0.0
  %6138 = vmatmul.mubr.f32.gmra.mxu0 %v5815
  %v6139 = vpop.f32.mrf.mxu0
  %v6140 = vadd.f32 %v5888, %v6139
  %v6141 = vpop.f32.mrf.mxu0
  %v6142 = vadd.f32 %v5892, %v6141
  %6143 = vmatprep.mubr.f32.mxu0 0.0
  %6144 = vmatmul.mubr.f32.gmra.mxu0 %v5816
  %v6145 = vpop.f32.mrf.mxu0
  %v6146 = vadd.f32 %v5888, %v6145
  %v6147 = vpop.f32.mrf.mxu0
  %v6148 = vadd.f32 %v5892, %v6147
  %6149 = vmatprep.mubr.f32.mxu0 0.0
  %6150 = vmatmul.mubr.f32.gmra.mxu0 %v5817
  %v6151 = vpop.f32.mrf.mxu0
  %v6152 = vadd.f32 %v5888, %v6151
  %v6153 = vpop.f32.mrf.mxu0
  %v6154 = vadd.f32 %v5892, %v6153
  %6155 = vmatprep.mubr.f32.mxu0 0.0
  %6156 = vmatmul.mubr.f32.gmra.mxu0 %v5818
  %v6157 = vpop.f32.mrf.mxu0
  %v6158 = vadd.f32 %v5888, %v6157
  %v6159 = vpop.f32.mrf.mxu0
  %v6160 = vadd.f32 %v5892, %v6159
  %6161 = vdwg.mxu0
  %6162 = vmatprep.subr.mxu0 %v5882
  %6163 = vmatpush1.msra.mxu0 %v5881
  %6164 = vmatprep.subr.mxu0 %v5878
  %6165 = vmatpush1.msra.mxu0 %v5877
  %6166 = vmatprep.subr.mxu0 %v5874
  %6167 = vmatpush1.msra.mxu0 %v5873
  %6168 = vmatprep.subr.mxu0 %v5870
  %6169 = vmatpush1.msra.mxu0 %v5869
  %6170 = vmatprep.subr.mxu0 %v5866
  %6171 = vmatpush1.msra.mxu0 %v5865
  %6172 = vmatprep.subr.mxu0 %v5862
  %6173 = vmatpush1.msra.mxu0 %v5861
  %6174 = vmatprep.subr.mxu0 %v5858
  %6175 = vmatpush1.msra.mxu0 %v5857
  %6176 = vmatprep.subr.mxu0 %v5854
  %6177 = vmatpush1.msra.mxu0 %v5853
  %6178 = vmatprep.subr.mxu0 %v5850
  %6179 = vmatpush1.msra.mxu0 %v5849
  %6180 = vmatprep.subr.mxu0 %v5846
  %6181 = vmatpush1.msra.mxu0 %v5845
  %6182 = vmatprep.subr.mxu0 %v5842
  %6183 = vmatpush1.msra.mxu0 %v5841
  %6184 = vmatprep.subr.mxu0 %v5838
  %6185 = vmatpush1.msra.mxu0 %v5837
  %6186 = vmatprep.subr.mxu0 %v5834
  %6187 = vmatpush1.msra.mxu0 %v5833
  %6188 = vmatprep.subr.mxu0 %v5830
  %6189 = vmatpush1.msra.mxu0 %v5829
  %6190 = vmatprep.subr.mxu0 %v5826
  %6191 = vmatpush1.msra.mxu0 %v5825
  %6192 = vmatprep.subr.mxu0 %v5822
  %6193 = vmatpush1.msra.mxu0 %v5821
  %6194 = vmatprep.subr.mxu0 0.0
  %6195 = vmatpush2.msra.mxu0 0.0
  %6196 = vmatprep.subr.mxu0 0.0
  %6197 = vmatpush2.msra.mxu0 0.0
  %6198 = vmatprep.subr.mxu0 0.0
  %6199 = vmatpush2.msra.mxu0 0.0
  %6200 = vmatprep.subr.mxu0 0.0
  %6201 = vmatpush2.msra.mxu0 0.0
  %6202 = vmatprep.subr.mxu0 0.0
  %6203 = vmatpush2.msra.mxu0 0.0
  %6204 = vmatprep.subr.mxu0 0.0
  %6205 = vmatpush2.msra.mxu0 0.0
  %6206 = vmatprep.subr.mxu0 0.0
  %6207 = vmatpush2.msra.mxu0 0.0
  %6208 = vmatprep.subr.mxu0 0.0
  %6209 = vmatpush2.msra.mxu0 0.0
  %6210 = vmatprep.subr.mxu0 0.0
  %6211 = vmatpush2.msra.mxu0 0.0
  %6212 = vmatprep.subr.mxu0 0.0
  %6213 = vmatpush2.msra.mxu0 0.0
  %6214 = vmatprep.subr.mxu0 0.0
  %6215 = vmatpush2.msra.mxu0 0.0
  %6216 = vmatprep.subr.mxu0 0.0
  %6217 = vmatpush2.msra.mxu0 0.0
  %6218 = vmatprep.subr.mxu0 0.0
  %6219 = vmatpush2.msra.mxu0 0.0
  %6220 = vmatprep.subr.mxu0 0.0
  %6221 = vmatpush2.msra.mxu0 0.0
  %6222 = vmatprep.subr.mxu0 0.0
  %6223 = vmatpush2.msra.mxu0 0.0
  %6224 = vmatprep.subr.mxu0 0.0
  %6225 = vmatpush2.msra.mxu0 0.0
  %6226 = vmatprep.mubr.f32.mxu0 0.0
  %6227 = vmatmul.mubr.f32.gmra.mxu0 %v5787
  %v6228 = vpop.f32.mrf.mxu0
  %v6229 = vadd.f32 %v5896, %v6228
  %v6230 = vpop.f32.mrf.mxu0
  %v6231 = vadd.f32 %v5900, %v6230
  %6232 = vmatprep.mubr.f32.mxu0 0.0
  %6233 = vmatmul.mubr.f32.gmra.mxu0 %v5788
  %v6234 = vpop.f32.mrf.mxu0
  %v6235 = vadd.f32 %v5896, %v6234
  %v6236 = vpop.f32.mrf.mxu0
  %v6237 = vadd.f32 %v5900, %v6236
  %6238 = vmatprep.mubr.f32.mxu0 0.0
  %6239 = vmatmul.mubr.f32.gmra.mxu0 %v5789
  %v6240 = vpop.f32.mrf.mxu0
  %v6241 = vadd.f32 %v5896, %v6240
  %v6242 = vpop.f32.mrf.mxu0
  %v6243 = vadd.f32 %v5900, %v6242
  %6244 = vmatprep.mubr.f32.mxu0 0.0
  %6245 = vmatmul.mubr.f32.gmra.mxu0 %v5790
  %v6246 = vpop.f32.mrf.mxu0
  %v6247 = vadd.f32 %v5896, %v6246
  %v6248 = vpop.f32.mrf.mxu0
  %v6249 = vadd.f32 %v5900, %v6248
  %6250 = vmatprep.mubr.f32.mxu0 0.0
  %6251 = vmatmul.mubr.f32.gmra.mxu0 %v5791
  %v6252 = vpop.f32.mrf.mxu0
  %v6253 = vadd.f32 %v5896, %v6252
  %v6254 = vpop.f32.mrf.mxu0
  %v6255 = vadd.f32 %v5900, %v6254
  %6256 = vmatprep.mubr.f32.mxu0 0.0
  %6257 = vmatmul.mubr.f32.gmra.mxu0 %v5792
  %v6258 = vpop.f32.mrf.mxu0
  %v6259 = vadd.f32 %v5896, %v6258
  %v6260 = vpop.f32.mrf.mxu0
  %v6261 = vadd.f32 %v5900, %v6260
  %6262 = vmatprep.mubr.f32.mxu0 0.0
  %6263 = vmatmul.mubr.f32.gmra.mxu0 %v5793
  %v6264 = vpop.f32.mrf.mxu0
  %v6265 = vadd.f32 %v5896, %v6264
  %v6266 = vpop.f32.mrf.mxu0
  %v6267 = vadd.f32 %v5900, %v6266
  %6268 = vmatprep.mubr.f32.mxu0 0.0
  %6269 = vmatmul.mubr.f32.gmra.mxu0 %v5794
  %v6270 = vpop.f32.mrf.mxu0
  %v6271 = vadd.f32 %v5896, %v6270
  %v6272 = vpop.f32.mrf.mxu0
  %v6273 = vadd.f32 %v5900, %v6272
  %6274 = vmatprep.mubr.f32.mxu0 0.0
  %6275 = vmatmul.mubr.f32.gmra.mxu0 %v5795
  %v6276 = vpop.f32.mrf.mxu0
  %v6277 = vadd.f32 %v5896, %v6276
  %v6278 = vpop.f32.mrf.mxu0
  %v6279 = vadd.f32 %v5900, %v6278
  %6280 = vmatprep.mubr.f32.mxu0 0.0
  %6281 = vmatmul.mubr.f32.gmra.mxu0 %v5796
  %v6282 = vpop.f32.mrf.mxu0
  %v6283 = vadd.f32 %v5896, %v6282
  %v6284 = vpop.f32.mrf.mxu0
  %v6285 = vadd.f32 %v5900, %v6284
  %6286 = vmatprep.mubr.f32.mxu0 0.0
  %6287 = vmatmul.mubr.f32.gmra.mxu0 %v5797
  %v6288 = vpop.f32.mrf.mxu0
  %v6289 = vadd.f32 %v5896, %v6288
  %v6290 = vpop.f32.mrf.mxu0
  %v6291 = vadd.f32 %v5900, %v6290
  %6292 = vmatprep.mubr.f32.mxu0 0.0
  %6293 = vmatmul.mubr.f32.gmra.mxu0 %v5798
  %v6294 = vpop.f32.mrf.mxu0
  %v6295 = vadd.f32 %v5896, %v6294
  %v6296 = vpop.f32.mrf.mxu0
  %v6297 = vadd.f32 %v5900, %v6296
  %6298 = vmatprep.mubr.f32.mxu0 0.0
  %6299 = vmatmul.mubr.f32.gmra.mxu0 %v5799
  %v6300 = vpop.f32.mrf.mxu0
  %v6301 = vadd.f32 %v5896, %v6300
  %v6302 = vpop.f32.mrf.mxu0
  %v6303 = vadd.f32 %v5900, %v6302
  %6304 = vmatprep.mubr.f32.mxu0 0.0
  %6305 = vmatmul.mubr.f32.gmra.mxu0 %v5800
  %v6306 = vpop.f32.mrf.mxu0
  %v6307 = vadd.f32 %v5896, %v6306
  %v6308 = vpop.f32.mrf.mxu0
  %v6309 = vadd.f32 %v5900, %v6308
  %6310 = vmatprep.mubr.f32.mxu0 0.0
  %6311 = vmatmul.mubr.f32.gmra.mxu0 %v5801
  %v6312 = vpop.f32.mrf.mxu0
  %v6313 = vadd.f32 %v5896, %v6312
  %v6314 = vpop.f32.mrf.mxu0
  %v6315 = vadd.f32 %v5900, %v6314
  %6316 = vmatprep.mubr.f32.mxu0 0.0
  %6317 = vmatmul.mubr.f32.gmra.mxu0 %v5802
  %v6318 = vpop.f32.mrf.mxu0
  %v6319 = vadd.f32 %v5896, %v6318
  %v6320 = vpop.f32.mrf.mxu0
  %v6321 = vadd.f32 %v5900, %v6320
  %6322 = vmatprep.mubr.f32.mxu0 0.0
  %6323 = vmatmul.mubr.f32.gmra.mxu0 %v5803
  %v6324 = vpop.f32.mrf.mxu0
  %v6325 = vadd.f32 %v5896, %v6324
  %v6326 = vpop.f32.mrf.mxu0
  %v6327 = vadd.f32 %v5900, %v6326
  %6328 = vmatprep.mubr.f32.mxu0 0.0
  %6329 = vmatmul.mubr.f32.gmra.mxu0 %v5804
  %v6330 = vpop.f32.mrf.mxu0
  %v6331 = vadd.f32 %v5896, %v6330
  %v6332 = vpop.f32.mrf.mxu0
  %v6333 = vadd.f32 %v5900, %v6332
  %6334 = vmatprep.mubr.f32.mxu0 0.0
  %6335 = vmatmul.mubr.f32.gmra.mxu0 %v5805
  %v6336 = vpop.f32.mrf.mxu0
  %v6337 = vadd.f32 %v5896, %v6336
  %v6338 = vpop.f32.mrf.mxu0
  %v6339 = vadd.f32 %v5900, %v6338
  %6340 = vmatprep.mubr.f32.mxu0 0.0
  %6341 = vmatmul.mubr.f32.gmra.mxu0 %v5806
  %v6342 = vpop.f32.mrf.mxu0
  %v6343 = vadd.f32 %v5896, %v6342
  %v6344 = vpop.f32.mrf.mxu0
  %v6345 = vadd.f32 %v5900, %v6344
  %6346 = vmatprep.mubr.f32.mxu0 0.0
  %6347 = vmatmul.mubr.f32.gmra.mxu0 %v5807
  %v6348 = vpop.f32.mrf.mxu0
  %v6349 = vadd.f32 %v5896, %v6348
  %v6350 = vpop.f32.mrf.mxu0
  %v6351 = vadd.f32 %v5900, %v6350
  %6352 = vmatprep.mubr.f32.mxu0 0.0
  %6353 = vmatmul.mubr.f32.gmra.mxu0 %v5808
  %v6354 = vpop.f32.mrf.mxu0
  %v6355 = vadd.f32 %v5896, %v6354
  %v6356 = vpop.f32.mrf.mxu0
  %v6357 = vadd.f32 %v5900, %v6356
  %6358 = vmatprep.mubr.f32.mxu0 0.0
  %6359 = vmatmul.mubr.f32.gmra.mxu0 %v5809
  %v6360 = vpop.f32.mrf.mxu0
  %v6361 = vadd.f32 %v5896, %v6360
  %v6362 = vpop.f32.mrf.mxu0
  %v6363 = vadd.f32 %v5900, %v6362
  %6364 = vmatprep.mubr.f32.mxu0 0.0
  %6365 = vmatmul.mubr.f32.gmra.mxu0 %v5810
  %v6366 = vpop.f32.mrf.mxu0
  %v6367 = vadd.f32 %v5896, %v6366
  %v6368 = vpop.f32.mrf.mxu0
  %v6369 = vadd.f32 %v5900, %v6368
  %6370 = vmatprep.mubr.f32.mxu0 0.0
  %6371 = vmatmul.mubr.f32.gmra.mxu0 %v5811
  %v6372 = vpop.f32.mrf.mxu0
  %v6373 = vadd.f32 %v5896, %v6372
  %v6374 = vpop.f32.mrf.mxu0
  %v6375 = vadd.f32 %v5900, %v6374
  %6376 = vmatprep.mubr.f32.mxu0 0.0
  %6377 = vmatmul.mubr.f32.gmra.mxu0 %v5812
  %v6378 = vpop.f32.mrf.mxu0
  %v6379 = vadd.f32 %v5896, %v6378
  %v6380 = vpop.f32.mrf.mxu0
  %v6381 = vadd.f32 %v5900, %v6380
  %6382 = vmatprep.mubr.f32.mxu0 0.0
  %6383 = vmatmul.mubr.f32.gmra.mxu0 %v5813
  %v6384 = vpop.f32.mrf.mxu0
  %v6385 = vadd.f32 %v5896, %v6384
  %v6386 = vpop.f32.mrf.mxu0
  %v6387 = vadd.f32 %v5900, %v6386
  %6388 = vmatprep.mubr.f32.mxu0 0.0
  %6389 = vmatmul.mubr.f32.gmra.mxu0 %v5814
  %v6390 = vpop.f32.mrf.mxu0
  %v6391 = vadd.f32 %v5896, %v6390
  %v6392 = vpop.f32.mrf.mxu0
  %v6393 = vadd.f32 %v5900, %v6392
  %6394 = vmatprep.mubr.f32.mxu0 0.0
  %6395 = vmatmul.mubr.f32.gmra.mxu0 %v5815
  %v6396 = vpop.f32.mrf.mxu0
  %v6397 = vadd.f32 %v5896, %v6396
  %v6398 = vpop.f32.mrf.mxu0
  %v6399 = vadd.f32 %v5900, %v6398
  %6400 = vmatprep.mubr.f32.mxu0 0.0
  %6401 = vmatmul.mubr.f32.gmra.mxu0 %v5816
  %v6402 = vpop.f32.mrf.mxu0
  %v6403 = vadd.f32 %v5896, %v6402
  %v6404 = vpop.f32.mrf.mxu0
  %v6405 = vadd.f32 %v5900, %v6404
  %6406 = vmatprep.mubr.f32.mxu0 0.0
  %6407 = vmatmul.mubr.f32.gmra.mxu0 %v5817
  %v6408 = vpop.f32.mrf.mxu0
  %v6409 = vadd.f32 %v5896, %v6408
  %v6410 = vpop.f32.mrf.mxu0
  %v6411 = vadd.f32 %v5900, %v6410
  %6412 = vmatprep.mubr.f32.mxu0 0.0
  %6413 = vmatmul.mubr.f32.gmra.mxu0 %v5818
  %v6414 = vpop.f32.mrf.mxu0
  %v6415 = vadd.f32 %v5896, %v6414
  %v6416 = vpop.f32.mrf.mxu0
  %v6417 = vadd.f32 %v5900, %v6416
  %6418 = vdwg.mxu0
  %v6419 = vmax.f32 %v5972, 0.0
  %v6420 = vmax.f32 %v5974, 0.0
  %v6421 = vmax.f32 %v6229, 0.0
  %v6422 = vmax.f32 %v6231, 0.0
  %v6423 = vmax.f32 %v5978, 0.0
  %v6424 = vmax.f32 %v5980, 0.0
  %v6425 = vmax.f32 %v6235, 0.0
  %v6426 = vmax.f32 %v6237, 0.0
  %v6427 = vmax.f32 %v5984, 0.0
  %v6428 = vmax.f32 %v5986, 0.0
  %v6429 = vmax.f32 %v6241, 0.0
  %v6430 = vmax.f32 %v6243, 0.0
  %v6431 = vmax.f32 %v5990, 0.0
  %v6432 = vmax.f32 %v5992, 0.0
  %v6433 = vmax.f32 %v6247, 0.0
  %v6434 = vmax.f32 %v6249, 0.0
  %v6435 = vmax.f32 %v5996, 0.0
  %v6436 = vmax.f32 %v5998, 0.0
  %v6437 = vmax.f32 %v6253, 0.0
  %v6438 = vmax.f32 %v6255, 0.0
  %v6439 = vmax.f32 %v6002, 0.0
  %v6440 = vmax.f32 %v6004, 0.0
  %v6441 = vmax.f32 %v6259, 0.0
  %v6442 = vmax.f32 %v6261, 0.0
  %v6443 = vmax.f32 %v6008, 0.0
  %v6444 = vmax.f32 %v6010, 0.0
  %v6445 = vmax.f32 %v6265, 0.0
  %v6446 = vmax.f32 %v6267, 0.0
  %v6447 = vmax.f32 %v6014, 0.0
  %v6448 = vmax.f32 %v6016, 0.0
  %v6449 = vmax.f32 %v6271, 0.0
  %v6450 = vmax.f32 %v6273, 0.0
  %v6451 = vmax.f32 %v6020, 0.0
  %v6452 = vmax.f32 %v6022, 0.0
  %v6453 = vmax.f32 %v6277, 0.0
  %v6454 = vmax.f32 %v6279, 0.0
  %v6455 = vmax.f32 %v6026, 0.0
  %v6456 = vmax.f32 %v6028, 0.0
  %v6457 = vmax.f32 %v6283, 0.0
  %v6458 = vmax.f32 %v6285, 0.0
  %v6459 = vmax.f32 %v6032, 0.0
  %v6460 = vmax.f32 %v6034, 0.0
  %v6461 = vmax.f32 %v6289, 0.0
  %v6462 = vmax.f32 %v6291, 0.0
  %v6463 = vmax.f32 %v6038, 0.0
  %v6464 = vmax.f32 %v6040, 0.0
  %v6465 = vmax.f32 %v6295, 0.0
  %v6466 = vmax.f32 %v6297, 0.0
  %v6467 = vmax.f32 %v6044, 0.0
  %v6468 = vmax.f32 %v6046, 0.0
  %v6469 = vmax.f32 %v6301, 0.0
  %v6470 = vmax.f32 %v6303, 0.0
  %v6471 = vmax.f32 %v6050, 0.0
  %v6472 = vmax.f32 %v6052, 0.0
  %v6473 = vmax.f32 %v6307, 0.0
  %v6474 = vmax.f32 %v6309, 0.0
  %v6475 = vmax.f32 %v6056, 0.0
  %v6476 = vmax.f32 %v6058, 0.0
  %v6477 = vmax.f32 %v6313, 0.0
  %v6478 = vmax.f32 %v6315, 0.0
  %v6479 = vmax.f32 %v6062, 0.0
  %v6480 = vmax.f32 %v6064, 0.0
  %v6481 = vmax.f32 %v6319, 0.0
  %v6482 = vmax.f32 %v6321, 0.0
  %v6483 = vmax.f32 %v6068, 0.0
  %v6484 = vmax.f32 %v6070, 0.0
  %v6485 = vmax.f32 %v6325, 0.0
  %v6486 = vmax.f32 %v6327, 0.0
  %v6487 = vmax.f32 %v6074, 0.0
  %v6488 = vmax.f32 %v6076, 0.0
  %v6489 = vmax.f32 %v6331, 0.0
  %v6490 = vmax.f32 %v6333, 0.0
  %v6491 = vmax.f32 %v6080, 0.0
  %v6492 = vmax.f32 %v6082, 0.0
  %v6493 = vmax.f32 %v6337, 0.0
  %v6494 = vmax.f32 %v6339, 0.0
  %v6495 = vmax.f32 %v6086, 0.0
  %v6496 = vmax.f32 %v6088, 0.0
  %v6497 = vmax.f32 %v6343, 0.0
  %v6498 = vmax.f32 %v6345, 0.0
  %v6499 = vmax.f32 %v6092, 0.0
  %v6500 = vmax.f32 %v6094, 0.0
  %v6501 = vmax.f32 %v6349, 0.0
  %v6502 = vmax.f32 %v6351, 0.0
  %v6503 = vmax.f32 %v6098, 0.0
  %v6504 = vmax.f32 %v6100, 0.0
  %v6505 = vmax.f32 %v6355, 0.0
  %v6506 = vmax.f32 %v6357, 0.0
  %v6507 = vmax.f32 %v6104, 0.0
  %v6508 = vmax.f32 %v6106, 0.0
  %v6509 = vmax.f32 %v6361, 0.0
  %v6510 = vmax.f32 %v6363, 0.0
  %v6511 = vmax.f32 %v6110, 0.0
  %v6512 = vmax.f32 %v6112, 0.0
  %v6513 = vmax.f32 %v6367, 0.0
  %v6514 = vmax.f32 %v6369, 0.0
  %v6515 = vmax.f32 %v6116, 0.0
  %v6516 = vmax.f32 %v6118, 0.0
  %v6517 = vmax.f32 %v6373, 0.0
  %v6518 = vmax.f32 %v6375, 0.0
  %v6519 = vmax.f32 %v6122, 0.0
  %v6520 = vmax.f32 %v6124, 0.0
  %v6521 = vmax.f32 %v6379, 0.0
  %v6522 = vmax.f32 %v6381, 0.0
  %v6523 = vmax.f32 %v6128, 0.0
  %v6524 = vmax.f32 %v6130, 0.0
  %v6525 = vmax.f32 %v6385, 0.0
  %v6526 = vmax.f32 %v6387, 0.0
  %v6527 = vmax.f32 %v6134, 0.0
  %v6528 = vmax.f32 %v6136, 0.0
  %v6529 = vmax.f32 %v6391, 0.0
  %v6530 = vmax.f32 %v6393, 0.0
  %v6531 = vmax.f32 %v6140, 0.0
  %v6532 = vmax.f32 %v6142, 0.0
  %v6533 = vmax.f32 %v6397, 0.0
  %v6534 = vmax.f32 %v6399, 0.0
  %v6535 = vmax.f32 %v6146, 0.0
  %v6536 = vmax.f32 %v6148, 0.0
  %v6537 = vmax.f32 %v6403, 0.0
  %v6538 = vmax.f32 %v6405, 0.0
  %v6539 = vmax.f32 %v6152, 0.0
  %v6540 = vmax.f32 %v6154, 0.0
  %v6541 = vmax.f32 %v6409, 0.0
  %v6542 = vmax.f32 %v6411, 0.0
  %v6543 = vmax.f32 %v6158, 0.0
  %v6544 = vmax.f32 %v6160, 0.0
  %v6545 = vmax.f32 %v6415, 0.0
  %v6546 = vmax.f32 %v6417, 0.0
  %v6547 = vld [vmem:[%s9] sm:$0xff]
  %v6548 = vld [vmem:[%s9 + $0x8] sm:$0xff]
  %v6549 = vld [vmem:[%s9 + $0x10] sm:$0xff]
  %v6550 = vld [vmem:[%s9 + $0x18] sm:$0xff]
  %v6551 = vld [vmem:[%s9 + $0x20] sm:$0xff]
  %v6552 = vld [vmem:[%s9 + $0x28] sm:$0xff]
  %v6553 = vld [vmem:[%s9 + $0x30] sm:$0xff]
  %v6554 = vld [vmem:[%s9 + $0x38] sm:$0xff]
  %v6555 = vld [vmem:[%s9 + $0x40] sm:$0xff]
  %v6556 = vld [vmem:[%s9 + $0x48] sm:$0xff]
  %v6557 = vld [vmem:[%s9 + $0x50] sm:$0xff]
  %v6558 = vld [vmem:[%s9 + $0x58] sm:$0xff]
  %v6559 = vld [vmem:[%s9 + $0x60] sm:$0xff]
  %v6560 = vld [vmem:[%s9 + $0x68] sm:$0xff]
  %v6561 = vld [vmem:[%s9 + $0x70] sm:$0xff]
  %v6562 = vld [vmem:[%s9 + $0x78] sm:$0xff]
  %v6563 = vld [vmem:[%s9 + $0x80] sm:$0xff]
  %v6564 = vld [vmem:[%s9 + $0x88] sm:$0xff]
  %v6565 = vld [vmem:[%s9 + $0x90] sm:$0xff]
  %v6566 = vld [vmem:[%s9 + $0x98] sm:$0xff]
  %v6567 = vld [vmem:[%s9 + $0xa0] sm:$0xff]
  %v6568 = vld [vmem:[%s9 + $0xa8] sm:$0xff]
  %v6569 = vld [vmem:[%s9 + $0xb0] sm:$0xff]
  %v6570 = vld [vmem:[%s9 + $0xb8] sm:$0xff]
  %v6571 = vld [vmem:[%s9 + $0xc0] sm:$0xff]
  %v6572 = vld [vmem:[%s9 + $0xc8] sm:$0xff]
  %v6573 = vld [vmem:[%s9 + $0xd0] sm:$0xff]
  %v6574 = vld [vmem:[%s9 + $0xd8] sm:$0xff]
  %v6575 = vld [vmem:[%s9 + $0xe0] sm:$0xff]
  %v6576 = vld [vmem:[%s9 + $0xe8] sm:$0xff]
  %v6577 = vld [vmem:[%s9 + $0xf0] sm:$0xff]
  %v6578 = vld [vmem:[%s9 + $0xf8] sm:$0xff]
  %v6579 = vld [vmem:[%s9 + $0x100] sm:$0xff]
  %v6580 = vld [vmem:[%s9 + $0x108] sm:$0xff]
  %v6581 = vld [vmem:[%s9 + $0x110] sm:$0xff]
  %v6582 = vld [vmem:[%s9 + $0x118] sm:$0xff]
  %v6583 = vld [vmem:[%s9 + $0x120] sm:$0xff]
  %v6584 = vld [vmem:[%s9 + $0x128] sm:$0xff]
  %v6585 = vld [vmem:[%s9 + $0x130] sm:$0xff]
  %v6586 = vld [vmem:[%s9 + $0x138] sm:$0xff]
  %v6587 = vld [vmem:[%s9 + $0x140] sm:$0xff]
  %v6588 = vld [vmem:[%s9 + $0x148] sm:$0xff]
  %v6589 = vld [vmem:[%s9 + $0x150] sm:$0xff]
  %v6590 = vld [vmem:[%s9 + $0x158] sm:$0xff]
  %v6591 = vld [vmem:[%s9 + $0x160] sm:$0xff]
  %v6592 = vld [vmem:[%s9 + $0x168] sm:$0xff]
  %v6593 = vld [vmem:[%s9 + $0x170] sm:$0xff]
  %v6594 = vld [vmem:[%s9 + $0x178] sm:$0xff]
  %v6595 = vld [vmem:[%s9 + $0x180] sm:$0xff]
  %v6596 = vld [vmem:[%s9 + $0x188] sm:$0xff]
  %v6597 = vld [vmem:[%s9 + $0x190] sm:$0xff]
  %v6598 = vld [vmem:[%s9 + $0x198] sm:$0xff]
  %v6599 = vld [vmem:[%s9 + $0x1a0] sm:$0xff]
  %v6600 = vld [vmem:[%s9 + $0x1a8] sm:$0xff]
  %v6601 = vld [vmem:[%s9 + $0x1b0] sm:$0xff]
  %v6602 = vld [vmem:[%s9 + $0x1b8] sm:$0xff]
  %v6603 = vld [vmem:[%s9 + $0x1c0] sm:$0xff]
  %v6604 = vld [vmem:[%s9 + $0x1c8] sm:$0xff]
  %v6605 = vld [vmem:[%s9 + $0x1d0] sm:$0xff]
  %v6606 = vld [vmem:[%s9 + $0x1d8] sm:$0xff]
  %v6607 = vld [vmem:[%s9 + $0x1e0] sm:$0xff]
  %v6608 = vld [vmem:[%s9 + $0x1e8] sm:$0xff]
  %v6609 = vld [vmem:[%s9 + $0x1f0] sm:$0xff]
  %v6610 = vld [vmem:[%s9 + $0x1f8] sm:$0xff]
  %6611 = vmatprep.subr.mxu0 0.0
  %6612 = vmatpush1.msra.mxu0 %v6562
  %6613 = vmatprep.subr.mxu0 0.0
  %6614 = vmatpush1.msra.mxu0 %v6561
  %6615 = vmatprep.subr.mxu0 0.0
  %6616 = vmatpush1.msra.mxu0 %v6560
  %6617 = vmatprep.subr.mxu0 0.0
  %6618 = vmatpush1.msra.mxu0 %v6559
  %6619 = vmatprep.subr.mxu0 0.0
  %6620 = vmatpush1.msra.mxu0 %v6558
  %6621 = vmatprep.subr.mxu0 0.0
  %6622 = vmatpush1.msra.mxu0 %v6557
  %6623 = vmatprep.subr.mxu0 0.0
  %6624 = vmatpush1.msra.mxu0 %v6556
  %6625 = vmatprep.subr.mxu0 0.0
  %6626 = vmatpush1.msra.mxu0 %v6555
  %6627 = vmatprep.subr.mxu0 0.0
  %6628 = vmatpush1.msra.mxu0 %v6554
  %6629 = vmatprep.subr.mxu0 0.0
  %6630 = vmatpush1.msra.mxu0 %v6553
  %6631 = vmatprep.subr.mxu0 0.0
  %6632 = vmatpush1.msra.mxu0 %v6552
  %6633 = vmatprep.subr.mxu0 0.0
  %6634 = vmatpush1.msra.mxu0 %v6551
  %6635 = vmatprep.subr.mxu0 0.0
  %6636 = vmatpush1.msra.mxu0 %v6550
  %6637 = vmatprep.subr.mxu0 0.0
  %6638 = vmatpush1.msra.mxu0 %v6549
  %6639 = vmatprep.subr.mxu0 0.0
  %6640 = vmatpush1.msra.mxu0 %v6548
  %6641 = vmatprep.subr.mxu0 0.0
  %6642 = vmatpush1.msra.mxu0 %v6547
  %6643 = vmatprep.subr.mxu0 0.0
  %6644 = vmatpush2.msra.mxu0 %v6578
  %6645 = vmatprep.subr.mxu0 0.0
  %6646 = vmatpush2.msra.mxu0 %v6577
  %6647 = vmatprep.subr.mxu0 0.0
  %6648 = vmatpush2.msra.mxu0 %v6576
  %6649 = vmatprep.subr.mxu0 0.0
  %6650 = vmatpush2.msra.mxu0 %v6575
  %6651 = vmatprep.subr.mxu0 0.0
  %6652 = vmatpush2.msra.mxu0 %v6574
  %6653 = vmatprep.subr.mxu0 0.0
  %6654 = vmatpush2.msra.mxu0 %v6573
  %6655 = vmatprep.subr.mxu0 0.0
  %6656 = vmatpush2.msra.mxu0 %v6572
  %6657 = vmatprep.subr.mxu0 0.0
  %6658 = vmatpush2.msra.mxu0 %v6571
  %6659 = vmatprep.subr.mxu0 0.0
  %6660 = vmatpush2.msra.mxu0 %v6570
  %6661 = vmatprep.subr.mxu0 0.0
  %6662 = vmatpush2.msra.mxu0 %v6569
  %6663 = vmatprep.subr.mxu0 0.0
  %6664 = vmatpush2.msra.mxu0 %v6568
  %6665 = vmatprep.subr.mxu0 0.0
  %6666 = vmatpush2.msra.mxu0 %v6567
  %6667 = vmatprep.subr.mxu0 0.0
  %6668 = vmatpush2.msra.mxu0 %v6566
  %6669 = vmatprep.subr.mxu0 0.0
  %6670 = vmatpush2.msra.mxu0 %v6565
  %6671 = vmatprep.subr.mxu0 0.0
  %6672 = vmatpush2.msra.mxu0 %v6564
  %6673 = vmatprep.subr.mxu0 0.0
  %6674 = vmatpush2.msra.mxu0 %v6563
  %6675 = vmatprep.mubr.f32.mxu0 %v6420
  %6676 = vmatmul.mubr.f32.gmra.mxu0 %v6419
  %v6677 = vpop.f32.mrf.mxu0
  %v6678 = vadd.f32 0.0, %v6677
  %v6679 = vpop.f32.mrf.mxu0
  %6680 = vmatprep.mubr.f32.mxu0 %v6424
  %6681 = vmatmul.mubr.f32.gmra.mxu0 %v6423
  %v6682 = vpop.f32.mrf.mxu0
  %v6683 = vadd.f32 0.0, %v6682
  %v6684 = vpop.f32.mrf.mxu0
  %6685 = vmatprep.mubr.f32.mxu0 %v6428
  %6686 = vmatmul.mubr.f32.gmra.mxu0 %v6427
  %v6687 = vpop.f32.mrf.mxu0
  %v6688 = vadd.f32 0.0, %v6687
  %v6689 = vpop.f32.mrf.mxu0
  %6690 = vmatprep.mubr.f32.mxu0 %v6432
  %6691 = vmatmul.mubr.f32.gmra.mxu0 %v6431
  %v6692 = vpop.f32.mrf.mxu0
  %v6693 = vadd.f32 0.0, %v6692
  %v6694 = vpop.f32.mrf.mxu0
  %6695 = vmatprep.mubr.f32.mxu0 %v6436
  %6696 = vmatmul.mubr.f32.gmra.mxu0 %v6435
  %v6697 = vpop.f32.mrf.mxu0
  %v6698 = vadd.f32 0.0, %v6697
  %v6699 = vpop.f32.mrf.mxu0
  %6700 = vmatprep.mubr.f32.mxu0 %v6440
  %6701 = vmatmul.mubr.f32.gmra.mxu0 %v6439
  %v6702 = vpop.f32.mrf.mxu0
  %v6703 = vadd.f32 0.0, %v6702
  %v6704 = vpop.f32.mrf.mxu0
  %6705 = vmatprep.mubr.f32.mxu0 %v6444
  %6706 = vmatmul.mubr.f32.gmra.mxu0 %v6443
  %v6707 = vpop.f32.mrf.mxu0
  %v6708 = vadd.f32 0.0, %v6707
  %v6709 = vpop.f32.mrf.mxu0
  %6710 = vmatprep.mubr.f32.mxu0 %v6448
  %6711 = vmatmul.mubr.f32.gmra.mxu0 %v6447
  %v6712 = vpop.f32.mrf.mxu0
  %v6713 = vadd.f32 0.0, %v6712
  %v6714 = vpop.f32.mrf.mxu0
  %6715 = vmatprep.mubr.f32.mxu0 %v6452
  %6716 = vmatmul.mubr.f32.gmra.mxu0 %v6451
  %v6717 = vpop.f32.mrf.mxu0
  %v6718 = vadd.f32 0.0, %v6717
  %v6719 = vpop.f32.mrf.mxu0
  %6720 = vmatprep.mubr.f32.mxu0 %v6456
  %6721 = vmatmul.mubr.f32.gmra.mxu0 %v6455
  %v6722 = vpop.f32.mrf.mxu0
  %v6723 = vadd.f32 0.0, %v6722
  %v6724 = vpop.f32.mrf.mxu0
  %6725 = vmatprep.mubr.f32.mxu0 %v6460
  %6726 = vmatmul.mubr.f32.gmra.mxu0 %v6459
  %v6727 = vpop.f32.mrf.mxu0
  %v6728 = vadd.f32 0.0, %v6727
  %v6729 = vpop.f32.mrf.mxu0
  %6730 = vmatprep.mubr.f32.mxu0 %v6464
  %6731 = vmatmul.mubr.f32.gmra.mxu0 %v6463
  %v6732 = vpop.f32.mrf.mxu0
  %v6733 = vadd.f32 0.0, %v6732
  %v6734 = vpop.f32.mrf.mxu0
  %6735 = vmatprep.mubr.f32.mxu0 %v6468
  %6736 = vmatmul.mubr.f32.gmra.mxu0 %v6467
  %v6737 = vpop.f32.mrf.mxu0
  %v6738 = vadd.f32 0.0, %v6737
  %v6739 = vpop.f32.mrf.mxu0
  %6740 = vmatprep.mubr.f32.mxu0 %v6472
  %6741 = vmatmul.mubr.f32.gmra.mxu0 %v6471
  %v6742 = vpop.f32.mrf.mxu0
  %v6743 = vadd.f32 0.0, %v6742
  %v6744 = vpop.f32.mrf.mxu0
  %6745 = vmatprep.mubr.f32.mxu0 %v6476
  %6746 = vmatmul.mubr.f32.gmra.mxu0 %v6475
  %v6747 = vpop.f32.mrf.mxu0
  %v6748 = vadd.f32 0.0, %v6747
  %v6749 = vpop.f32.mrf.mxu0
  %6750 = vmatprep.mubr.f32.mxu0 %v6480
  %6751 = vmatmul.mubr.f32.gmra.mxu0 %v6479
  %v6752 = vpop.f32.mrf.mxu0
  %v6753 = vadd.f32 0.0, %v6752
  %v6754 = vpop.f32.mrf.mxu0
  %6755 = vmatprep.mubr.f32.mxu0 %v6484
  %6756 = vmatmul.mubr.f32.gmra.mxu0 %v6483
  %v6757 = vpop.f32.mrf.mxu0
  %v6758 = vadd.f32 0.0, %v6757
  %v6759 = vpop.f32.mrf.mxu0
  %6760 = vmatprep.mubr.f32.mxu0 %v6488
  %6761 = vmatmul.mubr.f32.gmra.mxu0 %v6487
  %v6762 = vpop.f32.mrf.mxu0
  %v6763 = vadd.f32 0.0, %v6762
  %v6764 = vpop.f32.mrf.mxu0
  %6765 = vmatprep.mubr.f32.mxu0 %v6492
  %6766 = vmatmul.mubr.f32.gmra.mxu0 %v6491
  %v6767 = vpop.f32.mrf.mxu0
  %v6768 = vadd.f32 0.0, %v6767
  %v6769 = vpop.f32.mrf.mxu0
  %6770 = vmatprep.mubr.f32.mxu0 %v6496
  %6771 = vmatmul.mubr.f32.gmra.mxu0 %v6495
  %v6772 = vpop.f32.mrf.mxu0
  %v6773 = vadd.f32 0.0, %v6772
  %v6774 = vpop.f32.mrf.mxu0
  %6775 = vmatprep.mubr.f32.mxu0 %v6500
  %6776 = vmatmul.mubr.f32.gmra.mxu0 %v6499
  %v6777 = vpop.f32.mrf.mxu0
  %v6778 = vadd.f32 0.0, %v6777
  %v6779 = vpop.f32.mrf.mxu0
  %6780 = vmatprep.mubr.f32.mxu0 %v6504
  %6781 = vmatmul.mubr.f32.gmra.mxu0 %v6503
  %v6782 = vpop.f32.mrf.mxu0
  %v6783 = vadd.f32 0.0, %v6782
  %v6784 = vpop.f32.mrf.mxu0
  %6785 = vmatprep.mubr.f32.mxu0 %v6508
  %6786 = vmatmul.mubr.f32.gmra.mxu0 %v6507
  %v6787 = vpop.f32.mrf.mxu0
  %v6788 = vadd.f32 0.0, %v6787
  %v6789 = vpop.f32.mrf.mxu0
  %6790 = vmatprep.mubr.f32.mxu0 %v6512
  %6791 = vmatmul.mubr.f32.gmra.mxu0 %v6511
  %v6792 = vpop.f32.mrf.mxu0
  %v6793 = vadd.f32 0.0, %v6792
  %v6794 = vpop.f32.mrf.mxu0
  %6795 = vmatprep.mubr.f32.mxu0 %v6516
  %6796 = vmatmul.mubr.f32.gmra.mxu0 %v6515
  %v6797 = vpop.f32.mrf.mxu0
  %v6798 = vadd.f32 0.0, %v6797
  %v6799 = vpop.f32.mrf.mxu0
  %6800 = vmatprep.mubr.f32.mxu0 %v6520
  %6801 = vmatmul.mubr.f32.gmra.mxu0 %v6519
  %v6802 = vpop.f32.mrf.mxu0
  %v6803 = vadd.f32 0.0, %v6802
  %v6804 = vpop.f32.mrf.mxu0
  %6805 = vmatprep.mubr.f32.mxu0 %v6524
  %6806 = vmatmul.mubr.f32.gmra.mxu0 %v6523
  %v6807 = vpop.f32.mrf.mxu0
  %v6808 = vadd.f32 0.0, %v6807
  %v6809 = vpop.f32.mrf.mxu0
  %6810 = vmatprep.mubr.f32.mxu0 %v6528
  %6811 = vmatmul.mubr.f32.gmra.mxu0 %v6527
  %v6812 = vpop.f32.mrf.mxu0
  %v6813 = vadd.f32 0.0, %v6812
  %v6814 = vpop.f32.mrf.mxu0
  %6815 = vmatprep.mubr.f32.mxu0 %v6532
  %6816 = vmatmul.mubr.f32.gmra.mxu0 %v6531
  %v6817 = vpop.f32.mrf.mxu0
  %v6818 = vadd.f32 0.0, %v6817
  %v6819 = vpop.f32.mrf.mxu0
  %6820 = vmatprep.mubr.f32.mxu0 %v6536
  %6821 = vmatmul.mubr.f32.gmra.mxu0 %v6535
  %v6822 = vpop.f32.mrf.mxu0
  %v6823 = vadd.f32 0.0, %v6822
  %v6824 = vpop.f32.mrf.mxu0
  %6825 = vmatprep.mubr.f32.mxu0 %v6540
  %6826 = vmatmul.mubr.f32.gmra.mxu0 %v6539
  %v6827 = vpop.f32.mrf.mxu0
  %v6828 = vadd.f32 0.0, %v6827
  %v6829 = vpop.f32.mrf.mxu0
  %6830 = vmatprep.mubr.f32.mxu0 %v6544
  %6831 = vmatmul.mubr.f32.gmra.mxu0 %v6543
  %v6832 = vpop.f32.mrf.mxu0
  %v6833 = vadd.f32 0.0, %v6832
  %v6834 = vpop.f32.mrf.mxu0
  %6835 = vdwg.mxu0
  %6836 = vmatprep.subr.mxu0 0.0
  %6837 = vmatpush1.msra.mxu0 %v6594
  %6838 = vmatprep.subr.mxu0 0.0
  %6839 = vmatpush1.msra.mxu0 %v6593
  %6840 = vmatprep.subr.mxu0 0.0
  %6841 = vmatpush1.msra.mxu0 %v6592
  %6842 = vmatprep.subr.mxu0 0.0
  %6843 = vmatpush1.msra.mxu0 %v6591
  %6844 = vmatprep.subr.mxu0 0.0
  %6845 = vmatpush1.msra.mxu0 %v6590
  %6846 = vmatprep.subr.mxu0 0.0
  %6847 = vmatpush1.msra.mxu0 %v6589
  %6848 = vmatprep.subr.mxu0 0.0
  %6849 = vmatpush1.msra.mxu0 %v6588
  %6850 = vmatprep.subr.mxu0 0.0
  %6851 = vmatpush1.msra.mxu0 %v6587
  %6852 = vmatprep.subr.mxu0 0.0
  %6853 = vmatpush1.msra.mxu0 %v6586
  %6854 = vmatprep.subr.mxu0 0.0
  %6855 = vmatpush1.msra.mxu0 %v6585
  %6856 = vmatprep.subr.mxu0 0.0
  %6857 = vmatpush1.msra.mxu0 %v6584
  %6858 = vmatprep.subr.mxu0 0.0
  %6859 = vmatpush1.msra.mxu0 %v6583
  %6860 = vmatprep.subr.mxu0 0.0
  %6861 = vmatpush1.msra.mxu0 %v6582
  %6862 = vmatprep.subr.mxu0 0.0
  %6863 = vmatpush1.msra.mxu0 %v6581
  %6864 = vmatprep.subr.mxu0 0.0
  %6865 = vmatpush1.msra.mxu0 %v6580
  %6866 = vmatprep.subr.mxu0 0.0
  %6867 = vmatpush1.msra.mxu0 %v6579
  %6868 = vmatprep.subr.mxu0 0.0
  %6869 = vmatpush2.msra.mxu0 %v6610
  %6870 = vmatprep.subr.mxu0 0.0
  %6871 = vmatpush2.msra.mxu0 %v6609
  %6872 = vmatprep.subr.mxu0 0.0
  %6873 = vmatpush2.msra.mxu0 %v6608
  %6874 = vmatprep.subr.mxu0 0.0
  %6875 = vmatpush2.msra.mxu0 %v6607
  %6876 = vmatprep.subr.mxu0 0.0
  %6877 = vmatpush2.msra.mxu0 %v6606
  %6878 = vmatprep.subr.mxu0 0.0
  %6879 = vmatpush2.msra.mxu0 %v6605
  %6880 = vmatprep.subr.mxu0 0.0
  %6881 = vmatpush2.msra.mxu0 %v6604
  %6882 = vmatprep.subr.mxu0 0.0
  %6883 = vmatpush2.msra.mxu0 %v6603
  %6884 = vmatprep.subr.mxu0 0.0
  %6885 = vmatpush2.msra.mxu0 %v6602
  %6886 = vmatprep.subr.mxu0 0.0
  %6887 = vmatpush2.msra.mxu0 %v6601
  %6888 = vmatprep.subr.mxu0 0.0
  %6889 = vmatpush2.msra.mxu0 %v6600
  %6890 = vmatprep.subr.mxu0 0.0
  %6891 = vmatpush2.msra.mxu0 %v6599
  %6892 = vmatprep.subr.mxu0 0.0
  %6893 = vmatpush2.msra.mxu0 %v6598
  %6894 = vmatprep.subr.mxu0 0.0
  %6895 = vmatpush2.msra.mxu0 %v6597
  %6896 = vmatprep.subr.mxu0 0.0
  %6897 = vmatpush2.msra.mxu0 %v6596
  %6898 = vmatprep.subr.mxu0 0.0
  %6899 = vmatpush2.msra.mxu0 %v6595
  %6900 = vmatprep.mubr.f32.mxu0 %v6422
  %6901 = vmatmul.mubr.f32.gmra.mxu0 %v6421
  %v6902 = vpop.f32.mrf.mxu0
  %v6903 = vadd.f32 %v6678, %v6902
  %v6904 = vpop.f32.mrf.mxu0
  %6905 = vmatprep.mubr.f32.mxu0 %v6426
  %6906 = vmatmul.mubr.f32.gmra.mxu0 %v6425
  %v6907 = vpop.f32.mrf.mxu0
  %v6908 = vadd.f32 %v6683, %v6907
  %v6909 = vpop.f32.mrf.mxu0
  %6910 = vmatprep.mubr.f32.mxu0 %v6430
  %6911 = vmatmul.mubr.f32.gmra.mxu0 %v6429
  %v6912 = vpop.f32.mrf.mxu0
  %v6913 = vadd.f32 %v6688, %v6912
  %v6914 = vpop.f32.mrf.mxu0
  %6915 = vmatprep.mubr.f32.mxu0 %v6434
  %6916 = vmatmul.mubr.f32.gmra.mxu0 %v6433
  %v6917 = vpop.f32.mrf.mxu0
  %v6918 = vadd.f32 %v6693, %v6917
  %v6919 = vpop.f32.mrf.mxu0
  %6920 = vmatprep.mubr.f32.mxu0 %v6438
  %6921 = vmatmul.mubr.f32.gmra.mxu0 %v6437
  %v6922 = vpop.f32.mrf.mxu0
  %v6923 = vadd.f32 %v6698, %v6922
  %v6924 = vpop.f32.mrf.mxu0
  %6925 = vmatprep.mubr.f32.mxu0 %v6442
  %6926 = vmatmul.mubr.f32.gmra.mxu0 %v6441
  %v6927 = vpop.f32.mrf.mxu0
  %v6928 = vadd.f32 %v6703, %v6927
  %v6929 = vpop.f32.mrf.mxu0
  %6930 = vmatprep.mubr.f32.mxu0 %v6446
  %6931 = vmatmul.mubr.f32.gmra.mxu0 %v6445
  %v6932 = vpop.f32.mrf.mxu0
  %v6933 = vadd.f32 %v6708, %v6932
  %v6934 = vpop.f32.mrf.mxu0
  %6935 = vmatprep.mubr.f32.mxu0 %v6450
  %6936 = vmatmul.mubr.f32.gmra.mxu0 %v6449
  %v6937 = vpop.f32.mrf.mxu0
  %v6938 = vadd.f32 %v6713, %v6937
  %v6939 = vpop.f32.mrf.mxu0
  %6940 = vmatprep.mubr.f32.mxu0 %v6454
  %6941 = vmatmul.mubr.f32.gmra.mxu0 %v6453
  %v6942 = vpop.f32.mrf.mxu0
  %v6943 = vadd.f32 %v6718, %v6942
  %v6944 = vpop.f32.mrf.mxu0
  %6945 = vmatprep.mubr.f32.mxu0 %v6458
  %6946 = vmatmul.mubr.f32.gmra.mxu0 %v6457
  %v6947 = vpop.f32.mrf.mxu0
  %v6948 = vadd.f32 %v6723, %v6947
  %v6949 = vpop.f32.mrf.mxu0
  %6950 = vmatprep.mubr.f32.mxu0 %v6462
  %6951 = vmatmul.mubr.f32.gmra.mxu0 %v6461
  %v6952 = vpop.f32.mrf.mxu0
  %v6953 = vadd.f32 %v6728, %v6952
  %v6954 = vpop.f32.mrf.mxu0
  %6955 = vmatprep.mubr.f32.mxu0 %v6466
  %6956 = vmatmul.mubr.f32.gmra.mxu0 %v6465
  %v6957 = vpop.f32.mrf.mxu0
  %v6958 = vadd.f32 %v6733, %v6957
  %v6959 = vpop.f32.mrf.mxu0
  %6960 = vmatprep.mubr.f32.mxu0 %v6470
  %6961 = vmatmul.mubr.f32.gmra.mxu0 %v6469
  %v6962 = vpop.f32.mrf.mxu0
  %v6963 = vadd.f32 %v6738, %v6962
  %v6964 = vpop.f32.mrf.mxu0
  %6965 = vmatprep.mubr.f32.mxu0 %v6474
  %6966 = vmatmul.mubr.f32.gmra.mxu0 %v6473
  %v6967 = vpop.f32.mrf.mxu0
  %v6968 = vadd.f32 %v6743, %v6967
  %v6969 = vpop.f32.mrf.mxu0
  %6970 = vmatprep.mubr.f32.mxu0 %v6478
  %6971 = vmatmul.mubr.f32.gmra.mxu0 %v6477
  %v6972 = vpop.f32.mrf.mxu0
  %v6973 = vadd.f32 %v6748, %v6972
  %v6974 = vpop.f32.mrf.mxu0
  %6975 = vmatprep.mubr.f32.mxu0 %v6482
  %6976 = vmatmul.mubr.f32.gmra.mxu0 %v6481
  %v6977 = vpop.f32.mrf.mxu0
  %v6978 = vadd.f32 %v6753, %v6977
  %v6979 = vpop.f32.mrf.mxu0
  %6980 = vmatprep.mubr.f32.mxu0 %v6486
  %6981 = vmatmul.mubr.f32.gmra.mxu0 %v6485
  %v6982 = vpop.f32.mrf.mxu0
  %v6983 = vadd.f32 %v6758, %v6982
  %v6984 = vpop.f32.mrf.mxu0
  %6985 = vmatprep.mubr.f32.mxu0 %v6490
  %6986 = vmatmul.mubr.f32.gmra.mxu0 %v6489
  %v6987 = vpop.f32.mrf.mxu0
  %v6988 = vadd.f32 %v6763, %v6987
  %v6989 = vpop.f32.mrf.mxu0
  %6990 = vmatprep.mubr.f32.mxu0 %v6494
  %6991 = vmatmul.mubr.f32.gmra.mxu0 %v6493
  %v6992 = vpop.f32.mrf.mxu0
  %v6993 = vadd.f32 %v6768, %v6992
  %v6994 = vpop.f32.mrf.mxu0
  %6995 = vmatprep.mubr.f32.mxu0 %v6498
  %6996 = vmatmul.mubr.f32.gmra.mxu0 %v6497
  %v6997 = vpop.f32.mrf.mxu0
  %v6998 = vadd.f32 %v6773, %v6997
  %v6999 = vpop.f32.mrf.mxu0
  %7000 = vmatprep.mubr.f32.mxu0 %v6502
  %7001 = vmatmul.mubr.f32.gmra.mxu0 %v6501
  %v7002 = vpop.f32.mrf.mxu0
  %v7003 = vadd.f32 %v6778, %v7002
  %v7004 = vpop.f32.mrf.mxu0
  %7005 = vmatprep.mubr.f32.mxu0 %v6506
  %7006 = vmatmul.mubr.f32.gmra.mxu0 %v6505
  %v7007 = vpop.f32.mrf.mxu0
  %v7008 = vadd.f32 %v6783, %v7007
  %v7009 = vpop.f32.mrf.mxu0
  %7010 = vmatprep.mubr.f32.mxu0 %v6510
  %7011 = vmatmul.mubr.f32.gmra.mxu0 %v6509
  %v7012 = vpop.f32.mrf.mxu0
  %v7013 = vadd.f32 %v6788, %v7012
  %v7014 = vpop.f32.mrf.mxu0
  %7015 = vmatprep.mubr.f32.mxu0 %v6514
  %7016 = vmatmul.mubr.f32.gmra.mxu0 %v6513
  %v7017 = vpop.f32.mrf.mxu0
  %v7018 = vadd.f32 %v6793, %v7017
  %v7019 = vpop.f32.mrf.mxu0
  %7020 = vmatprep.mubr.f32.mxu0 %v6518
  %7021 = vmatmul.mubr.f32.gmra.mxu0 %v6517
  %v7022 = vpop.f32.mrf.mxu0
  %v7023 = vadd.f32 %v6798, %v7022
  %v7024 = vpop.f32.mrf.mxu0
  %7025 = vmatprep.mubr.f32.mxu0 %v6522
  %7026 = vmatmul.mubr.f32.gmra.mxu0 %v6521
  %v7027 = vpop.f32.mrf.mxu0
  %v7028 = vadd.f32 %v6803, %v7027
  %v7029 = vpop.f32.mrf.mxu0
  %7030 = vmatprep.mubr.f32.mxu0 %v6526
  %7031 = vmatmul.mubr.f32.gmra.mxu0 %v6525
  %v7032 = vpop.f32.mrf.mxu0
  %v7033 = vadd.f32 %v6808, %v7032
  %v7034 = vpop.f32.mrf.mxu0
  %7035 = vmatprep.mubr.f32.mxu0 %v6530
  %7036 = vmatmul.mubr.f32.gmra.mxu0 %v6529
  %v7037 = vpop.f32.mrf.mxu0
  %v7038 = vadd.f32 %v6813, %v7037
  %v7039 = vpop.f32.mrf.mxu0
  %7040 = vmatprep.mubr.f32.mxu0 %v6534
  %7041 = vmatmul.mubr.f32.gmra.mxu0 %v6533
  %v7042 = vpop.f32.mrf.mxu0
  %v7043 = vadd.f32 %v6818, %v7042
  %v7044 = vpop.f32.mrf.mxu0
  %7045 = vmatprep.mubr.f32.mxu0 %v6538
  %7046 = vmatmul.mubr.f32.gmra.mxu0 %v6537
  %v7047 = vpop.f32.mrf.mxu0
  %v7048 = vadd.f32 %v6823, %v7047
  %v7049 = vpop.f32.mrf.mxu0
  %7050 = vmatprep.mubr.f32.mxu0 %v6542
  %7051 = vmatmul.mubr.f32.gmra.mxu0 %v6541
  %v7052 = vpop.f32.mrf.mxu0
  %v7053 = vadd.f32 %v6828, %v7052
  %v7054 = vpop.f32.mrf.mxu0
  %7055 = vmatprep.mubr.f32.mxu0 %v6546
  %7056 = vmatmul.mubr.f32.gmra.mxu0 %v6545
  %v7057 = vpop.f32.mrf.mxu0
  %v7058 = vadd.f32 %v6833, %v7057
  %v7059 = vpop.f32.mrf.mxu0
  %7060 = vdwg.mxu0
  %v7061 = vadd.f32 %v5787, %v6903
  %v7062 = vadd.f32 %v5788, %v6908
  %v7063 = vadd.f32 %v5789, %v6913
  %v7064 = vadd.f32 %v5790, %v6918
  %v7065 = vadd.f32 %v5791, %v6923
  %v7066 = vadd.f32 %v5792, %v6928
  %v7067 = vadd.f32 %v5793, %v6933
  %v7068 = vadd.f32 %v5794, %v6938
  %v7069 = vadd.f32 %v5795, %v6943
  %v7070 = vadd.f32 %v5796, %v6948
  %v7071 = vadd.f32 %v5797, %v6953
  %v7072 = vadd.f32 %v5798, %v6958
  %v7073 = vadd.f32 %v5799, %v6963
  %v7074 = vadd.f32 %v5800, %v6968
  %v7075 = vadd.f32 %v5801, %v6973
  %v7076 = vadd.f32 %v5802, %v6978
  %v7077 = vadd.f32 %v5803, %v6983
  %v7078 = vadd.f32 %v5804, %v6988
  %v7079 = vadd.f32 %v5805, %v6993
  %v7080 = vadd.f32 %v5806, %v6998
  %v7081 = vadd.f32 %v5807, %v7003
  %v7082 = vadd.f32 %v5808, %v7008
  %v7083 = vadd.f32 %v5809, %v7013
  %v7084 = vadd.f32 %v5810, %v7018
  %v7085 = vadd.f32 %v5811, %v7023
  %v7086 = vadd.f32 %v5812, %v7028
  %v7087 = vadd.f32 %v5813, %v7033
  %v7088 = vadd.f32 %v5814, %v7038
  %v7089 = vadd.f32 %v5815, %v7043
  %v7090 = vadd.f32 %v5816, %v7048
  %v7091 = vadd.f32 %v5817, %v7053
  %v7092 = vadd.f32 %v5818, %v7058
  %v7093 = vld [vmem:[%s10] sm:$0x1]
  %v7095 = vlaneseq
  %v7096 = vshrl.u32 %v7095, 7
  %v7097 = vsub.s32 0, %v7096
  %v7098 = vrot.slane %v7093, %v7097
  %v7100 = vadd.f32 %v7061, %v7098
  %v7101 = vadd.f32 %v7062, %v7098
  %v7102 = vadd.f32 %v7063, %v7098
  %v7103 = vadd.f32 %v7064, %v7098
  %v7104 = vadd.f32 %v7065, %v7098
  %v7105 = vadd.f32 %v7066, %v7098
  %v7106 = vadd.f32 %v7067, %v7098
  %v7107 = vadd.f32 %v7068, %v7098
  %v7108 = vadd.f32 %v7069, %v7098
  %v7109 = vadd.f32 %v7070, %v7098
  %v7110 = vadd.f32 %v7071, %v7098
  %v7111 = vadd.f32 %v7072, %v7098
  %v7112 = vadd.f32 %v7073, %v7098
  %v7113 = vadd.f32 %v7074, %v7098
  %v7114 = vadd.f32 %v7075, %v7098
  %v7115 = vadd.f32 %v7076, %v7098
  %v7116 = vadd.f32 %v7077, %v7098
  %v7117 = vadd.f32 %v7078, %v7098
  %v7118 = vadd.f32 %v7079, %v7098
  %v7119 = vadd.f32 %v7080, %v7098
  %v7120 = vadd.f32 %v7081, %v7098
  %v7121 = vadd.f32 %v7082, %v7098
  %v7122 = vadd.f32 %v7083, %v7098
  %v7123 = vadd.f32 %v7084, %v7098
  %v7124 = vadd.f32 %v7085, %v7098
  %v7125 = vadd.f32 %v7086, %v7098
  %v7126 = vadd.f32 %v7087, %v7098
  %v7127 = vadd.f32 %v7088, %v7098
  %v7128 = vadd.f32 %v7089, %v7098
  %v7129 = vadd.f32 %v7090, %v7098
  %v7130 = vadd.f32 %v7091, %v7098
  %v7131 = vadd.f32 %v7092, %v7098
  %7132 = vrot.lane.b32.xlu0 %v7100, 64
  %v7133 = vpop.permute.xlu0 %7132
  %7134 = vrot.lane.b32.xlu0 %v7101, 64
  %v7135 = vpop.permute.xlu0 %7134
  %7136 = vrot.lane.b32.xlu0 %v7102, 64
  %v7137 = vpop.permute.xlu0 %7136
  %7138 = vrot.lane.b32.xlu0 %v7103, 64
  %v7139 = vpop.permute.xlu0 %7138
  %7140 = vrot.lane.b32.xlu0 %v7104, 64
  %v7141 = vpop.permute.xlu0 %7140
  %7142 = vrot.lane.b32.xlu0 %v7105, 64
  %v7143 = vpop.permute.xlu0 %7142
  %7144 = vrot.lane.b32.xlu0 %v7106, 64
  %v7145 = vpop.permute.xlu0 %7144
  %7146 = vrot.lane.b32.xlu0 %v7107, 64
  %v7147 = vpop.permute.xlu0 %7146
  %7148 = vrot.lane.b32.xlu0 %v7108, 64
  %v7149 = vpop.permute.xlu0 %7148
  %7150 = vrot.lane.b32.xlu0 %v7109, 64
  %v7151 = vpop.permute.xlu0 %7150
  %7152 = vrot.lane.b32.xlu0 %v7110, 64
  %v7153 = vpop.permute.xlu0 %7152
  %7154 = vrot.lane.b32.xlu0 %v7111, 64
  %v7155 = vpop.permute.xlu0 %7154
  %7156 = vrot.lane.b32.xlu0 %v7112, 64
  %v7157 = vpop.permute.xlu0 %7156
  %7158 = vrot.lane.b32.xlu0 %v7113, 64
  %v7159 = vpop.permute.xlu0 %7158
  %7160 = vrot.lane.b32.xlu0 %v7114, 64
  %v7161 = vpop.permute.xlu0 %7160
  %7162 = vrot.lane.b32.xlu0 %v7115, 64
  %v7163 = vpop.permute.xlu0 %7162
  %7164 = vrot.lane.b32.xlu0 %v7116, 64
  %v7165 = vpop.permute.xlu0 %7164
  %7166 = vrot.lane.b32.xlu0 %v7117, 64
  %v7167 = vpop.permute.xlu0 %7166
  %7168 = vrot.lane.b32.xlu0 %v7118, 64
  %v7169 = vpop.permute.xlu0 %7168
  %7170 = vrot.lane.b32.xlu0 %v7119, 64
  %v7171 = vpop.permute.xlu0 %7170
  %7172 = vrot.lane.b32.xlu0 %v7120, 64
  %v7173 = vpop.permute.xlu0 %7172
  %7174 = vrot.lane.b32.xlu0 %v7121, 64
  %v7175 = vpop.permute.xlu0 %7174
  %7176 = vrot.lane.b32.xlu0 %v7122, 64
  %v7177 = vpop.permute.xlu0 %7176
  %7178 = vrot.lane.b32.xlu0 %v7123, 64
  %v7179 = vpop.permute.xlu0 %7178
  %7180 = vrot.lane.b32.xlu0 %v7124, 64
  %v7181 = vpop.permute.xlu0 %7180
  %7182 = vrot.lane.b32.xlu0 %v7125, 64
  %v7183 = vpop.permute.xlu0 %7182
  %7184 = vrot.lane.b32.xlu0 %v7126, 64
  %v7185 = vpop.permute.xlu0 %7184
  %7186 = vrot.lane.b32.xlu0 %v7127, 64
  %v7187 = vpop.permute.xlu0 %7186
  %7188 = vrot.lane.b32.xlu0 %v7128, 64
  %v7189 = vpop.permute.xlu0 %7188
  %7190 = vrot.lane.b32.xlu0 %v7129, 64
  %v7191 = vpop.permute.xlu0 %7190
  %7192 = vrot.lane.b32.xlu0 %v7130, 64
  %v7193 = vpop.permute.xlu0 %7192
  %7194 = vrot.lane.b32.xlu0 %v7131, 64
  %v7195 = vpop.permute.xlu0 %7194
  %v7196 = vld [vmem:[%s11] sm:$0x1]
  %v7198 = vlaneseq
  %v7199 = vshrl.u32 %v7198, 7
  %v7200 = vsub.s32 0, %v7199
  %v7201 = vrot.slane %v7196, %v7200
  %v7203 = vmul.f32 %v7133, %v7201
  %v7204 = vmul.f32 %v7135, %v7201
  %v7205 = vmul.f32 %v7137, %v7201
  %v7206 = vmul.f32 %v7139, %v7201
  %v7207 = vmul.f32 %v7141, %v7201
  %v7208 = vmul.f32 %v7143, %v7201
  %v7209 = vmul.f32 %v7145, %v7201
  %v7210 = vmul.f32 %v7147, %v7201
  %v7211 = vmul.f32 %v7149, %v7201
  %v7212 = vmul.f32 %v7151, %v7201
  %v7213 = vmul.f32 %v7153, %v7201
  %v7214 = vmul.f32 %v7155, %v7201
  %v7215 = vmul.f32 %v7157, %v7201
  %v7216 = vmul.f32 %v7159, %v7201
  %v7217 = vmul.f32 %v7161, %v7201
  %v7218 = vmul.f32 %v7163, %v7201
  %v7219 = vmul.f32 %v7165, %v7201
  %v7220 = vmul.f32 %v7167, %v7201
  %v7221 = vmul.f32 %v7169, %v7201
  %v7222 = vmul.f32 %v7171, %v7201
  %v7223 = vmul.f32 %v7173, %v7201
  %v7224 = vmul.f32 %v7175, %v7201
  %v7225 = vmul.f32 %v7177, %v7201
  %v7226 = vmul.f32 %v7179, %v7201
  %v7227 = vmul.f32 %v7181, %v7201
  %v7228 = vmul.f32 %v7183, %v7201
  %v7229 = vmul.f32 %v7185, %v7201
  %v7230 = vmul.f32 %v7187, %v7201
  %v7231 = vmul.f32 %v7189, %v7201
  %v7232 = vmul.f32 %v7191, %v7201
  %v7233 = vmul.f32 %v7193, %v7201
  %v7234 = vmul.f32 %v7195, %v7201
  %v7235 = vadd.f32 %v7100, %v7203
  %v7236 = vadd.f32 %v7101, %v7204
  %v7237 = vadd.f32 %v7102, %v7205
  %v7238 = vadd.f32 %v7103, %v7206
  %v7239 = vadd.f32 %v7104, %v7207
  %v7240 = vadd.f32 %v7105, %v7208
  %v7241 = vadd.f32 %v7106, %v7209
  %v7242 = vadd.f32 %v7107, %v7210
  %v7243 = vadd.f32 %v7108, %v7211
  %v7244 = vadd.f32 %v7109, %v7212
  %v7245 = vadd.f32 %v7110, %v7213
  %v7246 = vadd.f32 %v7111, %v7214
  %v7247 = vadd.f32 %v7112, %v7215
  %v7248 = vadd.f32 %v7113, %v7216
  %v7249 = vadd.f32 %v7114, %v7217
  %v7250 = vadd.f32 %v7115, %v7218
  %v7251 = vadd.f32 %v7116, %v7219
  %v7252 = vadd.f32 %v7117, %v7220
  %v7253 = vadd.f32 %v7118, %v7221
  %v7254 = vadd.f32 %v7119, %v7222
  %v7255 = vadd.f32 %v7120, %v7223
  %v7256 = vadd.f32 %v7121, %v7224
  %v7257 = vadd.f32 %v7122, %v7225
  %v7258 = vadd.f32 %v7123, %v7226
  %v7259 = vadd.f32 %v7124, %v7227
  %v7260 = vadd.f32 %v7125, %v7228
  %v7261 = vadd.f32 %v7126, %v7229
  %v7262 = vadd.f32 %v7127, %v7230
  %v7263 = vadd.f32 %v7128, %v7231
  %v7264 = vadd.f32 %v7129, %v7232
  %v7265 = vadd.f32 %v7130, %v7233
  %v7266 = vadd.f32 %v7131, %v7234
  %s7267 = scalar_lea.vmem %s1, 128
  %v7268 = vld [vmem:[%s7267] sm:$0xff]
  %v7269 = vld [vmem:[%s7267 + $0x8] sm:$0xff]
  %v7270 = vld [vmem:[%s7267 + $0x10] sm:$0xff]
  %v7271 = vld [vmem:[%s7267 + $0x18] sm:$0xff]
  %v7272 = vld [vmem:[%s7267 + $0x20] sm:$0xff]
  %v7273 = vld [vmem:[%s7267 + $0x28] sm:$0xff]
  %v7274 = vld [vmem:[%s7267 + $0x30] sm:$0xff]
  %v7275 = vld [vmem:[%s7267 + $0x38] sm:$0xff]
  %v7276 = vld [vmem:[%s7267 + $0x40] sm:$0xff]
  %v7277 = vld [vmem:[%s7267 + $0x48] sm:$0xff]
  %v7278 = vld [vmem:[%s7267 + $0x50] sm:$0xff]
  %v7279 = vld [vmem:[%s7267 + $0x58] sm:$0xff]
  %v7280 = vld [vmem:[%s7267 + $0x60] sm:$0xff]
  %v7281 = vld [vmem:[%s7267 + $0x68] sm:$0xff]
  %v7282 = vld [vmem:[%s7267 + $0x70] sm:$0xff]
  %v7283 = vld [vmem:[%s7267 + $0x78] sm:$0xff]
  %s7284 = scalar_lea.vmem %s2, 1
  %v7285 = vld [vmem:[%s7284] sm:$0x1]
  %v7287 = vlaneseq
  %v7288 = vshrl.u32 %v7287, 7
  %v7289 = vsub.s32 0, %v7288
  %v7290 = vrot.slane %v7285, %v7289
  %7292 = vmatprep.subr.mxu0 0.0
  %7293 = vmatpush1.msra.mxu0 %v7283
  %7294 = vmatprep.subr.mxu0 0.0
  %7295 = vmatpush1.msra.mxu0 %v7282
  %7296 = vmatprep.subr.mxu0 0.0
  %7297 = vmatpush1.msra.mxu0 %v7281
  %7298 = vmatprep.subr.mxu0 0.0
  %7299 = vmatpush1.msra.mxu0 %v7280
  %7300 = vmatprep.subr.mxu0 0.0
  %7301 = vmatpush1.msra.mxu0 %v7279
  %7302 = vmatprep.subr.mxu0 0.0
  %7303 = vmatpush1.msra.mxu0 %v7278
  %7304 = vmatprep.subr.mxu0 0.0
  %7305 = vmatpush1.msra.mxu0 %v7277
  %7306 = vmatprep.subr.mxu0 0.0
  %7307 = vmatpush1.msra.mxu0 %v7276
  %7308 = vmatprep.subr.mxu0 0.0
  %7309 = vmatpush1.msra.mxu0 %v7275
  %7310 = vmatprep.subr.mxu0 0.0
  %7311 = vmatpush1.msra.mxu0 %v7274
  %7312 = vmatprep.subr.mxu0 0.0
  %7313 = vmatpush1.msra.mxu0 %v7273
  %7314 = vmatprep.subr.mxu0 0.0
  %7315 = vmatpush1.msra.mxu0 %v7272
  %7316 = vmatprep.subr.mxu0 0.0
  %7317 = vmatpush1.msra.mxu0 %v7271
  %7318 = vmatprep.subr.mxu0 0.0
  %7319 = vmatpush1.msra.mxu0 %v7270
  %7320 = vmatprep.subr.mxu0 0.0
  %7321 = vmatpush1.msra.mxu0 %v7269
  %7322 = vmatprep.subr.mxu0 0.0
  %7323 = vmatpush1.msra.mxu0 %v7268
  %7324 = vmatprep.subr.mxu0 0.0
  %7325 = vmatpush2.msra.mxu0 0.0
  %7326 = vmatprep.subr.mxu0 0.0
  %7327 = vmatpush2.msra.mxu0 0.0
  %7328 = vmatprep.subr.mxu0 0.0
  %7329 = vmatpush2.msra.mxu0 0.0
  %7330 = vmatprep.subr.mxu0 0.0
  %7331 = vmatpush2.msra.mxu0 0.0
  %7332 = vmatprep.subr.mxu0 0.0
  %7333 = vmatpush2.msra.mxu0 0.0
  %7334 = vmatprep.subr.mxu0 0.0
  %7335 = vmatpush2.msra.mxu0 0.0
  %7336 = vmatprep.subr.mxu0 0.0
  %7337 = vmatpush2.msra.mxu0 0.0
  %7338 = vmatprep.subr.mxu0 0.0
  %7339 = vmatpush2.msra.mxu0 0.0
  %7340 = vmatprep.subr.mxu0 0.0
  %7341 = vmatpush2.msra.mxu0 0.0
  %7342 = vmatprep.subr.mxu0 0.0
  %7343 = vmatpush2.msra.mxu0 0.0
  %7344 = vmatprep.subr.mxu0 0.0
  %7345 = vmatpush2.msra.mxu0 0.0
  %7346 = vmatprep.subr.mxu0 0.0
  %7347 = vmatpush2.msra.mxu0 0.0
  %7348 = vmatprep.subr.mxu0 0.0
  %7349 = vmatpush2.msra.mxu0 0.0
  %7350 = vmatprep.subr.mxu0 0.0
  %7351 = vmatpush2.msra.mxu0 0.0
  %7352 = vmatprep.subr.mxu0 0.0
  %7353 = vmatpush2.msra.mxu0 0.0
  %7354 = vmatprep.subr.mxu0 0.0
  %7355 = vmatpush2.msra.mxu0 0.0
  %7356 = vmatprep.mubr.f32.mxu0 0.0
  %7357 = vmatmul.mubr.f32.gmra.mxu0 %v7235
  %v7358 = vpop.f32.mrf.mxu0
  %v7359 = vadd.f32 %v7290, %v7358
  %v7360 = vpop.f32.mrf.mxu0
  %7361 = vmatprep.mubr.f32.mxu0 0.0
  %7362 = vmatmul.mubr.f32.gmra.mxu0 %v7236
  %v7363 = vpop.f32.mrf.mxu0
  %v7364 = vadd.f32 %v7290, %v7363
  %v7365 = vpop.f32.mrf.mxu0
  %7366 = vmatprep.mubr.f32.mxu0 0.0
  %7367 = vmatmul.mubr.f32.gmra.mxu0 %v7237
  %v7368 = vpop.f32.mrf.mxu0
  %v7369 = vadd.f32 %v7290, %v7368
  %v7370 = vpop.f32.mrf.mxu0
  %7371 = vmatprep.mubr.f32.mxu0 0.0
  %7372 = vmatmul.mubr.f32.gmra.mxu0 %v7238
  %v7373 = vpop.f32.mrf.mxu0
  %v7374 = vadd.f32 %v7290, %v7373
  %v7375 = vpop.f32.mrf.mxu0
  %7376 = vmatprep.mubr.f32.mxu0 0.0
  %7377 = vmatmul.mubr.f32.gmra.mxu0 %v7239
  %v7378 = vpop.f32.mrf.mxu0
  %v7379 = vadd.f32 %v7290, %v7378
  %v7380 = vpop.f32.mrf.mxu0
  %7381 = vmatprep.mubr.f32.mxu0 0.0
  %7382 = vmatmul.mubr.f32.gmra.mxu0 %v7240
  %v7383 = vpop.f32.mrf.mxu0
  %v7384 = vadd.f32 %v7290, %v7383
  %v7385 = vpop.f32.mrf.mxu0
  %7386 = vmatprep.mubr.f32.mxu0 0.0
  %7387 = vmatmul.mubr.f32.gmra.mxu0 %v7241
  %v7388 = vpop.f32.mrf.mxu0
  %v7389 = vadd.f32 %v7290, %v7388
  %v7390 = vpop.f32.mrf.mxu0
  %7391 = vmatprep.mubr.f32.mxu0 0.0
  %7392 = vmatmul.mubr.f32.gmra.mxu0 %v7242
  %v7393 = vpop.f32.mrf.mxu0
  %v7394 = vadd.f32 %v7290, %v7393
  %v7395 = vpop.f32.mrf.mxu0
  %7396 = vmatprep.mubr.f32.mxu0 0.0
  %7397 = vmatmul.mubr.f32.gmra.mxu0 %v7243
  %v7398 = vpop.f32.mrf.mxu0
  %v7399 = vadd.f32 %v7290, %v7398
  %v7400 = vpop.f32.mrf.mxu0
  %7401 = vmatprep.mubr.f32.mxu0 0.0
  %7402 = vmatmul.mubr.f32.gmra.mxu0 %v7244
  %v7403 = vpop.f32.mrf.mxu0
  %v7404 = vadd.f32 %v7290, %v7403
  %v7405 = vpop.f32.mrf.mxu0
  %7406 = vmatprep.mubr.f32.mxu0 0.0
  %7407 = vmatmul.mubr.f32.gmra.mxu0 %v7245
  %v7408 = vpop.f32.mrf.mxu0
  %v7409 = vadd.f32 %v7290, %v7408
  %v7410 = vpop.f32.mrf.mxu0
  %7411 = vmatprep.mubr.f32.mxu0 0.0
  %7412 = vmatmul.mubr.f32.gmra.mxu0 %v7246
  %v7413 = vpop.f32.mrf.mxu0
  %v7414 = vadd.f32 %v7290, %v7413
  %v7415 = vpop.f32.mrf.mxu0
  %7416 = vmatprep.mubr.f32.mxu0 0.0
  %7417 = vmatmul.mubr.f32.gmra.mxu0 %v7247
  %v7418 = vpop.f32.mrf.mxu0
  %v7419 = vadd.f32 %v7290, %v7418
  %v7420 = vpop.f32.mrf.mxu0
  %7421 = vmatprep.mubr.f32.mxu0 0.0
  %7422 = vmatmul.mubr.f32.gmra.mxu0 %v7248
  %v7423 = vpop.f32.mrf.mxu0
  %v7424 = vadd.f32 %v7290, %v7423
  %v7425 = vpop.f32.mrf.mxu0
  %7426 = vmatprep.mubr.f32.mxu0 0.0
  %7427 = vmatmul.mubr.f32.gmra.mxu0 %v7249
  %v7428 = vpop.f32.mrf.mxu0
  %v7429 = vadd.f32 %v7290, %v7428
  %v7430 = vpop.f32.mrf.mxu0
  %7431 = vmatprep.mubr.f32.mxu0 0.0
  %7432 = vmatmul.mubr.f32.gmra.mxu0 %v7250
  %v7433 = vpop.f32.mrf.mxu0
  %v7434 = vadd.f32 %v7290, %v7433
  %v7435 = vpop.f32.mrf.mxu0
  %7436 = vmatprep.mubr.f32.mxu0 0.0
  %7437 = vmatmul.mubr.f32.gmra.mxu0 %v7251
  %v7438 = vpop.f32.mrf.mxu0
  %v7439 = vadd.f32 %v7290, %v7438
  %v7440 = vpop.f32.mrf.mxu0
  %7441 = vmatprep.mubr.f32.mxu0 0.0
  %7442 = vmatmul.mubr.f32.gmra.mxu0 %v7252
  %v7443 = vpop.f32.mrf.mxu0
  %v7444 = vadd.f32 %v7290, %v7443
  %v7445 = vpop.f32.mrf.mxu0
  %7446 = vmatprep.mubr.f32.mxu0 0.0
  %7447 = vmatmul.mubr.f32.gmra.mxu0 %v7253
  %v7448 = vpop.f32.mrf.mxu0
  %v7449 = vadd.f32 %v7290, %v7448
  %v7450 = vpop.f32.mrf.mxu0
  %7451 = vmatprep.mubr.f32.mxu0 0.0
  %7452 = vmatmul.mubr.f32.gmra.mxu0 %v7254
  %v7453 = vpop.f32.mrf.mxu0
  %v7454 = vadd.f32 %v7290, %v7453
  %v7455 = vpop.f32.mrf.mxu0
  %7456 = vmatprep.mubr.f32.mxu0 0.0
  %7457 = vmatmul.mubr.f32.gmra.mxu0 %v7255
  %v7458 = vpop.f32.mrf.mxu0
  %v7459 = vadd.f32 %v7290, %v7458
  %v7460 = vpop.f32.mrf.mxu0
  %7461 = vmatprep.mubr.f32.mxu0 0.0
  %7462 = vmatmul.mubr.f32.gmra.mxu0 %v7256
  %v7463 = vpop.f32.mrf.mxu0
  %v7464 = vadd.f32 %v7290, %v7463
  %v7465 = vpop.f32.mrf.mxu0
  %7466 = vmatprep.mubr.f32.mxu0 0.0
  %7467 = vmatmul.mubr.f32.gmra.mxu0 %v7257
  %v7468 = vpop.f32.mrf.mxu0
  %v7469 = vadd.f32 %v7290, %v7468
  %v7470 = vpop.f32.mrf.mxu0
  %7471 = vmatprep.mubr.f32.mxu0 0.0
  %7472 = vmatmul.mubr.f32.gmra.mxu0 %v7258
  %v7473 = vpop.f32.mrf.mxu0
  %v7474 = vadd.f32 %v7290, %v7473
  %v7475 = vpop.f32.mrf.mxu0
  %7476 = vmatprep.mubr.f32.mxu0 0.0
  %7477 = vmatmul.mubr.f32.gmra.mxu0 %v7259
  %v7478 = vpop.f32.mrf.mxu0
  %v7479 = vadd.f32 %v7290, %v7478
  %v7480 = vpop.f32.mrf.mxu0
  %7481 = vmatprep.mubr.f32.mxu0 0.0
  %7482 = vmatmul.mubr.f32.gmra.mxu0 %v7260
  %v7483 = vpop.f32.mrf.mxu0
  %v7484 = vadd.f32 %v7290, %v7483
  %v7485 = vpop.f32.mrf.mxu0
  %7486 = vmatprep.mubr.f32.mxu0 0.0
  %7487 = vmatmul.mubr.f32.gmra.mxu0 %v7261
  %v7488 = vpop.f32.mrf.mxu0
  %v7489 = vadd.f32 %v7290, %v7488
  %v7490 = vpop.f32.mrf.mxu0
  %7491 = vmatprep.mubr.f32.mxu0 0.0
  %7492 = vmatmul.mubr.f32.gmra.mxu0 %v7262
  %v7493 = vpop.f32.mrf.mxu0
  %v7494 = vadd.f32 %v7290, %v7493
  %v7495 = vpop.f32.mrf.mxu0
  %7496 = vmatprep.mubr.f32.mxu0 0.0
  %7497 = vmatmul.mubr.f32.gmra.mxu0 %v7263
  %v7498 = vpop.f32.mrf.mxu0
  %v7499 = vadd.f32 %v7290, %v7498
  %v7500 = vpop.f32.mrf.mxu0
  %7501 = vmatprep.mubr.f32.mxu0 0.0
  %7502 = vmatmul.mubr.f32.gmra.mxu0 %v7264
  %v7503 = vpop.f32.mrf.mxu0
  %v7504 = vadd.f32 %v7290, %v7503
  %v7505 = vpop.f32.mrf.mxu0
  %7506 = vmatprep.mubr.f32.mxu0 0.0
  %7507 = vmatmul.mubr.f32.gmra.mxu0 %v7265
  %v7508 = vpop.f32.mrf.mxu0
  %v7509 = vadd.f32 %v7290, %v7508
  %v7510 = vpop.f32.mrf.mxu0
  %7511 = vmatprep.mubr.f32.mxu0 0.0
  %7512 = vmatmul.mubr.f32.gmra.mxu0 %v7266
  %v7513 = vpop.f32.mrf.mxu0
  %v7514 = vadd.f32 %v7290, %v7513
  %v7515 = vpop.f32.mrf.mxu0
  %7516 = vdwg.mxu0
  %v7533 = vrot.slane %v7379, 2
  %v7534 = vrot.slane %v7369, 2
  %v7535 = vrot.slane %v7359, 2
  %v7536 = vrot.slane %v7389, 2
  %v7537 = vrot.slane %v7399, 2
  %v7538 = vrot.slane %v7409, 2
  %v7539 = vrot.slane %v7419, 2
  %v7540 = vrot.slane %v7429, 2
  %v7541 = vrot.slane %v7439, 2
  %v7542 = vrot.slane %v7449, 2
  %v7543 = vrot.slane %v7459, 2
  %v7544 = vrot.slane %v7469, 2
  %v7545 = vrot.slane %v7479, 2
  %v7546 = vrot.slane %v7489, 2
  %v7547 = vrot.slane %v7499, 2
  %v7548 = vrot.slane %v7509, 2
  %v7581 = vrot.slane %v7379, 6
  %v7582 = vrot.slane %v7384, 6
  %v7583 = vsel %vm385, %v7581, %v7582
  %v7584 = vrot.slane %v7369, 6
  %v7585 = vrot.slane %v7374, 6
  %v7586 = vsel %vm385, %v7584, %v7585
  %v7587 = vrot.slane %v7359, 6
  %v7588 = vrot.slane %v7364, 6
  %v7589 = vsel %vm385, %v7587, %v7588
  %v7590 = vrot.slane %v7389, 6
  %v7591 = vrot.slane %v7394, 6
  %v7592 = vsel %vm385, %v7590, %v7591
  %v7593 = vrot.slane %v7399, 6
  %v7594 = vrot.slane %v7404, 6
  %v7595 = vsel %vm385, %v7593, %v7594
  %v7596 = vrot.slane %v7409, 6
  %v7597 = vrot.slane %v7414, 6
  %v7598 = vsel %vm385, %v7596, %v7597
  %v7599 = vrot.slane %v7419, 6
  %v7600 = vrot.slane %v7424, 6
  %v7601 = vsel %vm385, %v7599, %v7600
  %v7602 = vrot.slane %v7429, 6
  %v7603 = vrot.slane %v7434, 6
  %v7604 = vsel %vm385, %v7602, %v7603
  %v7605 = vrot.slane %v7439, 6
  %v7606 = vrot.slane %v7444, 6
  %v7607 = vsel %vm385, %v7605, %v7606
  %v7608 = vrot.slane %v7449, 6
  %v7609 = vrot.slane %v7454, 6
  %v7610 = vsel %vm385, %v7608, %v7609
  %v7611 = vrot.slane %v7459, 6
  %v7612 = vrot.slane %v7464, 6
  %v7613 = vsel %vm385, %v7611, %v7612
  %v7614 = vrot.slane %v7469, 6
  %v7615 = vrot.slane %v7474, 6
  %v7616 = vsel %vm385, %v7614, %v7615
  %v7617 = vrot.slane %v7479, 6
  %v7618 = vrot.slane %v7484, 6
  %v7619 = vsel %vm385, %v7617, %v7618
  %v7620 = vrot.slane %v7489, 6
  %v7621 = vrot.slane %v7494, 6
  %v7622 = vsel %vm385, %v7620, %v7621
  %v7623 = vrot.slane %v7499, 6
  %v7624 = vrot.slane %v7504, 6
  %v7625 = vsel %vm385, %v7623, %v7624
  %v7626 = vrot.slane %v7509, 6
  %v7627 = vrot.slane %v7514, 6
  %v7628 = vsel %vm385, %v7626, %v7627
  %v7677 = vrot.slane %v7384, 4
  %v7678 = vrot.slane %v7374, 4
  %v7679 = vrot.slane %v7364, 4
  %v7680 = vrot.slane %v7394, 4
  %v7681 = vrot.slane %v7404, 4
  %v7682 = vrot.slane %v7414, 4
  %v7683 = vrot.slane %v7424, 4
  %v7684 = vrot.slane %v7434, 4
  %v7685 = vrot.slane %v7444, 4
  %v7686 = vrot.slane %v7454, 4
  %v7687 = vrot.slane %v7464, 4
  %v7688 = vrot.slane %v7474, 4
  %v7689 = vrot.slane %v7484, 4
  %v7690 = vrot.slane %v7494, 4
  %v7691 = vrot.slane %v7504, 4
  %v7692 = vrot.slane %v7514, 4
  %v7709 = vrot.slane %v7384, 2
  %v7710 = vrot.slane %v7374, 2
  %v7711 = vrot.slane %v7364, 2
  %v7712 = vrot.slane %v7394, 2
  %v7713 = vrot.slane %v7404, 2
  %v7714 = vrot.slane %v7414, 2
  %v7715 = vrot.slane %v7424, 2
  %v7716 = vrot.slane %v7434, 2
  %v7717 = vrot.slane %v7444, 2
  %v7718 = vrot.slane %v7454, 2
  %v7719 = vrot.slane %v7464, 2
  %v7720 = vrot.slane %v7474, 2
  %v7721 = vrot.slane %v7484, 2
  %v7722 = vrot.slane %v7494, 2
  %v7723 = vrot.slane %v7504, 2
  %v7724 = vrot.slane %v7514, 2
  %v7741 = vsel %vm546, %v7533, %v7379
  %v7742 = vsel %vm546, %v7534, %v7369
  %v7743 = vsel %vm546, %v7535, %v7359
  %v7744 = vsel %vm546, %v7536, %v7389
  %v7745 = vsel %vm546, %v7537, %v7399
  %v7746 = vsel %vm546, %v7538, %v7409
  %v7747 = vsel %vm546, %v7539, %v7419
  %v7748 = vsel %vm546, %v7540, %v7429
  %v7749 = vsel %vm546, %v7541, %v7439
  %v7750 = vsel %vm546, %v7542, %v7449
  %v7751 = vsel %vm546, %v7543, %v7459
  %v7752 = vsel %vm546, %v7544, %v7469
  %v7753 = vsel %vm546, %v7545, %v7479
  %v7754 = vsel %vm546, %v7546, %v7489
  %v7755 = vsel %vm546, %v7547, %v7499
  %v7756 = vsel %vm546, %v7548, %v7509
  %v7757 = vsel %vm385, %v7741, %v7581
  %v7758 = vsel %vm385, %v7742, %v7584
  %v7759 = vsel %vm385, %v7743, %v7587
  %v7760 = vsel %vm385, %v7744, %v7590
  %v7761 = vsel %vm385, %v7745, %v7593
  %v7762 = vsel %vm385, %v7746, %v7596
  %v7763 = vsel %vm385, %v7747, %v7599
  %v7764 = vsel %vm385, %v7748, %v7602
  %v7765 = vsel %vm385, %v7749, %v7605
  %v7766 = vsel %vm385, %v7750, %v7608
  %v7767 = vsel %vm385, %v7751, %v7611
  %v7768 = vsel %vm385, %v7752, %v7614
  %v7769 = vsel %vm385, %v7753, %v7617
  %v7770 = vsel %vm385, %v7754, %v7620
  %v7771 = vsel %vm385, %v7755, %v7623
  %v7772 = vsel %vm385, %v7756, %v7626
  %v7773 = vsel %vm385, %v7582, %v7677
  %v7774 = vsel %vm385, %v7585, %v7678
  %v7775 = vsel %vm385, %v7588, %v7679
  %v7776 = vsel %vm385, %v7591, %v7680
  %v7777 = vsel %vm385, %v7594, %v7681
  %v7778 = vsel %vm385, %v7597, %v7682
  %v7779 = vsel %vm385, %v7600, %v7683
  %v7780 = vsel %vm385, %v7603, %v7684
  %v7781 = vsel %vm385, %v7606, %v7685
  %v7782 = vsel %vm385, %v7609, %v7686
  %v7783 = vsel %vm385, %v7612, %v7687
  %v7784 = vsel %vm385, %v7615, %v7688
  %v7785 = vsel %vm385, %v7618, %v7689
  %v7786 = vsel %vm385, %v7621, %v7690
  %v7787 = vsel %vm385, %v7624, %v7691
  %v7788 = vsel %vm385, %v7627, %v7692
  %v7789 = vsel %vm595, %v7773, %v7709
  %v7790 = vsel %vm595, %v7774, %v7710
  %v7791 = vsel %vm595, %v7775, %v7711
  %v7792 = vsel %vm595, %v7776, %v7712
  %v7793 = vsel %vm595, %v7777, %v7713
  %v7794 = vsel %vm595, %v7778, %v7714
  %v7795 = vsel %vm595, %v7779, %v7715
  %v7796 = vsel %vm595, %v7780, %v7716
  %v7797 = vsel %vm595, %v7781, %v7717
  %v7798 = vsel %vm595, %v7782, %v7718
  %v7799 = vsel %vm595, %v7783, %v7719
  %v7800 = vsel %vm595, %v7784, %v7720
  %v7801 = vsel %vm595, %v7785, %v7721
  %v7802 = vsel %vm595, %v7786, %v7722
  %v7803 = vsel %vm595, %v7787, %v7723
  %v7804 = vsel %vm595, %v7788, %v7724
  %s7805 = scalar_lea.vmem %s3, 32
  %v7806 = vld [vmem:[%s7805] sm:$0xff]
  %v7807 = vld [vmem:[%s7805 + $0x8] sm:$0xff]
  %v7808 = vld [vmem:[%s7805 + $0x10] sm:$0xff]
  %v7809 = vld [vmem:[%s7805 + $0x18] sm:$0x1]
  %v7810 = vlaneseq
  %v7811 = vshrl.u32 %v7810, 7
  %v7812 = vsub.s32 0, %v7811
  %v7813 = vrot.slane %v7806, %v7812
  %v7814 = vmul.f32 %v7757, %v7813
  %v7815 = vmul.f32 %v7583, %v7813
  %v7816 = vmul.f32 %v7758, %v7813
  %v7817 = vmul.f32 %v7586, %v7813
  %v7818 = vmul.f32 %v7759, %v7813
  %v7819 = vmul.f32 %v7589, %v7813
  %v7820 = vmul.f32 %v7760, %v7813
  %v7821 = vmul.f32 %v7592, %v7813
  %v7822 = vmul.f32 %v7761, %v7813
  %v7823 = vmul.f32 %v7595, %v7813
  %v7824 = vmul.f32 %v7762, %v7813
  %v7825 = vmul.f32 %v7598, %v7813
  %v7826 = vmul.f32 %v7763, %v7813
  %v7827 = vmul.f32 %v7601, %v7813
  %v7828 = vmul.f32 %v7764, %v7813
  %v7829 = vmul.f32 %v7604, %v7813
  %v7830 = vmul.f32 %v7765, %v7813
  %v7831 = vmul.f32 %v7607, %v7813
  %v7832 = vmul.f32 %v7766, %v7813
  %v7833 = vmul.f32 %v7610, %v7813
  %v7834 = vmul.f32 %v7767, %v7813
  %v7835 = vmul.f32 %v7613, %v7813
  %v7836 = vmul.f32 %v7768, %v7813
  %v7837 = vmul.f32 %v7616, %v7813
  %v7838 = vmul.f32 %v7769, %v7813
  %v7839 = vmul.f32 %v7619, %v7813
  %v7840 = vmul.f32 %v7770, %v7813
  %v7841 = vmul.f32 %v7622, %v7813
  %v7842 = vlaneseq
  %v7843 = vshrl.u32 %v7842, 7
  %v7844 = vsub.s32 1, %v7843
  %v7845 = vrot.slane %v7806, %v7844
  %v7846 = vmul.f32 %v7757, %v7845
  %v7847 = vmul.f32 %v7583, %v7845
  %v7848 = vmul.f32 %v7789, %v7845
  %v7849 = vmul.f32 %v7758, %v7845
  %v7850 = vmul.f32 %v7586, %v7845
  %v7851 = vmul.f32 %v7790, %v7845
  %v7852 = vmul.f32 %v7759, %v7845
  %v7853 = vmul.f32 %v7589, %v7845
  %v7854 = vmul.f32 %v7791, %v7845
  %v7855 = vmul.f32 %v7760, %v7845
  %v7856 = vmul.f32 %v7592, %v7845
  %v7857 = vmul.f32 %v7792, %v7845
  %v7858 = vmul.f32 %v7761, %v7845
  %v7859 = vmul.f32 %v7595, %v7845
  %v7860 = vmul.f32 %v7793, %v7845
  %v7861 = vmul.f32 %v7762, %v7845
  %v7862 = vmul.f32 %v7598, %v7845
  %v7863 = vmul.f32 %v7794, %v7845
  %v7864 = vmul.f32 %v7763, %v7845
  %v7865 = vmul.f32 %v7601, %v7845
  %v7866 = vmul.f32 %v7795, %v7845
  %v7867 = vmul.f32 %v7764, %v7845
  %v7868 = vmul.f32 %v7604, %v7845
  %v7869 = vmul.f32 %v7796, %v7845
  %v7870 = vmul.f32 %v7765, %v7845
  %v7871 = vmul.f32 %v7607, %v7845
  %v7872 = vmul.f32 %v7797, %v7845
  %v7873 = vmul.f32 %v7766, %v7845
  %v7874 = vmul.f32 %v7610, %v7845
  %v7875 = vmul.f32 %v7798, %v7845
  %v7876 = vmul.f32 %v7767, %v7845
  %v7877 = vmul.f32 %v7613, %v7845
  %v7878 = vmul.f32 %v7799, %v7845
  %v7879 = vmul.f32 %v7768, %v7845
  %v7880 = vmul.f32 %v7616, %v7845
  %v7881 = vmul.f32 %v7800, %v7845
  %v7882 = vmul.f32 %v7769, %v7845
  %v7883 = vmul.f32 %v7619, %v7845
  %v7884 = vmul.f32 %v7801, %v7845
  %v7885 = vmul.f32 %v7770, %v7845
  %v7886 = vmul.f32 %v7622, %v7845
  %v7887 = vmul.f32 %v7802, %v7845
  %v7930 = vrot.slane %v7846, 1
  %v7931 = vrot.slane %v7847, 1
  %v7932 = vsel %vm736, %v7930, %v7931
  %v7933 = vrot.slane %v7848, 1
  %v7934 = vsel %vm736, %v7931, %v7933
  %v7935 = vrot.slane %v7849, 1
  %v7936 = vrot.slane %v7850, 1
  %v7937 = vsel %vm736, %v7935, %v7936
  %v7938 = vrot.slane %v7851, 1
  %v7939 = vsel %vm736, %v7936, %v7938
  %v7940 = vrot.slane %v7852, 1
  %v7941 = vrot.slane %v7853, 1
  %v7942 = vsel %vm736, %v7940, %v7941
  %v7943 = vrot.slane %v7854, 1
  %v7944 = vsel %vm736, %v7941, %v7943
  %v7945 = vrot.slane %v7855, 1
  %v7946 = vrot.slane %v7856, 1
  %v7947 = vsel %vm736, %v7945, %v7946
  %v7948 = vrot.slane %v7857, 1
  %v7949 = vsel %vm736, %v7946, %v7948
  %v7950 = vrot.slane %v7858, 1
  %v7951 = vrot.slane %v7859, 1
  %v7952 = vsel %vm736, %v7950, %v7951
  %v7953 = vrot.slane %v7860, 1
  %v7954 = vsel %vm736, %v7951, %v7953
  %v7955 = vrot.slane %v7861, 1
  %v7956 = vrot.slane %v7862, 1
  %v7957 = vsel %vm736, %v7955, %v7956
  %v7958 = vrot.slane %v7863, 1
  %v7959 = vsel %vm736, %v7956, %v7958
  %v7960 = vrot.slane %v7864, 1
  %v7961 = vrot.slane %v7865, 1
  %v7962 = vsel %vm736, %v7960, %v7961
  %v7963 = vrot.slane %v7866, 1
  %v7964 = vsel %vm736, %v7961, %v7963
  %v7965 = vrot.slane %v7867, 1
  %v7966 = vrot.slane %v7868, 1
  %v7967 = vsel %vm736, %v7965, %v7966
  %v7968 = vrot.slane %v7869, 1
  %v7969 = vsel %vm736, %v7966, %v7968
  %v7970 = vrot.slane %v7870, 1
  %v7971 = vrot.slane %v7871, 1
  %v7972 = vsel %vm736, %v7970, %v7971
  %v7973 = vrot.slane %v7872, 1
  %v7974 = vsel %vm736, %v7971, %v7973
  %v7975 = vrot.slane %v7873, 1
  %v7976 = vrot.slane %v7874, 1
  %v7977 = vsel %vm736, %v7975, %v7976
  %v7978 = vrot.slane %v7875, 1
  %v7979 = vsel %vm736, %v7976, %v7978
  %v7980 = vrot.slane %v7876, 1
  %v7981 = vrot.slane %v7877, 1
  %v7982 = vsel %vm736, %v7980, %v7981
  %v7983 = vrot.slane %v7878, 1
  %v7984 = vsel %vm736, %v7981, %v7983
  %v7985 = vrot.slane %v7879, 1
  %v7986 = vrot.slane %v7880, 1
  %v7987 = vsel %vm736, %v7985, %v7986
  %v7988 = vrot.slane %v7881, 1
  %v7989 = vsel %vm736, %v7986, %v7988
  %v7990 = vrot.slane %v7882, 1
  %v7991 = vrot.slane %v7883, 1
  %v7992 = vsel %vm736, %v7990, %v7991
  %v7993 = vrot.slane %v7884, 1
  %v7994 = vsel %vm736, %v7991, %v7993
  %v7995 = vrot.slane %v7885, 1
  %v7996 = vrot.slane %v7886, 1
  %v7997 = vsel %vm736, %v7995, %v7996
  %v7998 = vrot.slane %v7887, 1
  %v7999 = vsel %vm736, %v7996, %v7998
  %v8028 = vadd.f32 %v7814, %v7932
  %v8029 = vadd.f32 %v7815, %v7934
  %v8030 = vadd.f32 %v7816, %v7937
  %v8031 = vadd.f32 %v7817, %v7939
  %v8032 = vadd.f32 %v7818, %v7942
  %v8033 = vadd.f32 %v7819, %v7944
  %v8034 = vadd.f32 %v7820, %v7947
  %v8035 = vadd.f32 %v7821, %v7949
  %v8036 = vadd.f32 %v7822, %v7952
  %v8037 = vadd.f32 %v7823, %v7954
  %v8038 = vadd.f32 %v7824, %v7957
  %v8039 = vadd.f32 %v7825, %v7959
  %v8040 = vadd.f32 %v7826, %v7962
  %v8041 = vadd.f32 %v7827, %v7964
  %v8042 = vadd.f32 %v7828, %v7967
  %v8043 = vadd.f32 %v7829, %v7969
  %v8044 = vadd.f32 %v7830, %v7972
  %v8045 = vadd.f32 %v7831, %v7974
  %v8046 = vadd.f32 %v7832, %v7977
  %v8047 = vadd.f32 %v7833, %v7979
  %v8048 = vadd.f32 %v7834, %v7982
  %v8049 = vadd.f32 %v7835, %v7984
  %v8050 = vadd.f32 %v7836, %v7987
  %v8051 = vadd.f32 %v7837, %v7989
  %v8052 = vadd.f32 %v7838, %v7992
  %v8053 = vadd.f32 %v7839, %v7994
  %v8054 = vadd.f32 %v7840, %v7997
  %v8055 = vadd.f32 %v7841, %v7999
  %v8056 = vlaneseq
  %v8057 = vshrl.u32 %v8056, 7
  %v8058 = vsub.s32 2, %v8057
  %v8059 = vrot.slane %v7806, %v8058
  %v8060 = vmul.f32 %v7757, %v8059
  %v8061 = vmul.f32 %v7583, %v8059
  %v8062 = vmul.f32 %v7789, %v8059
  %v8063 = vmul.f32 %v7758, %v8059
  %v8064 = vmul.f32 %v7586, %v8059
  %v8065 = vmul.f32 %v7790, %v8059
  %v8066 = vmul.f32 %v7759, %v8059
  %v8067 = vmul.f32 %v7589, %v8059
  %v8068 = vmul.f32 %v7791, %v8059
  %v8069 = vmul.f32 %v7760, %v8059
  %v8070 = vmul.f32 %v7592, %v8059
  %v8071 = vmul.f32 %v7792, %v8059
  %v8072 = vmul.f32 %v7761, %v8059
  %v8073 = vmul.f32 %v7595, %v8059
  %v8074 = vmul.f32 %v7793, %v8059
  %v8075 = vmul.f32 %v7762, %v8059
  %v8076 = vmul.f32 %v7598, %v8059
  %v8077 = vmul.f32 %v7794, %v8059
  %v8078 = vmul.f32 %v7763, %v8059
  %v8079 = vmul.f32 %v7601, %v8059
  %v8080 = vmul.f32 %v7795, %v8059
  %v8081 = vmul.f32 %v7764, %v8059
  %v8082 = vmul.f32 %v7604, %v8059
  %v8083 = vmul.f32 %v7796, %v8059
  %v8084 = vmul.f32 %v7765, %v8059
  %v8085 = vmul.f32 %v7607, %v8059
  %v8086 = vmul.f32 %v7797, %v8059
  %v8087 = vmul.f32 %v7766, %v8059
  %v8088 = vmul.f32 %v7610, %v8059
  %v8089 = vmul.f32 %v7798, %v8059
  %v8090 = vmul.f32 %v7767, %v8059
  %v8091 = vmul.f32 %v7613, %v8059
  %v8092 = vmul.f32 %v7799, %v8059
  %v8093 = vmul.f32 %v7768, %v8059
  %v8094 = vmul.f32 %v7616, %v8059
  %v8095 = vmul.f32 %v7800, %v8059
  %v8096 = vmul.f32 %v7769, %v8059
  %v8097 = vmul.f32 %v7619, %v8059
  %v8098 = vmul.f32 %v7801, %v8059
  %v8099 = vmul.f32 %v7770, %v8059
  %v8100 = vmul.f32 %v7622, %v8059
  %v8101 = vmul.f32 %v7802, %v8059
  %v8144 = vrot.slane %v8060, 2
  %v8145 = vrot.slane %v8061, 2
  %v8146 = vsel %vm951, %v8144, %v8145
  %v8147 = vrot.slane %v8062, 2
  %v8148 = vsel %vm951, %v8145, %v8147
  %v8149 = vrot.slane %v8063, 2
  %v8150 = vrot.slane %v8064, 2
  %v8151 = vsel %vm951, %v8149, %v8150
  %v8152 = vrot.slane %v8065, 2
  %v8153 = vsel %vm951, %v8150, %v8152
  %v8154 = vrot.slane %v8066, 2
  %v8155 = vrot.slane %v8067, 2
  %v8156 = vsel %vm951, %v8154, %v8155
  %v8157 = vrot.slane %v8068, 2
  %v8158 = vsel %vm951, %v8155, %v8157
  %v8159 = vrot.slane %v8069, 2
  %v8160 = vrot.slane %v8070, 2
  %v8161 = vsel %vm951, %v8159, %v8160
  %v8162 = vrot.slane %v8071, 2
  %v8163 = vsel %vm951, %v8160, %v8162
  %v8164 = vrot.slane %v8072, 2
  %v8165 = vrot.slane %v8073, 2
  %v8166 = vsel %vm951, %v8164, %v8165
  %v8167 = vrot.slane %v8074, 2
  %v8168 = vsel %vm951, %v8165, %v8167
  %v8169 = vrot.slane %v8075, 2
  %v8170 = vrot.slane %v8076, 2
  %v8171 = vsel %vm951, %v8169, %v8170
  %v8172 = vrot.slane %v8077, 2
  %v8173 = vsel %vm951, %v8170, %v8172
  %v8174 = vrot.slane %v8078, 2
  %v8175 = vrot.slane %v8079, 2
  %v8176 = vsel %vm951, %v8174, %v8175
  %v8177 = vrot.slane %v8080, 2
  %v8178 = vsel %vm951, %v8175, %v8177
  %v8179 = vrot.slane %v8081, 2
  %v8180 = vrot.slane %v8082, 2
  %v8181 = vsel %vm951, %v8179, %v8180
  %v8182 = vrot.slane %v8083, 2
  %v8183 = vsel %vm951, %v8180, %v8182
  %v8184 = vrot.slane %v8084, 2
  %v8185 = vrot.slane %v8085, 2
  %v8186 = vsel %vm951, %v8184, %v8185
  %v8187 = vrot.slane %v8086, 2
  %v8188 = vsel %vm951, %v8185, %v8187
  %v8189 = vrot.slane %v8087, 2
  %v8190 = vrot.slane %v8088, 2
  %v8191 = vsel %vm951, %v8189, %v8190
  %v8192 = vrot.slane %v8089, 2
  %v8193 = vsel %vm951, %v8190, %v8192
  %v8194 = vrot.slane %v8090, 2
  %v8195 = vrot.slane %v8091, 2
  %v8196 = vsel %vm951, %v8194, %v8195
  %v8197 = vrot.slane %v8092, 2
  %v8198 = vsel %vm951, %v8195, %v8197
  %v8199 = vrot.slane %v8093, 2
  %v8200 = vrot.slane %v8094, 2
  %v8201 = vsel %vm951, %v8199, %v8200
  %v8202 = vrot.slane %v8095, 2
  %v8203 = vsel %vm951, %v8200, %v8202
  %v8204 = vrot.slane %v8096, 2
  %v8205 = vrot.slane %v8097, 2
  %v8206 = vsel %vm951, %v8204, %v8205
  %v8207 = vrot.slane %v8098, 2
  %v8208 = vsel %vm951, %v8205, %v8207
  %v8209 = vrot.slane %v8099, 2
  %v8210 = vrot.slane %v8100, 2
  %v8211 = vsel %vm951, %v8209, %v8210
  %v8212 = vrot.slane %v8101, 2
  %v8213 = vsel %vm951, %v8210, %v8212
  %v8242 = vadd.f32 %v8028, %v8146
  %v8243 = vadd.f32 %v8029, %v8148
  %v8244 = vadd.f32 %v8030, %v8151
  %v8245 = vadd.f32 %v8031, %v8153
  %v8246 = vadd.f32 %v8032, %v8156
  %v8247 = vadd.f32 %v8033, %v8158
  %v8248 = vadd.f32 %v8034, %v8161
  %v8249 = vadd.f32 %v8035, %v8163
  %v8250 = vadd.f32 %v8036, %v8166
  %v8251 = vadd.f32 %v8037, %v8168
  %v8252 = vadd.f32 %v8038, %v8171
  %v8253 = vadd.f32 %v8039, %v8173
  %v8254 = vadd.f32 %v8040, %v8176
  %v8255 = vadd.f32 %v8041, %v8178
  %v8256 = vadd.f32 %v8042, %v8181
  %v8257 = vadd.f32 %v8043, %v8183
  %v8258 = vadd.f32 %v8044, %v8186
  %v8259 = vadd.f32 %v8045, %v8188
  %v8260 = vadd.f32 %v8046, %v8191
  %v8261 = vadd.f32 %v8047, %v8193
  %v8262 = vadd.f32 %v8048, %v8196
  %v8263 = vadd.f32 %v8049, %v8198
  %v8264 = vadd.f32 %v8050, %v8201
  %v8265 = vadd.f32 %v8051, %v8203
  %v8266 = vadd.f32 %v8052, %v8206
  %v8267 = vadd.f32 %v8053, %v8208
  %v8268 = vadd.f32 %v8054, %v8211
  %v8269 = vadd.f32 %v8055, %v8213
  %v8270 = vlaneseq
  %v8271 = vshrl.u32 %v8270, 7
  %v8272 = vsub.s32 3, %v8271
  %v8273 = vrot.slane %v7806, %v8272
  %v8274 = vmul.f32 %v7757, %v8273
  %v8275 = vmul.f32 %v7583, %v8273
  %v8276 = vmul.f32 %v7789, %v8273
  %v8277 = vmul.f32 %v7758, %v8273
  %v8278 = vmul.f32 %v7586, %v8273
  %v8279 = vmul.f32 %v7790, %v8273
  %v8280 = vmul.f32 %v7759, %v8273
  %v8281 = vmul.f32 %v7589, %v8273
  %v8282 = vmul.f32 %v7791, %v8273
  %v8283 = vmul.f32 %v7760, %v8273
  %v8284 = vmul.f32 %v7592, %v8273
  %v8285 = vmul.f32 %v7792, %v8273
  %v8286 = vmul.f32 %v7761, %v8273
  %v8287 = vmul.f32 %v7595, %v8273
  %v8288 = vmul.f32 %v7793, %v8273
  %v8289 = vmul.f32 %v7762, %v8273
  %v8290 = vmul.f32 %v7598, %v8273
  %v8291 = vmul.f32 %v7794, %v8273
  %v8292 = vmul.f32 %v7763, %v8273
  %v8293 = vmul.f32 %v7601, %v8273
  %v8294 = vmul.f32 %v7795, %v8273
  %v8295 = vmul.f32 %v7764, %v8273
  %v8296 = vmul.f32 %v7604, %v8273
  %v8297 = vmul.f32 %v7796, %v8273
  %v8298 = vmul.f32 %v7765, %v8273
  %v8299 = vmul.f32 %v7607, %v8273
  %v8300 = vmul.f32 %v7797, %v8273
  %v8301 = vmul.f32 %v7766, %v8273
  %v8302 = vmul.f32 %v7610, %v8273
  %v8303 = vmul.f32 %v7798, %v8273
  %v8304 = vmul.f32 %v7767, %v8273
  %v8305 = vmul.f32 %v7613, %v8273
  %v8306 = vmul.f32 %v7799, %v8273
  %v8307 = vmul.f32 %v7768, %v8273
  %v8308 = vmul.f32 %v7616, %v8273
  %v8309 = vmul.f32 %v7800, %v8273
  %v8310 = vmul.f32 %v7769, %v8273
  %v8311 = vmul.f32 %v7619, %v8273
  %v8312 = vmul.f32 %v7801, %v8273
  %v8313 = vmul.f32 %v7770, %v8273
  %v8314 = vmul.f32 %v7622, %v8273
  %v8315 = vmul.f32 %v7802, %v8273
  %v8358 = vrot.slane %v8274, 3
  %v8359 = vrot.slane %v8275, 3
  %v8360 = vsel %vm1166, %v8358, %v8359
  %v8361 = vrot.slane %v8276, 3
  %v8362 = vsel %vm1166, %v8359, %v8361
  %v8363 = vrot.slane %v8277, 3
  %v8364 = vrot.slane %v8278, 3
  %v8365 = vsel %vm1166, %v8363, %v8364
  %v8366 = vrot.slane %v8279, 3
  %v8367 = vsel %vm1166, %v8364, %v8366
  %v8368 = vrot.slane %v8280, 3
  %v8369 = vrot.slane %v8281, 3
  %v8370 = vsel %vm1166, %v8368, %v8369
  %v8371 = vrot.slane %v8282, 3
  %v8372 = vsel %vm1166, %v8369, %v8371
  %v8373 = vrot.slane %v8283, 3
  %v8374 = vrot.slane %v8284, 3
  %v8375 = vsel %vm1166, %v8373, %v8374
  %v8376 = vrot.slane %v8285, 3
  %v8377 = vsel %vm1166, %v8374, %v8376
  %v8378 = vrot.slane %v8286, 3
  %v8379 = vrot.slane %v8287, 3
  %v8380 = vsel %vm1166, %v8378, %v8379
  %v8381 = vrot.slane %v8288, 3
  %v8382 = vsel %vm1166, %v8379, %v8381
  %v8383 = vrot.slane %v8289, 3
  %v8384 = vrot.slane %v8290, 3
  %v8385 = vsel %vm1166, %v8383, %v8384
  %v8386 = vrot.slane %v8291, 3
  %v8387 = vsel %vm1166, %v8384, %v8386
  %v8388 = vrot.slane %v8292, 3
  %v8389 = vrot.slane %v8293, 3
  %v8390 = vsel %vm1166, %v8388, %v8389
  %v8391 = vrot.slane %v8294, 3
  %v8392 = vsel %vm1166, %v8389, %v8391
  %v8393 = vrot.slane %v8295, 3
  %v8394 = vrot.slane %v8296, 3
  %v8395 = vsel %vm1166, %v8393, %v8394
  %v8396 = vrot.slane %v8297, 3
  %v8397 = vsel %vm1166, %v8394, %v8396
  %v8398 = vrot.slane %v8298, 3
  %v8399 = vrot.slane %v8299, 3
  %v8400 = vsel %vm1166, %v8398, %v8399
  %v8401 = vrot.slane %v8300, 3
  %v8402 = vsel %vm1166, %v8399, %v8401
  %v8403 = vrot.slane %v8301, 3
  %v8404 = vrot.slane %v8302, 3
  %v8405 = vsel %vm1166, %v8403, %v8404
  %v8406 = vrot.slane %v8303, 3
  %v8407 = vsel %vm1166, %v8404, %v8406
  %v8408 = vrot.slane %v8304, 3
  %v8409 = vrot.slane %v8305, 3
  %v8410 = vsel %vm1166, %v8408, %v8409
  %v8411 = vrot.slane %v8306, 3
  %v8412 = vsel %vm1166, %v8409, %v8411
  %v8413 = vrot.slane %v8307, 3
  %v8414 = vrot.slane %v8308, 3
  %v8415 = vsel %vm1166, %v8413, %v8414
  %v8416 = vrot.slane %v8309, 3
  %v8417 = vsel %vm1166, %v8414, %v8416
  %v8418 = vrot.slane %v8310, 3
  %v8419 = vrot.slane %v8311, 3
  %v8420 = vsel %vm1166, %v8418, %v8419
  %v8421 = vrot.slane %v8312, 3
  %v8422 = vsel %vm1166, %v8419, %v8421
  %v8423 = vrot.slane %v8313, 3
  %v8424 = vrot.slane %v8314, 3
  %v8425 = vsel %vm1166, %v8423, %v8424
  %v8426 = vrot.slane %v8315, 3
  %v8427 = vsel %vm1166, %v8424, %v8426
  %v8456 = vadd.f32 %v8242, %v8360
  %v8457 = vadd.f32 %v8243, %v8362
  %v8458 = vadd.f32 %v8244, %v8365
  %v8459 = vadd.f32 %v8245, %v8367
  %v8460 = vadd.f32 %v8246, %v8370
  %v8461 = vadd.f32 %v8247, %v8372
  %v8462 = vadd.f32 %v8248, %v8375
  %v8463 = vadd.f32 %v8249, %v8377
  %v8464 = vadd.f32 %v8250, %v8380
  %v8465 = vadd.f32 %v8251, %v8382
  %v8466 = vadd.f32 %v8252, %v8385
  %v8467 = vadd.f32 %v8253, %v8387
  %v8468 = vadd.f32 %v8254, %v8390
  %v8469 = vadd.f32 %v8255, %v8392
  %v8470 = vadd.f32 %v8256, %v8395
  %v8471 = vadd.f32 %v8257, %v8397
  %v8472 = vadd.f32 %v8258, %v8400
  %v8473 = vadd.f32 %v8259, %v8402
  %v8474 = vadd.f32 %v8260, %v8405
  %v8475 = vadd.f32 %v8261, %v8407
  %v8476 = vadd.f32 %v8262, %v8410
  %v8477 = vadd.f32 %v8263, %v8412
  %v8478 = vadd.f32 %v8264, %v8415
  %v8479 = vadd.f32 %v8265, %v8417
  %v8480 = vadd.f32 %v8266, %v8420
  %v8481 = vadd.f32 %v8267, %v8422
  %v8482 = vadd.f32 %v8268, %v8425
  %v8483 = vadd.f32 %v8269, %v8427
  %v8484 = vlaneseq
  %v8485 = vshrl.u32 %v8484, 7
  %v8486 = vsub.s32 4, %v8485
  %v8487 = vrot.slane %v7806, %v8486
  %v8488 = vmul.f32 %v7757, %v8487
  %v8489 = vmul.f32 %v7583, %v8487
  %v8490 = vmul.f32 %v7789, %v8487
  %v8491 = vmul.f32 %v7758, %v8487
  %v8492 = vmul.f32 %v7586, %v8487
  %v8493 = vmul.f32 %v7790, %v8487
  %v8494 = vmul.f32 %v7759, %v8487
  %v8495 = vmul.f32 %v7589, %v8487
  %v8496 = vmul.f32 %v7791, %v8487
  %v8497 = vmul.f32 %v7760, %v8487
  %v8498 = vmul.f32 %v7592, %v8487
  %v8499 = vmul.f32 %v7792, %v8487
  %v8500 = vmul.f32 %v7761, %v8487
  %v8501 = vmul.f32 %v7595, %v8487
  %v8502 = vmul.f32 %v7793, %v8487
  %v8503 = vmul.f32 %v7762, %v8487
  %v8504 = vmul.f32 %v7598, %v8487
  %v8505 = vmul.f32 %v7794, %v8487
  %v8506 = vmul.f32 %v7763, %v8487
  %v8507 = vmul.f32 %v7601, %v8487
  %v8508 = vmul.f32 %v7795, %v8487
  %v8509 = vmul.f32 %v7764, %v8487
  %v8510 = vmul.f32 %v7604, %v8487
  %v8511 = vmul.f32 %v7796, %v8487
  %v8512 = vmul.f32 %v7765, %v8487
  %v8513 = vmul.f32 %v7607, %v8487
  %v8514 = vmul.f32 %v7797, %v8487
  %v8515 = vmul.f32 %v7766, %v8487
  %v8516 = vmul.f32 %v7610, %v8487
  %v8517 = vmul.f32 %v7798, %v8487
  %v8518 = vmul.f32 %v7767, %v8487
  %v8519 = vmul.f32 %v7613, %v8487
  %v8520 = vmul.f32 %v7799, %v8487
  %v8521 = vmul.f32 %v7768, %v8487
  %v8522 = vmul.f32 %v7616, %v8487
  %v8523 = vmul.f32 %v7800, %v8487
  %v8524 = vmul.f32 %v7769, %v8487
  %v8525 = vmul.f32 %v7619, %v8487
  %v8526 = vmul.f32 %v7801, %v8487
  %v8527 = vmul.f32 %v7770, %v8487
  %v8528 = vmul.f32 %v7622, %v8487
  %v8529 = vmul.f32 %v7802, %v8487
  %v8572 = vrot.slane %v8488, 4
  %v8573 = vrot.slane %v8489, 4
  %v8574 = vsel %vm1381, %v8572, %v8573
  %v8575 = vrot.slane %v8490, 4
  %v8576 = vsel %vm1381, %v8573, %v8575
  %v8577 = vrot.slane %v8491, 4
  %v8578 = vrot.slane %v8492, 4
  %v8579 = vsel %vm1381, %v8577, %v8578
  %v8580 = vrot.slane %v8493, 4
  %v8581 = vsel %vm1381, %v8578, %v8580
  %v8582 = vrot.slane %v8494, 4
  %v8583 = vrot.slane %v8495, 4
  %v8584 = vsel %vm1381, %v8582, %v8583
  %v8585 = vrot.slane %v8496, 4
  %v8586 = vsel %vm1381, %v8583, %v8585
  %v8587 = vrot.slane %v8497, 4
  %v8588 = vrot.slane %v8498, 4
  %v8589 = vsel %vm1381, %v8587, %v8588
  %v8590 = vrot.slane %v8499, 4
  %v8591 = vsel %vm1381, %v8588, %v8590
  %v8592 = vrot.slane %v8500, 4
  %v8593 = vrot.slane %v8501, 4
  %v8594 = vsel %vm1381, %v8592, %v8593
  %v8595 = vrot.slane %v8502, 4
  %v8596 = vsel %vm1381, %v8593, %v8595
  %v8597 = vrot.slane %v8503, 4
  %v8598 = vrot.slane %v8504, 4
  %v8599 = vsel %vm1381, %v8597, %v8598
  %v8600 = vrot.slane %v8505, 4
  %v8601 = vsel %vm1381, %v8598, %v8600
  %v8602 = vrot.slane %v8506, 4
  %v8603 = vrot.slane %v8507, 4
  %v8604 = vsel %vm1381, %v8602, %v8603
  %v8605 = vrot.slane %v8508, 4
  %v8606 = vsel %vm1381, %v8603, %v8605
  %v8607 = vrot.slane %v8509, 4
  %v8608 = vrot.slane %v8510, 4
  %v8609 = vsel %vm1381, %v8607, %v8608
  %v8610 = vrot.slane %v8511, 4
  %v8611 = vsel %vm1381, %v8608, %v8610
  %v8612 = vrot.slane %v8512, 4
  %v8613 = vrot.slane %v8513, 4
  %v8614 = vsel %vm1381, %v8612, %v8613
  %v8615 = vrot.slane %v8514, 4
  %v8616 = vsel %vm1381, %v8613, %v8615
  %v8617 = vrot.slane %v8515, 4
  %v8618 = vrot.slane %v8516, 4
  %v8619 = vsel %vm1381, %v8617, %v8618
  %v8620 = vrot.slane %v8517, 4
  %v8621 = vsel %vm1381, %v8618, %v8620
  %v8622 = vrot.slane %v8518, 4
  %v8623 = vrot.slane %v8519, 4
  %v8624 = vsel %vm1381, %v8622, %v8623
  %v8625 = vrot.slane %v8520, 4
  %v8626 = vsel %vm1381, %v8623, %v8625
  %v8627 = vrot.slane %v8521, 4
  %v8628 = vrot.slane %v8522, 4
  %v8629 = vsel %vm1381, %v8627, %v8628
  %v8630 = vrot.slane %v8523, 4
  %v8631 = vsel %vm1381, %v8628, %v8630
  %v8632 = vrot.slane %v8524, 4
  %v8633 = vrot.slane %v8525, 4
  %v8634 = vsel %vm1381, %v8632, %v8633
  %v8635 = vrot.slane %v8526, 4
  %v8636 = vsel %vm1381, %v8633, %v8635
  %v8637 = vrot.slane %v8527, 4
  %v8638 = vrot.slane %v8528, 4
  %v8639 = vsel %vm1381, %v8637, %v8638
  %v8640 = vrot.slane %v8529, 4
  %v8641 = vsel %vm1381, %v8638, %v8640
  %v8670 = vadd.f32 %v8456, %v8574
  %v8671 = vadd.f32 %v8457, %v8576
  %v8672 = vadd.f32 %v8458, %v8579
  %v8673 = vadd.f32 %v8459, %v8581
  %v8674 = vadd.f32 %v8460, %v8584
  %v8675 = vadd.f32 %v8461, %v8586
  %v8676 = vadd.f32 %v8462, %v8589
  %v8677 = vadd.f32 %v8463, %v8591
  %v8678 = vadd.f32 %v8464, %v8594
  %v8679 = vadd.f32 %v8465, %v8596
  %v8680 = vadd.f32 %v8466, %v8599
  %v8681 = vadd.f32 %v8467, %v8601
  %v8682 = vadd.f32 %v8468, %v8604
  %v8683 = vadd.f32 %v8469, %v8606
  %v8684 = vadd.f32 %v8470, %v8609
  %v8685 = vadd.f32 %v8471, %v8611
  %v8686 = vadd.f32 %v8472, %v8614
  %v8687 = vadd.f32 %v8473, %v8616
  %v8688 = vadd.f32 %v8474, %v8619
  %v8689 = vadd.f32 %v8475, %v8621
  %v8690 = vadd.f32 %v8476, %v8624
  %v8691 = vadd.f32 %v8477, %v8626
  %v8692 = vadd.f32 %v8478, %v8629
  %v8693 = vadd.f32 %v8479, %v8631
  %v8694 = vadd.f32 %v8480, %v8634
  %v8695 = vadd.f32 %v8481, %v8636
  %v8696 = vadd.f32 %v8482, %v8639
  %v8697 = vadd.f32 %v8483, %v8641
  %v8698 = vlaneseq
  %v8699 = vshrl.u32 %v8698, 7
  %v8700 = vsub.s32 5, %v8699
  %v8701 = vrot.slane %v7806, %v8700
  %v8702 = vmul.f32 %v7758, %v8701
  %v8703 = vmul.f32 %v7586, %v8701
  %v8704 = vmul.f32 %v7759, %v8701
  %v8705 = vmul.f32 %v7589, %v8701
  %v8706 = vmul.f32 %v7757, %v8701
  %v8707 = vmul.f32 %v7583, %v8701
  %v8708 = vmul.f32 %v7760, %v8701
  %v8709 = vmul.f32 %v7592, %v8701
  %v8710 = vmul.f32 %v7761, %v8701
  %v8711 = vmul.f32 %v7595, %v8701
  %v8712 = vmul.f32 %v7762, %v8701
  %v8713 = vmul.f32 %v7598, %v8701
  %v8714 = vmul.f32 %v7763, %v8701
  %v8715 = vmul.f32 %v7601, %v8701
  %v8716 = vmul.f32 %v7764, %v8701
  %v8717 = vmul.f32 %v7604, %v8701
  %v8718 = vmul.f32 %v7765, %v8701
  %v8719 = vmul.f32 %v7607, %v8701
  %v8720 = vmul.f32 %v7766, %v8701
  %v8721 = vmul.f32 %v7610, %v8701
  %v8722 = vmul.f32 %v7767, %v8701
  %v8723 = vmul.f32 %v7613, %v8701
  %v8724 = vmul.f32 %v7768, %v8701
  %v8725 = vmul.f32 %v7616, %v8701
  %v8726 = vmul.f32 %v7769, %v8701
  %v8727 = vmul.f32 %v7619, %v8701
  %v8728 = vmul.f32 %v7770, %v8701
  %v8729 = vmul.f32 %v7622, %v8701
  %v8730 = vmul.f32 %v7771, %v8701
  %v8731 = vmul.f32 %v7625, %v8701
  %v8732 = vadd.f32 %v8670, %v8702
  %v8733 = vadd.f32 %v8671, %v8703
  %v8734 = vadd.f32 %v8672, %v8704
  %v8735 = vadd.f32 %v8673, %v8705
  %v8736 = vadd.f32 %v8674, %v8702
  %v8737 = vadd.f32 %v8675, %v8703
  %v8738 = vadd.f32 %v8672, %v8706
  %v8739 = vadd.f32 %v8673, %v8707
  %v8740 = vadd.f32 %v8670, %v8708
  %v8741 = vadd.f32 %v8671, %v8709
  %v8742 = vadd.f32 %v8676, %v8710
  %v8743 = vadd.f32 %v8677, %v8711
  %v8744 = vadd.f32 %v8678, %v8712
  %v8745 = vadd.f32 %v8679, %v8713
  %v8746 = vadd.f32 %v8680, %v8714
  %v8747 = vadd.f32 %v8681, %v8715
  %v8748 = vadd.f32 %v8682, %v8716
  %v8749 = vadd.f32 %v8683, %v8717
  %v8750 = vadd.f32 %v8684, %v8718
  %v8751 = vadd.f32 %v8685, %v8719
  %v8752 = vadd.f32 %v8686, %v8720
  %v8753 = vadd.f32 %v8687, %v8721
  %v8754 = vadd.f32 %v8688, %v8722
  %v8755 = vadd.f32 %v8689, %v8723
  %v8756 = vadd.f32 %v8690, %v8724
  %v8757 = vadd.f32 %v8691, %v8725
  %v8758 = vadd.f32 %v8692, %v8726
  %v8759 = vadd.f32 %v8693, %v8727
  %v8760 = vadd.f32 %v8694, %v8728
  %v8761 = vadd.f32 %v8695, %v8729
  %v8762 = vadd.f32 %v8696, %v8730
  %v8763 = vadd.f32 %v8697, %v8731
  %v8764 = vlaneseq
  %v8765 = vshrl.u32 %v8764, 7
  %v8766 = vsub.s32 6, %v8765
  %v8767 = vrot.slane %v7806, %v8766
  %v8768 = vmul.f32 %v7758, %v8767
  %v8769 = vmul.f32 %v7586, %v8767
  %v8770 = vmul.f32 %v7790, %v8767
  %v8771 = vmul.f32 %v7759, %v8767
  %v8772 = vmul.f32 %v7589, %v8767
  %v8773 = vmul.f32 %v7791, %v8767
  %v8774 = vmul.f32 %v7757, %v8767
  %v8775 = vmul.f32 %v7583, %v8767
  %v8776 = vmul.f32 %v7789, %v8767
  %v8777 = vmul.f32 %v7760, %v8767
  %v8778 = vmul.f32 %v7592, %v8767
  %v8779 = vmul.f32 %v7792, %v8767
  %v8780 = vmul.f32 %v7761, %v8767
  %v8781 = vmul.f32 %v7595, %v8767
  %v8782 = vmul.f32 %v7793, %v8767
  %v8783 = vmul.f32 %v7762, %v8767
  %v8784 = vmul.f32 %v7598, %v8767
  %v8785 = vmul.f32 %v7794, %v8767
  %v8786 = vmul.f32 %v7763, %v8767
  %v8787 = vmul.f32 %v7601, %v8767
  %v8788 = vmul.f32 %v7795, %v8767
  %v8789 = vmul.f32 %v7764, %v8767
  %v8790 = vmul.f32 %v7604, %v8767
  %v8791 = vmul.f32 %v7796, %v8767
  %v8792 = vmul.f32 %v7765, %v8767
  %v8793 = vmul.f32 %v7607, %v8767
  %v8794 = vmul.f32 %v7797, %v8767
  %v8795 = vmul.f32 %v7766, %v8767
  %v8796 = vmul.f32 %v7610, %v8767
  %v8797 = vmul.f32 %v7798, %v8767
  %v8798 = vmul.f32 %v7767, %v8767
  %v8799 = vmul.f32 %v7613, %v8767
  %v8800 = vmul.f32 %v7799, %v8767
  %v8801 = vmul.f32 %v7768, %v8767
  %v8802 = vmul.f32 %v7616, %v8767
  %v8803 = vmul.f32 %v7800, %v8767
  %v8804 = vmul.f32 %v7769, %v8767
  %v8805 = vmul.f32 %v7619, %v8767
  %v8806 = vmul.f32 %v7801, %v8767
  %v8807 = vmul.f32 %v7770, %v8767
  %v8808 = vmul.f32 %v7622, %v8767
  %v8809 = vmul.f32 %v7802, %v8767
  %v8810 = vmul.f32 %v7771, %v8767
  %v8811 = vmul.f32 %v7625, %v8767
  %v8812 = vmul.f32 %v7803, %v8767
  %v8858 = vrot.slane %v8768, 1
  %v8859 = vrot.slane %v8769, 1
  %v8860 = vsel %vm736, %v8858, %v8859
  %v8861 = vrot.slane %v8770, 1
  %v8862 = vsel %vm736, %v8859, %v8861
  %v8863 = vrot.slane %v8771, 1
  %v8864 = vrot.slane %v8772, 1
  %v8865 = vsel %vm736, %v8863, %v8864
  %v8866 = vrot.slane %v8773, 1
  %v8867 = vsel %vm736, %v8864, %v8866
  %v8868 = vrot.slane %v8774, 1
  %v8869 = vrot.slane %v8775, 1
  %v8870 = vsel %vm736, %v8868, %v8869
  %v8871 = vrot.slane %v8776, 1
  %v8872 = vsel %vm736, %v8869, %v8871
  %v8873 = vrot.slane %v8777, 1
  %v8874 = vrot.slane %v8778, 1
  %v8875 = vsel %vm736, %v8873, %v8874
  %v8876 = vrot.slane %v8779, 1
  %v8877 = vsel %vm736, %v8874, %v8876
  %v8878 = vrot.slane %v8780, 1
  %v8879 = vrot.slane %v8781, 1
  %v8880 = vsel %vm736, %v8878, %v8879
  %v8881 = vrot.slane %v8782, 1
  %v8882 = vsel %vm736, %v8879, %v8881
  %v8883 = vrot.slane %v8783, 1
  %v8884 = vrot.slane %v8784, 1
  %v8885 = vsel %vm736, %v8883, %v8884
  %v8886 = vrot.slane %v8785, 1
  %v8887 = vsel %vm736, %v8884, %v8886
  %v8888 = vrot.slane %v8786, 1
  %v8889 = vrot.slane %v8787, 1
  %v8890 = vsel %vm736, %v8888, %v8889
  %v8891 = vrot.slane %v8788, 1
  %v8892 = vsel %vm736, %v8889, %v8891
  %v8893 = vrot.slane %v8789, 1
  %v8894 = vrot.slane %v8790, 1
  %v8895 = vsel %vm736, %v8893, %v8894
  %v8896 = vrot.slane %v8791, 1
  %v8897 = vsel %vm736, %v8894, %v8896
  %v8898 = vrot.slane %v8792, 1
  %v8899 = vrot.slane %v8793, 1
  %v8900 = vsel %vm736, %v8898, %v8899
  %v8901 = vrot.slane %v8794, 1
  %v8902 = vsel %vm736, %v8899, %v8901
  %v8903 = vrot.slane %v8795, 1
  %v8904 = vrot.slane %v8796, 1
  %v8905 = vsel %vm736, %v8903, %v8904
  %v8906 = vrot.slane %v8797, 1
  %v8907 = vsel %vm736, %v8904, %v8906
  %v8908 = vrot.slane %v8798, 1
  %v8909 = vrot.slane %v8799, 1
  %v8910 = vsel %vm736, %v8908, %v8909
  %v8911 = vrot.slane %v8800, 1
  %v8912 = vsel %vm736, %v8909, %v8911
  %v8913 = vrot.slane %v8801, 1
  %v8914 = vrot.slane %v8802, 1
  %v8915 = vsel %vm736, %v8913, %v8914
  %v8916 = vrot.slane %v8803, 1
  %v8917 = vsel %vm736, %v8914, %v8916
  %v8918 = vrot.slane %v8804, 1
  %v8919 = vrot.slane %v8805, 1
  %v8920 = vsel %vm736, %v8918, %v8919
  %v8921 = vrot.slane %v8806, 1
  %v8922 = vsel %vm736, %v8919, %v8921
  %v8923 = vrot.slane %v8807, 1
  %v8924 = vrot.slane %v8808, 1
  %v8925 = vsel %vm736, %v8923, %v8924
  %v8926 = vrot.slane %v8809, 1
  %v8927 = vsel %vm736, %v8924, %v8926
  %v8928 = vrot.slane %v8810, 1
  %v8929 = vrot.slane %v8811, 1
  %v8930 = vsel %vm736, %v8928, %v8929
  %v8931 = vrot.slane %v8812, 1
  %v8932 = vsel %vm736, %v8929, %v8931
  %v8963 = vadd.f32 %v8732, %v8860
  %v8964 = vadd.f32 %v8733, %v8862
  %v8965 = vadd.f32 %v8734, %v8865
  %v8966 = vadd.f32 %v8735, %v8867
  %v8967 = vadd.f32 %v8736, %v8860
  %v8968 = vadd.f32 %v8737, %v8862
  %v8969 = vadd.f32 %v8738, %v8870
  %v8970 = vadd.f32 %v8739, %v8872
  %v8971 = vadd.f32 %v8740, %v8875
  %v8972 = vadd.f32 %v8741, %v8877
  %v8973 = vadd.f32 %v8742, %v8880
  %v8974 = vadd.f32 %v8743, %v8882
  %v8975 = vadd.f32 %v8744, %v8885
  %v8976 = vadd.f32 %v8745, %v8887
  %v8977 = vadd.f32 %v8746, %v8890
  %v8978 = vadd.f32 %v8747, %v8892
  %v8979 = vadd.f32 %v8748, %v8895
  %v8980 = vadd.f32 %v8749, %v8897
  %v8981 = vadd.f32 %v8750, %v8900
  %v8982 = vadd.f32 %v8751, %v8902
  %v8983 = vadd.f32 %v8752, %v8905
  %v8984 = vadd.f32 %v8753, %v8907
  %v8985 = vadd.f32 %v8754, %v8910
  %v8986 = vadd.f32 %v8755, %v8912
  %v8987 = vadd.f32 %v8756, %v8915
  %v8988 = vadd.f32 %v8757, %v8917
  %v8989 = vadd.f32 %v8758, %v8920
  %v8990 = vadd.f32 %v8759, %v8922
  %v8991 = vadd.f32 %v8760, %v8925
  %v8992 = vadd.f32 %v8761, %v8927
  %v8993 = vadd.f32 %v8762, %v8930
  %v8994 = vadd.f32 %v8763, %v8932
  %v8995 = vlaneseq
  %v8996 = vshrl.u32 %v8995, 7
  %v8997 = vsub.s32 7, %v8996
  %v8998 = vrot.slane %v7806, %v8997
  %v8999 = vmul.f32 %v7758, %v8998
  %v9000 = vmul.f32 %v7586, %v8998
  %v9001 = vmul.f32 %v7790, %v8998
  %v9002 = vmul.f32 %v7759, %v8998
  %v9003 = vmul.f32 %v7589, %v8998
  %v9004 = vmul.f32 %v7791, %v8998
  %v9005 = vmul.f32 %v7757, %v8998
  %v9006 = vmul.f32 %v7583, %v8998
  %v9007 = vmul.f32 %v7789, %v8998
  %v9008 = vmul.f32 %v7760, %v8998
  %v9009 = vmul.f32 %v7592, %v8998
  %v9010 = vmul.f32 %v7792, %v8998
  %v9011 = vmul.f32 %v7761, %v8998
  %v9012 = vmul.f32 %v7595, %v8998
  %v9013 = vmul.f32 %v7793, %v8998
  %v9014 = vmul.f32 %v7762, %v8998
  %v9015 = vmul.f32 %v7598, %v8998
  %v9016 = vmul.f32 %v7794, %v8998
  %v9017 = vmul.f32 %v7763, %v8998
  %v9018 = vmul.f32 %v7601, %v8998
  %v9019 = vmul.f32 %v7795, %v8998
  %v9020 = vmul.f32 %v7764, %v8998
  %v9021 = vmul.f32 %v7604, %v8998
  %v9022 = vmul.f32 %v7796, %v8998
  %v9023 = vmul.f32 %v7765, %v8998
  %v9024 = vmul.f32 %v7607, %v8998
  %v9025 = vmul.f32 %v7797, %v8998
  %v9026 = vmul.f32 %v7766, %v8998
  %v9027 = vmul.f32 %v7610, %v8998
  %v9028 = vmul.f32 %v7798, %v8998
  %v9029 = vmul.f32 %v7767, %v8998
  %v9030 = vmul.f32 %v7613, %v8998
  %v9031 = vmul.f32 %v7799, %v8998
  %v9032 = vmul.f32 %v7768, %v8998
  %v9033 = vmul.f32 %v7616, %v8998
  %v9034 = vmul.f32 %v7800, %v8998
  %v9035 = vmul.f32 %v7769, %v8998
  %v9036 = vmul.f32 %v7619, %v8998
  %v9037 = vmul.f32 %v7801, %v8998
  %v9038 = vmul.f32 %v7770, %v8998
  %v9039 = vmul.f32 %v7622, %v8998
  %v9040 = vmul.f32 %v7802, %v8998
  %v9041 = vmul.f32 %v7771, %v8998
  %v9042 = vmul.f32 %v7625, %v8998
  %v9043 = vmul.f32 %v7803, %v8998
  %v9089 = vrot.slane %v8999, 2
  %v9090 = vrot.slane %v9000, 2
  %v9091 = vsel %vm951, %v9089, %v9090
  %v9092 = vrot.slane %v9001, 2
  %v9093 = vsel %vm951, %v9090, %v9092
  %v9094 = vrot.slane %v9002, 2
  %v9095 = vrot.slane %v9003, 2
  %v9096 = vsel %vm951, %v9094, %v9095
  %v9097 = vrot.slane %v9004, 2
  %v9098 = vsel %vm951, %v9095, %v9097
  %v9099 = vrot.slane %v9005, 2
  %v9100 = vrot.slane %v9006, 2
  %v9101 = vsel %vm951, %v9099, %v9100
  %v9102 = vrot.slane %v9007, 2
  %v9103 = vsel %vm951, %v9100, %v9102
  %v9104 = vrot.slane %v9008, 2
  %v9105 = vrot.slane %v9009, 2
  %v9106 = vsel %vm951, %v9104, %v9105
  %v9107 = vrot.slane %v9010, 2
  %v9108 = vsel %vm951, %v9105, %v9107
  %v9109 = vrot.slane %v9011, 2
  %v9110 = vrot.slane %v9012, 2
  %v9111 = vsel %vm951, %v9109, %v9110
  %v9112 = vrot.slane %v9013, 2
  %v9113 = vsel %vm951, %v9110, %v9112
  %v9114 = vrot.slane %v9014, 2
  %v9115 = vrot.slane %v9015, 2
  %v9116 = vsel %vm951, %v9114, %v9115
  %v9117 = vrot.slane %v9016, 2
  %v9118 = vsel %vm951, %v9115, %v9117
  %v9119 = vrot.slane %v9017, 2
  %v9120 = vrot.slane %v9018, 2
  %v9121 = vsel %vm951, %v9119, %v9120
  %v9122 = vrot.slane %v9019, 2
  %v9123 = vsel %vm951, %v9120, %v9122
  %v9124 = vrot.slane %v9020, 2
  %v9125 = vrot.slane %v9021, 2
  %v9126 = vsel %vm951, %v9124, %v9125
  %v9127 = vrot.slane %v9022, 2
  %v9128 = vsel %vm951, %v9125, %v9127
  %v9129 = vrot.slane %v9023, 2
  %v9130 = vrot.slane %v9024, 2
  %v9131 = vsel %vm951, %v9129, %v9130
  %v9132 = vrot.slane %v9025, 2
  %v9133 = vsel %vm951, %v9130, %v9132
  %v9134 = vrot.slane %v9026, 2
  %v9135 = vrot.slane %v9027, 2
  %v9136 = vsel %vm951, %v9134, %v9135
  %v9137 = vrot.slane %v9028, 2
  %v9138 = vsel %vm951, %v9135, %v9137
  %v9139 = vrot.slane %v9029, 2
  %v9140 = vrot.slane %v9030, 2
  %v9141 = vsel %vm951, %v9139, %v9140
  %v9142 = vrot.slane %v9031, 2
  %v9143 = vsel %vm951, %v9140, %v9142
  %v9144 = vrot.slane %v9032, 2
  %v9145 = vrot.slane %v9033, 2
  %v9146 = vsel %vm951, %v9144, %v9145
  %v9147 = vrot.slane %v9034, 2
  %v9148 = vsel %vm951, %v9145, %v9147
  %v9149 = vrot.slane %v9035, 2
  %v9150 = vrot.slane %v9036, 2
  %v9151 = vsel %vm951, %v9149, %v9150
  %v9152 = vrot.slane %v9037, 2
  %v9153 = vsel %vm951, %v9150, %v9152
  %v9154 = vrot.slane %v9038, 2
  %v9155 = vrot.slane %v9039, 2
  %v9156 = vsel %vm951, %v9154, %v9155
  %v9157 = vrot.slane %v9040, 2
  %v9158 = vsel %vm951, %v9155, %v9157
  %v9159 = vrot.slane %v9041, 2
  %v9160 = vrot.slane %v9042, 2
  %v9161 = vsel %vm951, %v9159, %v9160
  %v9162 = vrot.slane %v9043, 2
  %v9163 = vsel %vm951, %v9160, %v9162
  %v9194 = vadd.f32 %v8963, %v9091
  %v9195 = vadd.f32 %v8964, %v9093
  %v9196 = vadd.f32 %v8965, %v9096
  %v9197 = vadd.f32 %v8966, %v9098
  %v9198 = vadd.f32 %v8967, %v9091
  %v9199 = vadd.f32 %v8968, %v9093
  %v9200 = vadd.f32 %v8969, %v9101
  %v9201 = vadd.f32 %v8970, %v9103
  %v9202 = vadd.f32 %v8971, %v9106
  %v9203 = vadd.f32 %v8972, %v9108
  %v9204 = vadd.f32 %v8973, %v9111
  %v9205 = vadd.f32 %v8974, %v9113
  %v9206 = vadd.f32 %v8975, %v9116
  %v9207 = vadd.f32 %v8976, %v9118
  %v9208 = vadd.f32 %v8977, %v9121
  %v9209 = vadd.f32 %v8978, %v9123
  %v9210 = vadd.f32 %v8979, %v9126
  %v9211 = vadd.f32 %v8980, %v9128
  %v9212 = vadd.f32 %v8981, %v9131
  %v9213 = vadd.f32 %v8982, %v9133
  %v9214 = vadd.f32 %v8983, %v9136
  %v9215 = vadd.f32 %v8984, %v9138
  %v9216 = vadd.f32 %v8985, %v9141
  %v9217 = vadd.f32 %v8986, %v9143
  %v9218 = vadd.f32 %v8987, %v9146
  %v9219 = vadd.f32 %v8988, %v9148
  %v9220 = vadd.f32 %v8989, %v9151
  %v9221 = vadd.f32 %v8990, %v9153
  %v9222 = vadd.f32 %v8991, %v9156
  %v9223 = vadd.f32 %v8992, %v9158
  %v9224 = vadd.f32 %v8993, %v9161
  %v9225 = vadd.f32 %v8994, %v9163
  %v9226 = vlaneseq
  %v9227 = vshrl.u32 %v9226, 7
  %v9228 = vsub.s32 0, %v9227
  %v9229 = vrot.slane %v7807, %v9228
  %v9230 = vmul.f32 %v7758, %v9229
  %v9231 = vmul.f32 %v7586, %v9229
  %v9232 = vmul.f32 %v7790, %v9229
  %v9233 = vmul.f32 %v7759, %v9229
  %v9234 = vmul.f32 %v7589, %v9229
  %v9235 = vmul.f32 %v7791, %v9229
  %v9236 = vmul.f32 %v7757, %v9229
  %v9237 = vmul.f32 %v7583, %v9229
  %v9238 = vmul.f32 %v7789, %v9229
  %v9239 = vmul.f32 %v7760, %v9229
  %v9240 = vmul.f32 %v7592, %v9229
  %v9241 = vmul.f32 %v7792, %v9229
  %v9242 = vmul.f32 %v7761, %v9229
  %v9243 = vmul.f32 %v7595, %v9229
  %v9244 = vmul.f32 %v7793, %v9229
  %v9245 = vmul.f32 %v7762, %v9229
  %v9246 = vmul.f32 %v7598, %v9229
  %v9247 = vmul.f32 %v7794, %v9229
  %v9248 = vmul.f32 %v7763, %v9229
  %v9249 = vmul.f32 %v7601, %v9229
  %v9250 = vmul.f32 %v7795, %v9229
  %v9251 = vmul.f32 %v7764, %v9229
  %v9252 = vmul.f32 %v7604, %v9229
  %v9253 = vmul.f32 %v7796, %v9229
  %v9254 = vmul.f32 %v7765, %v9229
  %v9255 = vmul.f32 %v7607, %v9229
  %v9256 = vmul.f32 %v7797, %v9229
  %v9257 = vmul.f32 %v7766, %v9229
  %v9258 = vmul.f32 %v7610, %v9229
  %v9259 = vmul.f32 %v7798, %v9229
  %v9260 = vmul.f32 %v7767, %v9229
  %v9261 = vmul.f32 %v7613, %v9229
  %v9262 = vmul.f32 %v7799, %v9229
  %v9263 = vmul.f32 %v7768, %v9229
  %v9264 = vmul.f32 %v7616, %v9229
  %v9265 = vmul.f32 %v7800, %v9229
  %v9266 = vmul.f32 %v7769, %v9229
  %v9267 = vmul.f32 %v7619, %v9229
  %v9268 = vmul.f32 %v7801, %v9229
  %v9269 = vmul.f32 %v7770, %v9229
  %v9270 = vmul.f32 %v7622, %v9229
  %v9271 = vmul.f32 %v7802, %v9229
  %v9272 = vmul.f32 %v7771, %v9229
  %v9273 = vmul.f32 %v7625, %v9229
  %v9274 = vmul.f32 %v7803, %v9229
  %v9320 = vrot.slane %v9230, 3
  %v9321 = vrot.slane %v9231, 3
  %v9322 = vsel %vm1166, %v9320, %v9321
  %v9323 = vrot.slane %v9232, 3
  %v9324 = vsel %vm1166, %v9321, %v9323
  %v9325 = vrot.slane %v9233, 3
  %v9326 = vrot.slane %v9234, 3
  %v9327 = vsel %vm1166, %v9325, %v9326
  %v9328 = vrot.slane %v9235, 3
  %v9329 = vsel %vm1166, %v9326, %v9328
  %v9330 = vrot.slane %v9236, 3
  %v9331 = vrot.slane %v9237, 3
  %v9332 = vsel %vm1166, %v9330, %v9331
  %v9333 = vrot.slane %v9238, 3
  %v9334 = vsel %vm1166, %v9331, %v9333
  %v9335 = vrot.slane %v9239, 3
  %v9336 = vrot.slane %v9240, 3
  %v9337 = vsel %vm1166, %v9335, %v9336
  %v9338 = vrot.slane %v9241, 3
  %v9339 = vsel %vm1166, %v9336, %v9338
  %v9340 = vrot.slane %v9242, 3
  %v9341 = vrot.slane %v9243, 3
  %v9342 = vsel %vm1166, %v9340, %v9341
  %v9343 = vrot.slane %v9244, 3
  %v9344 = vsel %vm1166, %v9341, %v9343
  %v9345 = vrot.slane %v9245, 3
  %v9346 = vrot.slane %v9246, 3
  %v9347 = vsel %vm1166, %v9345, %v9346
  %v9348 = vrot.slane %v9247, 3
  %v9349 = vsel %vm1166, %v9346, %v9348
  %v9350 = vrot.slane %v9248, 3
  %v9351 = vrot.slane %v9249, 3
  %v9352 = vsel %vm1166, %v9350, %v9351
  %v9353 = vrot.slane %v9250, 3
  %v9354 = vsel %vm1166, %v9351, %v9353
  %v9355 = vrot.slane %v9251, 3
  %v9356 = vrot.slane %v9252, 3
  %v9357 = vsel %vm1166, %v9355, %v9356
  %v9358 = vrot.slane %v9253, 3
  %v9359 = vsel %vm1166, %v9356, %v9358
  %v9360 = vrot.slane %v9254, 3
  %v9361 = vrot.slane %v9255, 3
  %v9362 = vsel %vm1166, %v9360, %v9361
  %v9363 = vrot.slane %v9256, 3
  %v9364 = vsel %vm1166, %v9361, %v9363
  %v9365 = vrot.slane %v9257, 3
  %v9366 = vrot.slane %v9258, 3
  %v9367 = vsel %vm1166, %v9365, %v9366
  %v9368 = vrot.slane %v9259, 3
  %v9369 = vsel %vm1166, %v9366, %v9368
  %v9370 = vrot.slane %v9260, 3
  %v9371 = vrot.slane %v9261, 3
  %v9372 = vsel %vm1166, %v9370, %v9371
  %v9373 = vrot.slane %v9262, 3
  %v9374 = vsel %vm1166, %v9371, %v9373
  %v9375 = vrot.slane %v9263, 3
  %v9376 = vrot.slane %v9264, 3
  %v9377 = vsel %vm1166, %v9375, %v9376
  %v9378 = vrot.slane %v9265, 3
  %v9379 = vsel %vm1166, %v9376, %v9378
  %v9380 = vrot.slane %v9266, 3
  %v9381 = vrot.slane %v9267, 3
  %v9382 = vsel %vm1166, %v9380, %v9381
  %v9383 = vrot.slane %v9268, 3
  %v9384 = vsel %vm1166, %v9381, %v9383
  %v9385 = vrot.slane %v9269, 3
  %v9386 = vrot.slane %v9270, 3
  %v9387 = vsel %vm1166, %v9385, %v9386
  %v9388 = vrot.slane %v9271, 3
  %v9389 = vsel %vm1166, %v9386, %v9388
  %v9390 = vrot.slane %v9272, 3
  %v9391 = vrot.slane %v9273, 3
  %v9392 = vsel %vm1166, %v9390, %v9391
  %v9393 = vrot.slane %v9274, 3
  %v9394 = vsel %vm1166, %v9391, %v9393
  %v9425 = vadd.f32 %v9194, %v9322
  %v9426 = vadd.f32 %v9195, %v9324
  %v9427 = vadd.f32 %v9196, %v9327
  %v9428 = vadd.f32 %v9197, %v9329
  %v9429 = vadd.f32 %v9198, %v9322
  %v9430 = vadd.f32 %v9199, %v9324
  %v9431 = vadd.f32 %v9200, %v9332
  %v9432 = vadd.f32 %v9201, %v9334
  %v9433 = vadd.f32 %v9202, %v9337
  %v9434 = vadd.f32 %v9203, %v9339
  %v9435 = vadd.f32 %v9204, %v9342
  %v9436 = vadd.f32 %v9205, %v9344
  %v9437 = vadd.f32 %v9206, %v9347
  %v9438 = vadd.f32 %v9207, %v9349
  %v9439 = vadd.f32 %v9208, %v9352
  %v9440 = vadd.f32 %v9209, %v9354
  %v9441 = vadd.f32 %v9210, %v9357
  %v9442 = vadd.f32 %v9211, %v9359
  %v9443 = vadd.f32 %v9212, %v9362
  %v9444 = vadd.f32 %v9213, %v9364
  %v9445 = vadd.f32 %v9214, %v9367
  %v9446 = vadd.f32 %v9215, %v9369
  %v9447 = vadd.f32 %v9216, %v9372
  %v9448 = vadd.f32 %v9217, %v9374
  %v9449 = vadd.f32 %v9218, %v9377
  %v9450 = vadd.f32 %v9219, %v9379
  %v9451 = vadd.f32 %v9220, %v9382
  %v9452 = vadd.f32 %v9221, %v9384
  %v9453 = vadd.f32 %v9222, %v9387
  %v9454 = vadd.f32 %v9223, %v9389
  %v9455 = vadd.f32 %v9224, %v9392
  %v9456 = vadd.f32 %v9225, %v9394
  %v9457 = vlaneseq
  %v9458 = vshrl.u32 %v9457, 7
  %v9459 = vsub.s32 1, %v9458
  %v9460 = vrot.slane %v7807, %v9459
  %v9461 = vmul.f32 %v7758, %v9460
  %v9462 = vmul.f32 %v7586, %v9460
  %v9463 = vmul.f32 %v7790, %v9460
  %v9464 = vmul.f32 %v7759, %v9460
  %v9465 = vmul.f32 %v7589, %v9460
  %v9466 = vmul.f32 %v7791, %v9460
  %v9467 = vmul.f32 %v7757, %v9460
  %v9468 = vmul.f32 %v7583, %v9460
  %v9469 = vmul.f32 %v7789, %v9460
  %v9470 = vmul.f32 %v7760, %v9460
  %v9471 = vmul.f32 %v7592, %v9460
  %v9472 = vmul.f32 %v7792, %v9460
  %v9473 = vmul.f32 %v7761, %v9460
  %v9474 = vmul.f32 %v7595, %v9460
  %v9475 = vmul.f32 %v7793, %v9460
  %v9476 = vmul.f32 %v7762, %v9460
  %v9477 = vmul.f32 %v7598, %v9460
  %v9478 = vmul.f32 %v7794, %v9460
  %v9479 = vmul.f32 %v7763, %v9460
  %v9480 = vmul.f32 %v7601, %v9460
  %v9481 = vmul.f32 %v7795, %v9460
  %v9482 = vmul.f32 %v7764, %v9460
  %v9483 = vmul.f32 %v7604, %v9460
  %v9484 = vmul.f32 %v7796, %v9460
  %v9485 = vmul.f32 %v7765, %v9460
  %v9486 = vmul.f32 %v7607, %v9460
  %v9487 = vmul.f32 %v7797, %v9460
  %v9488 = vmul.f32 %v7766, %v9460
  %v9489 = vmul.f32 %v7610, %v9460
  %v9490 = vmul.f32 %v7798, %v9460
  %v9491 = vmul.f32 %v7767, %v9460
  %v9492 = vmul.f32 %v7613, %v9460
  %v9493 = vmul.f32 %v7799, %v9460
  %v9494 = vmul.f32 %v7768, %v9460
  %v9495 = vmul.f32 %v7616, %v9460
  %v9496 = vmul.f32 %v7800, %v9460
  %v9497 = vmul.f32 %v7769, %v9460
  %v9498 = vmul.f32 %v7619, %v9460
  %v9499 = vmul.f32 %v7801, %v9460
  %v9500 = vmul.f32 %v7770, %v9460
  %v9501 = vmul.f32 %v7622, %v9460
  %v9502 = vmul.f32 %v7802, %v9460
  %v9503 = vmul.f32 %v7771, %v9460
  %v9504 = vmul.f32 %v7625, %v9460
  %v9505 = vmul.f32 %v7803, %v9460
  %v9551 = vrot.slane %v9461, 4
  %v9552 = vrot.slane %v9462, 4
  %v9553 = vsel %vm1381, %v9551, %v9552
  %v9554 = vrot.slane %v9463, 4
  %v9555 = vsel %vm1381, %v9552, %v9554
  %v9556 = vrot.slane %v9464, 4
  %v9557 = vrot.slane %v9465, 4
  %v9558 = vsel %vm1381, %v9556, %v9557
  %v9559 = vrot.slane %v9466, 4
  %v9560 = vsel %vm1381, %v9557, %v9559
  %v9561 = vrot.slane %v9467, 4
  %v9562 = vrot.slane %v9468, 4
  %v9563 = vsel %vm1381, %v9561, %v9562
  %v9564 = vrot.slane %v9469, 4
  %v9565 = vsel %vm1381, %v9562, %v9564
  %v9566 = vrot.slane %v9470, 4
  %v9567 = vrot.slane %v9471, 4
  %v9568 = vsel %vm1381, %v9566, %v9567
  %v9569 = vrot.slane %v9472, 4
  %v9570 = vsel %vm1381, %v9567, %v9569
  %v9571 = vrot.slane %v9473, 4
  %v9572 = vrot.slane %v9474, 4
  %v9573 = vsel %vm1381, %v9571, %v9572
  %v9574 = vrot.slane %v9475, 4
  %v9575 = vsel %vm1381, %v9572, %v9574
  %v9576 = vrot.slane %v9476, 4
  %v9577 = vrot.slane %v9477, 4
  %v9578 = vsel %vm1381, %v9576, %v9577
  %v9579 = vrot.slane %v9478, 4
  %v9580 = vsel %vm1381, %v9577, %v9579
  %v9581 = vrot.slane %v9479, 4
  %v9582 = vrot.slane %v9480, 4
  %v9583 = vsel %vm1381, %v9581, %v9582
  %v9584 = vrot.slane %v9481, 4
  %v9585 = vsel %vm1381, %v9582, %v9584
  %v9586 = vrot.slane %v9482, 4
  %v9587 = vrot.slane %v9483, 4
  %v9588 = vsel %vm1381, %v9586, %v9587
  %v9589 = vrot.slane %v9484, 4
  %v9590 = vsel %vm1381, %v9587, %v9589
  %v9591 = vrot.slane %v9485, 4
  %v9592 = vrot.slane %v9486, 4
  %v9593 = vsel %vm1381, %v9591, %v9592
  %v9594 = vrot.slane %v9487, 4
  %v9595 = vsel %vm1381, %v9592, %v9594
  %v9596 = vrot.slane %v9488, 4
  %v9597 = vrot.slane %v9489, 4
  %v9598 = vsel %vm1381, %v9596, %v9597
  %v9599 = vrot.slane %v9490, 4
  %v9600 = vsel %vm1381, %v9597, %v9599
  %v9601 = vrot.slane %v9491, 4
  %v9602 = vrot.slane %v9492, 4
  %v9603 = vsel %vm1381, %v9601, %v9602
  %v9604 = vrot.slane %v9493, 4
  %v9605 = vsel %vm1381, %v9602, %v9604
  %v9606 = vrot.slane %v9494, 4
  %v9607 = vrot.slane %v9495, 4
  %v9608 = vsel %vm1381, %v9606, %v9607
  %v9609 = vrot.slane %v9496, 4
  %v9610 = vsel %vm1381, %v9607, %v9609
  %v9611 = vrot.slane %v9497, 4
  %v9612 = vrot.slane %v9498, 4
  %v9613 = vsel %vm1381, %v9611, %v9612
  %v9614 = vrot.slane %v9499, 4
  %v9615 = vsel %vm1381, %v9612, %v9614
  %v9616 = vrot.slane %v9500, 4
  %v9617 = vrot.slane %v9501, 4
  %v9618 = vsel %vm1381, %v9616, %v9617
  %v9619 = vrot.slane %v9502, 4
  %v9620 = vsel %vm1381, %v9617, %v9619
  %v9621 = vrot.slane %v9503, 4
  %v9622 = vrot.slane %v9504, 4
  %v9623 = vsel %vm1381, %v9621, %v9622
  %v9624 = vrot.slane %v9505, 4
  %v9625 = vsel %vm1381, %v9622, %v9624
  %v9656 = vadd.f32 %v9425, %v9553
  %v9657 = vadd.f32 %v9426, %v9555
  %v9658 = vadd.f32 %v9427, %v9558
  %v9659 = vadd.f32 %v9428, %v9560
  %v9660 = vadd.f32 %v9429, %v9553
  %v9661 = vadd.f32 %v9430, %v9555
  %v9662 = vadd.f32 %v9431, %v9563
  %v9663 = vadd.f32 %v9432, %v9565
  %v9664 = vadd.f32 %v9433, %v9568
  %v9665 = vadd.f32 %v9434, %v9570
  %v9666 = vadd.f32 %v9435, %v9573
  %v9667 = vadd.f32 %v9436, %v9575
  %v9668 = vadd.f32 %v9437, %v9578
  %v9669 = vadd.f32 %v9438, %v9580
  %v9670 = vadd.f32 %v9439, %v9583
  %v9671 = vadd.f32 %v9440, %v9585
  %v9672 = vadd.f32 %v9441, %v9588
  %v9673 = vadd.f32 %v9442, %v9590
  %v9674 = vadd.f32 %v9443, %v9593
  %v9675 = vadd.f32 %v9444, %v9595
  %v9676 = vadd.f32 %v9445, %v9598
  %v9677 = vadd.f32 %v9446, %v9600
  %v9678 = vadd.f32 %v9447, %v9603
  %v9679 = vadd.f32 %v9448, %v9605
  %v9680 = vadd.f32 %v9449, %v9608
  %v9681 = vadd.f32 %v9450, %v9610
  %v9682 = vadd.f32 %v9451, %v9613
  %v9683 = vadd.f32 %v9452, %v9615
  %v9684 = vadd.f32 %v9453, %v9618
  %v9685 = vadd.f32 %v9454, %v9620
  %v9686 = vadd.f32 %v9455, %v9623
  %v9687 = vadd.f32 %v9456, %v9625
  %v9688 = vlaneseq
  %v9689 = vshrl.u32 %v9688, 7
  %v9690 = vsub.s32 2, %v9689
  %v9691 = vrot.slane %v7807, %v9690
  %v9692 = vmul.f32 %v7759, %v9691
  %v9693 = vmul.f32 %v7589, %v9691
  %v9694 = vmul.f32 %v7758, %v9691
  %v9695 = vmul.f32 %v7586, %v9691
  %v9696 = vmul.f32 %v7757, %v9691
  %v9697 = vmul.f32 %v7583, %v9691
  %v9698 = vmul.f32 %v7760, %v9691
  %v9699 = vmul.f32 %v7592, %v9691
  %v9700 = vmul.f32 %v7761, %v9691
  %v9701 = vmul.f32 %v7595, %v9691
  %v9702 = vmul.f32 %v7762, %v9691
  %v9703 = vmul.f32 %v7598, %v9691
  %v9704 = vmul.f32 %v7763, %v9691
  %v9705 = vmul.f32 %v7601, %v9691
  %v9706 = vmul.f32 %v7764, %v9691
  %v9707 = vmul.f32 %v7604, %v9691
  %v9708 = vmul.f32 %v7765, %v9691
  %v9709 = vmul.f32 %v7607, %v9691
  %v9710 = vmul.f32 %v7766, %v9691
  %v9711 = vmul.f32 %v7610, %v9691
  %v9712 = vmul.f32 %v7767, %v9691
  %v9713 = vmul.f32 %v7613, %v9691
  %v9714 = vmul.f32 %v7768, %v9691
  %v9715 = vmul.f32 %v7616, %v9691
  %v9716 = vmul.f32 %v7769, %v9691
  %v9717 = vmul.f32 %v7619, %v9691
  %v9718 = vmul.f32 %v7770, %v9691
  %v9719 = vmul.f32 %v7622, %v9691
  %v9720 = vmul.f32 %v7771, %v9691
  %v9721 = vmul.f32 %v7625, %v9691
  %v9722 = vmul.f32 %v7772, %v9691
  %v9723 = vmul.f32 %v7628, %v9691
  %v9724 = vadd.f32 %v9656, %v9692
  %v9725 = vadd.f32 %v9657, %v9693
  %v9726 = vadd.f32 %v9658, %v9694
  %v9727 = vadd.f32 %v9659, %v9695
  %v9728 = vadd.f32 %v9660, %v9696
  %v9729 = vadd.f32 %v9661, %v9697
  %v9730 = vadd.f32 %v9662, %v9698
  %v9731 = vadd.f32 %v9663, %v9699
  %v9732 = vadd.f32 %v9664, %v9700
  %v9733 = vadd.f32 %v9665, %v9701
  %v9734 = vadd.f32 %v9666, %v9702
  %v9735 = vadd.f32 %v9667, %v9703
  %v9736 = vadd.f32 %v9668, %v9704
  %v9737 = vadd.f32 %v9669, %v9705
  %v9738 = vadd.f32 %v9670, %v9706
  %v9739 = vadd.f32 %v9671, %v9707
  %v9740 = vadd.f32 %v9672, %v9708
  %v9741 = vadd.f32 %v9673, %v9709
  %v9742 = vadd.f32 %v9674, %v9710
  %v9743 = vadd.f32 %v9675, %v9711
  %v9744 = vadd.f32 %v9676, %v9712
  %v9745 = vadd.f32 %v9677, %v9713
  %v9746 = vadd.f32 %v9678, %v9714
  %v9747 = vadd.f32 %v9679, %v9715
  %v9748 = vadd.f32 %v9680, %v9716
  %v9749 = vadd.f32 %v9681, %v9717
  %v9750 = vadd.f32 %v9682, %v9718
  %v9751 = vadd.f32 %v9683, %v9719
  %v9752 = vadd.f32 %v9684, %v9720
  %v9753 = vadd.f32 %v9685, %v9721
  %v9754 = vadd.f32 %v9686, %v9722
  %v9755 = vadd.f32 %v9687, %v9723
  %v9756 = vlaneseq
  %v9757 = vshrl.u32 %v9756, 7
  %v9758 = vsub.s32 3, %v9757
  %v9759 = vrot.slane %v7807, %v9758
  %v9760 = vmul.f32 %v7759, %v9759
  %v9761 = vmul.f32 %v7589, %v9759
  %v9762 = vmul.f32 %v7791, %v9759
  %v9763 = vmul.f32 %v7758, %v9759
  %v9764 = vmul.f32 %v7586, %v9759
  %v9765 = vmul.f32 %v7790, %v9759
  %v9766 = vmul.f32 %v7757, %v9759
  %v9767 = vmul.f32 %v7583, %v9759
  %v9768 = vmul.f32 %v7789, %v9759
  %v9769 = vmul.f32 %v7760, %v9759
  %v9770 = vmul.f32 %v7592, %v9759
  %v9771 = vmul.f32 %v7792, %v9759
  %v9772 = vmul.f32 %v7761, %v9759
  %v9773 = vmul.f32 %v7595, %v9759
  %v9774 = vmul.f32 %v7793, %v9759
  %v9775 = vmul.f32 %v7762, %v9759
  %v9776 = vmul.f32 %v7598, %v9759
  %v9777 = vmul.f32 %v7794, %v9759
  %v9778 = vmul.f32 %v7763, %v9759
  %v9779 = vmul.f32 %v7601, %v9759
  %v9780 = vmul.f32 %v7795, %v9759
  %v9781 = vmul.f32 %v7764, %v9759
  %v9782 = vmul.f32 %v7604, %v9759
  %v9783 = vmul.f32 %v7796, %v9759
  %v9784 = vmul.f32 %v7765, %v9759
  %v9785 = vmul.f32 %v7607, %v9759
  %v9786 = vmul.f32 %v7797, %v9759
  %v9787 = vmul.f32 %v7766, %v9759
  %v9788 = vmul.f32 %v7610, %v9759
  %v9789 = vmul.f32 %v7798, %v9759
  %v9790 = vmul.f32 %v7767, %v9759
  %v9791 = vmul.f32 %v7613, %v9759
  %v9792 = vmul.f32 %v7799, %v9759
  %v9793 = vmul.f32 %v7768, %v9759
  %v9794 = vmul.f32 %v7616, %v9759
  %v9795 = vmul.f32 %v7800, %v9759
  %v9796 = vmul.f32 %v7769, %v9759
  %v9797 = vmul.f32 %v7619, %v9759
  %v9798 = vmul.f32 %v7801, %v9759
  %v9799 = vmul.f32 %v7770, %v9759
  %v9800 = vmul.f32 %v7622, %v9759
  %v9801 = vmul.f32 %v7802, %v9759
  %v9802 = vmul.f32 %v7771, %v9759
  %v9803 = vmul.f32 %v7625, %v9759
  %v9804 = vmul.f32 %v7803, %v9759
  %v9805 = vmul.f32 %v7772, %v9759
  %v9806 = vmul.f32 %v7628, %v9759
  %v9807 = vmul.f32 %v7804, %v9759
  %v9856 = vrot.slane %v9760, 1
  %v9857 = vrot.slane %v9761, 1
  %v9858 = vsel %vm736, %v9856, %v9857
  %v9859 = vrot.slane %v9762, 1
  %v9860 = vsel %vm736, %v9857, %v9859
  %v9861 = vrot.slane %v9763, 1
  %v9862 = vrot.slane %v9764, 1
  %v9863 = vsel %vm736, %v9861, %v9862
  %v9864 = vrot.slane %v9765, 1
  %v9865 = vsel %vm736, %v9862, %v9864
  %v9866 = vrot.slane %v9766, 1
  %v9867 = vrot.slane %v9767, 1
  %v9868 = vsel %vm736, %v9866, %v9867
  %v9869 = vrot.slane %v9768, 1
  %v9870 = vsel %vm736, %v9867, %v9869
  %v9871 = vrot.slane %v9769, 1
  %v9872 = vrot.slane %v9770, 1
  %v9873 = vsel %vm736, %v9871, %v9872
  %v9874 = vrot.slane %v9771, 1
  %v9875 = vsel %vm736, %v9872, %v9874
  %v9876 = vrot.slane %v9772, 1
  %v9877 = vrot.slane %v9773, 1
  %v9878 = vsel %vm736, %v9876, %v9877
  %v9879 = vrot.slane %v9774, 1
  %v9880 = vsel %vm736, %v9877, %v9879
  %v9881 = vrot.slane %v9775, 1
  %v9882 = vrot.slane %v9776, 1
  %v9883 = vsel %vm736, %v9881, %v9882
  %v9884 = vrot.slane %v9777, 1
  %v9885 = vsel %vm736, %v9882, %v9884
  %v9886 = vrot.slane %v9778, 1
  %v9887 = vrot.slane %v9779, 1
  %v9888 = vsel %vm736, %v9886, %v9887
  %v9889 = vrot.slane %v9780, 1
  %v9890 = vsel %vm736, %v9887, %v9889
  %v9891 = vrot.slane %v9781, 1
  %v9892 = vrot.slane %v9782, 1
  %v9893 = vsel %vm736, %v9891, %v9892
  %v9894 = vrot.slane %v9783, 1
  %v9895 = vsel %vm736, %v9892, %v9894
  %v9896 = vrot.slane %v9784, 1
  %v9897 = vrot.slane %v9785, 1
  %v9898 = vsel %vm736, %v9896, %v9897
  %v9899 = vrot.slane %v9786, 1
  %v9900 = vsel %vm736, %v9897, %v9899
  %v9901 = vrot.slane %v9787, 1
  %v9902 = vrot.slane %v9788, 1
  %v9903 = vsel %vm736, %v9901, %v9902
  %v9904 = vrot.slane %v9789, 1
  %v9905 = vsel %vm736, %v9902, %v9904
  %v9906 = vrot.slane %v9790, 1
  %v9907 = vrot.slane %v9791, 1
  %v9908 = vsel %vm736, %v9906, %v9907
  %v9909 = vrot.slane %v9792, 1
  %v9910 = vsel %vm736, %v9907, %v9909
  %v9911 = vrot.slane %v9793, 1
  %v9912 = vrot.slane %v9794, 1
  %v9913 = vsel %vm736, %v9911, %v9912
  %v9914 = vrot.slane %v9795, 1
  %v9915 = vsel %vm736, %v9912, %v9914
  %v9916 = vrot.slane %v9796, 1
  %v9917 = vrot.slane %v9797, 1
  %v9918 = vsel %vm736, %v9916, %v9917
  %v9919 = vrot.slane %v9798, 1
  %v9920 = vsel %vm736, %v9917, %v9919
  %v9921 = vrot.slane %v9799, 1
  %v9922 = vrot.slane %v9800, 1
  %v9923 = vsel %vm736, %v9921, %v9922
  %v9924 = vrot.slane %v9801, 1
  %v9925 = vsel %vm736, %v9922, %v9924
  %v9926 = vrot.slane %v9802, 1
  %v9927 = vrot.slane %v9803, 1
  %v9928 = vsel %vm736, %v9926, %v9927
  %v9929 = vrot.slane %v9804, 1
  %v9930 = vsel %vm736, %v9927, %v9929
  %v9931 = vrot.slane %v9805, 1
  %v9932 = vrot.slane %v9806, 1
  %v9933 = vsel %vm736, %v9931, %v9932
  %v9934 = vrot.slane %v9807, 1
  %v9935 = vsel %vm736, %v9932, %v9934
  %v9968 = vadd.f32 %v9724, %v9858
  %v9969 = vadd.f32 %v9725, %v9860
  %v9970 = vadd.f32 %v9726, %v9863
  %v9971 = vadd.f32 %v9727, %v9865
  %v9972 = vadd.f32 %v9728, %v9868
  %v9973 = vadd.f32 %v9729, %v9870
  %v9974 = vadd.f32 %v9730, %v9873
  %v9975 = vadd.f32 %v9731, %v9875
  %v9976 = vadd.f32 %v9732, %v9878
  %v9977 = vadd.f32 %v9733, %v9880
  %v9978 = vadd.f32 %v9734, %v9883
  %v9979 = vadd.f32 %v9735, %v9885
  %v9980 = vadd.f32 %v9736, %v9888
  %v9981 = vadd.f32 %v9737, %v9890
  %v9982 = vadd.f32 %v9738, %v9893
  %v9983 = vadd.f32 %v9739, %v9895
  %v9984 = vadd.f32 %v9740, %v9898
  %v9985 = vadd.f32 %v9741, %v9900
  %v9986 = vadd.f32 %v9742, %v9903
  %v9987 = vadd.f32 %v9743, %v9905
  %v9988 = vadd.f32 %v9744, %v9908
  %v9989 = vadd.f32 %v9745, %v9910
  %v9990 = vadd.f32 %v9746, %v9913
  %v9991 = vadd.f32 %v9747, %v9915
  %v9992 = vadd.f32 %v9748, %v9918
  %v9993 = vadd.f32 %v9749, %v9920
  %v9994 = vadd.f32 %v9750, %v9923
  %v9995 = vadd.f32 %v9751, %v9925
  %v9996 = vadd.f32 %v9752, %v9928
  %v9997 = vadd.f32 %v9753, %v9930
  %v9998 = vadd.f32 %v9754, %v9933
  %v9999 = vadd.f32 %v9755, %v9935
  %v10000 = vlaneseq
  %v10001 = vshrl.u32 %v10000, 7
  %v10002 = vsub.s32 4, %v10001
  %v10003 = vrot.slane %v7807, %v10002
  %v10004 = vmul.f32 %v7759, %v10003
  %v10005 = vmul.f32 %v7589, %v10003
  %v10006 = vmul.f32 %v7791, %v10003
  %v10007 = vmul.f32 %v7758, %v10003
  %v10008 = vmul.f32 %v7586, %v10003
  %v10009 = vmul.f32 %v7790, %v10003
  %v10010 = vmul.f32 %v7757, %v10003
  %v10011 = vmul.f32 %v7583, %v10003
  %v10012 = vmul.f32 %v7789, %v10003
  %v10013 = vmul.f32 %v7760, %v10003
  %v10014 = vmul.f32 %v7592, %v10003
  %v10015 = vmul.f32 %v7792, %v10003
  %v10016 = vmul.f32 %v7761, %v10003
  %v10017 = vmul.f32 %v7595, %v10003
  %v10018 = vmul.f32 %v7793, %v10003
  %v10019 = vmul.f32 %v7762, %v10003
  %v10020 = vmul.f32 %v7598, %v10003
  %v10021 = vmul.f32 %v7794, %v10003
  %v10022 = vmul.f32 %v7763, %v10003
  %v10023 = vmul.f32 %v7601, %v10003
  %v10024 = vmul.f32 %v7795, %v10003
  %v10025 = vmul.f32 %v7764, %v10003
  %v10026 = vmul.f32 %v7604, %v10003
  %v10027 = vmul.f32 %v7796, %v10003
  %v10028 = vmul.f32 %v7765, %v10003
  %v10029 = vmul.f32 %v7607, %v10003
  %v10030 = vmul.f32 %v7797, %v10003
  %v10031 = vmul.f32 %v7766, %v10003
  %v10032 = vmul.f32 %v7610, %v10003
  %v10033 = vmul.f32 %v7798, %v10003
  %v10034 = vmul.f32 %v7767, %v10003
  %v10035 = vmul.f32 %v7613, %v10003
  %v10036 = vmul.f32 %v7799, %v10003
  %v10037 = vmul.f32 %v7768, %v10003
  %v10038 = vmul.f32 %v7616, %v10003
  %v10039 = vmul.f32 %v7800, %v10003
  %v10040 = vmul.f32 %v7769, %v10003
  %v10041 = vmul.f32 %v7619, %v10003
  %v10042 = vmul.f32 %v7801, %v10003
  %v10043 = vmul.f32 %v7770, %v10003
  %v10044 = vmul.f32 %v7622, %v10003
  %v10045 = vmul.f32 %v7802, %v10003
  %v10046 = vmul.f32 %v7771, %v10003
  %v10047 = vmul.f32 %v7625, %v10003
  %v10048 = vmul.f32 %v7803, %v10003
  %v10049 = vmul.f32 %v7772, %v10003
  %v10050 = vmul.f32 %v7628, %v10003
  %v10051 = vmul.f32 %v7804, %v10003
  %v10100 = vrot.slane %v10004, 2
  %v10101 = vrot.slane %v10005, 2
  %v10102 = vsel %vm951, %v10100, %v10101
  %v10103 = vrot.slane %v10006, 2
  %v10104 = vsel %vm951, %v10101, %v10103
  %v10105 = vrot.slane %v10007, 2
  %v10106 = vrot.slane %v10008, 2
  %v10107 = vsel %vm951, %v10105, %v10106
  %v10108 = vrot.slane %v10009, 2
  %v10109 = vsel %vm951, %v10106, %v10108
  %v10110 = vrot.slane %v10010, 2
  %v10111 = vrot.slane %v10011, 2
  %v10112 = vsel %vm951, %v10110, %v10111
  %v10113 = vrot.slane %v10012, 2
  %v10114 = vsel %vm951, %v10111, %v10113
  %v10115 = vrot.slane %v10013, 2
  %v10116 = vrot.slane %v10014, 2
  %v10117 = vsel %vm951, %v10115, %v10116
  %v10118 = vrot.slane %v10015, 2
  %v10119 = vsel %vm951, %v10116, %v10118
  %v10120 = vrot.slane %v10016, 2
  %v10121 = vrot.slane %v10017, 2
  %v10122 = vsel %vm951, %v10120, %v10121
  %v10123 = vrot.slane %v10018, 2
  %v10124 = vsel %vm951, %v10121, %v10123
  %v10125 = vrot.slane %v10019, 2
  %v10126 = vrot.slane %v10020, 2
  %v10127 = vsel %vm951, %v10125, %v10126
  %v10128 = vrot.slane %v10021, 2
  %v10129 = vsel %vm951, %v10126, %v10128
  %v10130 = vrot.slane %v10022, 2
  %v10131 = vrot.slane %v10023, 2
  %v10132 = vsel %vm951, %v10130, %v10131
  %v10133 = vrot.slane %v10024, 2
  %v10134 = vsel %vm951, %v10131, %v10133
  %v10135 = vrot.slane %v10025, 2
  %v10136 = vrot.slane %v10026, 2
  %v10137 = vsel %vm951, %v10135, %v10136
  %v10138 = vrot.slane %v10027, 2
  %v10139 = vsel %vm951, %v10136, %v10138
  %v10140 = vrot.slane %v10028, 2
  %v10141 = vrot.slane %v10029, 2
  %v10142 = vsel %vm951, %v10140, %v10141
  %v10143 = vrot.slane %v10030, 2
  %v10144 = vsel %vm951, %v10141, %v10143
  %v10145 = vrot.slane %v10031, 2
  %v10146 = vrot.slane %v10032, 2
  %v10147 = vsel %vm951, %v10145, %v10146
  %v10148 = vrot.slane %v10033, 2
  %v10149 = vsel %vm951, %v10146, %v10148
  %v10150 = vrot.slane %v10034, 2
  %v10151 = vrot.slane %v10035, 2
  %v10152 = vsel %vm951, %v10150, %v10151
  %v10153 = vrot.slane %v10036, 2
  %v10154 = vsel %vm951, %v10151, %v10153
  %v10155 = vrot.slane %v10037, 2
  %v10156 = vrot.slane %v10038, 2
  %v10157 = vsel %vm951, %v10155, %v10156
  %v10158 = vrot.slane %v10039, 2
  %v10159 = vsel %vm951, %v10156, %v10158
  %v10160 = vrot.slane %v10040, 2
  %v10161 = vrot.slane %v10041, 2
  %v10162 = vsel %vm951, %v10160, %v10161
  %v10163 = vrot.slane %v10042, 2
  %v10164 = vsel %vm951, %v10161, %v10163
  %v10165 = vrot.slane %v10043, 2
  %v10166 = vrot.slane %v10044, 2
  %v10167 = vsel %vm951, %v10165, %v10166
  %v10168 = vrot.slane %v10045, 2
  %v10169 = vsel %vm951, %v10166, %v10168
  %v10170 = vrot.slane %v10046, 2
  %v10171 = vrot.slane %v10047, 2
  %v10172 = vsel %vm951, %v10170, %v10171
  %v10173 = vrot.slane %v10048, 2
  %v10174 = vsel %vm951, %v10171, %v10173
  %v10175 = vrot.slane %v10049, 2
  %v10176 = vrot.slane %v10050, 2
  %v10177 = vsel %vm951, %v10175, %v10176
  %v10178 = vrot.slane %v10051, 2
  %v10179 = vsel %vm951, %v10176, %v10178
  %v10212 = vadd.f32 %v9968, %v10102
  %v10213 = vadd.f32 %v9969, %v10104
  %v10214 = vadd.f32 %v9970, %v10107
  %v10215 = vadd.f32 %v9971, %v10109
  %v10216 = vadd.f32 %v9972, %v10112
  %v10217 = vadd.f32 %v9973, %v10114
  %v10218 = vadd.f32 %v9974, %v10117
  %v10219 = vadd.f32 %v9975, %v10119
  %v10220 = vadd.f32 %v9976, %v10122
  %v10221 = vadd.f32 %v9977, %v10124
  %v10222 = vadd.f32 %v9978, %v10127
  %v10223 = vadd.f32 %v9979, %v10129
  %v10224 = vadd.f32 %v9980, %v10132
  %v10225 = vadd.f32 %v9981, %v10134
  %v10226 = vadd.f32 %v9982, %v10137
  %v10227 = vadd.f32 %v9983, %v10139
  %v10228 = vadd.f32 %v9984, %v10142
  %v10229 = vadd.f32 %v9985, %v10144
  %v10230 = vadd.f32 %v9986, %v10147
  %v10231 = vadd.f32 %v9987, %v10149
  %v10232 = vadd.f32 %v9988, %v10152
  %v10233 = vadd.f32 %v9989, %v10154
  %v10234 = vadd.f32 %v9990, %v10157
  %v10235 = vadd.f32 %v9991, %v10159
  %v10236 = vadd.f32 %v9992, %v10162
  %v10237 = vadd.f32 %v9993, %v10164
  %v10238 = vadd.f32 %v9994, %v10167
  %v10239 = vadd.f32 %v9995, %v10169
  %v10240 = vadd.f32 %v9996, %v10172
  %v10241 = vadd.f32 %v9997, %v10174
  %v10242 = vadd.f32 %v9998, %v10177
  %v10243 = vadd.f32 %v9999, %v10179
  %v10244 = vlaneseq
  %v10245 = vshrl.u32 %v10244, 7
  %v10246 = vsub.s32 5, %v10245
  %v10247 = vrot.slane %v7807, %v10246
  %v10248 = vmul.f32 %v7759, %v10247
  %v10249 = vmul.f32 %v7589, %v10247
  %v10250 = vmul.f32 %v7791, %v10247
  %v10251 = vmul.f32 %v7758, %v10247
  %v10252 = vmul.f32 %v7586, %v10247
  %v10253 = vmul.f32 %v7790, %v10247
  %v10254 = vmul.f32 %v7757, %v10247
  %v10255 = vmul.f32 %v7583, %v10247
  %v10256 = vmul.f32 %v7789, %v10247
  %v10257 = vmul.f32 %v7760, %v10247
  %v10258 = vmul.f32 %v7592, %v10247
  %v10259 = vmul.f32 %v7792, %v10247
  %v10260 = vmul.f32 %v7761, %v10247
  %v10261 = vmul.f32 %v7595, %v10247
  %v10262 = vmul.f32 %v7793, %v10247
  %v10263 = vmul.f32 %v7762, %v10247
  %v10264 = vmul.f32 %v7598, %v10247
  %v10265 = vmul.f32 %v7794, %v10247
  %v10266 = vmul.f32 %v7763, %v10247
  %v10267 = vmul.f32 %v7601, %v10247
  %v10268 = vmul.f32 %v7795, %v10247
  %v10269 = vmul.f32 %v7764, %v10247
  %v10270 = vmul.f32 %v7604, %v10247
  %v10271 = vmul.f32 %v7796, %v10247
  %v10272 = vmul.f32 %v7765, %v10247
  %v10273 = vmul.f32 %v7607, %v10247
  %v10274 = vmul.f32 %v7797, %v10247
  %v10275 = vmul.f32 %v7766, %v10247
  %v10276 = vmul.f32 %v7610, %v10247
  %v10277 = vmul.f32 %v7798, %v10247
  %v10278 = vmul.f32 %v7767, %v10247
  %v10279 = vmul.f32 %v7613, %v10247
  %v10280 = vmul.f32 %v7799, %v10247
  %v10281 = vmul.f32 %v7768, %v10247
  %v10282 = vmul.f32 %v7616, %v10247
  %v10283 = vmul.f32 %v7800, %v10247
  %v10284 = vmul.f32 %v7769, %v10247
  %v10285 = vmul.f32 %v7619, %v10247
  %v10286 = vmul.f32 %v7801, %v10247
  %v10287 = vmul.f32 %v7770, %v10247
  %v10288 = vmul.f32 %v7622, %v10247
  %v10289 = vmul.f32 %v7802, %v10247
  %v10290 = vmul.f32 %v7771, %v10247
  %v10291 = vmul.f32 %v7625, %v10247
  %v10292 = vmul.f32 %v7803, %v10247
  %v10293 = vmul.f32 %v7772, %v10247
  %v10294 = vmul.f32 %v7628, %v10247
  %v10295 = vmul.f32 %v7804, %v10247
  %v10344 = vrot.slane %v10248, 3
  %v10345 = vrot.slane %v10249, 3
  %v10346 = vsel %vm1166, %v10344, %v10345
  %v10347 = vrot.slane %v10250, 3
  %v10348 = vsel %vm1166, %v10345, %v10347
  %v10349 = vrot.slane %v10251, 3
  %v10350 = vrot.slane %v10252, 3
  %v10351 = vsel %vm1166, %v10349, %v10350
  %v10352 = vrot.slane %v10253, 3
  %v10353 = vsel %vm1166, %v10350, %v10352
  %v10354 = vrot.slane %v10254, 3
  %v10355 = vrot.slane %v10255, 3
  %v10356 = vsel %vm1166, %v10354, %v10355
  %v10357 = vrot.slane %v10256, 3
  %v10358 = vsel %vm1166, %v10355, %v10357
  %v10359 = vrot.slane %v10257, 3
  %v10360 = vrot.slane %v10258, 3
  %v10361 = vsel %vm1166, %v10359, %v10360
  %v10362 = vrot.slane %v10259, 3
  %v10363 = vsel %vm1166, %v10360, %v10362
  %v10364 = vrot.slane %v10260, 3
  %v10365 = vrot.slane %v10261, 3
  %v10366 = vsel %vm1166, %v10364, %v10365
  %v10367 = vrot.slane %v10262, 3
  %v10368 = vsel %vm1166, %v10365, %v10367
  %v10369 = vrot.slane %v10263, 3
  %v10370 = vrot.slane %v10264, 3
  %v10371 = vsel %vm1166, %v10369, %v10370
  %v10372 = vrot.slane %v10265, 3
  %v10373 = vsel %vm1166, %v10370, %v10372
  %v10374 = vrot.slane %v10266, 3
  %v10375 = vrot.slane %v10267, 3
  %v10376 = vsel %vm1166, %v10374, %v10375
  %v10377 = vrot.slane %v10268, 3
  %v10378 = vsel %vm1166, %v10375, %v10377
  %v10379 = vrot.slane %v10269, 3
  %v10380 = vrot.slane %v10270, 3
  %v10381 = vsel %vm1166, %v10379, %v10380
  %v10382 = vrot.slane %v10271, 3
  %v10383 = vsel %vm1166, %v10380, %v10382
  %v10384 = vrot.slane %v10272, 3
  %v10385 = vrot.slane %v10273, 3
  %v10386 = vsel %vm1166, %v10384, %v10385
  %v10387 = vrot.slane %v10274, 3
  %v10388 = vsel %vm1166, %v10385, %v10387
  %v10389 = vrot.slane %v10275, 3
  %v10390 = vrot.slane %v10276, 3
  %v10391 = vsel %vm1166, %v10389, %v10390
  %v10392 = vrot.slane %v10277, 3
  %v10393 = vsel %vm1166, %v10390, %v10392
  %v10394 = vrot.slane %v10278, 3
  %v10395 = vrot.slane %v10279, 3
  %v10396 = vsel %vm1166, %v10394, %v10395
  %v10397 = vrot.slane %v10280, 3
  %v10398 = vsel %vm1166, %v10395, %v10397
  %v10399 = vrot.slane %v10281, 3
  %v10400 = vrot.slane %v10282, 3
  %v10401 = vsel %vm1166, %v10399, %v10400
  %v10402 = vrot.slane %v10283, 3
  %v10403 = vsel %vm1166, %v10400, %v10402
  %v10404 = vrot.slane %v10284, 3
  %v10405 = vrot.slane %v10285, 3
  %v10406 = vsel %vm1166, %v10404, %v10405
  %v10407 = vrot.slane %v10286, 3
  %v10408 = vsel %vm1166, %v10405, %v10407
  %v10409 = vrot.slane %v10287, 3
  %v10410 = vrot.slane %v10288, 3
  %v10411 = vsel %vm1166, %v10409, %v10410
  %v10412 = vrot.slane %v10289, 3
  %v10413 = vsel %vm1166, %v10410, %v10412
  %v10414 = vrot.slane %v10290, 3
  %v10415 = vrot.slane %v10291, 3
  %v10416 = vsel %vm1166, %v10414, %v10415
  %v10417 = vrot.slane %v10292, 3
  %v10418 = vsel %vm1166, %v10415, %v10417
  %v10419 = vrot.slane %v10293, 3
  %v10420 = vrot.slane %v10294, 3
  %v10421 = vsel %vm1166, %v10419, %v10420
  %v10422 = vrot.slane %v10295, 3
  %v10423 = vsel %vm1166, %v10420, %v10422
  %v10456 = vadd.f32 %v10212, %v10346
  %v10457 = vadd.f32 %v10213, %v10348
  %v10458 = vadd.f32 %v10214, %v10351
  %v10459 = vadd.f32 %v10215, %v10353
  %v10460 = vadd.f32 %v10216, %v10356
  %v10461 = vadd.f32 %v10217, %v10358
  %v10462 = vadd.f32 %v10218, %v10361
  %v10463 = vadd.f32 %v10219, %v10363
  %v10464 = vadd.f32 %v10220, %v10366
  %v10465 = vadd.f32 %v10221, %v10368
  %v10466 = vadd.f32 %v10222, %v10371
  %v10467 = vadd.f32 %v10223, %v10373
  %v10468 = vadd.f32 %v10224, %v10376
  %v10469 = vadd.f32 %v10225, %v10378
  %v10470 = vadd.f32 %v10226, %v10381
  %v10471 = vadd.f32 %v10227, %v10383
  %v10472 = vadd.f32 %v10228, %v10386
  %v10473 = vadd.f32 %v10229, %v10388
  %v10474 = vadd.f32 %v10230, %v10391
  %v10475 = vadd.f32 %v10231, %v10393
  %v10476 = vadd.f32 %v10232, %v10396
  %v10477 = vadd.f32 %v10233, %v10398
  %v10478 = vadd.f32 %v10234, %v10401
  %v10479 = vadd.f32 %v10235, %v10403
  %v10480 = vadd.f32 %v10236, %v10406
  %v10481 = vadd.f32 %v10237, %v10408
  %v10482 = vadd.f32 %v10238, %v10411
  %v10483 = vadd.f32 %v10239, %v10413
  %v10484 = vadd.f32 %v10240, %v10416
  %v10485 = vadd.f32 %v10241, %v10418
  %v10486 = vadd.f32 %v10242, %v10421
  %v10487 = vadd.f32 %v10243, %v10423
  %v10488 = vlaneseq
  %v10489 = vshrl.u32 %v10488, 7
  %v10490 = vsub.s32 6, %v10489
  %v10491 = vrot.slane %v7807, %v10490
  %v10492 = vmul.f32 %v7759, %v10491
  %v10493 = vmul.f32 %v7589, %v10491
  %v10494 = vmul.f32 %v7791, %v10491
  %v10495 = vmul.f32 %v7758, %v10491
  %v10496 = vmul.f32 %v7586, %v10491
  %v10497 = vmul.f32 %v7790, %v10491
  %v10498 = vmul.f32 %v7757, %v10491
  %v10499 = vmul.f32 %v7583, %v10491
  %v10500 = vmul.f32 %v7789, %v10491
  %v10501 = vmul.f32 %v7760, %v10491
  %v10502 = vmul.f32 %v7592, %v10491
  %v10503 = vmul.f32 %v7792, %v10491
  %v10504 = vmul.f32 %v7761, %v10491
  %v10505 = vmul.f32 %v7595, %v10491
  %v10506 = vmul.f32 %v7793, %v10491
  %v10507 = vmul.f32 %v7762, %v10491
  %v10508 = vmul.f32 %v7598, %v10491
  %v10509 = vmul.f32 %v7794, %v10491
  %v10510 = vmul.f32 %v7763, %v10491
  %v10511 = vmul.f32 %v7601, %v10491
  %v10512 = vmul.f32 %v7795, %v10491
  %v10513 = vmul.f32 %v7764, %v10491
  %v10514 = vmul.f32 %v7604, %v10491
  %v10515 = vmul.f32 %v7796, %v10491
  %v10516 = vmul.f32 %v7765, %v10491
  %v10517 = vmul.f32 %v7607, %v10491
  %v10518 = vmul.f32 %v7797, %v10491
  %v10519 = vmul.f32 %v7766, %v10491
  %v10520 = vmul.f32 %v7610, %v10491
  %v10521 = vmul.f32 %v7798, %v10491
  %v10522 = vmul.f32 %v7767, %v10491
  %v10523 = vmul.f32 %v7613, %v10491
  %v10524 = vmul.f32 %v7799, %v10491
  %v10525 = vmul.f32 %v7768, %v10491
  %v10526 = vmul.f32 %v7616, %v10491
  %v10527 = vmul.f32 %v7800, %v10491
  %v10528 = vmul.f32 %v7769, %v10491
  %v10529 = vmul.f32 %v7619, %v10491
  %v10530 = vmul.f32 %v7801, %v10491
  %v10531 = vmul.f32 %v7770, %v10491
  %v10532 = vmul.f32 %v7622, %v10491
  %v10533 = vmul.f32 %v7802, %v10491
  %v10534 = vmul.f32 %v7771, %v10491
  %v10535 = vmul.f32 %v7625, %v10491
  %v10536 = vmul.f32 %v7803, %v10491
  %v10537 = vmul.f32 %v7772, %v10491
  %v10538 = vmul.f32 %v7628, %v10491
  %v10539 = vmul.f32 %v7804, %v10491
  %v10588 = vrot.slane %v10492, 4
  %v10589 = vrot.slane %v10493, 4
  %v10590 = vsel %vm1381, %v10588, %v10589
  %v10591 = vrot.slane %v10494, 4
  %v10592 = vsel %vm1381, %v10589, %v10591
  %v10593 = vrot.slane %v10495, 4
  %v10594 = vrot.slane %v10496, 4
  %v10595 = vsel %vm1381, %v10593, %v10594
  %v10596 = vrot.slane %v10497, 4
  %v10597 = vsel %vm1381, %v10594, %v10596
  %v10598 = vrot.slane %v10498, 4
  %v10599 = vrot.slane %v10499, 4
  %v10600 = vsel %vm1381, %v10598, %v10599
  %v10601 = vrot.slane %v10500, 4
  %v10602 = vsel %vm1381, %v10599, %v10601
  %v10603 = vrot.slane %v10501, 4
  %v10604 = vrot.slane %v10502, 4
  %v10605 = vsel %vm1381, %v10603, %v10604
  %v10606 = vrot.slane %v10503, 4
  %v10607 = vsel %vm1381, %v10604, %v10606
  %v10608 = vrot.slane %v10504, 4
  %v10609 = vrot.slane %v10505, 4
  %v10610 = vsel %vm1381, %v10608, %v10609
  %v10611 = vrot.slane %v10506, 4
  %v10612 = vsel %vm1381, %v10609, %v10611
  %v10613 = vrot.slane %v10507, 4
  %v10614 = vrot.slane %v10508, 4
  %v10615 = vsel %vm1381, %v10613, %v10614
  %v10616 = vrot.slane %v10509, 4
  %v10617 = vsel %vm1381, %v10614, %v10616
  %v10618 = vrot.slane %v10510, 4
  %v10619 = vrot.slane %v10511, 4
  %v10620 = vsel %vm1381, %v10618, %v10619
  %v10621 = vrot.slane %v10512, 4
  %v10622 = vsel %vm1381, %v10619, %v10621
  %v10623 = vrot.slane %v10513, 4
  %v10624 = vrot.slane %v10514, 4
  %v10625 = vsel %vm1381, %v10623, %v10624
  %v10626 = vrot.slane %v10515, 4
  %v10627 = vsel %vm1381, %v10624, %v10626
  %v10628 = vrot.slane %v10516, 4
  %v10629 = vrot.slane %v10517, 4
  %v10630 = vsel %vm1381, %v10628, %v10629
  %v10631 = vrot.slane %v10518, 4
  %v10632 = vsel %vm1381, %v10629, %v10631
  %v10633 = vrot.slane %v10519, 4
  %v10634 = vrot.slane %v10520, 4
  %v10635 = vsel %vm1381, %v10633, %v10634
  %v10636 = vrot.slane %v10521, 4
  %v10637 = vsel %vm1381, %v10634, %v10636
  %v10638 = vrot.slane %v10522, 4
  %v10639 = vrot.slane %v10523, 4
  %v10640 = vsel %vm1381, %v10638, %v10639
  %v10641 = vrot.slane %v10524, 4
  %v10642 = vsel %vm1381, %v10639, %v10641
  %v10643 = vrot.slane %v10525, 4
  %v10644 = vrot.slane %v10526, 4
  %v10645 = vsel %vm1381, %v10643, %v10644
  %v10646 = vrot.slane %v10527, 4
  %v10647 = vsel %vm1381, %v10644, %v10646
  %v10648 = vrot.slane %v10528, 4
  %v10649 = vrot.slane %v10529, 4
  %v10650 = vsel %vm1381, %v10648, %v10649
  %v10651 = vrot.slane %v10530, 4
  %v10652 = vsel %vm1381, %v10649, %v10651
  %v10653 = vrot.slane %v10531, 4
  %v10654 = vrot.slane %v10532, 4
  %v10655 = vsel %vm1381, %v10653, %v10654
  %v10656 = vrot.slane %v10533, 4
  %v10657 = vsel %vm1381, %v10654, %v10656
  %v10658 = vrot.slane %v10534, 4
  %v10659 = vrot.slane %v10535, 4
  %v10660 = vsel %vm1381, %v10658, %v10659
  %v10661 = vrot.slane %v10536, 4
  %v10662 = vsel %vm1381, %v10659, %v10661
  %v10663 = vrot.slane %v10537, 4
  %v10664 = vrot.slane %v10538, 4
  %v10665 = vsel %vm1381, %v10663, %v10664
  %v10666 = vrot.slane %v10539, 4
  %v10667 = vsel %vm1381, %v10664, %v10666
  %v10700 = vadd.f32 %v10456, %v10590
  %v10701 = vadd.f32 %v10457, %v10592
  %v10702 = vadd.f32 %v10458, %v10595
  %v10703 = vadd.f32 %v10459, %v10597
  %v10704 = vadd.f32 %v10460, %v10600
  %v10705 = vadd.f32 %v10461, %v10602
  %v10706 = vadd.f32 %v10462, %v10605
  %v10707 = vadd.f32 %v10463, %v10607
  %v10708 = vadd.f32 %v10464, %v10610
  %v10709 = vadd.f32 %v10465, %v10612
  %v10710 = vadd.f32 %v10466, %v10615
  %v10711 = vadd.f32 %v10467, %v10617
  %v10712 = vadd.f32 %v10468, %v10620
  %v10713 = vadd.f32 %v10469, %v10622
  %v10714 = vadd.f32 %v10470, %v10625
  %v10715 = vadd.f32 %v10471, %v10627
  %v10716 = vadd.f32 %v10472, %v10630
  %v10717 = vadd.f32 %v10473, %v10632
  %v10718 = vadd.f32 %v10474, %v10635
  %v10719 = vadd.f32 %v10475, %v10637
  %v10720 = vadd.f32 %v10476, %v10640
  %v10721 = vadd.f32 %v10477, %v10642
  %v10722 = vadd.f32 %v10478, %v10645
  %v10723 = vadd.f32 %v10479, %v10647
  %v10724 = vadd.f32 %v10480, %v10650
  %v10725 = vadd.f32 %v10481, %v10652
  %v10726 = vadd.f32 %v10482, %v10655
  %v10727 = vadd.f32 %v10483, %v10657
  %v10728 = vadd.f32 %v10484, %v10660
  %v10729 = vadd.f32 %v10485, %v10662
  %v10730 = vadd.f32 %v10486, %v10665
  %v10731 = vadd.f32 %v10487, %v10667
  %v10732 = vlaneseq
  %v10733 = vshrl.u32 %v10732, 7
  %v10734 = vsub.s32 7, %v10733
  %v10735 = vrot.slane %v7807, %v10734
  %v10736 = vmul.f32 %v7758, %v10735
  %v10737 = vmul.f32 %v7586, %v10735
  %v10738 = vmul.f32 %v7757, %v10735
  %v10739 = vmul.f32 %v7583, %v10735
  %v10740 = vmul.f32 %v7760, %v10735
  %v10741 = vmul.f32 %v7592, %v10735
  %v10742 = vmul.f32 %v7761, %v10735
  %v10743 = vmul.f32 %v7595, %v10735
  %v10744 = vmul.f32 %v7762, %v10735
  %v10745 = vmul.f32 %v7598, %v10735
  %v10746 = vmul.f32 %v7763, %v10735
  %v10747 = vmul.f32 %v7601, %v10735
  %v10748 = vmul.f32 %v7764, %v10735
  %v10749 = vmul.f32 %v7604, %v10735
  %v10750 = vmul.f32 %v7765, %v10735
  %v10751 = vmul.f32 %v7607, %v10735
  %v10752 = vmul.f32 %v7766, %v10735
  %v10753 = vmul.f32 %v7610, %v10735
  %v10754 = vmul.f32 %v7767, %v10735
  %v10755 = vmul.f32 %v7613, %v10735
  %v10756 = vmul.f32 %v7768, %v10735
  %v10757 = vmul.f32 %v7616, %v10735
  %v10758 = vmul.f32 %v7769, %v10735
  %v10759 = vmul.f32 %v7619, %v10735
  %v10760 = vmul.f32 %v7770, %v10735
  %v10761 = vmul.f32 %v7622, %v10735
  %v10762 = vmul.f32 %v7771, %v10735
  %v10763 = vmul.f32 %v7625, %v10735
  %v10764 = vmul.f32 %v7772, %v10735
  %v10765 = vmul.f32 %v7628, %v10735
  %v10766 = vadd.f32 %v10700, %v10736
  %v10767 = vadd.f32 %v10701, %v10737
  %v10768 = vadd.f32 %v10702, %v10738
  %v10769 = vadd.f32 %v10703, %v10739
  %v10770 = vadd.f32 %v10704, %v10740
  %v10771 = vadd.f32 %v10705, %v10741
  %v10772 = vadd.f32 %v10706, %v10742
  %v10773 = vadd.f32 %v10707, %v10743
  %v10774 = vadd.f32 %v10708, %v10744
  %v10775 = vadd.f32 %v10709, %v10745
  %v10776 = vadd.f32 %v10710, %v10746
  %v10777 = vadd.f32 %v10711, %v10747
  %v10778 = vadd.f32 %v10712, %v10748
  %v10779 = vadd.f32 %v10713, %v10749
  %v10780 = vadd.f32 %v10714, %v10750
  %v10781 = vadd.f32 %v10715, %v10751
  %v10782 = vadd.f32 %v10716, %v10752
  %v10783 = vadd.f32 %v10717, %v10753
  %v10784 = vadd.f32 %v10718, %v10754
  %v10785 = vadd.f32 %v10719, %v10755
  %v10786 = vadd.f32 %v10720, %v10756
  %v10787 = vadd.f32 %v10721, %v10757
  %v10788 = vadd.f32 %v10722, %v10758
  %v10789 = vadd.f32 %v10723, %v10759
  %v10790 = vadd.f32 %v10724, %v10760
  %v10791 = vadd.f32 %v10725, %v10761
  %v10792 = vadd.f32 %v10726, %v10762
  %v10793 = vadd.f32 %v10727, %v10763
  %v10794 = vadd.f32 %v10728, %v10764
  %v10795 = vadd.f32 %v10729, %v10765
  %v10796 = vadd.f32 %v10730, %v10762
  %v10797 = vadd.f32 %v10731, %v10763
  %v10798 = vlaneseq
  %v10799 = vshrl.u32 %v10798, 7
  %v10800 = vsub.s32 0, %v10799
  %v10801 = vrot.slane %v7808, %v10800
  %v10802 = vmul.f32 %v7758, %v10801
  %v10803 = vmul.f32 %v7586, %v10801
  %v10804 = vmul.f32 %v7790, %v10801
  %v10805 = vmul.f32 %v7757, %v10801
  %v10806 = vmul.f32 %v7583, %v10801
  %v10807 = vmul.f32 %v7789, %v10801
  %v10808 = vmul.f32 %v7760, %v10801
  %v10809 = vmul.f32 %v7592, %v10801
  %v10810 = vmul.f32 %v7792, %v10801
  %v10811 = vmul.f32 %v7761, %v10801
  %v10812 = vmul.f32 %v7595, %v10801
  %v10813 = vmul.f32 %v7793, %v10801
  %v10814 = vmul.f32 %v7762, %v10801
  %v10815 = vmul.f32 %v7598, %v10801
  %v10816 = vmul.f32 %v7794, %v10801
  %v10817 = vmul.f32 %v7763, %v10801
  %v10818 = vmul.f32 %v7601, %v10801
  %v10819 = vmul.f32 %v7795, %v10801
  %v10820 = vmul.f32 %v7764, %v10801
  %v10821 = vmul.f32 %v7604, %v10801
  %v10822 = vmul.f32 %v7796, %v10801
  %v10823 = vmul.f32 %v7765, %v10801
  %v10824 = vmul.f32 %v7607, %v10801
  %v10825 = vmul.f32 %v7797, %v10801
  %v10826 = vmul.f32 %v7766, %v10801
  %v10827 = vmul.f32 %v7610, %v10801
  %v10828 = vmul.f32 %v7798, %v10801
  %v10829 = vmul.f32 %v7767, %v10801
  %v10830 = vmul.f32 %v7613, %v10801
  %v10831 = vmul.f32 %v7799, %v10801
  %v10832 = vmul.f32 %v7768, %v10801
  %v10833 = vmul.f32 %v7616, %v10801
  %v10834 = vmul.f32 %v7800, %v10801
  %v10835 = vmul.f32 %v7769, %v10801
  %v10836 = vmul.f32 %v7619, %v10801
  %v10837 = vmul.f32 %v7801, %v10801
  %v10838 = vmul.f32 %v7770, %v10801
  %v10839 = vmul.f32 %v7622, %v10801
  %v10840 = vmul.f32 %v7802, %v10801
  %v10841 = vmul.f32 %v7771, %v10801
  %v10842 = vmul.f32 %v7625, %v10801
  %v10843 = vmul.f32 %v7803, %v10801
  %v10844 = vmul.f32 %v7772, %v10801
  %v10845 = vmul.f32 %v7628, %v10801
  %v10846 = vmul.f32 %v7804, %v10801
  %v10892 = vrot.slane %v10802, 1
  %v10893 = vrot.slane %v10803, 1
  %v10894 = vsel %vm736, %v10892, %v10893
  %v10895 = vrot.slane %v10804, 1
  %v10896 = vsel %vm736, %v10893, %v10895
  %v10897 = vrot.slane %v10805, 1
  %v10898 = vrot.slane %v10806, 1
  %v10899 = vsel %vm736, %v10897, %v10898
  %v10900 = vrot.slane %v10807, 1
  %v10901 = vsel %vm736, %v10898, %v10900
  %v10902 = vrot.slane %v10808, 1
  %v10903 = vrot.slane %v10809, 1
  %v10904 = vsel %vm736, %v10902, %v10903
  %v10905 = vrot.slane %v10810, 1
  %v10906 = vsel %vm736, %v10903, %v10905
  %v10907 = vrot.slane %v10811, 1
  %v10908 = vrot.slane %v10812, 1
  %v10909 = vsel %vm736, %v10907, %v10908
  %v10910 = vrot.slane %v10813, 1
  %v10911 = vsel %vm736, %v10908, %v10910
  %v10912 = vrot.slane %v10814, 1
  %v10913 = vrot.slane %v10815, 1
  %v10914 = vsel %vm736, %v10912, %v10913
  %v10915 = vrot.slane %v10816, 1
  %v10916 = vsel %vm736, %v10913, %v10915
  %v10917 = vrot.slane %v10817, 1
  %v10918 = vrot.slane %v10818, 1
  %v10919 = vsel %vm736, %v10917, %v10918
  %v10920 = vrot.slane %v10819, 1
  %v10921 = vsel %vm736, %v10918, %v10920
  %v10922 = vrot.slane %v10820, 1
  %v10923 = vrot.slane %v10821, 1
  %v10924 = vsel %vm736, %v10922, %v10923
  %v10925 = vrot.slane %v10822, 1
  %v10926 = vsel %vm736, %v10923, %v10925
  %v10927 = vrot.slane %v10823, 1
  %v10928 = vrot.slane %v10824, 1
  %v10929 = vsel %vm736, %v10927, %v10928
  %v10930 = vrot.slane %v10825, 1
  %v10931 = vsel %vm736, %v10928, %v10930
  %v10932 = vrot.slane %v10826, 1
  %v10933 = vrot.slane %v10827, 1
  %v10934 = vsel %vm736, %v10932, %v10933
  %v10935 = vrot.slane %v10828, 1
  %v10936 = vsel %vm736, %v10933, %v10935
  %v10937 = vrot.slane %v10829, 1
  %v10938 = vrot.slane %v10830, 1
  %v10939 = vsel %vm736, %v10937, %v10938
  %v10940 = vrot.slane %v10831, 1
  %v10941 = vsel %vm736, %v10938, %v10940
  %v10942 = vrot.slane %v10832, 1
  %v10943 = vrot.slane %v10833, 1
  %v10944 = vsel %vm736, %v10942, %v10943
  %v10945 = vrot.slane %v10834, 1
  %v10946 = vsel %vm736, %v10943, %v10945
  %v10947 = vrot.slane %v10835, 1
  %v10948 = vrot.slane %v10836, 1
  %v10949 = vsel %vm736, %v10947, %v10948
  %v10950 = vrot.slane %v10837, 1
  %v10951 = vsel %vm736, %v10948, %v10950
  %v10952 = vrot.slane %v10838, 1
  %v10953 = vrot.slane %v10839, 1
  %v10954 = vsel %vm736, %v10952, %v10953
  %v10955 = vrot.slane %v10840, 1
  %v10956 = vsel %vm736, %v10953, %v10955
  %v10957 = vrot.slane %v10841, 1
  %v10958 = vrot.slane %v10842, 1
  %v10959 = vsel %vm736, %v10957, %v10958
  %v10960 = vrot.slane %v10843, 1
  %v10961 = vsel %vm736, %v10958, %v10960
  %v10962 = vrot.slane %v10844, 1
  %v10963 = vrot.slane %v10845, 1
  %v10964 = vsel %vm736, %v10962, %v10963
  %v10965 = vrot.slane %v10846, 1
  %v10966 = vsel %vm736, %v10963, %v10965
  %v10997 = vadd.f32 %v10766, %v10894
  %v10998 = vadd.f32 %v10767, %v10896
  %v10999 = vadd.f32 %v10768, %v10899
  %v11000 = vadd.f32 %v10769, %v10901
  %v11001 = vadd.f32 %v10770, %v10904
  %v11002 = vadd.f32 %v10771, %v10906
  %v11003 = vadd.f32 %v10772, %v10909
  %v11004 = vadd.f32 %v10773, %v10911
  %v11005 = vadd.f32 %v10774, %v10914
  %v11006 = vadd.f32 %v10775, %v10916
  %v11007 = vadd.f32 %v10776, %v10919
  %v11008 = vadd.f32 %v10777, %v10921
  %v11009 = vadd.f32 %v10778, %v10924
  %v11010 = vadd.f32 %v10779, %v10926
  %v11011 = vadd.f32 %v10780, %v10929
  %v11012 = vadd.f32 %v10781, %v10931
  %v11013 = vadd.f32 %v10782, %v10934
  %v11014 = vadd.f32 %v10783, %v10936
  %v11015 = vadd.f32 %v10784, %v10939
  %v11016 = vadd.f32 %v10785, %v10941
  %v11017 = vadd.f32 %v10786, %v10944
  %v11018 = vadd.f32 %v10787, %v10946
  %v11019 = vadd.f32 %v10788, %v10949
  %v11020 = vadd.f32 %v10789, %v10951
  %v11021 = vadd.f32 %v10790, %v10954
  %v11022 = vadd.f32 %v10791, %v10956
  %v11023 = vadd.f32 %v10792, %v10959
  %v11024 = vadd.f32 %v10793, %v10961
  %v11025 = vadd.f32 %v10794, %v10964
  %v11026 = vadd.f32 %v10795, %v10966
  %v11027 = vadd.f32 %v10796, %v10959
  %v11028 = vadd.f32 %v10797, %v10961
  %v11029 = vlaneseq
  %v11030 = vshrl.u32 %v11029, 7
  %v11031 = vsub.s32 1, %v11030
  %v11032 = vrot.slane %v7808, %v11031
  %v11033 = vmul.f32 %v7758, %v11032
  %v11034 = vmul.f32 %v7586, %v11032
  %v11035 = vmul.f32 %v7790, %v11032
  %v11036 = vmul.f32 %v7757, %v11032
  %v11037 = vmul.f32 %v7583, %v11032
  %v11038 = vmul.f32 %v7789, %v11032
  %v11039 = vmul.f32 %v7760, %v11032
  %v11040 = vmul.f32 %v7592, %v11032
  %v11041 = vmul.f32 %v7792, %v11032
  %v11042 = vmul.f32 %v7761, %v11032
  %v11043 = vmul.f32 %v7595, %v11032
  %v11044 = vmul.f32 %v7793, %v11032
  %v11045 = vmul.f32 %v7762, %v11032
  %v11046 = vmul.f32 %v7598, %v11032
  %v11047 = vmul.f32 %v7794, %v11032
  %v11048 = vmul.f32 %v7763, %v11032
  %v11049 = vmul.f32 %v7601, %v11032
  %v11050 = vmul.f32 %v7795, %v11032
  %v11051 = vmul.f32 %v7764, %v11032
  %v11052 = vmul.f32 %v7604, %v11032
  %v11053 = vmul.f32 %v7796, %v11032
  %v11054 = vmul.f32 %v7765, %v11032
  %v11055 = vmul.f32 %v7607, %v11032
  %v11056 = vmul.f32 %v7797, %v11032
  %v11057 = vmul.f32 %v7766, %v11032
  %v11058 = vmul.f32 %v7610, %v11032
  %v11059 = vmul.f32 %v7798, %v11032
  %v11060 = vmul.f32 %v7767, %v11032
  %v11061 = vmul.f32 %v7613, %v11032
  %v11062 = vmul.f32 %v7799, %v11032
  %v11063 = vmul.f32 %v7768, %v11032
  %v11064 = vmul.f32 %v7616, %v11032
  %v11065 = vmul.f32 %v7800, %v11032
  %v11066 = vmul.f32 %v7769, %v11032
  %v11067 = vmul.f32 %v7619, %v11032
  %v11068 = vmul.f32 %v7801, %v11032
  %v11069 = vmul.f32 %v7770, %v11032
  %v11070 = vmul.f32 %v7622, %v11032
  %v11071 = vmul.f32 %v7802, %v11032
  %v11072 = vmul.f32 %v7771, %v11032
  %v11073 = vmul.f32 %v7625, %v11032
  %v11074 = vmul.f32 %v7803, %v11032
  %v11075 = vmul.f32 %v7772, %v11032
  %v11076 = vmul.f32 %v7628, %v11032
  %v11077 = vmul.f32 %v7804, %v11032
  %v11123 = vrot.slane %v11033, 2
  %v11124 = vrot.slane %v11034, 2
  %v11125 = vsel %vm951, %v11123, %v11124
  %v11126 = vrot.slane %v11035, 2
  %v11127 = vsel %vm951, %v11124, %v11126
  %v11128 = vrot.slane %v11036, 2
  %v11129 = vrot.slane %v11037, 2
  %v11130 = vsel %vm951, %v11128, %v11129
  %v11131 = vrot.slane %v11038, 2
  %v11132 = vsel %vm951, %v11129, %v11131
  %v11133 = vrot.slane %v11039, 2
  %v11134 = vrot.slane %v11040, 2
  %v11135 = vsel %vm951, %v11133, %v11134
  %v11136 = vrot.slane %v11041, 2
  %v11137 = vsel %vm951, %v11134, %v11136
  %v11138 = vrot.slane %v11042, 2
  %v11139 = vrot.slane %v11043, 2
  %v11140 = vsel %vm951, %v11138, %v11139
  %v11141 = vrot.slane %v11044, 2
  %v11142 = vsel %vm951, %v11139, %v11141
  %v11143 = vrot.slane %v11045, 2
  %v11144 = vrot.slane %v11046, 2
  %v11145 = vsel %vm951, %v11143, %v11144
  %v11146 = vrot.slane %v11047, 2
  %v11147 = vsel %vm951, %v11144, %v11146
  %v11148 = vrot.slane %v11048, 2
  %v11149 = vrot.slane %v11049, 2
  %v11150 = vsel %vm951, %v11148, %v11149
  %v11151 = vrot.slane %v11050, 2
  %v11152 = vsel %vm951, %v11149, %v11151
  %v11153 = vrot.slane %v11051, 2
  %v11154 = vrot.slane %v11052, 2
  %v11155 = vsel %vm951, %v11153, %v11154
  %v11156 = vrot.slane %v11053, 2
  %v11157 = vsel %vm951, %v11154, %v11156
  %v11158 = vrot.slane %v11054, 2
  %v11159 = vrot.slane %v11055, 2
  %v11160 = vsel %vm951, %v11158, %v11159
  %v11161 = vrot.slane %v11056, 2
  %v11162 = vsel %vm951, %v11159, %v11161
  %v11163 = vrot.slane %v11057, 2
  %v11164 = vrot.slane %v11058, 2
  %v11165 = vsel %vm951, %v11163, %v11164
  %v11166 = vrot.slane %v11059, 2
  %v11167 = vsel %vm951, %v11164, %v11166
  %v11168 = vrot.slane %v11060, 2
  %v11169 = vrot.slane %v11061, 2
  %v11170 = vsel %vm951, %v11168, %v11169
  %v11171 = vrot.slane %v11062, 2
  %v11172 = vsel %vm951, %v11169, %v11171
  %v11173 = vrot.slane %v11063, 2
  %v11174 = vrot.slane %v11064, 2
  %v11175 = vsel %vm951, %v11173, %v11174
  %v11176 = vrot.slane %v11065, 2
  %v11177 = vsel %vm951, %v11174, %v11176
  %v11178 = vrot.slane %v11066, 2
  %v11179 = vrot.slane %v11067, 2
  %v11180 = vsel %vm951, %v11178, %v11179
  %v11181 = vrot.slane %v11068, 2
  %v11182 = vsel %vm951, %v11179, %v11181
  %v11183 = vrot.slane %v11069, 2
  %v11184 = vrot.slane %v11070, 2
  %v11185 = vsel %vm951, %v11183, %v11184
  %v11186 = vrot.slane %v11071, 2
  %v11187 = vsel %vm951, %v11184, %v11186
  %v11188 = vrot.slane %v11072, 2
  %v11189 = vrot.slane %v11073, 2
  %v11190 = vsel %vm951, %v11188, %v11189
  %v11191 = vrot.slane %v11074, 2
  %v11192 = vsel %vm951, %v11189, %v11191
  %v11193 = vrot.slane %v11075, 2
  %v11194 = vrot.slane %v11076, 2
  %v11195 = vsel %vm951, %v11193, %v11194
  %v11196 = vrot.slane %v11077, 2
  %v11197 = vsel %vm951, %v11194, %v11196
  %v11228 = vadd.f32 %v10997, %v11125
  %v11229 = vadd.f32 %v10998, %v11127
  %v11230 = vadd.f32 %v10999, %v11130
  %v11231 = vadd.f32 %v11000, %v11132
  %v11232 = vadd.f32 %v11001, %v11135
  %v11233 = vadd.f32 %v11002, %v11137
  %v11234 = vadd.f32 %v11003, %v11140
  %v11235 = vadd.f32 %v11004, %v11142
  %v11236 = vadd.f32 %v11005, %v11145
  %v11237 = vadd.f32 %v11006, %v11147
  %v11238 = vadd.f32 %v11007, %v11150
  %v11239 = vadd.f32 %v11008, %v11152
  %v11240 = vadd.f32 %v11009, %v11155
  %v11241 = vadd.f32 %v11010, %v11157
  %v11242 = vadd.f32 %v11011, %v11160
  %v11243 = vadd.f32 %v11012, %v11162
  %v11244 = vadd.f32 %v11013, %v11165
  %v11245 = vadd.f32 %v11014, %v11167
  %v11246 = vadd.f32 %v11015, %v11170
  %v11247 = vadd.f32 %v11016, %v11172
  %v11248 = vadd.f32 %v11017, %v11175
  %v11249 = vadd.f32 %v11018, %v11177
  %v11250 = vadd.f32 %v11019, %v11180
  %v11251 = vadd.f32 %v11020, %v11182
  %v11252 = vadd.f32 %v11021, %v11185
  %v11253 = vadd.f32 %v11022, %v11187
  %v11254 = vadd.f32 %v11023, %v11190
  %v11255 = vadd.f32 %v11024, %v11192
  %v11256 = vadd.f32 %v11025, %v11195
  %v11257 = vadd.f32 %v11026, %v11197
  %v11258 = vadd.f32 %v11027, %v11190
  %v11259 = vadd.f32 %v11028, %v11192
  %v11260 = vlaneseq
  %v11261 = vshrl.u32 %v11260, 7
  %v11262 = vsub.s32 2, %v11261
  %v11263 = vrot.slane %v7808, %v11262
  %v11264 = vmul.f32 %v7758, %v11263
  %v11265 = vmul.f32 %v7586, %v11263
  %v11266 = vmul.f32 %v7790, %v11263
  %v11267 = vmul.f32 %v7757, %v11263
  %v11268 = vmul.f32 %v7583, %v11263
  %v11269 = vmul.f32 %v7789, %v11263
  %v11270 = vmul.f32 %v7760, %v11263
  %v11271 = vmul.f32 %v7592, %v11263
  %v11272 = vmul.f32 %v7792, %v11263
  %v11273 = vmul.f32 %v7761, %v11263
  %v11274 = vmul.f32 %v7595, %v11263
  %v11275 = vmul.f32 %v7793, %v11263
  %v11276 = vmul.f32 %v7762, %v11263
  %v11277 = vmul.f32 %v7598, %v11263
  %v11278 = vmul.f32 %v7794, %v11263
  %v11279 = vmul.f32 %v7763, %v11263
  %v11280 = vmul.f32 %v7601, %v11263
  %v11281 = vmul.f32 %v7795, %v11263
  %v11282 = vmul.f32 %v7764, %v11263
  %v11283 = vmul.f32 %v7604, %v11263
  %v11284 = vmul.f32 %v7796, %v11263
  %v11285 = vmul.f32 %v7765, %v11263
  %v11286 = vmul.f32 %v7607, %v11263
  %v11287 = vmul.f32 %v7797, %v11263
  %v11288 = vmul.f32 %v7766, %v11263
  %v11289 = vmul.f32 %v7610, %v11263
  %v11290 = vmul.f32 %v7798, %v11263
  %v11291 = vmul.f32 %v7767, %v11263
  %v11292 = vmul.f32 %v7613, %v11263
  %v11293 = vmul.f32 %v7799, %v11263
  %v11294 = vmul.f32 %v7768, %v11263
  %v11295 = vmul.f32 %v7616, %v11263
  %v11296 = vmul.f32 %v7800, %v11263
  %v11297 = vmul.f32 %v7769, %v11263
  %v11298 = vmul.f32 %v7619, %v11263
  %v11299 = vmul.f32 %v7801, %v11263
  %v11300 = vmul.f32 %v7770, %v11263
  %v11301 = vmul.f32 %v7622, %v11263
  %v11302 = vmul.f32 %v7802, %v11263
  %v11303 = vmul.f32 %v7771, %v11263
  %v11304 = vmul.f32 %v7625, %v11263
  %v11305 = vmul.f32 %v7803, %v11263
  %v11306 = vmul.f32 %v7772, %v11263
  %v11307 = vmul.f32 %v7628, %v11263
  %v11308 = vmul.f32 %v7804, %v11263
  %v11354 = vrot.slane %v11264, 3
  %v11355 = vrot.slane %v11265, 3
  %v11356 = vsel %vm1166, %v11354, %v11355
  %v11357 = vrot.slane %v11266, 3
  %v11358 = vsel %vm1166, %v11355, %v11357
  %v11359 = vrot.slane %v11267, 3
  %v11360 = vrot.slane %v11268, 3
  %v11361 = vsel %vm1166, %v11359, %v11360
  %v11362 = vrot.slane %v11269, 3
  %v11363 = vsel %vm1166, %v11360, %v11362
  %v11364 = vrot.slane %v11270, 3
  %v11365 = vrot.slane %v11271, 3
  %v11366 = vsel %vm1166, %v11364, %v11365
  %v11367 = vrot.slane %v11272, 3
  %v11368 = vsel %vm1166, %v11365, %v11367
  %v11369 = vrot.slane %v11273, 3
  %v11370 = vrot.slane %v11274, 3
  %v11371 = vsel %vm1166, %v11369, %v11370
  %v11372 = vrot.slane %v11275, 3
  %v11373 = vsel %vm1166, %v11370, %v11372
  %v11374 = vrot.slane %v11276, 3
  %v11375 = vrot.slane %v11277, 3
  %v11376 = vsel %vm1166, %v11374, %v11375
  %v11377 = vrot.slane %v11278, 3
  %v11378 = vsel %vm1166, %v11375, %v11377
  %v11379 = vrot.slane %v11279, 3
  %v11380 = vrot.slane %v11280, 3
  %v11381 = vsel %vm1166, %v11379, %v11380
  %v11382 = vrot.slane %v11281, 3
  %v11383 = vsel %vm1166, %v11380, %v11382
  %v11384 = vrot.slane %v11282, 3
  %v11385 = vrot.slane %v11283, 3
  %v11386 = vsel %vm1166, %v11384, %v11385
  %v11387 = vrot.slane %v11284, 3
  %v11388 = vsel %vm1166, %v11385, %v11387
  %v11389 = vrot.slane %v11285, 3
  %v11390 = vrot.slane %v11286, 3
  %v11391 = vsel %vm1166, %v11389, %v11390
  %v11392 = vrot.slane %v11287, 3
  %v11393 = vsel %vm1166, %v11390, %v11392
  %v11394 = vrot.slane %v11288, 3
  %v11395 = vrot.slane %v11289, 3
  %v11396 = vsel %vm1166, %v11394, %v11395
  %v11397 = vrot.slane %v11290, 3
  %v11398 = vsel %vm1166, %v11395, %v11397
  %v11399 = vrot.slane %v11291, 3
  %v11400 = vrot.slane %v11292, 3
  %v11401 = vsel %vm1166, %v11399, %v11400
  %v11402 = vrot.slane %v11293, 3
  %v11403 = vsel %vm1166, %v11400, %v11402
  %v11404 = vrot.slane %v11294, 3
  %v11405 = vrot.slane %v11295, 3
  %v11406 = vsel %vm1166, %v11404, %v11405
  %v11407 = vrot.slane %v11296, 3
  %v11408 = vsel %vm1166, %v11405, %v11407
  %v11409 = vrot.slane %v11297, 3
  %v11410 = vrot.slane %v11298, 3
  %v11411 = vsel %vm1166, %v11409, %v11410
  %v11412 = vrot.slane %v11299, 3
  %v11413 = vsel %vm1166, %v11410, %v11412
  %v11414 = vrot.slane %v11300, 3
  %v11415 = vrot.slane %v11301, 3
  %v11416 = vsel %vm1166, %v11414, %v11415
  %v11417 = vrot.slane %v11302, 3
  %v11418 = vsel %vm1166, %v11415, %v11417
  %v11419 = vrot.slane %v11303, 3
  %v11420 = vrot.slane %v11304, 3
  %v11421 = vsel %vm1166, %v11419, %v11420
  %v11422 = vrot.slane %v11305, 3
  %v11423 = vsel %vm1166, %v11420, %v11422
  %v11424 = vrot.slane %v11306, 3
  %v11425 = vrot.slane %v11307, 3
  %v11426 = vsel %vm1166, %v11424, %v11425
  %v11427 = vrot.slane %v11308, 3
  %v11428 = vsel %vm1166, %v11425, %v11427
  %v11459 = vadd.f32 %v11228, %v11356
  %v11460 = vadd.f32 %v11229, %v11358
  %v11461 = vadd.f32 %v11230, %v11361
  %v11462 = vadd.f32 %v11231, %v11363
  %v11463 = vadd.f32 %v11232, %v11366
  %v11464 = vadd.f32 %v11233, %v11368
  %v11465 = vadd.f32 %v11234, %v11371
  %v11466 = vadd.f32 %v11235, %v11373
  %v11467 = vadd.f32 %v11236, %v11376
  %v11468 = vadd.f32 %v11237, %v11378
  %v11469 = vadd.f32 %v11238, %v11381
  %v11470 = vadd.f32 %v11239, %v11383
  %v11471 = vadd.f32 %v11240, %v11386
  %v11472 = vadd.f32 %v11241, %v11388
  %v11473 = vadd.f32 %v11242, %v11391
  %v11474 = vadd.f32 %v11243, %v11393
  %v11475 = vadd.f32 %v11244, %v11396
  %v11476 = vadd.f32 %v11245, %v11398
  %v11477 = vadd.f32 %v11246, %v11401
  %v11478 = vadd.f32 %v11247, %v11403
  %v11479 = vadd.f32 %v11248, %v11406
  %v11480 = vadd.f32 %v11249, %v11408
  %v11481 = vadd.f32 %v11250, %v11411
  %v11482 = vadd.f32 %v11251, %v11413
  %v11483 = vadd.f32 %v11252, %v11416
  %v11484 = vadd.f32 %v11253, %v11418
  %v11485 = vadd.f32 %v11254, %v11421
  %v11486 = vadd.f32 %v11255, %v11423
  %v11487 = vadd.f32 %v11256, %v11426
  %v11488 = vadd.f32 %v11257, %v11428
  %v11489 = vadd.f32 %v11258, %v11421
  %v11490 = vadd.f32 %v11259, %v11423
  %v11491 = vlaneseq
  %v11492 = vshrl.u32 %v11491, 7
  %v11493 = vsub.s32 3, %v11492
  %v11494 = vrot.slane %v7808, %v11493
  %v11495 = vmul.f32 %v7758, %v11494
  %v11496 = vmul.f32 %v7586, %v11494
  %v11497 = vmul.f32 %v7790, %v11494
  %v11498 = vmul.f32 %v7757, %v11494
  %v11499 = vmul.f32 %v7583, %v11494
  %v11500 = vmul.f32 %v7789, %v11494
  %v11501 = vmul.f32 %v7760, %v11494
  %v11502 = vmul.f32 %v7592, %v11494
  %v11503 = vmul.f32 %v7792, %v11494
  %v11504 = vmul.f32 %v7761, %v11494
  %v11505 = vmul.f32 %v7595, %v11494
  %v11506 = vmul.f32 %v7793, %v11494
  %v11507 = vmul.f32 %v7762, %v11494
  %v11508 = vmul.f32 %v7598, %v11494
  %v11509 = vmul.f32 %v7794, %v11494
  %v11510 = vmul.f32 %v7763, %v11494
  %v11511 = vmul.f32 %v7601, %v11494
  %v11512 = vmul.f32 %v7795, %v11494
  %v11513 = vmul.f32 %v7764, %v11494
  %v11514 = vmul.f32 %v7604, %v11494
  %v11515 = vmul.f32 %v7796, %v11494
  %v11516 = vmul.f32 %v7765, %v11494
  %v11517 = vmul.f32 %v7607, %v11494
  %v11518 = vmul.f32 %v7797, %v11494
  %v11519 = vmul.f32 %v7766, %v11494
  %v11520 = vmul.f32 %v7610, %v11494
  %v11521 = vmul.f32 %v7798, %v11494
  %v11522 = vmul.f32 %v7767, %v11494
  %v11523 = vmul.f32 %v7613, %v11494
  %v11524 = vmul.f32 %v7799, %v11494
  %v11525 = vmul.f32 %v7768, %v11494
  %v11526 = vmul.f32 %v7616, %v11494
  %v11527 = vmul.f32 %v7800, %v11494
  %v11528 = vmul.f32 %v7769, %v11494
  %v11529 = vmul.f32 %v7619, %v11494
  %v11530 = vmul.f32 %v7801, %v11494
  %v11531 = vmul.f32 %v7770, %v11494
  %v11532 = vmul.f32 %v7622, %v11494
  %v11533 = vmul.f32 %v7802, %v11494
  %v11534 = vmul.f32 %v7771, %v11494
  %v11535 = vmul.f32 %v7625, %v11494
  %v11536 = vmul.f32 %v7803, %v11494
  %v11537 = vmul.f32 %v7772, %v11494
  %v11538 = vmul.f32 %v7628, %v11494
  %v11539 = vmul.f32 %v7804, %v11494
  %v11585 = vrot.slane %v11495, 4
  %v11586 = vrot.slane %v11496, 4
  %v11587 = vsel %vm1381, %v11585, %v11586
  %v11588 = vrot.slane %v11497, 4
  %v11589 = vsel %vm1381, %v11586, %v11588
  %v11590 = vrot.slane %v11498, 4
  %v11591 = vrot.slane %v11499, 4
  %v11592 = vsel %vm1381, %v11590, %v11591
  %v11593 = vrot.slane %v11500, 4
  %v11594 = vsel %vm1381, %v11591, %v11593
  %v11595 = vrot.slane %v11501, 4
  %v11596 = vrot.slane %v11502, 4
  %v11597 = vsel %vm1381, %v11595, %v11596
  %v11598 = vrot.slane %v11503, 4
  %v11599 = vsel %vm1381, %v11596, %v11598
  %v11600 = vrot.slane %v11504, 4
  %v11601 = vrot.slane %v11505, 4
  %v11602 = vsel %vm1381, %v11600, %v11601
  %v11603 = vrot.slane %v11506, 4
  %v11604 = vsel %vm1381, %v11601, %v11603
  %v11605 = vrot.slane %v11507, 4
  %v11606 = vrot.slane %v11508, 4
  %v11607 = vsel %vm1381, %v11605, %v11606
  %v11608 = vrot.slane %v11509, 4
  %v11609 = vsel %vm1381, %v11606, %v11608
  %v11610 = vrot.slane %v11510, 4
  %v11611 = vrot.slane %v11511, 4
  %v11612 = vsel %vm1381, %v11610, %v11611
  %v11613 = vrot.slane %v11512, 4
  %v11614 = vsel %vm1381, %v11611, %v11613
  %v11615 = vrot.slane %v11513, 4
  %v11616 = vrot.slane %v11514, 4
  %v11617 = vsel %vm1381, %v11615, %v11616
  %v11618 = vrot.slane %v11515, 4
  %v11619 = vsel %vm1381, %v11616, %v11618
  %v11620 = vrot.slane %v11516, 4
  %v11621 = vrot.slane %v11517, 4
  %v11622 = vsel %vm1381, %v11620, %v11621
  %v11623 = vrot.slane %v11518, 4
  %v11624 = vsel %vm1381, %v11621, %v11623
  %v11625 = vrot.slane %v11519, 4
  %v11626 = vrot.slane %v11520, 4
  %v11627 = vsel %vm1381, %v11625, %v11626
  %v11628 = vrot.slane %v11521, 4
  %v11629 = vsel %vm1381, %v11626, %v11628
  %v11630 = vrot.slane %v11522, 4
  %v11631 = vrot.slane %v11523, 4
  %v11632 = vsel %vm1381, %v11630, %v11631
  %v11633 = vrot.slane %v11524, 4
  %v11634 = vsel %vm1381, %v11631, %v11633
  %v11635 = vrot.slane %v11525, 4
  %v11636 = vrot.slane %v11526, 4
  %v11637 = vsel %vm1381, %v11635, %v11636
  %v11638 = vrot.slane %v11527, 4
  %v11639 = vsel %vm1381, %v11636, %v11638
  %v11640 = vrot.slane %v11528, 4
  %v11641 = vrot.slane %v11529, 4
  %v11642 = vsel %vm1381, %v11640, %v11641
  %v11643 = vrot.slane %v11530, 4
  %v11644 = vsel %vm1381, %v11641, %v11643
  %v11645 = vrot.slane %v11531, 4
  %v11646 = vrot.slane %v11532, 4
  %v11647 = vsel %vm1381, %v11645, %v11646
  %v11648 = vrot.slane %v11533, 4
  %v11649 = vsel %vm1381, %v11646, %v11648
  %v11650 = vrot.slane %v11534, 4
  %v11651 = vrot.slane %v11535, 4
  %v11652 = vsel %vm1381, %v11650, %v11651
  %v11653 = vrot.slane %v11536, 4
  %v11654 = vsel %vm1381, %v11651, %v11653
  %v11655 = vrot.slane %v11537, 4
  %v11656 = vrot.slane %v11538, 4
  %v11657 = vsel %vm1381, %v11655, %v11656
  %v11658 = vrot.slane %v11539, 4
  %v11659 = vsel %vm1381, %v11656, %v11658
  %v11690 = vadd.f32 %v11459, %v11587
  %v11691 = vadd.f32 %v11460, %v11589
  %v11692 = vadd.f32 %v11461, %v11592
  %v11693 = vadd.f32 %v11462, %v11594
  %v11694 = vadd.f32 %v11463, %v11597
  %v11695 = vadd.f32 %v11464, %v11599
  %v11696 = vadd.f32 %v11465, %v11602
  %v11697 = vadd.f32 %v11466, %v11604
  %v11698 = vadd.f32 %v11467, %v11607
  %v11699 = vadd.f32 %v11468, %v11609
  %v11700 = vadd.f32 %v11469, %v11612
  %v11701 = vadd.f32 %v11470, %v11614
  %v11702 = vadd.f32 %v11471, %v11617
  %v11703 = vadd.f32 %v11472, %v11619
  %v11704 = vadd.f32 %v11473, %v11622
  %v11705 = vadd.f32 %v11474, %v11624
  %v11706 = vadd.f32 %v11475, %v11627
  %v11707 = vadd.f32 %v11476, %v11629
  %v11708 = vadd.f32 %v11477, %v11632
  %v11709 = vadd.f32 %v11478, %v11634
  %v11710 = vadd.f32 %v11479, %v11637
  %v11711 = vadd.f32 %v11480, %v11639
  %v11712 = vadd.f32 %v11481, %v11642
  %v11713 = vadd.f32 %v11482, %v11644
  %v11714 = vadd.f32 %v11483, %v11647
  %v11715 = vadd.f32 %v11484, %v11649
  %v11716 = vadd.f32 %v11485, %v11652
  %v11717 = vadd.f32 %v11486, %v11654
  %v11718 = vadd.f32 %v11487, %v11657
  %v11719 = vadd.f32 %v11488, %v11659
  %v11720 = vadd.f32 %v11489, %v11652
  %v11721 = vadd.f32 %v11490, %v11654
  %v11722 = vlaneseq
  %v11723 = vshrl.u32 %v11722, 7
  %v11724 = vsub.s32 4, %v11723
  %v11725 = vrot.slane %v7808, %v11724
  %v11726 = vmul.f32 %v7757, %v11725
  %v11727 = vmul.f32 %v7583, %v11725
  %v11728 = vmul.f32 %v7760, %v11725
  %v11729 = vmul.f32 %v7592, %v11725
  %v11730 = vmul.f32 %v7761, %v11725
  %v11731 = vmul.f32 %v7595, %v11725
  %v11732 = vmul.f32 %v7762, %v11725
  %v11733 = vmul.f32 %v7598, %v11725
  %v11734 = vmul.f32 %v7763, %v11725
  %v11735 = vmul.f32 %v7601, %v11725
  %v11736 = vmul.f32 %v7764, %v11725
  %v11737 = vmul.f32 %v7604, %v11725
  %v11738 = vmul.f32 %v7765, %v11725
  %v11739 = vmul.f32 %v7607, %v11725
  %v11740 = vmul.f32 %v7766, %v11725
  %v11741 = vmul.f32 %v7610, %v11725
  %v11742 = vmul.f32 %v7767, %v11725
  %v11743 = vmul.f32 %v7613, %v11725
  %v11744 = vmul.f32 %v7768, %v11725
  %v11745 = vmul.f32 %v7616, %v11725
  %v11746 = vmul.f32 %v7769, %v11725
  %v11747 = vmul.f32 %v7619, %v11725
  %v11748 = vmul.f32 %v7770, %v11725
  %v11749 = vmul.f32 %v7622, %v11725
  %v11750 = vmul.f32 %v7771, %v11725
  %v11751 = vmul.f32 %v7625, %v11725
  %v11752 = vmul.f32 %v7772, %v11725
  %v11753 = vmul.f32 %v7628, %v11725
  %v11754 = vadd.f32 %v11690, %v11726
  %v11755 = vadd.f32 %v11691, %v11727
  %v11756 = vadd.f32 %v11692, %v11728
  %v11757 = vadd.f32 %v11693, %v11729
  %v11758 = vadd.f32 %v11694, %v11730
  %v11759 = vadd.f32 %v11695, %v11731
  %v11760 = vadd.f32 %v11696, %v11732
  %v11761 = vadd.f32 %v11697, %v11733
  %v11762 = vadd.f32 %v11698, %v11734
  %v11763 = vadd.f32 %v11699, %v11735
  %v11764 = vadd.f32 %v11700, %v11736
  %v11765 = vadd.f32 %v11701, %v11737
  %v11766 = vadd.f32 %v11702, %v11738
  %v11767 = vadd.f32 %v11703, %v11739
  %v11768 = vadd.f32 %v11704, %v11740
  %v11769 = vadd.f32 %v11705, %v11741
  %v11770 = vadd.f32 %v11706, %v11742
  %v11771 = vadd.f32 %v11707, %v11743
  %v11772 = vadd.f32 %v11708, %v11744
  %v11773 = vadd.f32 %v11709, %v11745
  %v11774 = vadd.f32 %v11710, %v11746
  %v11775 = vadd.f32 %v11711, %v11747
  %v11776 = vadd.f32 %v11712, %v11748
  %v11777 = vadd.f32 %v11713, %v11749
  %v11778 = vadd.f32 %v11714, %v11750
  %v11779 = vadd.f32 %v11715, %v11751
  %v11780 = vadd.f32 %v11716, %v11752
  %v11781 = vadd.f32 %v11717, %v11753
  %v11782 = vadd.f32 %v11718, %v11750
  %v11783 = vadd.f32 %v11719, %v11751
  %v11784 = vadd.f32 %v11720, %v11748
  %v11785 = vadd.f32 %v11721, %v11749
  %v11786 = vlaneseq
  %v11787 = vshrl.u32 %v11786, 7
  %v11788 = vsub.s32 5, %v11787
  %v11789 = vrot.slane %v7808, %v11788
  %v11790 = vmul.f32 %v7757, %v11789
  %v11791 = vmul.f32 %v7583, %v11789
  %v11792 = vmul.f32 %v7789, %v11789
  %v11793 = vmul.f32 %v7760, %v11789
  %v11794 = vmul.f32 %v7592, %v11789
  %v11795 = vmul.f32 %v7792, %v11789
  %v11796 = vmul.f32 %v7761, %v11789
  %v11797 = vmul.f32 %v7595, %v11789
  %v11798 = vmul.f32 %v7793, %v11789
  %v11799 = vmul.f32 %v7762, %v11789
  %v11800 = vmul.f32 %v7598, %v11789
  %v11801 = vmul.f32 %v7794, %v11789
  %v11802 = vmul.f32 %v7763, %v11789
  %v11803 = vmul.f32 %v7601, %v11789
  %v11804 = vmul.f32 %v7795, %v11789
  %v11805 = vmul.f32 %v7764, %v11789
  %v11806 = vmul.f32 %v7604, %v11789
  %v11807 = vmul.f32 %v7796, %v11789
  %v11808 = vmul.f32 %v7765, %v11789
  %v11809 = vmul.f32 %v7607, %v11789
  %v11810 = vmul.f32 %v7797, %v11789
  %v11811 = vmul.f32 %v7766, %v11789
  %v11812 = vmul.f32 %v7610, %v11789
  %v11813 = vmul.f32 %v7798, %v11789
  %v11814 = vmul.f32 %v7767, %v11789
  %v11815 = vmul.f32 %v7613, %v11789
  %v11816 = vmul.f32 %v7799, %v11789
  %v11817 = vmul.f32 %v7768, %v11789
  %v11818 = vmul.f32 %v7616, %v11789
  %v11819 = vmul.f32 %v7800, %v11789
  %v11820 = vmul.f32 %v7769, %v11789
  %v11821 = vmul.f32 %v7619, %v11789
  %v11822 = vmul.f32 %v7801, %v11789
  %v11823 = vmul.f32 %v7770, %v11789
  %v11824 = vmul.f32 %v7622, %v11789
  %v11825 = vmul.f32 %v7802, %v11789
  %v11826 = vmul.f32 %v7771, %v11789
  %v11827 = vmul.f32 %v7625, %v11789
  %v11828 = vmul.f32 %v7803, %v11789
  %v11829 = vmul.f32 %v7772, %v11789
  %v11830 = vmul.f32 %v7628, %v11789
  %v11831 = vmul.f32 %v7804, %v11789
  %v11874 = vrot.slane %v11790, 1
  %v11875 = vrot.slane %v11791, 1
  %v11876 = vsel %vm736, %v11874, %v11875
  %v11877 = vrot.slane %v11792, 1
  %v11878 = vsel %vm736, %v11875, %v11877
  %v11879 = vrot.slane %v11793, 1
  %v11880 = vrot.slane %v11794, 1
  %v11881 = vsel %vm736, %v11879, %v11880
  %v11882 = vrot.slane %v11795, 1
  %v11883 = vsel %vm736, %v11880, %v11882
  %v11884 = vrot.slane %v11796, 1
  %v11885 = vrot.slane %v11797, 1
  %v11886 = vsel %vm736, %v11884, %v11885
  %v11887 = vrot.slane %v11798, 1
  %v11888 = vsel %vm736, %v11885, %v11887
  %v11889 = vrot.slane %v11799, 1
  %v11890 = vrot.slane %v11800, 1
  %v11891 = vsel %vm736, %v11889, %v11890
  %v11892 = vrot.slane %v11801, 1
  %v11893 = vsel %vm736, %v11890, %v11892
  %v11894 = vrot.slane %v11802, 1
  %v11895 = vrot.slane %v11803, 1
  %v11896 = vsel %vm736, %v11894, %v11895
  %v11897 = vrot.slane %v11804, 1
  %v11898 = vsel %vm736, %v11895, %v11897
  %v11899 = vrot.slane %v11805, 1
  %v11900 = vrot.slane %v11806, 1
  %v11901 = vsel %vm736, %v11899, %v11900
  %v11902 = vrot.slane %v11807, 1
  %v11903 = vsel %vm736, %v11900, %v11902
  %v11904 = vrot.slane %v11808, 1
  %v11905 = vrot.slane %v11809, 1
  %v11906 = vsel %vm736, %v11904, %v11905
  %v11907 = vrot.slane %v11810, 1
  %v11908 = vsel %vm736, %v11905, %v11907
  %v11909 = vrot.slane %v11811, 1
  %v11910 = vrot.slane %v11812, 1
  %v11911 = vsel %vm736, %v11909, %v11910
  %v11912 = vrot.slane %v11813, 1
  %v11913 = vsel %vm736, %v11910, %v11912
  %v11914 = vrot.slane %v11814, 1
  %v11915 = vrot.slane %v11815, 1
  %v11916 = vsel %vm736, %v11914, %v11915
  %v11917 = vrot.slane %v11816, 1
  %v11918 = vsel %vm736, %v11915, %v11917
  %v11919 = vrot.slane %v11817, 1
  %v11920 = vrot.slane %v11818, 1
  %v11921 = vsel %vm736, %v11919, %v11920
  %v11922 = vrot.slane %v11819, 1
  %v11923 = vsel %vm736, %v11920, %v11922
  %v11924 = vrot.slane %v11820, 1
  %v11925 = vrot.slane %v11821, 1
  %v11926 = vsel %vm736, %v11924, %v11925
  %v11927 = vrot.slane %v11822, 1
  %v11928 = vsel %vm736, %v11925, %v11927
  %v11929 = vrot.slane %v11823, 1
  %v11930 = vrot.slane %v11824, 1
  %v11931 = vsel %vm736, %v11929, %v11930
  %v11932 = vrot.slane %v11825, 1
  %v11933 = vsel %vm736, %v11930, %v11932
  %v11934 = vrot.slane %v11826, 1
  %v11935 = vrot.slane %v11827, 1
  %v11936 = vsel %vm736, %v11934, %v11935
  %v11937 = vrot.slane %v11828, 1
  %v11938 = vsel %vm736, %v11935, %v11937
  %v11939 = vrot.slane %v11829, 1
  %v11940 = vrot.slane %v11830, 1
  %v11941 = vsel %vm736, %v11939, %v11940
  %v11942 = vrot.slane %v11831, 1
  %v11943 = vsel %vm736, %v11940, %v11942
  %v11972 = vadd.f32 %v11754, %v11876
  %v11973 = vadd.f32 %v11755, %v11878
  %v11974 = vadd.f32 %v11756, %v11881
  %v11975 = vadd.f32 %v11757, %v11883
  %v11976 = vadd.f32 %v11758, %v11886
  %v11977 = vadd.f32 %v11759, %v11888
  %v11978 = vadd.f32 %v11760, %v11891
  %v11979 = vadd.f32 %v11761, %v11893
  %v11980 = vadd.f32 %v11762, %v11896
  %v11981 = vadd.f32 %v11763, %v11898
  %v11982 = vadd.f32 %v11764, %v11901
  %v11983 = vadd.f32 %v11765, %v11903
  %v11984 = vadd.f32 %v11766, %v11906
  %v11985 = vadd.f32 %v11767, %v11908
  %v11986 = vadd.f32 %v11768, %v11911
  %v11987 = vadd.f32 %v11769, %v11913
  %v11988 = vadd.f32 %v11770, %v11916
  %v11989 = vadd.f32 %v11771, %v11918
  %v11990 = vadd.f32 %v11772, %v11921
  %v11991 = vadd.f32 %v11773, %v11923
  %v11992 = vadd.f32 %v11774, %v11926
  %v11993 = vadd.f32 %v11775, %v11928
  %v11994 = vadd.f32 %v11776, %v11931
  %v11995 = vadd.f32 %v11777, %v11933
  %v11996 = vadd.f32 %v11778, %v11936
  %v11997 = vadd.f32 %v11779, %v11938
  %v11998 = vadd.f32 %v11780, %v11941
  %v11999 = vadd.f32 %v11781, %v11943
  %v12000 = vadd.f32 %v11782, %v11936
  %v12001 = vadd.f32 %v11783, %v11938
  %v12002 = vadd.f32 %v11784, %v11931
  %v12003 = vadd.f32 %v11785, %v11933
  %v12004 = vlaneseq
  %v12005 = vshrl.u32 %v12004, 7
  %v12006 = vsub.s32 6, %v12005
  %v12007 = vrot.slane %v7808, %v12006
  %v12008 = vmul.f32 %v7757, %v12007
  %v12009 = vmul.f32 %v7583, %v12007
  %v12010 = vmul.f32 %v7789, %v12007
  %v12011 = vmul.f32 %v7760, %v12007
  %v12012 = vmul.f32 %v7592, %v12007
  %v12013 = vmul.f32 %v7792, %v12007
  %v12014 = vmul.f32 %v7761, %v12007
  %v12015 = vmul.f32 %v7595, %v12007
  %v12016 = vmul.f32 %v7793, %v12007
  %v12017 = vmul.f32 %v7762, %v12007
  %v12018 = vmul.f32 %v7598, %v12007
  %v12019 = vmul.f32 %v7794, %v12007
  %v12020 = vmul.f32 %v7763, %v12007
  %v12021 = vmul.f32 %v7601, %v12007
  %v12022 = vmul.f32 %v7795, %v12007
  %v12023 = vmul.f32 %v7764, %v12007
  %v12024 = vmul.f32 %v7604, %v12007
  %v12025 = vmul.f32 %v7796, %v12007
  %v12026 = vmul.f32 %v7765, %v12007
  %v12027 = vmul.f32 %v7607, %v12007
  %v12028 = vmul.f32 %v7797, %v12007
  %v12029 = vmul.f32 %v7766, %v12007
  %v12030 = vmul.f32 %v7610, %v12007
  %v12031 = vmul.f32 %v7798, %v12007
  %v12032 = vmul.f32 %v7767, %v12007
  %v12033 = vmul.f32 %v7613, %v12007
  %v12034 = vmul.f32 %v7799, %v12007
  %v12035 = vmul.f32 %v7768, %v12007
  %v12036 = vmul.f32 %v7616, %v12007
  %v12037 = vmul.f32 %v7800, %v12007
  %v12038 = vmul.f32 %v7769, %v12007
  %v12039 = vmul.f32 %v7619, %v12007
  %v12040 = vmul.f32 %v7801, %v12007
  %v12041 = vmul.f32 %v7770, %v12007
  %v12042 = vmul.f32 %v7622, %v12007
  %v12043 = vmul.f32 %v7802, %v12007
  %v12044 = vmul.f32 %v7771, %v12007
  %v12045 = vmul.f32 %v7625, %v12007
  %v12046 = vmul.f32 %v7803, %v12007
  %v12047 = vmul.f32 %v7772, %v12007
  %v12048 = vmul.f32 %v7628, %v12007
  %v12049 = vmul.f32 %v7804, %v12007
  %v12092 = vrot.slane %v12008, 2
  %v12093 = vrot.slane %v12009, 2
  %v12094 = vsel %vm951, %v12092, %v12093
  %v12095 = vrot.slane %v12010, 2
  %v12096 = vsel %vm951, %v12093, %v12095
  %v12097 = vrot.slane %v12011, 2
  %v12098 = vrot.slane %v12012, 2
  %v12099 = vsel %vm951, %v12097, %v12098
  %v12100 = vrot.slane %v12013, 2
  %v12101 = vsel %vm951, %v12098, %v12100
  %v12102 = vrot.slane %v12014, 2
  %v12103 = vrot.slane %v12015, 2
  %v12104 = vsel %vm951, %v12102, %v12103
  %v12105 = vrot.slane %v12016, 2
  %v12106 = vsel %vm951, %v12103, %v12105
  %v12107 = vrot.slane %v12017, 2
  %v12108 = vrot.slane %v12018, 2
  %v12109 = vsel %vm951, %v12107, %v12108
  %v12110 = vrot.slane %v12019, 2
  %v12111 = vsel %vm951, %v12108, %v12110
  %v12112 = vrot.slane %v12020, 2
  %v12113 = vrot.slane %v12021, 2
  %v12114 = vsel %vm951, %v12112, %v12113
  %v12115 = vrot.slane %v12022, 2
  %v12116 = vsel %vm951, %v12113, %v12115
  %v12117 = vrot.slane %v12023, 2
  %v12118 = vrot.slane %v12024, 2
  %v12119 = vsel %vm951, %v12117, %v12118
  %v12120 = vrot.slane %v12025, 2
  %v12121 = vsel %vm951, %v12118, %v12120
  %v12122 = vrot.slane %v12026, 2
  %v12123 = vrot.slane %v12027, 2
  %v12124 = vsel %vm951, %v12122, %v12123
  %v12125 = vrot.slane %v12028, 2
  %v12126 = vsel %vm951, %v12123, %v12125
  %v12127 = vrot.slane %v12029, 2
  %v12128 = vrot.slane %v12030, 2
  %v12129 = vsel %vm951, %v12127, %v12128
  %v12130 = vrot.slane %v12031, 2
  %v12131 = vsel %vm951, %v12128, %v12130
  %v12132 = vrot.slane %v12032, 2
  %v12133 = vrot.slane %v12033, 2
  %v12134 = vsel %vm951, %v12132, %v12133
  %v12135 = vrot.slane %v12034, 2
  %v12136 = vsel %vm951, %v12133, %v12135
  %v12137 = vrot.slane %v12035, 2
  %v12138 = vrot.slane %v12036, 2
  %v12139 = vsel %vm951, %v12137, %v12138
  %v12140 = vrot.slane %v12037, 2
  %v12141 = vsel %vm951, %v12138, %v12140
  %v12142 = vrot.slane %v12038, 2
  %v12143 = vrot.slane %v12039, 2
  %v12144 = vsel %vm951, %v12142, %v12143
  %v12145 = vrot.slane %v12040, 2
  %v12146 = vsel %vm951, %v12143, %v12145
  %v12147 = vrot.slane %v12041, 2
  %v12148 = vrot.slane %v12042, 2
  %v12149 = vsel %vm951, %v12147, %v12148
  %v12150 = vrot.slane %v12043, 2
  %v12151 = vsel %vm951, %v12148, %v12150
  %v12152 = vrot.slane %v12044, 2
  %v12153 = vrot.slane %v12045, 2
  %v12154 = vsel %vm951, %v12152, %v12153
  %v12155 = vrot.slane %v12046, 2
  %v12156 = vsel %vm951, %v12153, %v12155
  %v12157 = vrot.slane %v12047, 2
  %v12158 = vrot.slane %v12048, 2
  %v12159 = vsel %vm951, %v12157, %v12158
  %v12160 = vrot.slane %v12049, 2
  %v12161 = vsel %vm951, %v12158, %v12160
  %v12190 = vadd.f32 %v11972, %v12094
  %v12191 = vadd.f32 %v11973, %v12096
  %v12192 = vadd.f32 %v11974, %v12099
  %v12193 = vadd.f32 %v11975, %v12101
  %v12194 = vadd.f32 %v11976, %v12104
  %v12195 = vadd.f32 %v11977, %v12106
  %v12196 = vadd.f32 %v11978, %v12109
  %v12197 = vadd.f32 %v11979, %v12111
  %v12198 = vadd.f32 %v11980, %v12114
  %v12199 = vadd.f32 %v11981, %v12116
  %v12200 = vadd.f32 %v11982, %v12119
  %v12201 = vadd.f32 %v11983, %v12121
  %v12202 = vadd.f32 %v11984, %v12124
  %v12203 = vadd.f32 %v11985, %v12126
  %v12204 = vadd.f32 %v11986, %v12129
  %v12205 = vadd.f32 %v11987, %v12131
  %v12206 = vadd.f32 %v11988, %v12134
  %v12207 = vadd.f32 %v11989, %v12136
  %v12208 = vadd.f32 %v11990, %v12139
  %v12209 = vadd.f32 %v11991, %v12141
  %v12210 = vadd.f32 %v11992, %v12144
  %v12211 = vadd.f32 %v11993, %v12146
  %v12212 = vadd.f32 %v11994, %v12149
  %v12213 = vadd.f32 %v11995, %v12151
  %v12214 = vadd.f32 %v11996, %v12154
  %v12215 = vadd.f32 %v11997, %v12156
  %v12216 = vadd.f32 %v11998, %v12159
  %v12217 = vadd.f32 %v11999, %v12161
  %v12218 = vadd.f32 %v12000, %v12154
  %v12219 = vadd.f32 %v12001, %v12156
  %v12220 = vadd.f32 %v12002, %v12149
  %v12221 = vadd.f32 %v12003, %v12151
  %v12222 = vlaneseq
  %v12223 = vshrl.u32 %v12222, 7
  %v12224 = vsub.s32 7, %v12223
  %v12225 = vrot.slane %v7808, %v12224
  %v12226 = vmul.f32 %v7757, %v12225
  %v12227 = vmul.f32 %v7583, %v12225
  %v12228 = vmul.f32 %v7789, %v12225
  %v12229 = vmul.f32 %v7760, %v12225
  %v12230 = vmul.f32 %v7592, %v12225
  %v12231 = vmul.f32 %v7792, %v12225
  %v12232 = vmul.f32 %v7761, %v12225
  %v12233 = vmul.f32 %v7595, %v12225
  %v12234 = vmul.f32 %v7793, %v12225
  %v12235 = vmul.f32 %v7762, %v12225
  %v12236 = vmul.f32 %v7598, %v12225
  %v12237 = vmul.f32 %v7794, %v12225
  %v12238 = vmul.f32 %v7763, %v12225
  %v12239 = vmul.f32 %v7601, %v12225
  %v12240 = vmul.f32 %v7795, %v12225
  %v12241 = vmul.f32 %v7764, %v12225
  %v12242 = vmul.f32 %v7604, %v12225
  %v12243 = vmul.f32 %v7796, %v12225
  %v12244 = vmul.f32 %v7765, %v12225
  %v12245 = vmul.f32 %v7607, %v12225
  %v12246 = vmul.f32 %v7797, %v12225
  %v12247 = vmul.f32 %v7766, %v12225
  %v12248 = vmul.f32 %v7610, %v12225
  %v12249 = vmul.f32 %v7798, %v12225
  %v12250 = vmul.f32 %v7767, %v12225
  %v12251 = vmul.f32 %v7613, %v12225
  %v12252 = vmul.f32 %v7799, %v12225
  %v12253 = vmul.f32 %v7768, %v12225
  %v12254 = vmul.f32 %v7616, %v12225
  %v12255 = vmul.f32 %v7800, %v12225
  %v12256 = vmul.f32 %v7769, %v12225
  %v12257 = vmul.f32 %v7619, %v12225
  %v12258 = vmul.f32 %v7801, %v12225
  %v12259 = vmul.f32 %v7770, %v12225
  %v12260 = vmul.f32 %v7622, %v12225
  %v12261 = vmul.f32 %v7802, %v12225
  %v12262 = vmul.f32 %v7771, %v12225
  %v12263 = vmul.f32 %v7625, %v12225
  %v12264 = vmul.f32 %v7803, %v12225
  %v12265 = vmul.f32 %v7772, %v12225
  %v12266 = vmul.f32 %v7628, %v12225
  %v12267 = vmul.f32 %v7804, %v12225
  %v12310 = vrot.slane %v12226, 3
  %v12311 = vrot.slane %v12227, 3
  %v12312 = vsel %vm1166, %v12310, %v12311
  %v12313 = vrot.slane %v12228, 3
  %v12314 = vsel %vm1166, %v12311, %v12313
  %v12315 = vrot.slane %v12229, 3
  %v12316 = vrot.slane %v12230, 3
  %v12317 = vsel %vm1166, %v12315, %v12316
  %v12318 = vrot.slane %v12231, 3
  %v12319 = vsel %vm1166, %v12316, %v12318
  %v12320 = vrot.slane %v12232, 3
  %v12321 = vrot.slane %v12233, 3
  %v12322 = vsel %vm1166, %v12320, %v12321
  %v12323 = vrot.slane %v12234, 3
  %v12324 = vsel %vm1166, %v12321, %v12323
  %v12325 = vrot.slane %v12235, 3
  %v12326 = vrot.slane %v12236, 3
  %v12327 = vsel %vm1166, %v12325, %v12326
  %v12328 = vrot.slane %v12237, 3
  %v12329 = vsel %vm1166, %v12326, %v12328
  %v12330 = vrot.slane %v12238, 3
  %v12331 = vrot.slane %v12239, 3
  %v12332 = vsel %vm1166, %v12330, %v12331
  %v12333 = vrot.slane %v12240, 3
  %v12334 = vsel %vm1166, %v12331, %v12333
  %v12335 = vrot.slane %v12241, 3
  %v12336 = vrot.slane %v12242, 3
  %v12337 = vsel %vm1166, %v12335, %v12336
  %v12338 = vrot.slane %v12243, 3
  %v12339 = vsel %vm1166, %v12336, %v12338
  %v12340 = vrot.slane %v12244, 3
  %v12341 = vrot.slane %v12245, 3
  %v12342 = vsel %vm1166, %v12340, %v12341
  %v12343 = vrot.slane %v12246, 3
  %v12344 = vsel %vm1166, %v12341, %v12343
  %v12345 = vrot.slane %v12247, 3
  %v12346 = vrot.slane %v12248, 3
  %v12347 = vsel %vm1166, %v12345, %v12346
  %v12348 = vrot.slane %v12249, 3
  %v12349 = vsel %vm1166, %v12346, %v12348
  %v12350 = vrot.slane %v12250, 3
  %v12351 = vrot.slane %v12251, 3
  %v12352 = vsel %vm1166, %v12350, %v12351
  %v12353 = vrot.slane %v12252, 3
  %v12354 = vsel %vm1166, %v12351, %v12353
  %v12355 = vrot.slane %v12253, 3
  %v12356 = vrot.slane %v12254, 3
  %v12357 = vsel %vm1166, %v12355, %v12356
  %v12358 = vrot.slane %v12255, 3
  %v12359 = vsel %vm1166, %v12356, %v12358
  %v12360 = vrot.slane %v12256, 3
  %v12361 = vrot.slane %v12257, 3
  %v12362 = vsel %vm1166, %v12360, %v12361
  %v12363 = vrot.slane %v12258, 3
  %v12364 = vsel %vm1166, %v12361, %v12363
  %v12365 = vrot.slane %v12259, 3
  %v12366 = vrot.slane %v12260, 3
  %v12367 = vsel %vm1166, %v12365, %v12366
  %v12368 = vrot.slane %v12261, 3
  %v12369 = vsel %vm1166, %v12366, %v12368
  %v12370 = vrot.slane %v12262, 3
  %v12371 = vrot.slane %v12263, 3
  %v12372 = vsel %vm1166, %v12370, %v12371
  %v12373 = vrot.slane %v12264, 3
  %v12374 = vsel %vm1166, %v12371, %v12373
  %v12375 = vrot.slane %v12265, 3
  %v12376 = vrot.slane %v12266, 3
  %v12377 = vsel %vm1166, %v12375, %v12376
  %v12378 = vrot.slane %v12267, 3
  %v12379 = vsel %vm1166, %v12376, %v12378
  %v12408 = vadd.f32 %v12190, %v12312
  %v12409 = vadd.f32 %v12191, %v12314
  %v12410 = vadd.f32 %v12192, %v12317
  %v12411 = vadd.f32 %v12193, %v12319
  %v12412 = vadd.f32 %v12194, %v12322
  %v12413 = vadd.f32 %v12195, %v12324
  %v12414 = vadd.f32 %v12196, %v12327
  %v12415 = vadd.f32 %v12197, %v12329
  %v12416 = vadd.f32 %v12198, %v12332
  %v12417 = vadd.f32 %v12199, %v12334
  %v12418 = vadd.f32 %v12200, %v12337
  %v12419 = vadd.f32 %v12201, %v12339
  %v12420 = vadd.f32 %v12202, %v12342
  %v12421 = vadd.f32 %v12203, %v12344
  %v12422 = vadd.f32 %v12204, %v12347
  %v12423 = vadd.f32 %v12205, %v12349
  %v12424 = vadd.f32 %v12206, %v12352
  %v12425 = vadd.f32 %v12207, %v12354
  %v12426 = vadd.f32 %v12208, %v12357
  %v12427 = vadd.f32 %v12209, %v12359
  %v12428 = vadd.f32 %v12210, %v12362
  %v12429 = vadd.f32 %v12211, %v12364
  %v12430 = vadd.f32 %v12212, %v12367
  %v12431 = vadd.f32 %v12213, %v12369
  %v12432 = vadd.f32 %v12214, %v12372
  %v12433 = vadd.f32 %v12215, %v12374
  %v12434 = vadd.f32 %v12216, %v12377
  %v12435 = vadd.f32 %v12217, %v12379
  %v12436 = vadd.f32 %v12218, %v12372
  %v12437 = vadd.f32 %v12219, %v12374
  %v12438 = vadd.f32 %v12220, %v12367
  %v12439 = vadd.f32 %v12221, %v12369
  %v12440 = vlaneseq
  %v12441 = vshrl.u32 %v12440, 7
  %v12442 = vsub.s32 0, %v12441
  %v12443 = vrot.slane %v7809, %v12442
  %v12444 = vmul.f32 %v7757, %v12443
  %v12445 = vmul.f32 %v7583, %v12443
  %v12446 = vmul.f32 %v7789, %v12443
  %v12447 = vmul.f32 %v7760, %v12443
  %v12448 = vmul.f32 %v7592, %v12443
  %v12449 = vmul.f32 %v7792, %v12443
  %v12450 = vmul.f32 %v7761, %v12443
  %v12451 = vmul.f32 %v7595, %v12443
  %v12452 = vmul.f32 %v7793, %v12443
  %v12453 = vmul.f32 %v7762, %v12443
  %v12454 = vmul.f32 %v7598, %v12443
  %v12455 = vmul.f32 %v7794, %v12443
  %v12456 = vmul.f32 %v7763, %v12443
  %v12457 = vmul.f32 %v7601, %v12443
  %v12458 = vmul.f32 %v7795, %v12443
  %v12459 = vmul.f32 %v7764, %v12443
  %v12460 = vmul.f32 %v7604, %v12443
  %v12461 = vmul.f32 %v7796, %v12443
  %v12462 = vmul.f32 %v7765, %v12443
  %v12463 = vmul.f32 %v7607, %v12443
  %v12464 = vmul.f32 %v7797, %v12443
  %v12465 = vmul.f32 %v7766, %v12443
  %v12466 = vmul.f32 %v7610, %v12443
  %v12467 = vmul.f32 %v7798, %v12443
  %v12468 = vmul.f32 %v7767, %v12443
  %v12469 = vmul.f32 %v7613, %v12443
  %v12470 = vmul.f32 %v7799, %v12443
  %v12471 = vmul.f32 %v7768, %v12443
  %v12472 = vmul.f32 %v7616, %v12443
  %v12473 = vmul.f32 %v7800, %v12443
  %v12474 = vmul.f32 %v7769, %v12443
  %v12475 = vmul.f32 %v7619, %v12443
  %v12476 = vmul.f32 %v7801, %v12443
  %v12477 = vmul.f32 %v7770, %v12443
  %v12478 = vmul.f32 %v7622, %v12443
  %v12479 = vmul.f32 %v7802, %v12443
  %v12480 = vmul.f32 %v7771, %v12443
  %v12481 = vmul.f32 %v7625, %v12443
  %v12482 = vmul.f32 %v7803, %v12443
  %v12483 = vmul.f32 %v7772, %v12443
  %v12484 = vmul.f32 %v7628, %v12443
  %v12485 = vmul.f32 %v7804, %v12443
  %v12528 = vrot.slane %v12444, 4
  %v12529 = vrot.slane %v12445, 4
  %v12530 = vsel %vm1381, %v12528, %v12529
  %v12531 = vrot.slane %v12446, 4
  %v12532 = vsel %vm1381, %v12529, %v12531
  %v12533 = vrot.slane %v12447, 4
  %v12534 = vrot.slane %v12448, 4
  %v12535 = vsel %vm1381, %v12533, %v12534
  %v12536 = vrot.slane %v12449, 4
  %v12537 = vsel %vm1381, %v12534, %v12536
  %v12538 = vrot.slane %v12450, 4
  %v12539 = vrot.slane %v12451, 4
  %v12540 = vsel %vm1381, %v12538, %v12539
  %v12541 = vrot.slane %v12452, 4
  %v12542 = vsel %vm1381, %v12539, %v12541
  %v12543 = vrot.slane %v12453, 4
  %v12544 = vrot.slane %v12454, 4
  %v12545 = vsel %vm1381, %v12543, %v12544
  %v12546 = vrot.slane %v12455, 4
  %v12547 = vsel %vm1381, %v12544, %v12546
  %v12548 = vrot.slane %v12456, 4
  %v12549 = vrot.slane %v12457, 4
  %v12550 = vsel %vm1381, %v12548, %v12549
  %v12551 = vrot.slane %v12458, 4
  %v12552 = vsel %vm1381, %v12549, %v12551
  %v12553 = vrot.slane %v12459, 4
  %v12554 = vrot.slane %v12460, 4
  %v12555 = vsel %vm1381, %v12553, %v12554
  %v12556 = vrot.slane %v12461, 4
  %v12557 = vsel %vm1381, %v12554, %v12556
  %v12558 = vrot.slane %v12462, 4
  %v12559 = vrot.slane %v12463, 4
  %v12560 = vsel %vm1381, %v12558, %v12559
  %v12561 = vrot.slane %v12464, 4
  %v12562 = vsel %vm1381, %v12559, %v12561
  %v12563 = vrot.slane %v12465, 4
  %v12564 = vrot.slane %v12466, 4
  %v12565 = vsel %vm1381, %v12563, %v12564
  %v12566 = vrot.slane %v12467, 4
  %v12567 = vsel %vm1381, %v12564, %v12566
  %v12568 = vrot.slane %v12468, 4
  %v12569 = vrot.slane %v12469, 4
  %v12570 = vsel %vm1381, %v12568, %v12569
  %v12571 = vrot.slane %v12470, 4
  %v12572 = vsel %vm1381, %v12569, %v12571
  %v12573 = vrot.slane %v12471, 4
  %v12574 = vrot.slane %v12472, 4
  %v12575 = vsel %vm1381, %v12573, %v12574
  %v12576 = vrot.slane %v12473, 4
  %v12577 = vsel %vm1381, %v12574, %v12576
  %v12578 = vrot.slane %v12474, 4
  %v12579 = vrot.slane %v12475, 4
  %v12580 = vsel %vm1381, %v12578, %v12579
  %v12581 = vrot.slane %v12476, 4
  %v12582 = vsel %vm1381, %v12579, %v12581
  %v12583 = vrot.slane %v12477, 4
  %v12584 = vrot.slane %v12478, 4
  %v12585 = vsel %vm1381, %v12583, %v12584
  %v12586 = vrot.slane %v12479, 4
  %v12587 = vsel %vm1381, %v12584, %v12586
  %v12588 = vrot.slane %v12480, 4
  %v12589 = vrot.slane %v12481, 4
  %v12590 = vsel %vm1381, %v12588, %v12589
  %v12591 = vrot.slane %v12482, 4
  %v12592 = vsel %vm1381, %v12589, %v12591
  %v12593 = vrot.slane %v12483, 4
  %v12594 = vrot.slane %v12484, 4
  %v12595 = vsel %vm1381, %v12593, %v12594
  %v12596 = vrot.slane %v12485, 4
  %v12597 = vsel %vm1381, %v12594, %v12596
  %v12626 = vadd.f32 %v12408, %v12530
  %v12627 = vadd.f32 %v12409, %v12532
  %v12628 = vadd.f32 %v12410, %v12535
  %v12629 = vadd.f32 %v12411, %v12537
  %v12630 = vadd.f32 %v12412, %v12540
  %v12631 = vadd.f32 %v12413, %v12542
  %v12632 = vadd.f32 %v12414, %v12545
  %v12633 = vadd.f32 %v12415, %v12547
  %v12634 = vadd.f32 %v12416, %v12550
  %v12635 = vadd.f32 %v12417, %v12552
  %v12636 = vadd.f32 %v12418, %v12555
  %v12637 = vadd.f32 %v12419, %v12557
  %v12638 = vadd.f32 %v12420, %v12560
  %v12639 = vadd.f32 %v12421, %v12562
  %v12640 = vadd.f32 %v12422, %v12565
  %v12641 = vadd.f32 %v12423, %v12567
  %v12642 = vadd.f32 %v12424, %v12570
  %v12643 = vadd.f32 %v12425, %v12572
  %v12644 = vadd.f32 %v12426, %v12575
  %v12645 = vadd.f32 %v12427, %v12577
  %v12646 = vadd.f32 %v12428, %v12580
  %v12647 = vadd.f32 %v12429, %v12582
  %v12648 = vadd.f32 %v12430, %v12585
  %v12649 = vadd.f32 %v12431, %v12587
  %v12650 = vadd.f32 %v12432, %v12590
  %v12651 = vadd.f32 %v12433, %v12592
  %v12652 = vadd.f32 %v12434, %v12595
  %v12653 = vadd.f32 %v12435, %v12597
  %v12654 = vadd.f32 %v12436, %v12590
  %v12655 = vadd.f32 %v12437, %v12592
  %v12656 = vadd.f32 %v12438, %v12585
  %v12657 = vadd.f32 %v12439, %v12587
  %s12658 = scalar_lea.vmem %s4, 1
  %v12659 = vld [vmem:[%s12658] sm:$0x1]
  %v12661 = vlaneseq
  %v12662 = vshrl.u32 %v12661, 7
  %v12663 = vsub.s32 0, %v12662
  %v12664 = vrot.slane %v12659, %v12663
  %v12666 = vadd.f32 %v12626, %v12664
  %v12667 = vadd.f32 %v12627, %v12664
  %v12668 = vadd.f32 %v12628, %v12664
  %v12669 = vadd.f32 %v12629, %v12664
  %v12670 = vadd.f32 %v12630, %v12664
  %v12671 = vadd.f32 %v12631, %v12664
  %v12672 = vadd.f32 %v12632, %v12664
  %v12673 = vadd.f32 %v12633, %v12664
  %v12674 = vadd.f32 %v12634, %v12664
  %v12675 = vadd.f32 %v12635, %v12664
  %v12676 = vadd.f32 %v12636, %v12664
  %v12677 = vadd.f32 %v12637, %v12664
  %v12678 = vadd.f32 %v12638, %v12664
  %v12679 = vadd.f32 %v12639, %v12664
  %v12680 = vadd.f32 %v12640, %v12664
  %v12681 = vadd.f32 %v12641, %v12664
  %v12682 = vadd.f32 %v12642, %v12664
  %v12683 = vadd.f32 %v12643, %v12664
  %v12684 = vadd.f32 %v12644, %v12664
  %v12685 = vadd.f32 %v12645, %v12664
  %v12686 = vadd.f32 %v12646, %v12664
  %v12687 = vadd.f32 %v12647, %v12664
  %v12688 = vadd.f32 %v12648, %v12664
  %v12689 = vadd.f32 %v12649, %v12664
  %v12690 = vadd.f32 %v12650, %v12664
  %v12691 = vadd.f32 %v12651, %v12664
  %v12692 = vadd.f32 %v12652, %v12664
  %v12693 = vadd.f32 %v12653, %v12664
  %v12694 = vadd.f32 %v12654, %v12664
  %v12695 = vadd.f32 %v12655, %v12664
  %v12696 = vadd.f32 %v12656, %v12664
  %v12697 = vadd.f32 %v12657, %v12664
  %s12698 = scalar_lea.vmem %s5, 128
  %v12699 = vld [vmem:[%s12698] sm:$0xff]
  %v12700 = vld [vmem:[%s12698 + $0x8] sm:$0xff]
  %v12701 = vld [vmem:[%s12698 + $0x10] sm:$0xff]
  %v12702 = vld [vmem:[%s12698 + $0x18] sm:$0xff]
  %v12703 = vld [vmem:[%s12698 + $0x20] sm:$0xff]
  %v12704 = vld [vmem:[%s12698 + $0x28] sm:$0xff]
  %v12705 = vld [vmem:[%s12698 + $0x30] sm:$0xff]
  %v12706 = vld [vmem:[%s12698 + $0x38] sm:$0xff]
  %v12707 = vld [vmem:[%s12698 + $0x40] sm:$0xff]
  %v12708 = vld [vmem:[%s12698 + $0x48] sm:$0xff]
  %v12709 = vld [vmem:[%s12698 + $0x50] sm:$0xff]
  %v12710 = vld [vmem:[%s12698 + $0x58] sm:$0xff]
  %v12711 = vld [vmem:[%s12698 + $0x60] sm:$0xff]
  %v12712 = vld [vmem:[%s12698 + $0x68] sm:$0xff]
  %v12713 = vld [vmem:[%s12698 + $0x70] sm:$0xff]
  %v12714 = vld [vmem:[%s12698 + $0x78] sm:$0xff]
  %12715 = vmatprep.subr.mxu0 0.0
  %12716 = vmatpush1.msra.mxu0 %v12714
  %12717 = vmatprep.subr.mxu0 0.0
  %12718 = vmatpush1.msra.mxu0 %v12713
  %12719 = vmatprep.subr.mxu0 0.0
  %12720 = vmatpush1.msra.mxu0 %v12712
  %12721 = vmatprep.subr.mxu0 0.0
  %12722 = vmatpush1.msra.mxu0 %v12711
  %12723 = vmatprep.subr.mxu0 0.0
  %12724 = vmatpush1.msra.mxu0 %v12710
  %12725 = vmatprep.subr.mxu0 0.0
  %12726 = vmatpush1.msra.mxu0 %v12709
  %12727 = vmatprep.subr.mxu0 0.0
  %12728 = vmatpush1.msra.mxu0 %v12708
  %12729 = vmatprep.subr.mxu0 0.0
  %12730 = vmatpush1.msra.mxu0 %v12707
  %12731 = vmatprep.subr.mxu0 0.0
  %12732 = vmatpush1.msra.mxu0 %v12706
  %12733 = vmatprep.subr.mxu0 0.0
  %12734 = vmatpush1.msra.mxu0 %v12705
  %12735 = vmatprep.subr.mxu0 0.0
  %12736 = vmatpush1.msra.mxu0 %v12704
  %12737 = vmatprep.subr.mxu0 0.0
  %12738 = vmatpush1.msra.mxu0 %v12703
  %12739 = vmatprep.subr.mxu0 0.0
  %12740 = vmatpush1.msra.mxu0 %v12702
  %12741 = vmatprep.subr.mxu0 0.0
  %12742 = vmatpush1.msra.mxu0 %v12701
  %12743 = vmatprep.subr.mxu0 0.0
  %12744 = vmatpush1.msra.mxu0 %v12700
  %12745 = vmatprep.subr.mxu0 0.0
  %12746 = vmatpush1.msra.mxu0 %v12699
  %12747 = vmatprep.subr.mxu0 0.0
  %12748 = vmatpush2.msra.mxu0 0.0
  %12749 = vmatprep.subr.mxu0 0.0
  %12750 = vmatpush2.msra.mxu0 0.0
  %12751 = vmatprep.subr.mxu0 0.0
  %12752 = vmatpush2.msra.mxu0 0.0
  %12753 = vmatprep.subr.mxu0 0.0
  %12754 = vmatpush2.msra.mxu0 0.0
  %12755 = vmatprep.subr.mxu0 0.0
  %12756 = vmatpush2.msra.mxu0 0.0
  %12757 = vmatprep.subr.mxu0 0.0
  %12758 = vmatpush2.msra.mxu0 0.0
  %12759 = vmatprep.subr.mxu0 0.0
  %12760 = vmatpush2.msra.mxu0 0.0
  %12761 = vmatprep.subr.mxu0 0.0
  %12762 = vmatpush2.msra.mxu0 0.0
  %12763 = vmatprep.subr.mxu0 0.0
  %12764 = vmatpush2.msra.mxu0 0.0
  %12765 = vmatprep.subr.mxu0 0.0
  %12766 = vmatpush2.msra.mxu0 0.0
  %12767 = vmatprep.subr.mxu0 0.0
  %12768 = vmatpush2.msra.mxu0 0.0
  %12769 = vmatprep.subr.mxu0 0.0
  %12770 = vmatpush2.msra.mxu0 0.0
  %12771 = vmatprep.subr.mxu0 0.0
  %12772 = vmatpush2.msra.mxu0 0.0
  %12773 = vmatprep.subr.mxu0 0.0
  %12774 = vmatpush2.msra.mxu0 0.0
  %12775 = vmatprep.subr.mxu0 0.0
  %12776 = vmatpush2.msra.mxu0 0.0
  %12777 = vmatprep.subr.mxu0 0.0
  %12778 = vmatpush2.msra.mxu0 0.0
  %12779 = vmatprep.mubr.f32.mxu0 0.0
  %12780 = vmatmul.mubr.f32.gmra.mxu0 %v12666
  %v12781 = vpop.f32.mrf.mxu0
  %v12782 = vadd.f32 0.0, %v12781
  %v12783 = vpop.f32.mrf.mxu0
  %12784 = vmatprep.mubr.f32.mxu0 0.0
  %12785 = vmatmul.mubr.f32.gmra.mxu0 %v12667
  %v12786 = vpop.f32.mrf.mxu0
  %v12787 = vadd.f32 0.0, %v12786
  %v12788 = vpop.f32.mrf.mxu0
  %12789 = vmatprep.mubr.f32.mxu0 0.0
  %12790 = vmatmul.mubr.f32.gmra.mxu0 %v12668
  %v12791 = vpop.f32.mrf.mxu0
  %v12792 = vadd.f32 0.0, %v12791
  %v12793 = vpop.f32.mrf.mxu0
  %12794 = vmatprep.mubr.f32.mxu0 0.0
  %12795 = vmatmul.mubr.f32.gmra.mxu0 %v12669
  %v12796 = vpop.f32.mrf.mxu0
  %v12797 = vadd.f32 0.0, %v12796
  %v12798 = vpop.f32.mrf.mxu0
  %12799 = vmatprep.mubr.f32.mxu0 0.0
  %12800 = vmatmul.mubr.f32.gmra.mxu0 %v12670
  %v12801 = vpop.f32.mrf.mxu0
  %v12802 = vadd.f32 0.0, %v12801
  %v12803 = vpop.f32.mrf.mxu0
  %12804 = vmatprep.mubr.f32.mxu0 0.0
  %12805 = vmatmul.mubr.f32.gmra.mxu0 %v12671
  %v12806 = vpop.f32.mrf.mxu0
  %v12807 = vadd.f32 0.0, %v12806
  %v12808 = vpop.f32.mrf.mxu0
  %12809 = vmatprep.mubr.f32.mxu0 0.0
  %12810 = vmatmul.mubr.f32.gmra.mxu0 %v12672
  %v12811 = vpop.f32.mrf.mxu0
  %v12812 = vadd.f32 0.0, %v12811
  %v12813 = vpop.f32.mrf.mxu0
  %12814 = vmatprep.mubr.f32.mxu0 0.0
  %12815 = vmatmul.mubr.f32.gmra.mxu0 %v12673
  %v12816 = vpop.f32.mrf.mxu0
  %v12817 = vadd.f32 0.0, %v12816
  %v12818 = vpop.f32.mrf.mxu0
  %12819 = vmatprep.mubr.f32.mxu0 0.0
  %12820 = vmatmul.mubr.f32.gmra.mxu0 %v12674
  %v12821 = vpop.f32.mrf.mxu0
  %v12822 = vadd.f32 0.0, %v12821
  %v12823 = vpop.f32.mrf.mxu0
  %12824 = vmatprep.mubr.f32.mxu0 0.0
  %12825 = vmatmul.mubr.f32.gmra.mxu0 %v12675
  %v12826 = vpop.f32.mrf.mxu0
  %v12827 = vadd.f32 0.0, %v12826
  %v12828 = vpop.f32.mrf.mxu0
  %12829 = vmatprep.mubr.f32.mxu0 0.0
  %12830 = vmatmul.mubr.f32.gmra.mxu0 %v12676
  %v12831 = vpop.f32.mrf.mxu0
  %v12832 = vadd.f32 0.0, %v12831
  %v12833 = vpop.f32.mrf.mxu0
  %12834 = vmatprep.mubr.f32.mxu0 0.0
  %12835 = vmatmul.mubr.f32.gmra.mxu0 %v12677
  %v12836 = vpop.f32.mrf.mxu0
  %v12837 = vadd.f32 0.0, %v12836
  %v12838 = vpop.f32.mrf.mxu0
  %12839 = vmatprep.mubr.f32.mxu0 0.0
  %12840 = vmatmul.mubr.f32.gmra.mxu0 %v12678
  %v12841 = vpop.f32.mrf.mxu0
  %v12842 = vadd.f32 0.0, %v12841
  %v12843 = vpop.f32.mrf.mxu0
  %12844 = vmatprep.mubr.f32.mxu0 0.0
  %12845 = vmatmul.mubr.f32.gmra.mxu0 %v12679
  %v12846 = vpop.f32.mrf.mxu0
  %v12847 = vadd.f32 0.0, %v12846
  %v12848 = vpop.f32.mrf.mxu0
  %12849 = vmatprep.mubr.f32.mxu0 0.0
  %12850 = vmatmul.mubr.f32.gmra.mxu0 %v12680
  %v12851 = vpop.f32.mrf.mxu0
  %v12852 = vadd.f32 0.0, %v12851
  %v12853 = vpop.f32.mrf.mxu0
  %12854 = vmatprep.mubr.f32.mxu0 0.0
  %12855 = vmatmul.mubr.f32.gmra.mxu0 %v12681
  %v12856 = vpop.f32.mrf.mxu0
  %v12857 = vadd.f32 0.0, %v12856
  %v12858 = vpop.f32.mrf.mxu0
  %12859 = vmatprep.mubr.f32.mxu0 0.0
  %12860 = vmatmul.mubr.f32.gmra.mxu0 %v12682
  %v12861 = vpop.f32.mrf.mxu0
  %v12862 = vadd.f32 0.0, %v12861
  %v12863 = vpop.f32.mrf.mxu0
  %12864 = vmatprep.mubr.f32.mxu0 0.0
  %12865 = vmatmul.mubr.f32.gmra.mxu0 %v12683
  %v12866 = vpop.f32.mrf.mxu0
  %v12867 = vadd.f32 0.0, %v12866
  %v12868 = vpop.f32.mrf.mxu0
  %12869 = vmatprep.mubr.f32.mxu0 0.0
  %12870 = vmatmul.mubr.f32.gmra.mxu0 %v12684
  %v12871 = vpop.f32.mrf.mxu0
  %v12872 = vadd.f32 0.0, %v12871
  %v12873 = vpop.f32.mrf.mxu0
  %12874 = vmatprep.mubr.f32.mxu0 0.0
  %12875 = vmatmul.mubr.f32.gmra.mxu0 %v12685
  %v12876 = vpop.f32.mrf.mxu0
  %v12877 = vadd.f32 0.0, %v12876
  %v12878 = vpop.f32.mrf.mxu0
  %12879 = vmatprep.mubr.f32.mxu0 0.0
  %12880 = vmatmul.mubr.f32.gmra.mxu0 %v12686
  %v12881 = vpop.f32.mrf.mxu0
  %v12882 = vadd.f32 0.0, %v12881
  %v12883 = vpop.f32.mrf.mxu0
  %12884 = vmatprep.mubr.f32.mxu0 0.0
  %12885 = vmatmul.mubr.f32.gmra.mxu0 %v12687
  %v12886 = vpop.f32.mrf.mxu0
  %v12887 = vadd.f32 0.0, %v12886
  %v12888 = vpop.f32.mrf.mxu0
  %12889 = vmatprep.mubr.f32.mxu0 0.0
  %12890 = vmatmul.mubr.f32.gmra.mxu0 %v12688
  %v12891 = vpop.f32.mrf.mxu0
  %v12892 = vadd.f32 0.0, %v12891
  %v12893 = vpop.f32.mrf.mxu0
  %12894 = vmatprep.mubr.f32.mxu0 0.0
  %12895 = vmatmul.mubr.f32.gmra.mxu0 %v12689
  %v12896 = vpop.f32.mrf.mxu0
  %v12897 = vadd.f32 0.0, %v12896
  %v12898 = vpop.f32.mrf.mxu0
  %12899 = vmatprep.mubr.f32.mxu0 0.0
  %12900 = vmatmul.mubr.f32.gmra.mxu0 %v12690
  %v12901 = vpop.f32.mrf.mxu0
  %v12902 = vadd.f32 0.0, %v12901
  %v12903 = vpop.f32.mrf.mxu0
  %12904 = vmatprep.mubr.f32.mxu0 0.0
  %12905 = vmatmul.mubr.f32.gmra.mxu0 %v12691
  %v12906 = vpop.f32.mrf.mxu0
  %v12907 = vadd.f32 0.0, %v12906
  %v12908 = vpop.f32.mrf.mxu0
  %12909 = vmatprep.mubr.f32.mxu0 0.0
  %12910 = vmatmul.mubr.f32.gmra.mxu0 %v12692
  %v12911 = vpop.f32.mrf.mxu0
  %v12912 = vadd.f32 0.0, %v12911
  %v12913 = vpop.f32.mrf.mxu0
  %12914 = vmatprep.mubr.f32.mxu0 0.0
  %12915 = vmatmul.mubr.f32.gmra.mxu0 %v12693
  %v12916 = vpop.f32.mrf.mxu0
  %v12917 = vadd.f32 0.0, %v12916
  %v12918 = vpop.f32.mrf.mxu0
  %12919 = vmatprep.mubr.f32.mxu0 0.0
  %12920 = vmatmul.mubr.f32.gmra.mxu0 %v12694
  %v12921 = vpop.f32.mrf.mxu0
  %v12922 = vadd.f32 0.0, %v12921
  %v12923 = vpop.f32.mrf.mxu0
  %12924 = vmatprep.mubr.f32.mxu0 0.0
  %12925 = vmatmul.mubr.f32.gmra.mxu0 %v12695
  %v12926 = vpop.f32.mrf.mxu0
  %v12927 = vadd.f32 0.0, %v12926
  %v12928 = vpop.f32.mrf.mxu0
  %12929 = vmatprep.mubr.f32.mxu0 0.0
  %12930 = vmatmul.mubr.f32.gmra.mxu0 %v12696
  %v12931 = vpop.f32.mrf.mxu0
  %v12932 = vadd.f32 0.0, %v12931
  %v12933 = vpop.f32.mrf.mxu0
  %12934 = vmatprep.mubr.f32.mxu0 0.0
  %12935 = vmatmul.mubr.f32.gmra.mxu0 %v12697
  %v12936 = vpop.f32.mrf.mxu0
  %v12937 = vadd.f32 0.0, %v12936
  %v12938 = vpop.f32.mrf.mxu0
  %12939 = vdwg.mxu0
  %v12940 = vadd.f32 %v7235, %v12782
  %v12941 = vadd.f32 %v7236, %v12787
  %v12942 = vadd.f32 %v7237, %v12792
  %v12943 = vadd.f32 %v7238, %v12797
  %v12944 = vadd.f32 %v7239, %v12802
  %v12945 = vadd.f32 %v7240, %v12807
  %v12946 = vadd.f32 %v7241, %v12812
  %v12947 = vadd.f32 %v7242, %v12817
  %v12948 = vadd.f32 %v7243, %v12822
  %v12949 = vadd.f32 %v7244, %v12827
  %v12950 = vadd.f32 %v7245, %v12832
  %v12951 = vadd.f32 %v7246, %v12837
  %v12952 = vadd.f32 %v7247, %v12842
  %v12953 = vadd.f32 %v7248, %v12847
  %v12954 = vadd.f32 %v7249, %v12852
  %v12955 = vadd.f32 %v7250, %v12857
  %v12956 = vadd.f32 %v7251, %v12862
  %v12957 = vadd.f32 %v7252, %v12867
  %v12958 = vadd.f32 %v7253, %v12872
  %v12959 = vadd.f32 %v7254, %v12877
  %v12960 = vadd.f32 %v7255, %v12882
  %v12961 = vadd.f32 %v7256, %v12887
  %v12962 = vadd.f32 %v7257, %v12892
  %v12963 = vadd.f32 %v7258, %v12897
  %v12964 = vadd.f32 %v7259, %v12902
  %v12965 = vadd.f32 %v7260, %v12907
  %v12966 = vadd.f32 %v7261, %v12912
  %v12967 = vadd.f32 %v7262, %v12917
  %v12968 = vadd.f32 %v7263, %v12922
  %v12969 = vadd.f32 %v7264, %v12927
  %v12970 = vadd.f32 %v7265, %v12932
  %v12971 = vadd.f32 %v7266, %v12937
  %s12972 = scalar_lea.vmem %s6, 1
  %v12973 = vld [vmem:[%s12972] sm:$0x1]
  %v12975 = vlaneseq
  %v12976 = vshrl.u32 %v12975, 7
  %v12977 = vsub.s32 0, %v12976
  %v12978 = vrot.slane %v12973, %v12977
  %v12980 = vadd.f32 %v12940, %v12978
  %v12981 = vadd.f32 %v12941, %v12978
  %v12982 = vadd.f32 %v12942, %v12978
  %v12983 = vadd.f32 %v12943, %v12978
  %v12984 = vadd.f32 %v12944, %v12978
  %v12985 = vadd.f32 %v12945, %v12978
  %v12986 = vadd.f32 %v12946, %v12978
  %v12987 = vadd.f32 %v12947, %v12978
  %v12988 = vadd.f32 %v12948, %v12978
  %v12989 = vadd.f32 %v12949, %v12978
  %v12990 = vadd.f32 %v12950, %v12978
  %v12991 = vadd.f32 %v12951, %v12978
  %v12992 = vadd.f32 %v12952, %v12978
  %v12993 = vadd.f32 %v12953, %v12978
  %v12994 = vadd.f32 %v12954, %v12978
  %v12995 = vadd.f32 %v12955, %v12978
  %v12996 = vadd.f32 %v12956, %v12978
  %v12997 = vadd.f32 %v12957, %v12978
  %v12998 = vadd.f32 %v12958, %v12978
  %v12999 = vadd.f32 %v12959, %v12978
  %v13000 = vadd.f32 %v12960, %v12978
  %v13001 = vadd.f32 %v12961, %v12978
  %v13002 = vadd.f32 %v12962, %v12978
  %v13003 = vadd.f32 %v12963, %v12978
  %v13004 = vadd.f32 %v12964, %v12978
  %v13005 = vadd.f32 %v12965, %v12978
  %v13006 = vadd.f32 %v12966, %v12978
  %v13007 = vadd.f32 %v12967, %v12978
  %v13008 = vadd.f32 %v12968, %v12978
  %v13009 = vadd.f32 %v12969, %v12978
  %v13010 = vadd.f32 %v12970, %v12978
  %v13011 = vadd.f32 %v12971, %v12978
  %s13012 = scalar_lea.vmem %s7, 512
  %v13013 = vld [vmem:[%s13012] sm:$0xff]
  %v13014 = vld [vmem:[%s13012 + $0x8] sm:$0xff]
  %v13015 = vld [vmem:[%s13012 + $0x10] sm:$0xff]
  %v13016 = vld [vmem:[%s13012 + $0x18] sm:$0xff]
  %v13017 = vld [vmem:[%s13012 + $0x20] sm:$0xff]
  %v13018 = vld [vmem:[%s13012 + $0x28] sm:$0xff]
  %v13019 = vld [vmem:[%s13012 + $0x30] sm:$0xff]
  %v13020 = vld [vmem:[%s13012 + $0x38] sm:$0xff]
  %v13021 = vld [vmem:[%s13012 + $0x40] sm:$0xff]
  %v13022 = vld [vmem:[%s13012 + $0x48] sm:$0xff]
  %v13023 = vld [vmem:[%s13012 + $0x50] sm:$0xff]
  %v13024 = vld [vmem:[%s13012 + $0x58] sm:$0xff]
  %v13025 = vld [vmem:[%s13012 + $0x60] sm:$0xff]
  %v13026 = vld [vmem:[%s13012 + $0x68] sm:$0xff]
  %v13027 = vld [vmem:[%s13012 + $0x70] sm:$0xff]
  %v13028 = vld [vmem:[%s13012 + $0x78] sm:$0xff]
  %v13029 = vld [vmem:[%s13012 + $0x80] sm:$0xff]
  %v13030 = vld [vmem:[%s13012 + $0x88] sm:$0xff]
  %v13031 = vld [vmem:[%s13012 + $0x90] sm:$0xff]
  %v13032 = vld [vmem:[%s13012 + $0x98] sm:$0xff]
  %v13033 = vld [vmem:[%s13012 + $0xa0] sm:$0xff]
  %v13034 = vld [vmem:[%s13012 + $0xa8] sm:$0xff]
  %v13035 = vld [vmem:[%s13012 + $0xb0] sm:$0xff]
  %v13036 = vld [vmem:[%s13012 + $0xb8] sm:$0xff]
  %v13037 = vld [vmem:[%s13012 + $0xc0] sm:$0xff]
  %v13038 = vld [vmem:[%s13012 + $0xc8] sm:$0xff]
  %v13039 = vld [vmem:[%s13012 + $0xd0] sm:$0xff]
  %v13040 = vld [vmem:[%s13012 + $0xd8] sm:$0xff]
  %v13041 = vld [vmem:[%s13012 + $0xe0] sm:$0xff]
  %v13042 = vld [vmem:[%s13012 + $0xe8] sm:$0xff]
  %v13043 = vld [vmem:[%s13012 + $0xf0] sm:$0xff]
  %v13044 = vld [vmem:[%s13012 + $0xf8] sm:$0xff]
  %v13045 = vld [vmem:[%s13012 + $0x100] sm:$0xff]
  %v13046 = vld [vmem:[%s13012 + $0x108] sm:$0xff]
  %v13047 = vld [vmem:[%s13012 + $0x110] sm:$0xff]
  %v13048 = vld [vmem:[%s13012 + $0x118] sm:$0xff]
  %v13049 = vld [vmem:[%s13012 + $0x120] sm:$0xff]
  %v13050 = vld [vmem:[%s13012 + $0x128] sm:$0xff]
  %v13051 = vld [vmem:[%s13012 + $0x130] sm:$0xff]
  %v13052 = vld [vmem:[%s13012 + $0x138] sm:$0xff]
  %v13053 = vld [vmem:[%s13012 + $0x140] sm:$0xff]
  %v13054 = vld [vmem:[%s13012 + $0x148] sm:$0xff]
  %v13055 = vld [vmem:[%s13012 + $0x150] sm:$0xff]
  %v13056 = vld [vmem:[%s13012 + $0x158] sm:$0xff]
  %v13057 = vld [vmem:[%s13012 + $0x160] sm:$0xff]
  %v13058 = vld [vmem:[%s13012 + $0x168] sm:$0xff]
  %v13059 = vld [vmem:[%s13012 + $0x170] sm:$0xff]
  %v13060 = vld [vmem:[%s13012 + $0x178] sm:$0xff]
  %v13061 = vld [vmem:[%s13012 + $0x180] sm:$0xff]
  %v13062 = vld [vmem:[%s13012 + $0x188] sm:$0xff]
  %v13063 = vld [vmem:[%s13012 + $0x190] sm:$0xff]
  %v13064 = vld [vmem:[%s13012 + $0x198] sm:$0xff]
  %v13065 = vld [vmem:[%s13012 + $0x1a0] sm:$0xff]
  %v13066 = vld [vmem:[%s13012 + $0x1a8] sm:$0xff]
  %v13067 = vld [vmem:[%s13012 + $0x1b0] sm:$0xff]
  %v13068 = vld [vmem:[%s13012 + $0x1b8] sm:$0xff]
  %v13069 = vld [vmem:[%s13012 + $0x1c0] sm:$0xff]
  %v13070 = vld [vmem:[%s13012 + $0x1c8] sm:$0xff]
  %v13071 = vld [vmem:[%s13012 + $0x1d0] sm:$0xff]
  %v13072 = vld [vmem:[%s13012 + $0x1d8] sm:$0xff]
  %v13073 = vld [vmem:[%s13012 + $0x1e0] sm:$0xff]
  %v13074 = vld [vmem:[%s13012 + $0x1e8] sm:$0xff]
  %v13075 = vld [vmem:[%s13012 + $0x1f0] sm:$0xff]
  %v13076 = vld [vmem:[%s13012 + $0x1f8] sm:$0xff]
  %s13077 = scalar_lea.vmem %s8, 4
  %v13078 = vld [vmem:[%s13077] sm:$0xf]
  %v13080 = vlaneseq
  %v13081 = vshrl.u32 %v13080, 7
  %v13082 = vsub.s32 0, %v13081
  %v13083 = vrot.slane %v13078, %v13082
  %v13084 = vlaneseq
  %v13085 = vshrl.u32 %v13084, 7
  %v13086 = vsub.s32 1, %v13085
  %v13087 = vrot.slane %v13078, %v13086
  %v13088 = vlaneseq
  %v13089 = vshrl.u32 %v13088, 7
  %v13090 = vsub.s32 2, %v13089
  %v13091 = vrot.slane %v13078, %v13090
  %v13092 = vlaneseq
  %v13093 = vshrl.u32 %v13092, 7
  %v13094 = vsub.s32 3, %v13093
  %v13095 = vrot.slane %v13078, %v13094
  %13100 = vmatprep.subr.mxu0 %v13074
  %13101 = vmatpush1.msra.mxu0 %v13073
  %13102 = vmatprep.subr.mxu0 %v13070
  %13103 = vmatpush1.msra.mxu0 %v13069
  %13104 = vmatprep.subr.mxu0 %v13066
  %13105 = vmatpush1.msra.mxu0 %v13065
  %13106 = vmatprep.subr.mxu0 %v13062
  %13107 = vmatpush1.msra.mxu0 %v13061
  %13108 = vmatprep.subr.mxu0 %v13058
  %13109 = vmatpush1.msra.mxu0 %v13057
  %13110 = vmatprep.subr.mxu0 %v13054
  %13111 = vmatpush1.msra.mxu0 %v13053
  %13112 = vmatprep.subr.mxu0 %v13050
  %13113 = vmatpush1.msra.mxu0 %v13049
  %13114 = vmatprep.subr.mxu0 %v13046
  %13115 = vmatpush1.msra.mxu0 %v13045
  %13116 = vmatprep.subr.mxu0 %v13042
  %13117 = vmatpush1.msra.mxu0 %v13041
  %13118 = vmatprep.subr.mxu0 %v13038
  %13119 = vmatpush1.msra.mxu0 %v13037
  %13120 = vmatprep.subr.mxu0 %v13034
  %13121 = vmatpush1.msra.mxu0 %v13033
  %13122 = vmatprep.subr.mxu0 %v13030
  %13123 = vmatpush1.msra.mxu0 %v13029
  %13124 = vmatprep.subr.mxu0 %v13026
  %13125 = vmatpush1.msra.mxu0 %v13025
  %13126 = vmatprep.subr.mxu0 %v13022
  %13127 = vmatpush1.msra.mxu0 %v13021
  %13128 = vmatprep.subr.mxu0 %v13018
  %13129 = vmatpush1.msra.mxu0 %v13017
  %13130 = vmatprep.subr.mxu0 %v13014
  %13131 = vmatpush1.msra.mxu0 %v13013
  %13132 = vmatprep.subr.mxu0 0.0
  %13133 = vmatpush2.msra.mxu0 0.0
  %13134 = vmatprep.subr.mxu0 0.0
  %13135 = vmatpush2.msra.mxu0 0.0
  %13136 = vmatprep.subr.mxu0 0.0
  %13137 = vmatpush2.msra.mxu0 0.0
  %13138 = vmatprep.subr.mxu0 0.0
  %13139 = vmatpush2.msra.mxu0 0.0
  %13140 = vmatprep.subr.mxu0 0.0
  %13141 = vmatpush2.msra.mxu0 0.0
  %13142 = vmatprep.subr.mxu0 0.0
  %13143 = vmatpush2.msra.mxu0 0.0
  %13144 = vmatprep.subr.mxu0 0.0
  %13145 = vmatpush2.msra.mxu0 0.0
  %13146 = vmatprep.subr.mxu0 0.0
  %13147 = vmatpush2.msra.mxu0 0.0
  %13148 = vmatprep.subr.mxu0 0.0
  %13149 = vmatpush2.msra.mxu0 0.0
  %13150 = vmatprep.subr.mxu0 0.0
  %13151 = vmatpush2.msra.mxu0 0.0
  %13152 = vmatprep.subr.mxu0 0.0
  %13153 = vmatpush2.msra.mxu0 0.0
  %13154 = vmatprep.subr.mxu0 0.0
  %13155 = vmatpush2.msra.mxu0 0.0
  %13156 = vmatprep.subr.mxu0 0.0
  %13157 = vmatpush2.msra.mxu0 0.0
  %13158 = vmatprep.subr.mxu0 0.0
  %13159 = vmatpush2.msra.mxu0 0.0
  %13160 = vmatprep.subr.mxu0 0.0
  %13161 = vmatpush2.msra.mxu0 0.0
  %13162 = vmatprep.subr.mxu0 0.0
  %13163 = vmatpush2.msra.mxu0 0.0
  %13164 = vmatprep.mubr.f32.mxu0 0.0
  %13165 = vmatmul.mubr.f32.gmra.mxu0 %v12980
  %v13166 = vpop.f32.mrf.mxu0
  %v13167 = vadd.f32 %v13083, %v13166
  %v13168 = vpop.f32.mrf.mxu0
  %v13169 = vadd.f32 %v13087, %v13168
  %13170 = vmatprep.mubr.f32.mxu0 0.0
  %13171 = vmatmul.mubr.f32.gmra.mxu0 %v12981
  %v13172 = vpop.f32.mrf.mxu0
  %v13173 = vadd.f32 %v13083, %v13172
  %v13174 = vpop.f32.mrf.mxu0
  %v13175 = vadd.f32 %v13087, %v13174
  %13176 = vmatprep.mubr.f32.mxu0 0.0
  %13177 = vmatmul.mubr.f32.gmra.mxu0 %v12982
  %v13178 = vpop.f32.mrf.mxu0
  %v13179 = vadd.f32 %v13083, %v13178
  %v13180 = vpop.f32.mrf.mxu0
  %v13181 = vadd.f32 %v13087, %v13180
  %13182 = vmatprep.mubr.f32.mxu0 0.0
  %13183 = vmatmul.mubr.f32.gmra.mxu0 %v12983
  %v13184 = vpop.f32.mrf.mxu0
  %v13185 = vadd.f32 %v13083, %v13184
  %v13186 = vpop.f32.mrf.mxu0
  %v13187 = vadd.f32 %v13087, %v13186
  %13188 = vmatprep.mubr.f32.mxu0 0.0
  %13189 = vmatmul.mubr.f32.gmra.mxu0 %v12984
  %v13190 = vpop.f32.mrf.mxu0
  %v13191 = vadd.f32 %v13083, %v13190
  %v13192 = vpop.f32.mrf.mxu0
  %v13193 = vadd.f32 %v13087, %v13192
  %13194 = vmatprep.mubr.f32.mxu0 0.0
  %13195 = vmatmul.mubr.f32.gmra.mxu0 %v12985
  %v13196 = vpop.f32.mrf.mxu0
  %v13197 = vadd.f32 %v13083, %v13196
  %v13198 = vpop.f32.mrf.mxu0
  %v13199 = vadd.f32 %v13087, %v13198
  %13200 = vmatprep.mubr.f32.mxu0 0.0
  %13201 = vmatmul.mubr.f32.gmra.mxu0 %v12986
  %v13202 = vpop.f32.mrf.mxu0
  %v13203 = vadd.f32 %v13083, %v13202
  %v13204 = vpop.f32.mrf.mxu0
  %v13205 = vadd.f32 %v13087, %v13204
  %13206 = vmatprep.mubr.f32.mxu0 0.0
  %13207 = vmatmul.mubr.f32.gmra.mxu0 %v12987
  %v13208 = vpop.f32.mrf.mxu0
  %v13209 = vadd.f32 %v13083, %v13208
  %v13210 = vpop.f32.mrf.mxu0
  %v13211 = vadd.f32 %v13087, %v13210
  %13212 = vmatprep.mubr.f32.mxu0 0.0
  %13213 = vmatmul.mubr.f32.gmra.mxu0 %v12988
  %v13214 = vpop.f32.mrf.mxu0
  %v13215 = vadd.f32 %v13083, %v13214
  %v13216 = vpop.f32.mrf.mxu0
  %v13217 = vadd.f32 %v13087, %v13216
  %13218 = vmatprep.mubr.f32.mxu0 0.0
  %13219 = vmatmul.mubr.f32.gmra.mxu0 %v12989
  %v13220 = vpop.f32.mrf.mxu0
  %v13221 = vadd.f32 %v13083, %v13220
  %v13222 = vpop.f32.mrf.mxu0
  %v13223 = vadd.f32 %v13087, %v13222
  %13224 = vmatprep.mubr.f32.mxu0 0.0
  %13225 = vmatmul.mubr.f32.gmra.mxu0 %v12990
  %v13226 = vpop.f32.mrf.mxu0
  %v13227 = vadd.f32 %v13083, %v13226
  %v13228 = vpop.f32.mrf.mxu0
  %v13229 = vadd.f32 %v13087, %v13228
  %13230 = vmatprep.mubr.f32.mxu0 0.0
  %13231 = vmatmul.mubr.f32.gmra.mxu0 %v12991
  %v13232 = vpop.f32.mrf.mxu0
  %v13233 = vadd.f32 %v13083, %v13232
  %v13234 = vpop.f32.mrf.mxu0
  %v13235 = vadd.f32 %v13087, %v13234
  %13236 = vmatprep.mubr.f32.mxu0 0.0
  %13237 = vmatmul.mubr.f32.gmra.mxu0 %v12992
  %v13238 = vpop.f32.mrf.mxu0
  %v13239 = vadd.f32 %v13083, %v13238
  %v13240 = vpop.f32.mrf.mxu0
  %v13241 = vadd.f32 %v13087, %v13240
  %13242 = vmatprep.mubr.f32.mxu0 0.0
  %13243 = vmatmul.mubr.f32.gmra.mxu0 %v12993
  %v13244 = vpop.f32.mrf.mxu0
  %v13245 = vadd.f32 %v13083, %v13244
  %v13246 = vpop.f32.mrf.mxu0
  %v13247 = vadd.f32 %v13087, %v13246
  %13248 = vmatprep.mubr.f32.mxu0 0.0
  %13249 = vmatmul.mubr.f32.gmra.mxu0 %v12994
  %v13250 = vpop.f32.mrf.mxu0
  %v13251 = vadd.f32 %v13083, %v13250
  %v13252 = vpop.f32.mrf.mxu0
  %v13253 = vadd.f32 %v13087, %v13252
  %13254 = vmatprep.mubr.f32.mxu0 0.0
  %13255 = vmatmul.mubr.f32.gmra.mxu0 %v12995
  %v13256 = vpop.f32.mrf.mxu0
  %v13257 = vadd.f32 %v13083, %v13256
  %v13258 = vpop.f32.mrf.mxu0
  %v13259 = vadd.f32 %v13087, %v13258
  %13260 = vmatprep.mubr.f32.mxu0 0.0
  %13261 = vmatmul.mubr.f32.gmra.mxu0 %v12996
  %v13262 = vpop.f32.mrf.mxu0
  %v13263 = vadd.f32 %v13083, %v13262
  %v13264 = vpop.f32.mrf.mxu0
  %v13265 = vadd.f32 %v13087, %v13264
  %13266 = vmatprep.mubr.f32.mxu0 0.0
  %13267 = vmatmul.mubr.f32.gmra.mxu0 %v12997
  %v13268 = vpop.f32.mrf.mxu0
  %v13269 = vadd.f32 %v13083, %v13268
  %v13270 = vpop.f32.mrf.mxu0
  %v13271 = vadd.f32 %v13087, %v13270
  %13272 = vmatprep.mubr.f32.mxu0 0.0
  %13273 = vmatmul.mubr.f32.gmra.mxu0 %v12998
  %v13274 = vpop.f32.mrf.mxu0
  %v13275 = vadd.f32 %v13083, %v13274
  %v13276 = vpop.f32.mrf.mxu0
  %v13277 = vadd.f32 %v13087, %v13276
  %13278 = vmatprep.mubr.f32.mxu0 0.0
  %13279 = vmatmul.mubr.f32.gmra.mxu0 %v12999
  %v13280 = vpop.f32.mrf.mxu0
  %v13281 = vadd.f32 %v13083, %v13280
  %v13282 = vpop.f32.mrf.mxu0
  %v13283 = vadd.f32 %v13087, %v13282
  %13284 = vmatprep.mubr.f32.mxu0 0.0
  %13285 = vmatmul.mubr.f32.gmra.mxu0 %v13000
  %v13286 = vpop.f32.mrf.mxu0
  %v13287 = vadd.f32 %v13083, %v13286
  %v13288 = vpop.f32.mrf.mxu0
  %v13289 = vadd.f32 %v13087, %v13288
  %13290 = vmatprep.mubr.f32.mxu0 0.0
  %13291 = vmatmul.mubr.f32.gmra.mxu0 %v13001
  %v13292 = vpop.f32.mrf.mxu0
  %v13293 = vadd.f32 %v13083, %v13292
  %v13294 = vpop.f32.mrf.mxu0
  %v13295 = vadd.f32 %v13087, %v13294
  %13296 = vmatprep.mubr.f32.mxu0 0.0
  %13297 = vmatmul.mubr.f32.gmra.mxu0 %v13002
  %v13298 = vpop.f32.mrf.mxu0
  %v13299 = vadd.f32 %v13083, %v13298
  %v13300 = vpop.f32.mrf.mxu0
  %v13301 = vadd.f32 %v13087, %v13300
  %13302 = vmatprep.mubr.f32.mxu0 0.0
  %13303 = vmatmul.mubr.f32.gmra.mxu0 %v13003
  %v13304 = vpop.f32.mrf.mxu0
  %v13305 = vadd.f32 %v13083, %v13304
  %v13306 = vpop.f32.mrf.mxu0
  %v13307 = vadd.f32 %v13087, %v13306
  %13308 = vmatprep.mubr.f32.mxu0 0.0
  %13309 = vmatmul.mubr.f32.gmra.mxu0 %v13004
  %v13310 = vpop.f32.mrf.mxu0
  %v13311 = vadd.f32 %v13083, %v13310
  %v13312 = vpop.f32.mrf.mxu0
  %v13313 = vadd.f32 %v13087, %v13312
  %13314 = vmatprep.mubr.f32.mxu0 0.0
  %13315 = vmatmul.mubr.f32.gmra.mxu0 %v13005
  %v13316 = vpop.f32.mrf.mxu0
  %v13317 = vadd.f32 %v13083, %v13316
  %v13318 = vpop.f32.mrf.mxu0
  %v13319 = vadd.f32 %v13087, %v13318
  %13320 = vmatprep.mubr.f32.mxu0 0.0
  %13321 = vmatmul.mubr.f32.gmra.mxu0 %v13006
  %v13322 = vpop.f32.mrf.mxu0
  %v13323 = vadd.f32 %v13083, %v13322
  %v13324 = vpop.f32.mrf.mxu0
  %v13325 = vadd.f32 %v13087, %v13324
  %13326 = vmatprep.mubr.f32.mxu0 0.0
  %13327 = vmatmul.mubr.f32.gmra.mxu0 %v13007
  %v13328 = vpop.f32.mrf.mxu0
  %v13329 = vadd.f32 %v13083, %v13328
  %v13330 = vpop.f32.mrf.mxu0
  %v13331 = vadd.f32 %v13087, %v13330
  %13332 = vmatprep.mubr.f32.mxu0 0.0
  %13333 = vmatmul.mubr.f32.gmra.mxu0 %v13008
  %v13334 = vpop.f32.mrf.mxu0
  %v13335 = vadd.f32 %v13083, %v13334
  %v13336 = vpop.f32.mrf.mxu0
  %v13337 = vadd.f32 %v13087, %v13336
  %13338 = vmatprep.mubr.f32.mxu0 0.0
  %13339 = vmatmul.mubr.f32.gmra.mxu0 %v13009
  %v13340 = vpop.f32.mrf.mxu0
  %v13341 = vadd.f32 %v13083, %v13340
  %v13342 = vpop.f32.mrf.mxu0
  %v13343 = vadd.f32 %v13087, %v13342
  %13344 = vmatprep.mubr.f32.mxu0 0.0
  %13345 = vmatmul.mubr.f32.gmra.mxu0 %v13010
  %v13346 = vpop.f32.mrf.mxu0
  %v13347 = vadd.f32 %v13083, %v13346
  %v13348 = vpop.f32.mrf.mxu0
  %v13349 = vadd.f32 %v13087, %v13348
  %13350 = vmatprep.mubr.f32.mxu0 0.0
  %13351 = vmatmul.mubr.f32.gmra.mxu0 %v13011
  %v13352 = vpop.f32.mrf.mxu0
  %v13353 = vadd.f32 %v13083, %v13352
  %v13354 = vpop.f32.mrf.mxu0
  %v13355 = vadd.f32 %v13087, %v13354
  %13356 = vdwg.mxu0
  %13357 = vmatprep.subr.mxu0 %v13076
  %13358 = vmatpush1.msra.mxu0 %v13075
  %13359 = vmatprep.subr.mxu0 %v13072
  %13360 = vmatpush1.msra.mxu0 %v13071
  %13361 = vmatprep.subr.mxu0 %v13068
  %13362 = vmatpush1.msra.mxu0 %v13067
  %13363 = vmatprep.subr.mxu0 %v13064
  %13364 = vmatpush1.msra.mxu0 %v13063
  %13365 = vmatprep.subr.mxu0 %v13060
  %13366 = vmatpush1.msra.mxu0 %v13059
  %13367 = vmatprep.subr.mxu0 %v13056
  %13368 = vmatpush1.msra.mxu0 %v13055
  %13369 = vmatprep.subr.mxu0 %v13052
  %13370 = vmatpush1.msra.mxu0 %v13051
  %13371 = vmatprep.subr.mxu0 %v13048
  %13372 = vmatpush1.msra.mxu0 %v13047
  %13373 = vmatprep.subr.mxu0 %v13044
  %13374 = vmatpush1.msra.mxu0 %v13043
  %13375 = vmatprep.subr.mxu0 %v13040
  %13376 = vmatpush1.msra.mxu0 %v13039
  %13377 = vmatprep.subr.mxu0 %v13036
  %13378 = vmatpush1.msra.mxu0 %v13035
  %13379 = vmatprep.subr.mxu0 %v13032
  %13380 = vmatpush1.msra.mxu0 %v13031
  %13381 = vmatprep.subr.mxu0 %v13028
  %13382 = vmatpush1.msra.mxu0 %v13027
  %13383 = vmatprep.subr.mxu0 %v13024
  %13384 = vmatpush1.msra.mxu0 %v13023
  %13385 = vmatprep.subr.mxu0 %v13020
  %13386 = vmatpush1.msra.mxu0 %v13019
  %13387 = vmatprep.subr.mxu0 %v13016
  %13388 = vmatpush1.msra.mxu0 %v13015
  %13389 = vmatprep.subr.mxu0 0.0
  %13390 = vmatpush2.msra.mxu0 0.0
  %13391 = vmatprep.subr.mxu0 0.0
  %13392 = vmatpush2.msra.mxu0 0.0
  %13393 = vmatprep.subr.mxu0 0.0
  %13394 = vmatpush2.msra.mxu0 0.0
  %13395 = vmatprep.subr.mxu0 0.0
  %13396 = vmatpush2.msra.mxu0 0.0
  %13397 = vmatprep.subr.mxu0 0.0
  %13398 = vmatpush2.msra.mxu0 0.0
  %13399 = vmatprep.subr.mxu0 0.0
  %13400 = vmatpush2.msra.mxu0 0.0
  %13401 = vmatprep.subr.mxu0 0.0
  %13402 = vmatpush2.msra.mxu0 0.0
  %13403 = vmatprep.subr.mxu0 0.0
  %13404 = vmatpush2.msra.mxu0 0.0
  %13405 = vmatprep.subr.mxu0 0.0
  %13406 = vmatpush2.msra.mxu0 0.0
  %13407 = vmatprep.subr.mxu0 0.0
  %13408 = vmatpush2.msra.mxu0 0.0
  %13409 = vmatprep.subr.mxu0 0.0
  %13410 = vmatpush2.msra.mxu0 0.0
  %13411 = vmatprep.subr.mxu0 0.0
  %13412 = vmatpush2.msra.mxu0 0.0
  %13413 = vmatprep.subr.mxu0 0.0
  %13414 = vmatpush2.msra.mxu0 0.0
  %13415 = vmatprep.subr.mxu0 0.0
  %13416 = vmatpush2.msra.mxu0 0.0
  %13417 = vmatprep.subr.mxu0 0.0
  %13418 = vmatpush2.msra.mxu0 0.0
  %13419 = vmatprep.subr.mxu0 0.0
  %13420 = vmatpush2.msra.mxu0 0.0
  %13421 = vmatprep.mubr.f32.mxu0 0.0
  %13422 = vmatmul.mubr.f32.gmra.mxu0 %v12980
  %v13423 = vpop.f32.mrf.mxu0
  %v13424 = vadd.f32 %v13091, %v13423
  %v13425 = vpop.f32.mrf.mxu0
  %v13426 = vadd.f32 %v13095, %v13425
  %13427 = vmatprep.mubr.f32.mxu0 0.0
  %13428 = vmatmul.mubr.f32.gmra.mxu0 %v12981
  %v13429 = vpop.f32.mrf.mxu0
  %v13430 = vadd.f32 %v13091, %v13429
  %v13431 = vpop.f32.mrf.mxu0
  %v13432 = vadd.f32 %v13095, %v13431
  %13433 = vmatprep.mubr.f32.mxu0 0.0
  %13434 = vmatmul.mubr.f32.gmra.mxu0 %v12982
  %v13435 = vpop.f32.mrf.mxu0
  %v13436 = vadd.f32 %v13091, %v13435
  %v13437 = vpop.f32.mrf.mxu0
  %v13438 = vadd.f32 %v13095, %v13437
  %13439 = vmatprep.mubr.f32.mxu0 0.0
  %13440 = vmatmul.mubr.f32.gmra.mxu0 %v12983
  %v13441 = vpop.f32.mrf.mxu0
  %v13442 = vadd.f32 %v13091, %v13441
  %v13443 = vpop.f32.mrf.mxu0
  %v13444 = vadd.f32 %v13095, %v13443
  %13445 = vmatprep.mubr.f32.mxu0 0.0
  %13446 = vmatmul.mubr.f32.gmra.mxu0 %v12984
  %v13447 = vpop.f32.mrf.mxu0
  %v13448 = vadd.f32 %v13091, %v13447
  %v13449 = vpop.f32.mrf.mxu0
  %v13450 = vadd.f32 %v13095, %v13449
  %13451 = vmatprep.mubr.f32.mxu0 0.0
  %13452 = vmatmul.mubr.f32.gmra.mxu0 %v12985
  %v13453 = vpop.f32.mrf.mxu0
  %v13454 = vadd.f32 %v13091, %v13453
  %v13455 = vpop.f32.mrf.mxu0
  %v13456 = vadd.f32 %v13095, %v13455
  %13457 = vmatprep.mubr.f32.mxu0 0.0
  %13458 = vmatmul.mubr.f32.gmra.mxu0 %v12986
  %v13459 = vpop.f32.mrf.mxu0
  %v13460 = vadd.f32 %v13091, %v13459
  %v13461 = vpop.f32.mrf.mxu0
  %v13462 = vadd.f32 %v13095, %v13461
  %13463 = vmatprep.mubr.f32.mxu0 0.0
  %13464 = vmatmul.mubr.f32.gmra.mxu0 %v12987
  %v13465 = vpop.f32.mrf.mxu0
  %v13466 = vadd.f32 %v13091, %v13465
  %v13467 = vpop.f32.mrf.mxu0
  %v13468 = vadd.f32 %v13095, %v13467
  %13469 = vmatprep.mubr.f32.mxu0 0.0
  %13470 = vmatmul.mubr.f32.gmra.mxu0 %v12988
  %v13471 = vpop.f32.mrf.mxu0
  %v13472 = vadd.f32 %v13091, %v13471
  %v13473 = vpop.f32.mrf.mxu0
  %v13474 = vadd.f32 %v13095, %v13473
  %13475 = vmatprep.mubr.f32.mxu0 0.0
  %13476 = vmatmul.mubr.f32.gmra.mxu0 %v12989
  %v13477 = vpop.f32.mrf.mxu0
  %v13478 = vadd.f32 %v13091, %v13477
  %v13479 = vpop.f32.mrf.mxu0
  %v13480 = vadd.f32 %v13095, %v13479
  %13481 = vmatprep.mubr.f32.mxu0 0.0
  %13482 = vmatmul.mubr.f32.gmra.mxu0 %v12990
  %v13483 = vpop.f32.mrf.mxu0
  %v13484 = vadd.f32 %v13091, %v13483
  %v13485 = vpop.f32.mrf.mxu0
  %v13486 = vadd.f32 %v13095, %v13485
  %13487 = vmatprep.mubr.f32.mxu0 0.0
  %13488 = vmatmul.mubr.f32.gmra.mxu0 %v12991
  %v13489 = vpop.f32.mrf.mxu0
  %v13490 = vadd.f32 %v13091, %v13489
  %v13491 = vpop.f32.mrf.mxu0
  %v13492 = vadd.f32 %v13095, %v13491
  %13493 = vmatprep.mubr.f32.mxu0 0.0
  %13494 = vmatmul.mubr.f32.gmra.mxu0 %v12992
  %v13495 = vpop.f32.mrf.mxu0
  %v13496 = vadd.f32 %v13091, %v13495
  %v13497 = vpop.f32.mrf.mxu0
  %v13498 = vadd.f32 %v13095, %v13497
  %13499 = vmatprep.mubr.f32.mxu0 0.0
  %13500 = vmatmul.mubr.f32.gmra.mxu0 %v12993
  %v13501 = vpop.f32.mrf.mxu0
  %v13502 = vadd.f32 %v13091, %v13501
  %v13503 = vpop.f32.mrf.mxu0
  %v13504 = vadd.f32 %v13095, %v13503
  %13505 = vmatprep.mubr.f32.mxu0 0.0
  %13506 = vmatmul.mubr.f32.gmra.mxu0 %v12994
  %v13507 = vpop.f32.mrf.mxu0
  %v13508 = vadd.f32 %v13091, %v13507
  %v13509 = vpop.f32.mrf.mxu0
  %v13510 = vadd.f32 %v13095, %v13509
  %13511 = vmatprep.mubr.f32.mxu0 0.0
  %13512 = vmatmul.mubr.f32.gmra.mxu0 %v12995
  %v13513 = vpop.f32.mrf.mxu0
  %v13514 = vadd.f32 %v13091, %v13513
  %v13515 = vpop.f32.mrf.mxu0
  %v13516 = vadd.f32 %v13095, %v13515
  %13517 = vmatprep.mubr.f32.mxu0 0.0
  %13518 = vmatmul.mubr.f32.gmra.mxu0 %v12996
  %v13519 = vpop.f32.mrf.mxu0
  %v13520 = vadd.f32 %v13091, %v13519
  %v13521 = vpop.f32.mrf.mxu0
  %v13522 = vadd.f32 %v13095, %v13521
  %13523 = vmatprep.mubr.f32.mxu0 0.0
  %13524 = vmatmul.mubr.f32.gmra.mxu0 %v12997
  %v13525 = vpop.f32.mrf.mxu0
  %v13526 = vadd.f32 %v13091, %v13525
  %v13527 = vpop.f32.mrf.mxu0
  %v13528 = vadd.f32 %v13095, %v13527
  %13529 = vmatprep.mubr.f32.mxu0 0.0
  %13530 = vmatmul.mubr.f32.gmra.mxu0 %v12998
  %v13531 = vpop.f32.mrf.mxu0
  %v13532 = vadd.f32 %v13091, %v13531
  %v13533 = vpop.f32.mrf.mxu0
  %v13534 = vadd.f32 %v13095, %v13533
  %13535 = vmatprep.mubr.f32.mxu0 0.0
  %13536 = vmatmul.mubr.f32.gmra.mxu0 %v12999
  %v13537 = vpop.f32.mrf.mxu0
  %v13538 = vadd.f32 %v13091, %v13537
  %v13539 = vpop.f32.mrf.mxu0
  %v13540 = vadd.f32 %v13095, %v13539
  %13541 = vmatprep.mubr.f32.mxu0 0.0
  %13542 = vmatmul.mubr.f32.gmra.mxu0 %v13000
  %v13543 = vpop.f32.mrf.mxu0
  %v13544 = vadd.f32 %v13091, %v13543
  %v13545 = vpop.f32.mrf.mxu0
  %v13546 = vadd.f32 %v13095, %v13545
  %13547 = vmatprep.mubr.f32.mxu0 0.0
  %13548 = vmatmul.mubr.f32.gmra.mxu0 %v13001
  %v13549 = vpop.f32.mrf.mxu0
  %v13550 = vadd.f32 %v13091, %v13549
  %v13551 = vpop.f32.mrf.mxu0
  %v13552 = vadd.f32 %v13095, %v13551
  %13553 = vmatprep.mubr.f32.mxu0 0.0
  %13554 = vmatmul.mubr.f32.gmra.mxu0 %v13002
  %v13555 = vpop.f32.mrf.mxu0
  %v13556 = vadd.f32 %v13091, %v13555
  %v13557 = vpop.f32.mrf.mxu0
  %v13558 = vadd.f32 %v13095, %v13557
  %13559 = vmatprep.mubr.f32.mxu0 0.0
  %13560 = vmatmul.mubr.f32.gmra.mxu0 %v13003
  %v13561 = vpop.f32.mrf.mxu0
  %v13562 = vadd.f32 %v13091, %v13561
  %v13563 = vpop.f32.mrf.mxu0
  %v13564 = vadd.f32 %v13095, %v13563
  %13565 = vmatprep.mubr.f32.mxu0 0.0
  %13566 = vmatmul.mubr.f32.gmra.mxu0 %v13004
  %v13567 = vpop.f32.mrf.mxu0
  %v13568 = vadd.f32 %v13091, %v13567
  %v13569 = vpop.f32.mrf.mxu0
  %v13570 = vadd.f32 %v13095, %v13569
  %13571 = vmatprep.mubr.f32.mxu0 0.0
  %13572 = vmatmul.mubr.f32.gmra.mxu0 %v13005
  %v13573 = vpop.f32.mrf.mxu0
  %v13574 = vadd.f32 %v13091, %v13573
  %v13575 = vpop.f32.mrf.mxu0
  %v13576 = vadd.f32 %v13095, %v13575
  %13577 = vmatprep.mubr.f32.mxu0 0.0
  %13578 = vmatmul.mubr.f32.gmra.mxu0 %v13006
  %v13579 = vpop.f32.mrf.mxu0
  %v13580 = vadd.f32 %v13091, %v13579
  %v13581 = vpop.f32.mrf.mxu0
  %v13582 = vadd.f32 %v13095, %v13581
  %13583 = vmatprep.mubr.f32.mxu0 0.0
  %13584 = vmatmul.mubr.f32.gmra.mxu0 %v13007
  %v13585 = vpop.f32.mrf.mxu0
  %v13586 = vadd.f32 %v13091, %v13585
  %v13587 = vpop.f32.mrf.mxu0
  %v13588 = vadd.f32 %v13095, %v13587
  %13589 = vmatprep.mubr.f32.mxu0 0.0
  %13590 = vmatmul.mubr.f32.gmra.mxu0 %v13008
  %v13591 = vpop.f32.mrf.mxu0
  %v13592 = vadd.f32 %v13091, %v13591
  %v13593 = vpop.f32.mrf.mxu0
  %v13594 = vadd.f32 %v13095, %v13593
  %13595 = vmatprep.mubr.f32.mxu0 0.0
  %13596 = vmatmul.mubr.f32.gmra.mxu0 %v13009
  %v13597 = vpop.f32.mrf.mxu0
  %v13598 = vadd.f32 %v13091, %v13597
  %v13599 = vpop.f32.mrf.mxu0
  %v13600 = vadd.f32 %v13095, %v13599
  %13601 = vmatprep.mubr.f32.mxu0 0.0
  %13602 = vmatmul.mubr.f32.gmra.mxu0 %v13010
  %v13603 = vpop.f32.mrf.mxu0
  %v13604 = vadd.f32 %v13091, %v13603
  %v13605 = vpop.f32.mrf.mxu0
  %v13606 = vadd.f32 %v13095, %v13605
  %13607 = vmatprep.mubr.f32.mxu0 0.0
  %13608 = vmatmul.mubr.f32.gmra.mxu0 %v13011
  %v13609 = vpop.f32.mrf.mxu0
  %v13610 = vadd.f32 %v13091, %v13609
  %v13611 = vpop.f32.mrf.mxu0
  %v13612 = vadd.f32 %v13095, %v13611
  %13613 = vdwg.mxu0
  %v13614 = vmax.f32 %v13167, 0.0
  %v13615 = vmax.f32 %v13169, 0.0
  %v13616 = vmax.f32 %v13424, 0.0
  %v13617 = vmax.f32 %v13426, 0.0
  %v13618 = vmax.f32 %v13173, 0.0
  %v13619 = vmax.f32 %v13175, 0.0
  %v13620 = vmax.f32 %v13430, 0.0
  %v13621 = vmax.f32 %v13432, 0.0
  %v13622 = vmax.f32 %v13179, 0.0
  %v13623 = vmax.f32 %v13181, 0.0
  %v13624 = vmax.f32 %v13436, 0.0
  %v13625 = vmax.f32 %v13438, 0.0
  %v13626 = vmax.f32 %v13185, 0.0
  %v13627 = vmax.f32 %v13187, 0.0
  %v13628 = vmax.f32 %v13442, 0.0
  %v13629 = vmax.f32 %v13444, 0.0
  %v13630 = vmax.f32 %v13191, 0.0
  %v13631 = vmax.f32 %v13193, 0.0
  %v13632 = vmax.f32 %v13448, 0.0
  %v13633 = vmax.f32 %v13450, 0.0
  %v13634 = vmax.f32 %v13197, 0.0
  %v13635 = vmax.f32 %v13199, 0.0
  %v13636 = vmax.f32 %v13454, 0.0
  %v13637 = vmax.f32 %v13456, 0.0
  %v13638 = vmax.f32 %v13203, 0.0
  %v13639 = vmax.f32 %v13205, 0.0
  %v13640 = vmax.f32 %v13460, 0.0
  %v13641 = vmax.f32 %v13462, 0.0
  %v13642 = vmax.f32 %v13209, 0.0
  %v13643 = vmax.f32 %v13211, 0.0
  %v13644 = vmax.f32 %v13466, 0.0
  %v13645 = vmax.f32 %v13468, 0.0
  %v13646 = vmax.f32 %v13215, 0.0
  %v13647 = vmax.f32 %v13217, 0.0
  %v13648 = vmax.f32 %v13472, 0.0
  %v13649 = vmax.f32 %v13474, 0.0
  %v13650 = vmax.f32 %v13221, 0.0
  %v13651 = vmax.f32 %v13223, 0.0
  %v13652 = vmax.f32 %v13478, 0.0
  %v13653 = vmax.f32 %v13480, 0.0
  %v13654 = vmax.f32 %v13227, 0.0
  %v13655 = vmax.f32 %v13229, 0.0
  %v13656 = vmax.f32 %v13484, 0.0
  %v13657 = vmax.f32 %v13486, 0.0
  %v13658 = vmax.f32 %v13233, 0.0
  %v13659 = vmax.f32 %v13235, 0.0
  %v13660 = vmax.f32 %v13490, 0.0
  %v13661 = vmax.f32 %v13492, 0.0
  %v13662 = vmax.f32 %v13239, 0.0
  %v13663 = vmax.f32 %v13241, 0.0
  %v13664 = vmax.f32 %v13496, 0.0
  %v13665 = vmax.f32 %v13498, 0.0
  %v13666 = vmax.f32 %v13245, 0.0
  %v13667 = vmax.f32 %v13247, 0.0
  %v13668 = vmax.f32 %v13502, 0.0
  %v13669 = vmax.f32 %v13504, 0.0
  %v13670 = vmax.f32 %v13251, 0.0
  %v13671 = vmax.f32 %v13253, 0.0
  %v13672 = vmax.f32 %v13508, 0.0
  %v13673 = vmax.f32 %v13510, 0.0
  %v13674 = vmax.f32 %v13257, 0.0
  %v13675 = vmax.f32 %v13259, 0.0
  %v13676 = vmax.f32 %v13514, 0.0
  %v13677 = vmax.f32 %v13516, 0.0
  %v13678 = vmax.f32 %v13263, 0.0
  %v13679 = vmax.f32 %v13265, 0.0
  %v13680 = vmax.f32 %v13520, 0.0
  %v13681 = vmax.f32 %v13522, 0.0
  %v13682 = vmax.f32 %v13269, 0.0
  %v13683 = vmax.f32 %v13271, 0.0
  %v13684 = vmax.f32 %v13526, 0.0
  %v13685 = vmax.f32 %v13528, 0.0
  %v13686 = vmax.f32 %v13275, 0.0
  %v13687 = vmax.f32 %v13277, 0.0
  %v13688 = vmax.f32 %v13532, 0.0
  %v13689 = vmax.f32 %v13534, 0.0
  %v13690 = vmax.f32 %v13281, 0.0
  %v13691 = vmax.f32 %v13283, 0.0
  %v13692 = vmax.f32 %v13538, 0.0
  %v13693 = vmax.f32 %v13540, 0.0
  %v13694 = vmax.f32 %v13287, 0.0
  %v13695 = vmax.f32 %v13289, 0.0
  %v13696 = vmax.f32 %v13544, 0.0
  %v13697 = vmax.f32 %v13546, 0.0
  %v13698 = vmax.f32 %v13293, 0.0
  %v13699 = vmax.f32 %v13295, 0.0
  %v13700 = vmax.f32 %v13550, 0.0
  %v13701 = vmax.f32 %v13552, 0.0
  %v13702 = vmax.f32 %v13299, 0.0
  %v13703 = vmax.f32 %v13301, 0.0
  %v13704 = vmax.f32 %v13556, 0.0
  %v13705 = vmax.f32 %v13558, 0.0
  %v13706 = vmax.f32 %v13305, 0.0
  %v13707 = vmax.f32 %v13307, 0.0
  %v13708 = vmax.f32 %v13562, 0.0
  %v13709 = vmax.f32 %v13564, 0.0
  %v13710 = vmax.f32 %v13311, 0.0
  %v13711 = vmax.f32 %v13313, 0.0
  %v13712 = vmax.f32 %v13568, 0.0
  %v13713 = vmax.f32 %v13570, 0.0
  %v13714 = vmax.f32 %v13317, 0.0
  %v13715 = vmax.f32 %v13319, 0.0
  %v13716 = vmax.f32 %v13574, 0.0
  %v13717 = vmax.f32 %v13576, 0.0
  %v13718 = vmax.f32 %v13323, 0.0
  %v13719 = vmax.f32 %v13325, 0.0
  %v13720 = vmax.f32 %v13580, 0.0
  %v13721 = vmax.f32 %v13582, 0.0
  %v13722 = vmax.f32 %v13329, 0.0
  %v13723 = vmax.f32 %v13331, 0.0
  %v13724 = vmax.f32 %v13586, 0.0
  %v13725 = vmax.f32 %v13588, 0.0
  %v13726 = vmax.f32 %v13335, 0.0
  %v13727 = vmax.f32 %v13337, 0.0
  %v13728 = vmax.f32 %v13592, 0.0
  %v13729 = vmax.f32 %v13594, 0.0
  %v13730 = vmax.f32 %v13341, 0.0
  %v13731 = vmax.f32 %v13343, 0.0
  %v13732 = vmax.f32 %v13598, 0.0
  %v13733 = vmax.f32 %v13600, 0.0
  %v13734 = vmax.f32 %v13347, 0.0
  %v13735 = vmax.f32 %v13349, 0.0
  %v13736 = vmax.f32 %v13604, 0.0
  %v13737 = vmax.f32 %v13606, 0.0
  %v13738 = vmax.f32 %v13353, 0.0
  %v13739 = vmax.f32 %v13355, 0.0
  %v13740 = vmax.f32 %v13610, 0.0
  %v13741 = vmax.f32 %v13612, 0.0
  %s13742 = scalar_lea.vmem %s9, 512
  %v13743 = vld [vmem:[%s13742] sm:$0xff]
  %v13744 = vld [vmem:[%s13742 + $0x8] sm:$0xff]
  %v13745 = vld [vmem:[%s13742 + $0x10] sm:$0xff]
  %v13746 = vld [vmem:[%s13742 + $0x18] sm:$0xff]
  %v13747 = vld [vmem:[%s13742 + $0x20] sm:$0xff]
  %v13748 = vld [vmem:[%s13742 + $0x28] sm:$0xff]
  %v13749 = vld [vmem:[%s13742 + $0x30] sm:$0xff]
  %v13750 = vld [vmem:[%s13742 + $0x38] sm:$0xff]
  %v13751 = vld [vmem:[%s13742 + $0x40] sm:$0xff]
  %v13752 = vld [vmem:[%s13742 + $0x48] sm:$0xff]
  %v13753 = vld [vmem:[%s13742 + $0x50] sm:$0xff]
  %v13754 = vld [vmem:[%s13742 + $0x58] sm:$0xff]
  %v13755 = vld [vmem:[%s13742 + $0x60] sm:$0xff]
  %v13756 = vld [vmem:[%s13742 + $0x68] sm:$0xff]
  %v13757 = vld [vmem:[%s13742 + $0x70] sm:$0xff]
  %v13758 = vld [vmem:[%s13742 + $0x78] sm:$0xff]
  %v13759 = vld [vmem:[%s13742 + $0x80] sm:$0xff]
  %v13760 = vld [vmem:[%s13742 + $0x88] sm:$0xff]
  %v13761 = vld [vmem:[%s13742 + $0x90] sm:$0xff]
  %v13762 = vld [vmem:[%s13742 + $0x98] sm:$0xff]
  %v13763 = vld [vmem:[%s13742 + $0xa0] sm:$0xff]
  %v13764 = vld [vmem:[%s13742 + $0xa8] sm:$0xff]
  %v13765 = vld [vmem:[%s13742 + $0xb0] sm:$0xff]
  %v13766 = vld [vmem:[%s13742 + $0xb8] sm:$0xff]
  %v13767 = vld [vmem:[%s13742 + $0xc0] sm:$0xff]
  %v13768 = vld [vmem:[%s13742 + $0xc8] sm:$0xff]
  %v13769 = vld [vmem:[%s13742 + $0xd0] sm:$0xff]
  %v13770 = vld [vmem:[%s13742 + $0xd8] sm:$0xff]
  %v13771 = vld [vmem:[%s13742 + $0xe0] sm:$0xff]
  %v13772 = vld [vmem:[%s13742 + $0xe8] sm:$0xff]
  %v13773 = vld [vmem:[%s13742 + $0xf0] sm:$0xff]
  %v13774 = vld [vmem:[%s13742 + $0xf8] sm:$0xff]
  %v13775 = vld [vmem:[%s13742 + $0x100] sm:$0xff]
  %v13776 = vld [vmem:[%s13742 + $0x108] sm:$0xff]
  %v13777 = vld [vmem:[%s13742 + $0x110] sm:$0xff]
  %v13778 = vld [vmem:[%s13742 + $0x118] sm:$0xff]
  %v13779 = vld [vmem:[%s13742 + $0x120] sm:$0xff]
  %v13780 = vld [vmem:[%s13742 + $0x128] sm:$0xff]
  %v13781 = vld [vmem:[%s13742 + $0x130] sm:$0xff]
  %v13782 = vld [vmem:[%s13742 + $0x138] sm:$0xff]
  %v13783 = vld [vmem:[%s13742 + $0x140] sm:$0xff]
  %v13784 = vld [vmem:[%s13742 + $0x148] sm:$0xff]
  %v13785 = vld [vmem:[%s13742 + $0x150] sm:$0xff]
  %v13786 = vld [vmem:[%s13742 + $0x158] sm:$0xff]
  %v13787 = vld [vmem:[%s13742 + $0x160] sm:$0xff]
  %v13788 = vld [vmem:[%s13742 + $0x168] sm:$0xff]
  %v13789 = vld [vmem:[%s13742 + $0x170] sm:$0xff]
  %v13790 = vld [vmem:[%s13742 + $0x178] sm:$0xff]
  %v13791 = vld [vmem:[%s13742 + $0x180] sm:$0xff]
  %v13792 = vld [vmem:[%s13742 + $0x188] sm:$0xff]
  %v13793 = vld [vmem:[%s13742 + $0x190] sm:$0xff]
  %v13794 = vld [vmem:[%s13742 + $0x198] sm:$0xff]
  %v13795 = vld [vmem:[%s13742 + $0x1a0] sm:$0xff]
  %v13796 = vld [vmem:[%s13742 + $0x1a8] sm:$0xff]
  %v13797 = vld [vmem:[%s13742 + $0x1b0] sm:$0xff]
  %v13798 = vld [vmem:[%s13742 + $0x1b8] sm:$0xff]
  %v13799 = vld [vmem:[%s13742 + $0x1c0] sm:$0xff]
  %v13800 = vld [vmem:[%s13742 + $0x1c8] sm:$0xff]
  %v13801 = vld [vmem:[%s13742 + $0x1d0] sm:$0xff]
  %v13802 = vld [vmem:[%s13742 + $0x1d8] sm:$0xff]
  %v13803 = vld [vmem:[%s13742 + $0x1e0] sm:$0xff]
  %v13804 = vld [vmem:[%s13742 + $0x1e8] sm:$0xff]
  %v13805 = vld [vmem:[%s13742 + $0x1f0] sm:$0xff]
  %v13806 = vld [vmem:[%s13742 + $0x1f8] sm:$0xff]
  %13807 = vmatprep.subr.mxu0 0.0
  %13808 = vmatpush1.msra.mxu0 %v13758
  %13809 = vmatprep.subr.mxu0 0.0
  %13810 = vmatpush1.msra.mxu0 %v13757
  %13811 = vmatprep.subr.mxu0 0.0
  %13812 = vmatpush1.msra.mxu0 %v13756
  %13813 = vmatprep.subr.mxu0 0.0
  %13814 = vmatpush1.msra.mxu0 %v13755
  %13815 = vmatprep.subr.mxu0 0.0
  %13816 = vmatpush1.msra.mxu0 %v13754
  %13817 = vmatprep.subr.mxu0 0.0
  %13818 = vmatpush1.msra.mxu0 %v13753
  %13819 = vmatprep.subr.mxu0 0.0
  %13820 = vmatpush1.msra.mxu0 %v13752
  %13821 = vmatprep.subr.mxu0 0.0
  %13822 = vmatpush1.msra.mxu0 %v13751
  %13823 = vmatprep.subr.mxu0 0.0
  %13824 = vmatpush1.msra.mxu0 %v13750
  %13825 = vmatprep.subr.mxu0 0.0
  %13826 = vmatpush1.msra.mxu0 %v13749
  %13827 = vmatprep.subr.mxu0 0.0
  %13828 = vmatpush1.msra.mxu0 %v13748
  %13829 = vmatprep.subr.mxu0 0.0
  %13830 = vmatpush1.msra.mxu0 %v13747
  %13831 = vmatprep.subr.mxu0 0.0
  %13832 = vmatpush1.msra.mxu0 %v13746
  %13833 = vmatprep.subr.mxu0 0.0
  %13834 = vmatpush1.msra.mxu0 %v13745
  %13835 = vmatprep.subr.mxu0 0.0
  %13836 = vmatpush1.msra.mxu0 %v13744
  %13837 = vmatprep.subr.mxu0 0.0
  %13838 = vmatpush1.msra.mxu0 %v13743
  %13839 = vmatprep.subr.mxu0 0.0
  %13840 = vmatpush2.msra.mxu0 %v13774
  %13841 = vmatprep.subr.mxu0 0.0
  %13842 = vmatpush2.msra.mxu0 %v13773
  %13843 = vmatprep.subr.mxu0 0.0
  %13844 = vmatpush2.msra.mxu0 %v13772
  %13845 = vmatprep.subr.mxu0 0.0
  %13846 = vmatpush2.msra.mxu0 %v13771
  %13847 = vmatprep.subr.mxu0 0.0
  %13848 = vmatpush2.msra.mxu0 %v13770
  %13849 = vmatprep.subr.mxu0 0.0
  %13850 = vmatpush2.msra.mxu0 %v13769
  %13851 = vmatprep.subr.mxu0 0.0
  %13852 = vmatpush2.msra.mxu0 %v13768
  %13853 = vmatprep.subr.mxu0 0.0
  %13854 = vmatpush2.msra.mxu0 %v13767
  %13855 = vmatprep.subr.mxu0 0.0
  %13856 = vmatpush2.msra.mxu0 %v13766
  %13857 = vmatprep.subr.mxu0 0.0
  %13858 = vmatpush2.msra.mxu0 %v13765
  %13859 = vmatprep.subr.mxu0 0.0
  %13860 = vmatpush2.msra.mxu0 %v13764
  %13861 = vmatprep.subr.mxu0 0.0
  %13862 = vmatpush2.msra.mxu0 %v13763
  %13863 = vmatprep.subr.mxu0 0.0
  %13864 = vmatpush2.msra.mxu0 %v13762
  %13865 = vmatprep.subr.mxu0 0.0
  %13866 = vmatpush2.msra.mxu0 %v13761
  %13867 = vmatprep.subr.mxu0 0.0
  %13868 = vmatpush2.msra.mxu0 %v13760
  %13869 = vmatprep.subr.mxu0 0.0
  %13870 = vmatpush2.msra.mxu0 %v13759
  %13871 = vmatprep.mubr.f32.mxu0 %v13615
  %13872 = vmatmul.mubr.f32.gmra.mxu0 %v13614
  %v13873 = vpop.f32.mrf.mxu0
  %v13874 = vadd.f32 0.0, %v13873
  %v13875 = vpop.f32.mrf.mxu0
  %13876 = vmatprep.mubr.f32.mxu0 %v13619
  %13877 = vmatmul.mubr.f32.gmra.mxu0 %v13618
  %v13878 = vpop.f32.mrf.mxu0
  %v13879 = vadd.f32 0.0, %v13878
  %v13880 = vpop.f32.mrf.mxu0
  %13881 = vmatprep.mubr.f32.mxu0 %v13623
  %13882 = vmatmul.mubr.f32.gmra.mxu0 %v13622
  %v13883 = vpop.f32.mrf.mxu0
  %v13884 = vadd.f32 0.0, %v13883
  %v13885 = vpop.f32.mrf.mxu0
  %13886 = vmatprep.mubr.f32.mxu0 %v13627
  %13887 = vmatmul.mubr.f32.gmra.mxu0 %v13626
  %v13888 = vpop.f32.mrf.mxu0
  %v13889 = vadd.f32 0.0, %v13888
  %v13890 = vpop.f32.mrf.mxu0
  %13891 = vmatprep.mubr.f32.mxu0 %v13631
  %13892 = vmatmul.mubr.f32.gmra.mxu0 %v13630
  %v13893 = vpop.f32.mrf.mxu0
  %v13894 = vadd.f32 0.0, %v13893
  %v13895 = vpop.f32.mrf.mxu0
  %13896 = vmatprep.mubr.f32.mxu0 %v13635
  %13897 = vmatmul.mubr.f32.gmra.mxu0 %v13634
  %v13898 = vpop.f32.mrf.mxu0
  %v13899 = vadd.f32 0.0, %v13898
  %v13900 = vpop.f32.mrf.mxu0
  %13901 = vmatprep.mubr.f32.mxu0 %v13639
  %13902 = vmatmul.mubr.f32.gmra.mxu0 %v13638
  %v13903 = vpop.f32.mrf.mxu0
  %v13904 = vadd.f32 0.0, %v13903
  %v13905 = vpop.f32.mrf.mxu0
  %13906 = vmatprep.mubr.f32.mxu0 %v13643
  %13907 = vmatmul.mubr.f32.gmra.mxu0 %v13642
  %v13908 = vpop.f32.mrf.mxu0
  %v13909 = vadd.f32 0.0, %v13908
  %v13910 = vpop.f32.mrf.mxu0
  %13911 = vmatprep.mubr.f32.mxu0 %v13647
  %13912 = vmatmul.mubr.f32.gmra.mxu0 %v13646
  %v13913 = vpop.f32.mrf.mxu0
  %v13914 = vadd.f32 0.0, %v13913
  %v13915 = vpop.f32.mrf.mxu0
  %13916 = vmatprep.mubr.f32.mxu0 %v13651
  %13917 = vmatmul.mubr.f32.gmra.mxu0 %v13650
  %v13918 = vpop.f32.mrf.mxu0
  %v13919 = vadd.f32 0.0, %v13918
  %v13920 = vpop.f32.mrf.mxu0
  %13921 = vmatprep.mubr.f32.mxu0 %v13655
  %13922 = vmatmul.mubr.f32.gmra.mxu0 %v13654
  %v13923 = vpop.f32.mrf.mxu0
  %v13924 = vadd.f32 0.0, %v13923
  %v13925 = vpop.f32.mrf.mxu0
  %13926 = vmatprep.mubr.f32.mxu0 %v13659
  %13927 = vmatmul.mubr.f32.gmra.mxu0 %v13658
  %v13928 = vpop.f32.mrf.mxu0
  %v13929 = vadd.f32 0.0, %v13928
  %v13930 = vpop.f32.mrf.mxu0
  %13931 = vmatprep.mubr.f32.mxu0 %v13663
  %13932 = vmatmul.mubr.f32.gmra.mxu0 %v13662
  %v13933 = vpop.f32.mrf.mxu0
  %v13934 = vadd.f32 0.0, %v13933
  %v13935 = vpop.f32.mrf.mxu0
  %13936 = vmatprep.mubr.f32.mxu0 %v13667
  %13937 = vmatmul.mubr.f32.gmra.mxu0 %v13666
  %v13938 = vpop.f32.mrf.mxu0
  %v13939 = vadd.f32 0.0, %v13938
  %v13940 = vpop.f32.mrf.mxu0
  %13941 = vmatprep.mubr.f32.mxu0 %v13671
  %13942 = vmatmul.mubr.f32.gmra.mxu0 %v13670
  %v13943 = vpop.f32.mrf.mxu0
  %v13944 = vadd.f32 0.0, %v13943
  %v13945 = vpop.f32.mrf.mxu0
  %13946 = vmatprep.mubr.f32.mxu0 %v13675
  %13947 = vmatmul.mubr.f32.gmra.mxu0 %v13674
  %v13948 = vpop.f32.mrf.mxu0
  %v13949 = vadd.f32 0.0, %v13948
  %v13950 = vpop.f32.mrf.mxu0
  %13951 = vmatprep.mubr.f32.mxu0 %v13679
  %13952 = vmatmul.mubr.f32.gmra.mxu0 %v13678
  %v13953 = vpop.f32.mrf.mxu0
  %v13954 = vadd.f32 0.0, %v13953
  %v13955 = vpop.f32.mrf.mxu0
  %13956 = vmatprep.mubr.f32.mxu0 %v13683
  %13957 = vmatmul.mubr.f32.gmra.mxu0 %v13682
  %v13958 = vpop.f32.mrf.mxu0
  %v13959 = vadd.f32 0.0, %v13958
  %v13960 = vpop.f32.mrf.mxu0
  %13961 = vmatprep.mubr.f32.mxu0 %v13687
  %13962 = vmatmul.mubr.f32.gmra.mxu0 %v13686
  %v13963 = vpop.f32.mrf.mxu0
  %v13964 = vadd.f32 0.0, %v13963
  %v13965 = vpop.f32.mrf.mxu0
  %13966 = vmatprep.mubr.f32.mxu0 %v13691
  %13967 = vmatmul.mubr.f32.gmra.mxu0 %v13690
  %v13968 = vpop.f32.mrf.mxu0
  %v13969 = vadd.f32 0.0, %v13968
  %v13970 = vpop.f32.mrf.mxu0
  %13971 = vmatprep.mubr.f32.mxu0 %v13695
  %13972 = vmatmul.mubr.f32.gmra.mxu0 %v13694
  %v13973 = vpop.f32.mrf.mxu0
  %v13974 = vadd.f32 0.0, %v13973
  %v13975 = vpop.f32.mrf.mxu0
  %13976 = vmatprep.mubr.f32.mxu0 %v13699
  %13977 = vmatmul.mubr.f32.gmra.mxu0 %v13698
  %v13978 = vpop.f32.mrf.mxu0
  %v13979 = vadd.f32 0.0, %v13978
  %v13980 = vpop.f32.mrf.mxu0
  %13981 = vmatprep.mubr.f32.mxu0 %v13703
  %13982 = vmatmul.mubr.f32.gmra.mxu0 %v13702
  %v13983 = vpop.f32.mrf.mxu0
  %v13984 = vadd.f32 0.0, %v13983
  %v13985 = vpop.f32.mrf.mxu0
  %13986 = vmatprep.mubr.f32.mxu0 %v13707
  %13987 = vmatmul.mubr.f32.gmra.mxu0 %v13706
  %v13988 = vpop.f32.mrf.mxu0
  %v13989 = vadd.f32 0.0, %v13988
  %v13990 = vpop.f32.mrf.mxu0
  %13991 = vmatprep.mubr.f32.mxu0 %v13711
  %13992 = vmatmul.mubr.f32.gmra.mxu0 %v13710
  %v13993 = vpop.f32.mrf.mxu0
  %v13994 = vadd.f32 0.0, %v13993
  %v13995 = vpop.f32.mrf.mxu0
  %13996 = vmatprep.mubr.f32.mxu0 %v13715
  %13997 = vmatmul.mubr.f32.gmra.mxu0 %v13714
  %v13998 = vpop.f32.mrf.mxu0
  %v13999 = vadd.f32 0.0, %v13998
  %v14000 = vpop.f32.mrf.mxu0
  %14001 = vmatprep.mubr.f32.mxu0 %v13719
  %14002 = vmatmul.mubr.f32.gmra.mxu0 %v13718
  %v14003 = vpop.f32.mrf.mxu0
  %v14004 = vadd.f32 0.0, %v14003
  %v14005 = vpop.f32.mrf.mxu0
  %14006 = vmatprep.mubr.f32.mxu0 %v13723
  %14007 = vmatmul.mubr.f32.gmra.mxu0 %v13722
  %v14008 = vpop.f32.mrf.mxu0
  %v14009 = vadd.f32 0.0, %v14008
  %v14010 = vpop.f32.mrf.mxu0
  %14011 = vmatprep.mubr.f32.mxu0 %v13727
  %14012 = vmatmul.mubr.f32.gmra.mxu0 %v13726
  %v14013 = vpop.f32.mrf.mxu0
  %v14014 = vadd.f32 0.0, %v14013
  %v14015 = vpop.f32.mrf.mxu0
  %14016 = vmatprep.mubr.f32.mxu0 %v13731
  %14017 = vmatmul.mubr.f32.gmra.mxu0 %v13730
  %v14018 = vpop.f32.mrf.mxu0
  %v14019 = vadd.f32 0.0, %v14018
  %v14020 = vpop.f32.mrf.mxu0
  %14021 = vmatprep.mubr.f32.mxu0 %v13735
  %14022 = vmatmul.mubr.f32.gmra.mxu0 %v13734
  %v14023 = vpop.f32.mrf.mxu0
  %v14024 = vadd.f32 0.0, %v14023
  %v14025 = vpop.f32.mrf.mxu0
  %14026 = vmatprep.mubr.f32.mxu0 %v13739
  %14027 = vmatmul.mubr.f32.gmra.mxu0 %v13738
  %v14028 = vpop.f32.mrf.mxu0
  %v14029 = vadd.f32 0.0, %v14028
  %v14030 = vpop.f32.mrf.mxu0
  %14031 = vdwg.mxu0
  %14032 = vmatprep.subr.mxu0 0.0
  %14033 = vmatpush1.msra.mxu0 %v13790
  %14034 = vmatprep.subr.mxu0 0.0
  %14035 = vmatpush1.msra.mxu0 %v13789
  %14036 = vmatprep.subr.mxu0 0.0
  %14037 = vmatpush1.msra.mxu0 %v13788
  %14038 = vmatprep.subr.mxu0 0.0
  %14039 = vmatpush1.msra.mxu0 %v13787
  %14040 = vmatprep.subr.mxu0 0.0
  %14041 = vmatpush1.msra.mxu0 %v13786
  %14042 = vmatprep.subr.mxu0 0.0
  %14043 = vmatpush1.msra.mxu0 %v13785
  %14044 = vmatprep.subr.mxu0 0.0
  %14045 = vmatpush1.msra.mxu0 %v13784
  %14046 = vmatprep.subr.mxu0 0.0
  %14047 = vmatpush1.msra.mxu0 %v13783
  %14048 = vmatprep.subr.mxu0 0.0
  %14049 = vmatpush1.msra.mxu0 %v13782
  %14050 = vmatprep.subr.mxu0 0.0
  %14051 = vmatpush1.msra.mxu0 %v13781
  %14052 = vmatprep.subr.mxu0 0.0
  %14053 = vmatpush1.msra.mxu0 %v13780
  %14054 = vmatprep.subr.mxu0 0.0
  %14055 = vmatpush1.msra.mxu0 %v13779
  %14056 = vmatprep.subr.mxu0 0.0
  %14057 = vmatpush1.msra.mxu0 %v13778
  %14058 = vmatprep.subr.mxu0 0.0
  %14059 = vmatpush1.msra.mxu0 %v13777
  %14060 = vmatprep.subr.mxu0 0.0
  %14061 = vmatpush1.msra.mxu0 %v13776
  %14062 = vmatprep.subr.mxu0 0.0
  %14063 = vmatpush1.msra.mxu0 %v13775
  %14064 = vmatprep.subr.mxu0 0.0
  %14065 = vmatpush2.msra.mxu0 %v13806
  %14066 = vmatprep.subr.mxu0 0.0
  %14067 = vmatpush2.msra.mxu0 %v13805
  %14068 = vmatprep.subr.mxu0 0.0
  %14069 = vmatpush2.msra.mxu0 %v13804
  %14070 = vmatprep.subr.mxu0 0.0
  %14071 = vmatpush2.msra.mxu0 %v13803
  %14072 = vmatprep.subr.mxu0 0.0
  %14073 = vmatpush2.msra.mxu0 %v13802
  %14074 = vmatprep.subr.mxu0 0.0
  %14075 = vmatpush2.msra.mxu0 %v13801
  %14076 = vmatprep.subr.mxu0 0.0
  %14077 = vmatpush2.msra.mxu0 %v13800
  %14078 = vmatprep.subr.mxu0 0.0
  %14079 = vmatpush2.msra.mxu0 %v13799
  %14080 = vmatprep.subr.mxu0 0.0
  %14081 = vmatpush2.msra.mxu0 %v13798
  %14082 = vmatprep.subr.mxu0 0.0
  %14083 = vmatpush2.msra.mxu0 %v13797
  %14084 = vmatprep.subr.mxu0 0.0
  %14085 = vmatpush2.msra.mxu0 %v13796
  %14086 = vmatprep.subr.mxu0 0.0
  %14087 = vmatpush2.msra.mxu0 %v13795
  %14088 = vmatprep.subr.mxu0 0.0
  %14089 = vmatpush2.msra.mxu0 %v13794
  %14090 = vmatprep.subr.mxu0 0.0
  %14091 = vmatpush2.msra.mxu0 %v13793
  %14092 = vmatprep.subr.mxu0 0.0
  %14093 = vmatpush2.msra.mxu0 %v13792
  %14094 = vmatprep.subr.mxu0 0.0
  %14095 = vmatpush2.msra.mxu0 %v13791
  %14096 = vmatprep.mubr.f32.mxu0 %v13617
  %14097 = vmatmul.mubr.f32.gmra.mxu0 %v13616
  %v14098 = vpop.f32.mrf.mxu0
  %v14099 = vadd.f32 %v13874, %v14098
  %v14100 = vpop.f32.mrf.mxu0
  %14101 = vmatprep.mubr.f32.mxu0 %v13621
  %14102 = vmatmul.mubr.f32.gmra.mxu0 %v13620
  %v14103 = vpop.f32.mrf.mxu0
  %v14104 = vadd.f32 %v13879, %v14103
  %v14105 = vpop.f32.mrf.mxu0
  %14106 = vmatprep.mubr.f32.mxu0 %v13625
  %14107 = vmatmul.mubr.f32.gmra.mxu0 %v13624
  %v14108 = vpop.f32.mrf.mxu0
  %v14109 = vadd.f32 %v13884, %v14108
  %v14110 = vpop.f32.mrf.mxu0
  %14111 = vmatprep.mubr.f32.mxu0 %v13629
  %14112 = vmatmul.mubr.f32.gmra.mxu0 %v13628
  %v14113 = vpop.f32.mrf.mxu0
  %v14114 = vadd.f32 %v13889, %v14113
  %v14115 = vpop.f32.mrf.mxu0
  %14116 = vmatprep.mubr.f32.mxu0 %v13633
  %14117 = vmatmul.mubr.f32.gmra.mxu0 %v13632
  %v14118 = vpop.f32.mrf.mxu0
  %v14119 = vadd.f32 %v13894, %v14118
  %v14120 = vpop.f32.mrf.mxu0
  %14121 = vmatprep.mubr.f32.mxu0 %v13637
  %14122 = vmatmul.mubr.f32.gmra.mxu0 %v13636
  %v14123 = vpop.f32.mrf.mxu0
  %v14124 = vadd.f32 %v13899, %v14123
  %v14125 = vpop.f32.mrf.mxu0
  %14126 = vmatprep.mubr.f32.mxu0 %v13641
  %14127 = vmatmul.mubr.f32.gmra.mxu0 %v13640
  %v14128 = vpop.f32.mrf.mxu0
  %v14129 = vadd.f32 %v13904, %v14128
  %v14130 = vpop.f32.mrf.mxu0
  %14131 = vmatprep.mubr.f32.mxu0 %v13645
  %14132 = vmatmul.mubr.f32.gmra.mxu0 %v13644
  %v14133 = vpop.f32.mrf.mxu0
  %v14134 = vadd.f32 %v13909, %v14133
  %v14135 = vpop.f32.mrf.mxu0
  %14136 = vmatprep.mubr.f32.mxu0 %v13649
  %14137 = vmatmul.mubr.f32.gmra.mxu0 %v13648
  %v14138 = vpop.f32.mrf.mxu0
  %v14139 = vadd.f32 %v13914, %v14138
  %v14140 = vpop.f32.mrf.mxu0
  %14141 = vmatprep.mubr.f32.mxu0 %v13653
  %14142 = vmatmul.mubr.f32.gmra.mxu0 %v13652
  %v14143 = vpop.f32.mrf.mxu0
  %v14144 = vadd.f32 %v13919, %v14143
  %v14145 = vpop.f32.mrf.mxu0
  %14146 = vmatprep.mubr.f32.mxu0 %v13657
  %14147 = vmatmul.mubr.f32.gmra.mxu0 %v13656
  %v14148 = vpop.f32.mrf.mxu0
  %v14149 = vadd.f32 %v13924, %v14148
  %v14150 = vpop.f32.mrf.mxu0
  %14151 = vmatprep.mubr.f32.mxu0 %v13661
  %14152 = vmatmul.mubr.f32.gmra.mxu0 %v13660
  %v14153 = vpop.f32.mrf.mxu0
  %v14154 = vadd.f32 %v13929, %v14153
  %v14155 = vpop.f32.mrf.mxu0
  %14156 = vmatprep.mubr.f32.mxu0 %v13665
  %14157 = vmatmul.mubr.f32.gmra.mxu0 %v13664
  %v14158 = vpop.f32.mrf.mxu0
  %v14159 = vadd.f32 %v13934, %v14158
  %v14160 = vpop.f32.mrf.mxu0
  %14161 = vmatprep.mubr.f32.mxu0 %v13669
  %14162 = vmatmul.mubr.f32.gmra.mxu0 %v13668
  %v14163 = vpop.f32.mrf.mxu0
  %v14164 = vadd.f32 %v13939, %v14163
  %v14165 = vpop.f32.mrf.mxu0
  %14166 = vmatprep.mubr.f32.mxu0 %v13673
  %14167 = vmatmul.mubr.f32.gmra.mxu0 %v13672
  %v14168 = vpop.f32.mrf.mxu0
  %v14169 = vadd.f32 %v13944, %v14168
  %v14170 = vpop.f32.mrf.mxu0
  %14171 = vmatprep.mubr.f32.mxu0 %v13677
  %14172 = vmatmul.mubr.f32.gmra.mxu0 %v13676
  %v14173 = vpop.f32.mrf.mxu0
  %v14174 = vadd.f32 %v13949, %v14173
  %v14175 = vpop.f32.mrf.mxu0
  %14176 = vmatprep.mubr.f32.mxu0 %v13681
  %14177 = vmatmul.mubr.f32.gmra.mxu0 %v13680
  %v14178 = vpop.f32.mrf.mxu0
  %v14179 = vadd.f32 %v13954, %v14178
  %v14180 = vpop.f32.mrf.mxu0
  %14181 = vmatprep.mubr.f32.mxu0 %v13685
  %14182 = vmatmul.mubr.f32.gmra.mxu0 %v13684
  %v14183 = vpop.f32.mrf.mxu0
  %v14184 = vadd.f32 %v13959, %v14183
  %v14185 = vpop.f32.mrf.mxu0
  %14186 = vmatprep.mubr.f32.mxu0 %v13689
  %14187 = vmatmul.mubr.f32.gmra.mxu0 %v13688
  %v14188 = vpop.f32.mrf.mxu0
  %v14189 = vadd.f32 %v13964, %v14188
  %v14190 = vpop.f32.mrf.mxu0
  %14191 = vmatprep.mubr.f32.mxu0 %v13693
  %14192 = vmatmul.mubr.f32.gmra.mxu0 %v13692
  %v14193 = vpop.f32.mrf.mxu0
  %v14194 = vadd.f32 %v13969, %v14193
  %v14195 = vpop.f32.mrf.mxu0
  %14196 = vmatprep.mubr.f32.mxu0 %v13697
  %14197 = vmatmul.mubr.f32.gmra.mxu0 %v13696
  %v14198 = vpop.f32.mrf.mxu0
  %v14199 = vadd.f32 %v13974, %v14198
  %v14200 = vpop.f32.mrf.mxu0
  %14201 = vmatprep.mubr.f32.mxu0 %v13701
  %14202 = vmatmul.mubr.f32.gmra.mxu0 %v13700
  %v14203 = vpop.f32.mrf.mxu0
  %v14204 = vadd.f32 %v13979, %v14203
  %v14205 = vpop.f32.mrf.mxu0
  %14206 = vmatprep.mubr.f32.mxu0 %v13705
  %14207 = vmatmul.mubr.f32.gmra.mxu0 %v13704
  %v14208 = vpop.f32.mrf.mxu0
  %v14209 = vadd.f32 %v13984, %v14208
  %v14210 = vpop.f32.mrf.mxu0
  %14211 = vmatprep.mubr.f32.mxu0 %v13709
  %14212 = vmatmul.mubr.f32.gmra.mxu0 %v13708
  %v14213 = vpop.f32.mrf.mxu0
  %v14214 = vadd.f32 %v13989, %v14213
  %v14215 = vpop.f32.mrf.mxu0
  %14216 = vmatprep.mubr.f32.mxu0 %v13713
  %14217 = vmatmul.mubr.f32.gmra.mxu0 %v13712
  %v14218 = vpop.f32.mrf.mxu0
  %v14219 = vadd.f32 %v13994, %v14218
  %v14220 = vpop.f32.mrf.mxu0
  %14221 = vmatprep.mubr.f32.mxu0 %v13717
  %14222 = vmatmul.mubr.f32.gmra.mxu0 %v13716
  %v14223 = vpop.f32.mrf.mxu0
  %v14224 = vadd.f32 %v13999, %v14223
  %v14225 = vpop.f32.mrf.mxu0
  %14226 = vmatprep.mubr.f32.mxu0 %v13721
  %14227 = vmatmul.mubr.f32.gmra.mxu0 %v13720
  %v14228 = vpop.f32.mrf.mxu0
  %v14229 = vadd.f32 %v14004, %v14228
  %v14230 = vpop.f32.mrf.mxu0
  %14231 = vmatprep.mubr.f32.mxu0 %v13725
  %14232 = vmatmul.mubr.f32.gmra.mxu0 %v13724
  %v14233 = vpop.f32.mrf.mxu0
  %v14234 = vadd.f32 %v14009, %v14233
  %v14235 = vpop.f32.mrf.mxu0
  %14236 = vmatprep.mubr.f32.mxu0 %v13729
  %14237 = vmatmul.mubr.f32.gmra.mxu0 %v13728
  %v14238 = vpop.f32.mrf.mxu0
  %v14239 = vadd.f32 %v14014, %v14238
  %v14240 = vpop.f32.mrf.mxu0
  %14241 = vmatprep.mubr.f32.mxu0 %v13733
  %14242 = vmatmul.mubr.f32.gmra.mxu0 %v13732
  %v14243 = vpop.f32.mrf.mxu0
  %v14244 = vadd.f32 %v14019, %v14243
  %v14245 = vpop.f32.mrf.mxu0
  %14246 = vmatprep.mubr.f32.mxu0 %v13737
  %14247 = vmatmul.mubr.f32.gmra.mxu0 %v13736
  %v14248 = vpop.f32.mrf.mxu0
  %v14249 = vadd.f32 %v14024, %v14248
  %v14250 = vpop.f32.mrf.mxu0
  %14251 = vmatprep.mubr.f32.mxu0 %v13741
  %14252 = vmatmul.mubr.f32.gmra.mxu0 %v13740
  %v14253 = vpop.f32.mrf.mxu0
  %v14254 = vadd.f32 %v14029, %v14253
  %v14255 = vpop.f32.mrf.mxu0
  %14256 = vdwg.mxu0
  %v14257 = vadd.f32 %v12980, %v14099
  %v14258 = vadd.f32 %v12981, %v14104
  %v14259 = vadd.f32 %v12982, %v14109
  %v14260 = vadd.f32 %v12983, %v14114
  %v14261 = vadd.f32 %v12984, %v14119
  %v14262 = vadd.f32 %v12985, %v14124
  %v14263 = vadd.f32 %v12986, %v14129
  %v14264 = vadd.f32 %v12987, %v14134
  %v14265 = vadd.f32 %v12988, %v14139
  %v14266 = vadd.f32 %v12989, %v14144
  %v14267 = vadd.f32 %v12990, %v14149
  %v14268 = vadd.f32 %v12991, %v14154
  %v14269 = vadd.f32 %v12992, %v14159
  %v14270 = vadd.f32 %v12993, %v14164
  %v14271 = vadd.f32 %v12994, %v14169
  %v14272 = vadd.f32 %v12995, %v14174
  %v14273 = vadd.f32 %v12996, %v14179
  %v14274 = vadd.f32 %v12997, %v14184
  %v14275 = vadd.f32 %v12998, %v14189
  %v14276 = vadd.f32 %v12999, %v14194
  %v14277 = vadd.f32 %v13000, %v14199
  %v14278 = vadd.f32 %v13001, %v14204
  %v14279 = vadd.f32 %v13002, %v14209
  %v14280 = vadd.f32 %v13003, %v14214
  %v14281 = vadd.f32 %v13004, %v14219
  %v14282 = vadd.f32 %v13005, %v14224
  %v14283 = vadd.f32 %v13006, %v14229
  %v14284 = vadd.f32 %v13007, %v14234
  %v14285 = vadd.f32 %v13008, %v14239
  %v14286 = vadd.f32 %v13009, %v14244
  %v14287 = vadd.f32 %v13010, %v14249
  %v14288 = vadd.f32 %v13011, %v14254
  %s14289 = scalar_lea.vmem %s10, 1
  %v14290 = vld [vmem:[%s14289] sm:$0x1]
  %v14292 = vlaneseq
  %v14293 = vshrl.u32 %v14292, 7
  %v14294 = vsub.s32 0, %v14293
  %v14295 = vrot.slane %v14290, %v14294
  %v14297 = vadd.f32 %v14257, %v14295
  %v14298 = vadd.f32 %v14258, %v14295
  %v14299 = vadd.f32 %v14259, %v14295
  %v14300 = vadd.f32 %v14260, %v14295
  %v14301 = vadd.f32 %v14261, %v14295
  %v14302 = vadd.f32 %v14262, %v14295
  %v14303 = vadd.f32 %v14263, %v14295
  %v14304 = vadd.f32 %v14264, %v14295
  %v14305 = vadd.f32 %v14265, %v14295
  %v14306 = vadd.f32 %v14266, %v14295
  %v14307 = vadd.f32 %v14267, %v14295
  %v14308 = vadd.f32 %v14268, %v14295
  %v14309 = vadd.f32 %v14269, %v14295
  %v14310 = vadd.f32 %v14270, %v14295
  %v14311 = vadd.f32 %v14271, %v14295
  %v14312 = vadd.f32 %v14272, %v14295
  %v14313 = vadd.f32 %v14273, %v14295
  %v14314 = vadd.f32 %v14274, %v14295
  %v14315 = vadd.f32 %v14275, %v14295
  %v14316 = vadd.f32 %v14276, %v14295
  %v14317 = vadd.f32 %v14277, %v14295
  %v14318 = vadd.f32 %v14278, %v14295
  %v14319 = vadd.f32 %v14279, %v14295
  %v14320 = vadd.f32 %v14280, %v14295
  %v14321 = vadd.f32 %v14281, %v14295
  %v14322 = vadd.f32 %v14282, %v14295
  %v14323 = vadd.f32 %v14283, %v14295
  %v14324 = vadd.f32 %v14284, %v14295
  %v14325 = vadd.f32 %v14285, %v14295
  %v14326 = vadd.f32 %v14286, %v14295
  %v14327 = vadd.f32 %v14287, %v14295
  %v14328 = vadd.f32 %v14288, %v14295
  %14329 = vst [vmem:[%s12] sm:$0xff] %v14297
  %14330 = vst [vmem:[%s12 + $0x8] sm:$0xff] %v14298
  %14331 = vst [vmem:[%s12 + $0x10] sm:$0xff] %v14299
  %14332 = vst [vmem:[%s12 + $0x18] sm:$0xff] %v14300
  %14333 = vst [vmem:[%s12 + $0x20] sm:$0xff] %v14301
  %14334 = vst [vmem:[%s12 + $0x28] sm:$0xff] %v14302
  %14335 = vst [vmem:[%s12 + $0x30] sm:$0xff] %v14303
  %14336 = vst [vmem:[%s12 + $0x38] sm:$0xff] %v14304
  %14337 = vst [vmem:[%s12 + $0x40] sm:$0xff] %v14305
  %14338 = vst [vmem:[%s12 + $0x48] sm:$0xff] %v14306
  %14339 = vst [vmem:[%s12 + $0x50] sm:$0xff] %v14307
  %14340 = vst [vmem:[%s12 + $0x58] sm:$0xff] %v14308
  %14341 = vst [vmem:[%s12 + $0x60] sm:$0xff] %v14309
  %14342 = vst [vmem:[%s12 + $0x68] sm:$0xff] %v14310
  %14343 = vst [vmem:[%s12 + $0x70] sm:$0xff] %v14311
  %14344 = vst [vmem:[%s12 + $0x78] sm:$0xff] %v14312
  %14345 = vst [vmem:[%s12 + $0x80] sm:$0xff] %v14313
  %14346 = vst [vmem:[%s12 + $0x88] sm:$0xff] %v14314
  %14347 = vst [vmem:[%s12 + $0x90] sm:$0xff] %v14315
  %14348 = vst [vmem:[%s12 + $0x98] sm:$0xff] %v14316
  %14349 = vst [vmem:[%s12 + $0xa0] sm:$0xff] %v14317
  %14350 = vst [vmem:[%s12 + $0xa8] sm:$0xff] %v14318
  %14351 = vst [vmem:[%s12 + $0xb0] sm:$0xff] %v14319
  %14352 = vst [vmem:[%s12 + $0xb8] sm:$0xff] %v14320
  %14353 = vst [vmem:[%s12 + $0xc0] sm:$0xff] %v14321
  %14354 = vst [vmem:[%s12 + $0xc8] sm:$0xff] %v14322
  %14355 = vst [vmem:[%s12 + $0xd0] sm:$0xff] %v14323
  %14356 = vst [vmem:[%s12 + $0xd8] sm:$0xff] %v14324
  %14357 = vst [vmem:[%s12 + $0xe0] sm:$0xff] %v14325
  %14358 = vst [vmem:[%s12 + $0xe8] sm:$0xff] %v14326
  %14359 = vst [vmem:[%s12 + $0xf0] sm:$0xff] %v14327
  %14360 = vst [vmem:[%s12 + $0xf8] sm:$0xff] %v14328
  // Predicated region
  $region50: #{basic_layer_forward.1} parent=0 // pred_check
    _
  $region51: #{basic_layer_forward.1} parent=0 // pred_check_branch
    %14362 = sbr.rel (0) target = $region53
  $region52: #{basic_layer_forward.1} parent=0 // pred_region
    _
  $region53: #{basic_layer_forward.1} parent=0 // pred_fallthru
    _
  // Predicated region
  $region54: #{basic_layer_forward.1} parent=0 // pred_check
    _
  $region55: #{basic_layer_forward.1} parent=0 // pred_check_branch
    %14364 = sbr.rel (0) target = $region57
  $region56: #{basic_layer_forward.1} parent=0 // pred_region
    _
  $region57: #{basic_layer_forward.1} parent=0 // pred_fallthru
    _

</llo_original>
